<compile_context>
chip_gen: v7x
topology: tpu7x:2x2x1
jax: 0.10.0
libtpu: 0.0.40
codegen_flags: <defaults>
</compile_context>

<pallas_src>
import functools

import jax
import jax.numpy as jnp
import numpy as np
from jax.experimental import pallas as pl
from jax.experimental.pallas import tpu as pltpu

C1 = 0.01 ** 2
C2 = 0.03 ** 2


def _round_up(v, m):
    return ((v + m - 1) // m) * m


def _padded_rows(H, radius):
    """Sublane-padded H extent: `radius`-wide zero borders, aligned offsets."""
    pad_top = _round_up(radius, 8)               # aligned interior writes
    hp_rows = _round_up(pad_top + H + radius, 8)  # bottom pad >= radius
    return pad_top, hp_rows


def _window_sum(x, n, axis, out_len, start=0):
    """sum_{k=0..n-1} x[..., start + j + k, ...] for j in [0, out_len).

    Shift-doubling: builds power-of-two partial window sums and combines the
    binary decomposition of n (e.g. 11 = 8 + 2 + 1), so the add count is
    O(log n) + popcount(n) instead of n.
    """
    def slc(v, lo, length):
        idx = [slice(None)] * v.ndim
        idx[axis] = slice(lo, lo + length)
        return v[tuple(idx)]

    maxp = n.bit_length() - 1
    partial = [x]                                # partial[p]: window of 2**p
    for p in range(1, maxp + 1):
        prev = partial[p - 1]
        plen = prev.shape[axis]
        half = 1 << (p - 1)
        partial.append(slc(prev, 0, plen - half) + slc(prev, half, plen - half))

    acc = None
    off = 0
    for p in range(maxp, -1, -1):
        if n & (1 << p):
            term = slc(partial[p], start + off, out_len)
            acc = term if acc is None else acc + term
            off += 1 << p
    return acc


def _ssim3d_kernel(xc_ref, xn_ref, yc_ref, yn_ref, aw_ref, o_ref,
                   buf_ref, carry_ref, *,
                   td, radius, pad_top, nblk_static, inv_total):
    """One D-slab of the SSIM map; accumulates its sum into o_ref (1, 1)."""
    i = pl.program_id(0)
    nblk = pl.num_programs(0)
    r = radius
    n = 2 * r + 1
    de = td + 2 * r
    hp_rows = buf_ref.shape[2]
    H = xc_ref.shape[1]
    W = xc_ref.shape[2]
    h0 = pad_top                      # first interior H row inside buf

    @pl.when(i == 0)
    def _init():
        o_ref[...] = jnp.zeros_like(o_ref)
        # Zero once: the H borders / unused pad rows never get written again,
        # giving the zero padding of the box filter for free on later steps.
        buf_ref[...] = jnp.zeros_like(buf_ref)

    xc = xc_ref[...]
    yc = yc_ref[...]

    def put(d_lo, xs, ys):
        """Write the 5 channels of a group of D-planes directly into buf."""
        nd = xs.shape[0]
        buf_ref[0, d_lo:d_lo + nd, h0:h0 + H, :] = xs
        buf_ref[1, d_lo:d_lo + nd, h0:h0 + H, :] = ys
        buf_ref[2, d_lo:d_lo + nd, h0:h0 + H, :] = xs * xs
        buf_ref[3, d_lo:d_lo + nd, h0:h0 + H, :] = ys * ys
        buf_ref[4, d_lo:d_lo + nd, h0:h0 + H, :] = xs * ys

    # Centre slab (always).
    put(r, xc, yc)

    if nblk_static > 1 and r > 0:
        # Previous-slab halo from the VMEM carry ring (zero at i == 0 because
        # buf was zero-initialised and we simply skip the copy).
        @pl.when(i > 0)
        def _prev_halo():
            put(0, carry_ref[0, :, :, :], carry_ref[1, :, :, :])

        # Next-slab halo straight from the next input block.
        @pl.when(i < nblk - 1)
        def _next_halo():
            put(r + td, xn_ref[0:r, :, :], yn_ref[0:r, :, :])

        # At the last slab the tail planes still hold the previous step's
        # next-halo; restore the zero padding.
        @pl.when(i == nblk - 1)
        def _zero_tail():
            z = jnp.zeros((r, H, W), jnp.float32)
            for c in range(5):
                buf_ref[c, r + td:de, h0:h0 + H, :] = z

        # Refresh the carry ring with this slab's last `radius` raw planes
        # (the read of the old carry above happens first in program order).
        carry_ref[0, :, :, :] = xc[td - r:, :, :]
        carry_ref[1, :, :, :] = yc[td - r:, :, :]

    # --- W-axis box sum: one batched MXU matmul over all 5 channels; the
    #     band matrix already carries the 1/window^3 normalisation. ----------
    p = buf_ref[...]                                       # (5, de, Hp, W)
    q = jnp.dot(p.reshape(5 * de * hp_rows, W), aw_ref[...],
                preferred_element_type=jnp.float32)
    q = q.reshape(5, de, hp_rows, W)

    # --- D-axis box sum: leading-axis shifted adds with shift-doubling. -----
    qd = _window_sum(q, n, axis=1, out_len=td, start=0)    # (5, td, Hp, W)

    # --- H-axis box sum: sublane-axis shifted adds with shift-doubling; the
    #     zero borders built into buf provide the padding. -------------------
    s = _window_sum(qd, n, axis=2, out_len=H, start=pad_top - r)  # (5,td,H,W)

    mu_x, mu_y, e_xx, e_yy, e_xy = s[0], s[1], s[2], s[3], s[4]
    mu_xy = mu_x * mu_y
    mu_x2 = mu_x * mu_x
    mu_y2 = mu_y * mu_y
    sig_x = e_xx - mu_x2
    sig_y = e_yy - mu_y2
    sig_xy = e_xy - mu_xy

    num = (2.0 * mu_xy + C1) * (2.0 * sig_xy + C2)
    den = (mu_x2 + mu_y2 + C1) * (sig_x + sig_y + C2)
    ssim = num * pl.reciprocal(den, approx=True)           # EUP slot, not VALU

    m2 = ssim.reshape(td * H, W)
    part = jnp.sum(jnp.sum(m2, axis=1, keepdims=True), axis=0, keepdims=True)
    o_ref[...] += part

    @pl.when(i == nblk - 1)
    def _finalize():
        o_ref[...] = 1.0 - o_ref[...] * inv_total


def _choose_tile_d(D, radius, target=8):
    """Divisor of D, >= radius (so the carry ring holds one slab's tail),
    preferring a small slab to bound VMEM and exercise the pipelined grid."""
    cands = [t for t in range(1, D + 1) if D % t == 0 and t >= radius]
    if not cands:
        return D
    for t in cands:
        if t >= target:
            return t
    return cands[-1]


def _vmem_limit_bytes(td, H, W, radius):
    """Derive the scoped-VMEM request from the actual working set."""
    de = td + 2 * radius
    _, hp_rows = _padded_rows(H, radius)
    slab = td * H * W * 4
    buf = 5 * de * hp_rows * W * 4
    carry = 2 * max(radius, 1) * H * W * 4
    est = 8 * slab + carry + 5 * buf + (2 << 20)   # inputs dbl-buffered + temps
    return int(min(max(est, 32 * 1024 * 1024), 96 * 1024 * 1024))


def ssim3d_loss(x, y, window_size=11, tile_d=None):
    """Pallas equivalent of SSIM3DLoss.forward(x, y) for x, y of shape (D, H, W)."""
    if window_size % 2 != 1:
        raise ValueError("window_size must be odd")
    D, H, W = x.shape
    radius = window_size // 2
    td = int(tile_d) if tile_d is not None else _choose_tile_d(D, radius)
    if D % td != 0:
        raise ValueError("tile_d must divide D")
    nblk = D // td
    if nblk > 1 and td < radius:
        raise ValueError("tile_d must be >= window_size // 2 when tiling D")

    de = td + 2 * radius
    pad_top, hp_rows = _padded_rows(H, radius)

    # Host-side constant: W-axis band matrix (truncated band == zero padding)
    # with the uniform-window 1/ws^3 normalisation folded in.
    idx = np.arange(W)
    aw = (np.abs(idx[:, None] - idx[None, :]) <= radius).astype(np.float32)
    aw *= 1.0 / float(window_size ** 3)
    aw = jnp.asarray(aw)

    x = x.astype(jnp.float32)
    y = y.astype(jnp.float32)

    blk = (td, H, W)
    cur_map = lambda i: (i, 0, 0)
    nxt_map = lambda i: (jnp.minimum(i + 1, nblk - 1), 0, 0)

    kernel = functools.partial(
        _ssim3d_kernel, td=td, radius=radius, pad_top=pad_top,
        nblk_static=nblk, inv_total=1.0 / float(D * H * W))

    out = pl.pallas_call(
        kernel,
        out_shape=jax.ShapeDtypeStruct((1, 1), jnp.float32),
        grid=(nblk,),
        in_specs=[
            pl.BlockSpec(blk, cur_map),               # x: current slab
            pl.BlockSpec(blk, nxt_map),               # x: next slab (halo)
            pl.BlockSpec(blk, cur_map),               # y: current slab
            pl.BlockSpec(blk, nxt_map),               # y: next slab (halo)
            pl.BlockSpec((W, W), lambda i: (0, 0)),   # scaled W band matrix
        ],
        out_specs=pl.BlockSpec((1, 1), lambda i: (0, 0)),
        scratch_shapes=[
            pltpu.VMEM((5, de, hp_rows, W), jnp.float32),        # channel buf
            pltpu.VMEM((2, max(radius, 1), H, W), jnp.float32),  # carry ring
        ],
        compiler_params=pltpu.CompilerParams(
            # Carried scalar sum + carry ring across slabs -> sequential axis.
            dimension_semantics=("arbitrary",),
            vmem_limit_bytes=_vmem_limit_bytes(td, H, W, radius),
        ),
    )(x, x, y, y, aw)
    return out[0, 0]


def _ssim3d_loss_ref(x, y, window_size=11):
    """Pure-JAX reference matching the PyTorch F.conv3d implementation."""
    w = jnp.ones((1, 1, window_size, window_size, window_size), jnp.float32)
    w = w / float(window_size ** 3)
    pad = window_size // 2

    def conv(v):
        return jax.lax.conv_general_dilated(
            v[None, None].astype(jnp.float32), w,
            window_strides=(1, 1, 1),
            padding=[(pad, pad)] * 3,
            dimension_numbers=("NCDHW", "OIDHW", "NCDHW"),
        )[0, 0]

    mu_x = conv(x)
    mu_y = conv(y)
    sxx = conv(x * x) - mu_x ** 2
    syy = conv(y * y) - mu_y ** 2
    sxy = conv(x * y) - mu_x * mu_y
    ssim = ((2 * mu_x * mu_y + C1) * (2 * sxy + C2)) / (
        (mu_x ** 2 + mu_y ** 2 + C1) * (sxx + syy + C2)
    )
    return 1.0 - ssim.mean()


if __name__ == "__main__":
    key = jax.random.PRNGKey(0)
    kx, ky = jax.random.split(key)
    D = H = W = 16  # small 3-D volume, normalized to [0, 1]
    x = jax.random.uniform(kx, (D, H, W), dtype=jnp.float32)
    y = jax.random.uniform(ky, (D, H, W), dtype=jnp.float32)

    loss_fn = jax.jit(functools.partial(ssim3d_loss, window_size=11))
    loss = jax.block_until_ready(loss_fn(x, y))
    ref = jax.block_until_ready(_ssim3d_loss_ref(x, y, window_size=11))
    np.testing.assert_allclose(np.asarray(loss), np.asarray(ref), rtol=1e-3, atol=1e-4)

    print("KERNEL_OK")
</pallas_src>

<mosaic_0001>
module attributes {stable_mosaic.version = 11 : i64} {
  func.func @_ssim3d_kernel(%arg0: i32, %arg1: memref<8x16x16xf32, #tpu.memory_space<vmem>>, %arg2: memref<8x16x16xf32, #tpu.memory_space<vmem>>, %arg3: memref<8x16x16xf32, #tpu.memory_space<vmem>>, %arg4: memref<8x16x16xf32, #tpu.memory_space<vmem>>, %arg5: memref<16x16xf32, #tpu.memory_space<vmem>>, %arg6: memref<1x1xf32, #tpu.memory_space<vmem>>, %arg7: memref<5x18x32x16xf32, #tpu.memory_space<vmem>>, %arg8: memref<2x5x16x16xf32, #tpu.memory_space<vmem>>) attributes {dimension_semantics = [#tpu.dimension_semantics<arbitrary>], iteration_bounds = array<i64: 2>, scalar_prefetch = 0 : i64, scratch_operands = 2 : i64, tpu.core_type = #tpu.core_type<tc>, window_params = [{transform_indices = @transform_0, window_bounds = array<i64: 8, 16, 16>}, {transform_indices = @transform_1, window_bounds = array<i64: 8, 16, 16>}, {transform_indices = @transform_2, window_bounds = array<i64: 8, 16, 16>}, {transform_indices = @transform_3, window_bounds = array<i64: 8, 16, 16>}, {pipeline_mode = #tpu.pipeline_mode<synchronous>, transform_indices = @transform_4, window_bounds = array<i64: 16, 16>}, {pipeline_mode = #tpu.pipeline_mode<synchronous>, transform_indices = @transform_5, window_bounds = array<i64: 1, 1>}]} {
    %c0_i32 = arith.constant 0 : i32
    %0 = arith.cmpi eq, %arg0, %c0_i32 : i32
    %1 = arith.extui %0 : i1 to i32
    %c0_i32_0 = arith.constant 0 : i32
    %2 = arith.cmpi ne, %1, %c0_i32_0 : i32
    scf.if %2 {
      %cst_53 = arith.constant 0.000000e+00 : f32
      %118 = vector.broadcast %cst_53 : f32 to vector<1x1xf32>
      %c0_54 = arith.constant 0 : index
      %c0_55 = arith.constant 0 : index
      %119 = vector.load %arg6[%c0_54, %c0_55] : memref<1x1xf32, #tpu.memory_space<vmem>>, vector<1x1xf32>
      tpu.vector_store %arg6[%c0_54, %c0_55], %118 {strides = array<i32>} : memref<1x1xf32, #tpu.memory_space<vmem>>, vector<1x1xf32>,
      %cst_56 = arith.constant 0.000000e+00 : f32
      %120 = vector.broadcast %cst_56 : f32 to vector<5x18x32x16xf32>
      %c0_57 = arith.constant 0 : index
      %c0_58 = arith.constant 0 : index
      %c0_59 = arith.constant 0 : index
      %c0_60 = arith.constant 0 : index
      %121 = vector.load %arg7[%c0_57, %c0_58, %c0_59, %c0_60] : memref<5x18x32x16xf32, #tpu.memory_space<vmem>>, vector<5x18x32x16xf32>
      tpu.vector_store %arg7[%c0_57, %c0_58, %c0_59, %c0_60], %120 {strides = array<i32>} : memref<5x18x32x16xf32, #tpu.memory_space<vmem>>, vector<5x18x32x16xf32>,
    } else {
    }
    %c0 = arith.constant 0 : index
    %c0_1 = arith.constant 0 : index
    %c0_2 = arith.constant 0 : index
    %3 = vector.load %arg1[%c0, %c0_1, %c0_2] : memref<8x16x16xf32, #tpu.memory_space<vmem>>, vector<8x16x16xf32>
    %c0_3 = arith.constant 0 : index
    %c0_4 = arith.constant 0 : index
    %c0_5 = arith.constant 0 : index
    %4 = vector.load %arg3[%c0_3, %c0_4, %c0_5] : memref<8x16x16xf32, #tpu.memory_space<vmem>>, vector<8x16x16xf32>
    %c0_6 = arith.constant 0 : index
    %c5 = arith.constant 5 : index
    %c8 = arith.constant 8 : index
    %c0_7 = arith.constant 0 : index
    %5 = vector.load %arg7[%c0_6, %c5, %c8, %c0_7] : memref<5x18x32x16xf32, #tpu.memory_space<vmem>>, vector<1x8x16x16xf32>
    %6 = vector.shape_cast %5 : vector<1x8x16x16xf32> to vector<8x16x16xf32>
    %7 = vector.shape_cast %3 : vector<8x16x16xf32> to vector<1x8x16x16xf32>
    tpu.vector_store %arg7[%c0_6, %c5, %c8, %c0_7], %7 {strides = array<i32>} : memref<5x18x32x16xf32, #tpu.memory_space<vmem>>, vector<1x8x16x16xf32>,
    %c1 = arith.constant 1 : index
    %c5_8 = arith.constant 5 : index
    %c8_9 = arith.constant 8 : index
    %c0_10 = arith.constant 0 : index
    %8 = vector.load %arg7[%c1, %c5_8, %c8_9, %c0_10] : memref<5x18x32x16xf32, #tpu.memory_space<vmem>>, vector<1x8x16x16xf32>
    %9 = vector.shape_cast %8 : vector<1x8x16x16xf32> to vector<8x16x16xf32>
    %10 = vector.shape_cast %4 : vector<8x16x16xf32> to vector<1x8x16x16xf32>
    tpu.vector_store %arg7[%c1, %c5_8, %c8_9, %c0_10], %10 {strides = array<i32>} : memref<5x18x32x16xf32, #tpu.memory_space<vmem>>, vector<1x8x16x16xf32>,
    %11 = arith.mulf %3, %3 : vector<8x16x16xf32>
    %c2 = arith.constant 2 : index
    %c5_11 = arith.constant 5 : index
    %c8_12 = arith.constant 8 : index
    %c0_13 = arith.constant 0 : index
    %12 = vector.load %arg7[%c2, %c5_11, %c8_12, %c0_13] : memref<5x18x32x16xf32, #tpu.memory_space<vmem>>, vector<1x8x16x16xf32>
    %13 = vector.shape_cast %12 : vector<1x8x16x16xf32> to vector<8x16x16xf32>
    %14 = vector.shape_cast %11 : vector<8x16x16xf32> to vector<1x8x16x16xf32>
    tpu.vector_store %arg7[%c2, %c5_11, %c8_12, %c0_13], %14 {strides = array<i32>} : memref<5x18x32x16xf32, #tpu.memory_space<vmem>>, vector<1x8x16x16xf32>,
    %15 = arith.mulf %4, %4 : vector<8x16x16xf32>
    %c3 = arith.constant 3 : index
    %c5_14 = arith.constant 5 : index
    %c8_15 = arith.constant 8 : index
    %c0_16 = arith.constant 0 : index
    %16 = vector.load %arg7[%c3, %c5_14, %c8_15, %c0_16] : memref<5x18x32x16xf32, #tpu.memory_space<vmem>>, vector<1x8x16x16xf32>
    %17 = vector.shape_cast %16 : vector<1x8x16x16xf32> to vector<8x16x16xf32>
    %18 = vector.shape_cast %15 : vector<8x16x16xf32> to vector<1x8x16x16xf32>
    tpu.vector_store %arg7[%c3, %c5_14, %c8_15, %c0_16], %18 {strides = array<i32>} : memref<5x18x32x16xf32, #tpu.memory_space<vmem>>, vector<1x8x16x16xf32>,
    %19 = arith.mulf %3, %4 : vector<8x16x16xf32>
    %c4 = arith.constant 4 : index
    %c5_17 = arith.constant 5 : index
    %c8_18 = arith.constant 8 : index
    %c0_19 = arith.constant 0 : index
    %20 = vector.load %arg7[%c4, %c5_17, %c8_18, %c0_19] : memref<5x18x32x16xf32, #tpu.memory_space<vmem>>, vector<1x8x16x16xf32>
    %21 = vector.shape_cast %20 : vector<1x8x16x16xf32> to vector<8x16x16xf32>
    %22 = vector.shape_cast %19 : vector<8x16x16xf32> to vector<1x8x16x16xf32>
    tpu.vector_store %arg7[%c4, %c5_17, %c8_18, %c0_19], %22 {strides = array<i32>} : memref<5x18x32x16xf32, #tpu.memory_space<vmem>>, vector<1x8x16x16xf32>,
    %c0_i32_20 = arith.constant 0 : i32
    %23 = arith.cmpi sgt, %arg0, %c0_i32_20 : i32
    %24 = arith.extui %23 : i1 to i32
    %c0_i32_21 = arith.constant 0 : i32
    %25 = arith.cmpi ne, %24, %c0_i32_21 : i32
    scf.if %25 {
      %c0_53 = arith.constant 0 : index
      %c0_54 = arith.constant 0 : index
      %c0_55 = arith.constant 0 : index
      %c0_56 = arith.constant 0 : index
      %118 = vector.load %arg8[%c0_53, %c0_54, %c0_55, %c0_56] : memref<2x5x16x16xf32, #tpu.memory_space<vmem>>, vector<1x5x16x16xf32>
      %119 = vector.shape_cast %118 : vector<1x5x16x16xf32> to vector<5x16x16xf32>
      %c1_57 = arith.constant 1 : index
      %c0_58 = arith.constant 0 : index
      %c0_59 = arith.constant 0 : index
      %c0_60 = arith.constant 0 : index
      %120 = vector.load %arg8[%c1_57, %c0_58, %c0_59, %c0_60] : memref<2x5x16x16xf32, #tpu.memory_space<vmem>>, vector<1x5x16x16xf32>
      %121 = vector.shape_cast %120 : vector<1x5x16x16xf32> to vector<5x16x16xf32>
      %c0_61 = arith.constant 0 : index
      %c0_62 = arith.constant 0 : index
      %c8_63 = arith.constant 8 : index
      %c0_64 = arith.constant 0 : index
      %122 = vector.load %arg7[%c0_61, %c0_62, %c8_63, %c0_64] : memref<5x18x32x16xf32, #tpu.memory_space<vmem>>, vector<1x5x16x16xf32>
      %123 = vector.shape_cast %122 : vector<1x5x16x16xf32> to vector<5x16x16xf32>
      %124 = vector.shape_cast %119 : vector<5x16x16xf32> to vector<1x5x16x16xf32>
      tpu.vector_store %arg7[%c0_61, %c0_62, %c8_63, %c0_64], %124 {strides = array<i32>} : memref<5x18x32x16xf32, #tpu.memory_space<vmem>>, vector<1x5x16x16xf32>,
      %c1_65 = arith.constant 1 : index
      %c0_66 = arith.constant 0 : index
      %c8_67 = arith.constant 8 : index
      %c0_68 = arith.constant 0 : index
      %125 = vector.load %arg7[%c1_65, %c0_66, %c8_67, %c0_68] : memref<5x18x32x16xf32, #tpu.memory_space<vmem>>, vector<1x5x16x16xf32>
      %126 = vector.shape_cast %125 : vector<1x5x16x16xf32> to vector<5x16x16xf32>
      %127 = vector.shape_cast %121 : vector<5x16x16xf32> to vector<1x5x16x16xf32>
      tpu.vector_store %arg7[%c1_65, %c0_66, %c8_67, %c0_68], %127 {strides = array<i32>} : memref<5x18x32x16xf32, #tpu.memory_space<vmem>>, vector<1x5x16x16xf32>,
      %128 = arith.mulf %119, %119 : vector<5x16x16xf32>
      %c2_69 = arith.constant 2 : index
      %c0_70 = arith.constant 0 : index
      %c8_71 = arith.constant 8 : index
      %c0_72 = arith.constant 0 : index
      %129 = vector.load %arg7[%c2_69, %c0_70, %c8_71, %c0_72] : memref<5x18x32x16xf32, #tpu.memory_space<vmem>>, vector<1x5x16x16xf32>
      %130 = vector.shape_cast %129 : vector<1x5x16x16xf32> to vector<5x16x16xf32>
      %131 = vector.shape_cast %128 : vector<5x16x16xf32> to vector<1x5x16x16xf32>
      tpu.vector_store %arg7[%c2_69, %c0_70, %c8_71, %c0_72], %131 {strides = array<i32>} : memref<5x18x32x16xf32, #tpu.memory_space<vmem>>, vector<1x5x16x16xf32>,
      %132 = arith.mulf %121, %121 : vector<5x16x16xf32>
      %c3_73 = arith.constant 3 : index
      %c0_74 = arith.constant 0 : index
      %c8_75 = arith.constant 8 : index
      %c0_76 = arith.constant 0 : index
      %133 = vector.load %arg7[%c3_73, %c0_74, %c8_75, %c0_76] : memref<5x18x32x16xf32, #tpu.memory_space<vmem>>, vector<1x5x16x16xf32>
      %134 = vector.shape_cast %133 : vector<1x5x16x16xf32> to vector<5x16x16xf32>
      %135 = vector.shape_cast %132 : vector<5x16x16xf32> to vector<1x5x16x16xf32>
      tpu.vector_store %arg7[%c3_73, %c0_74, %c8_75, %c0_76], %135 {strides = array<i32>} : memref<5x18x32x16xf32, #tpu.memory_space<vmem>>, vector<1x5x16x16xf32>,
      %136 = arith.mulf %119, %121 : vector<5x16x16xf32>
      %c4_77 = arith.constant 4 : index
      %c0_78 = arith.constant 0 : index
      %c8_79 = arith.constant 8 : index
      %c0_80 = arith.constant 0 : index
      %137 = vector.load %arg7[%c4_77, %c0_78, %c8_79, %c0_80] : memref<5x18x32x16xf32, #tpu.memory_space<vmem>>, vector<1x5x16x16xf32>
      %138 = vector.shape_cast %137 : vector<1x5x16x16xf32> to vector<5x16x16xf32>
      %139 = vector.shape_cast %136 : vector<5x16x16xf32> to vector<1x5x16x16xf32>
      tpu.vector_store %arg7[%c4_77, %c0_78, %c8_79, %c0_80], %139 {strides = array<i32>} : memref<5x18x32x16xf32, #tpu.memory_space<vmem>>, vector<1x5x16x16xf32>,
    } else {
    }
    %c1_i32 = arith.constant 1 : i32
    %26 = arith.cmpi slt, %arg0, %c1_i32 : i32
    %27 = arith.extui %26 : i1 to i32
    %c0_i32_22 = arith.constant 0 : i32
    %28 = arith.cmpi ne, %27, %c0_i32_22 : i32
    scf.if %28 {
      %c0_53 = arith.constant 0 : index
      %c0_54 = arith.constant 0 : index
      %c0_55 = arith.constant 0 : index
      %118 = vector.load %arg2[%c0_53, %c0_54, %c0_55] : memref<8x16x16xf32, #tpu.memory_space<vmem>>, vector<5x16x16xf32>
      %c0_56 = arith.constant 0 : index
      %c0_57 = arith.constant 0 : index
      %c0_58 = arith.constant 0 : index
      %119 = vector.load %arg4[%c0_56, %c0_57, %c0_58] : memref<8x16x16xf32, #tpu.memory_space<vmem>>, vector<5x16x16xf32>
      %c0_59 = arith.constant 0 : index
      %c13 = arith.constant 13 : index
      %c8_60 = arith.constant 8 : index
      %c0_61 = arith.constant 0 : index
      %120 = vector.load %arg7[%c0_59, %c13, %c8_60, %c0_61] : memref<5x18x32x16xf32, #tpu.memory_space<vmem>>, vector<1x5x16x16xf32>
      %121 = vector.shape_cast %120 : vector<1x5x16x16xf32> to vector<5x16x16xf32>
      %122 = vector.shape_cast %118 : vector<5x16x16xf32> to vector<1x5x16x16xf32>
      tpu.vector_store %arg7[%c0_59, %c13, %c8_60, %c0_61], %122 {strides = array<i32>} : memref<5x18x32x16xf32, #tpu.memory_space<vmem>>, vector<1x5x16x16xf32>,
      %c1_62 = arith.constant 1 : index
      %c13_63 = arith.constant 13 : index
      %c8_64 = arith.constant 8 : index
      %c0_65 = arith.constant 0 : index
      %123 = vector.load %arg7[%c1_62, %c13_63, %c8_64, %c0_65] : memref<5x18x32x16xf32, #tpu.memory_space<vmem>>, vector<1x5x16x16xf32>
      %124 = vector.shape_cast %123 : vector<1x5x16x16xf32> to vector<5x16x16xf32>
      %125 = vector.shape_cast %119 : vector<5x16x16xf32> to vector<1x5x16x16xf32>
      tpu.vector_store %arg7[%c1_62, %c13_63, %c8_64, %c0_65], %125 {strides = array<i32>} : memref<5x18x32x16xf32, #tpu.memory_space<vmem>>, vector<1x5x16x16xf32>,
      %126 = arith.mulf %118, %118 : vector<5x16x16xf32>
      %c2_66 = arith.constant 2 : index
      %c13_67 = arith.constant 13 : index
      %c8_68 = arith.constant 8 : index
      %c0_69 = arith.constant 0 : index
      %127 = vector.load %arg7[%c2_66, %c13_67, %c8_68, %c0_69] : memref<5x18x32x16xf32, #tpu.memory_space<vmem>>, vector<1x5x16x16xf32>
      %128 = vector.shape_cast %127 : vector<1x5x16x16xf32> to vector<5x16x16xf32>
      %129 = vector.shape_cast %126 : vector<5x16x16xf32> to vector<1x5x16x16xf32>
      tpu.vector_store %arg7[%c2_66, %c13_67, %c8_68, %c0_69], %129 {strides = array<i32>} : memref<5x18x32x16xf32, #tpu.memory_space<vmem>>, vector<1x5x16x16xf32>,
      %130 = arith.mulf %119, %119 : vector<5x16x16xf32>
      %c3_70 = arith.constant 3 : index
      %c13_71 = arith.constant 13 : index
      %c8_72 = arith.constant 8 : index
      %c0_73 = arith.constant 0 : index
      %131 = vector.load %arg7[%c3_70, %c13_71, %c8_72, %c0_73] : memref<5x18x32x16xf32, #tpu.memory_space<vmem>>, vector<1x5x16x16xf32>
      %132 = vector.shape_cast %131 : vector<1x5x16x16xf32> to vector<5x16x16xf32>
      %133 = vector.shape_cast %130 : vector<5x16x16xf32> to vector<1x5x16x16xf32>
      tpu.vector_store %arg7[%c3_70, %c13_71, %c8_72, %c0_73], %133 {strides = array<i32>} : memref<5x18x32x16xf32, #tpu.memory_space<vmem>>, vector<1x5x16x16xf32>,
      %134 = arith.mulf %118, %119 : vector<5x16x16xf32>
      %c4_74 = arith.constant 4 : index
      %c13_75 = arith.constant 13 : index
      %c8_76 = arith.constant 8 : index
      %c0_77 = arith.constant 0 : index
      %135 = vector.load %arg7[%c4_74, %c13_75, %c8_76, %c0_77] : memref<5x18x32x16xf32, #tpu.memory_space<vmem>>, vector<1x5x16x16xf32>
      %136 = vector.shape_cast %135 : vector<1x5x16x16xf32> to vector<5x16x16xf32>
      %137 = vector.shape_cast %134 : vector<5x16x16xf32> to vector<1x5x16x16xf32>
      tpu.vector_store %arg7[%c4_74, %c13_75, %c8_76, %c0_77], %137 {strides = array<i32>} : memref<5x18x32x16xf32, #tpu.memory_space<vmem>>, vector<1x5x16x16xf32>,
    } else {
    }
    %c1_i32_23 = arith.constant 1 : i32
    %29 = arith.cmpi eq, %arg0, %c1_i32_23 : i32
    %30 = arith.extui %29 : i1 to i32
    %c0_i32_24 = arith.constant 0 : i32
    %31 = arith.cmpi ne, %30, %c0_i32_24 : i32
    scf.if %31 {
      %cst_53 = arith.constant 0.000000e+00 : f32
      %118 = vector.broadcast %cst_53 : f32 to vector<5x16x16xf32>
      %c0_54 = arith.constant 0 : index
      %c13 = arith.constant 13 : index
      %c8_55 = arith.constant 8 : index
      %c0_56 = arith.constant 0 : index
      %119 = vector.load %arg7[%c0_54, %c13, %c8_55, %c0_56] : memref<5x18x32x16xf32, #tpu.memory_space<vmem>>, vector<1x5x16x16xf32>
      %120 = vector.shape_cast %119 : vector<1x5x16x16xf32> to vector<5x16x16xf32>
      %121 = vector.shape_cast %118 : vector<5x16x16xf32> to vector<1x5x16x16xf32>
      tpu.vector_store %arg7[%c0_54, %c13, %c8_55, %c0_56], %121 {strides = array<i32>} : memref<5x18x32x16xf32, #tpu.memory_space<vmem>>, vector<1x5x16x16xf32>,
      %c1_57 = arith.constant 1 : index
      %c13_58 = arith.constant 13 : index
      %c8_59 = arith.constant 8 : index
      %c0_60 = arith.constant 0 : index
      %122 = vector.load %arg7[%c1_57, %c13_58, %c8_59, %c0_60] : memref<5x18x32x16xf32, #tpu.memory_space<vmem>>, vector<1x5x16x16xf32>
      %123 = vector.shape_cast %122 : vector<1x5x16x16xf32> to vector<5x16x16xf32>
      %124 = vector.shape_cast %118 : vector<5x16x16xf32> to vector<1x5x16x16xf32>
      tpu.vector_store %arg7[%c1_57, %c13_58, %c8_59, %c0_60], %124 {strides = array<i32>} : memref<5x18x32x16xf32, #tpu.memory_space<vmem>>, vector<1x5x16x16xf32>,
      %c2_61 = arith.constant 2 : index
      %c13_62 = arith.constant 13 : index
      %c8_63 = arith.constant 8 : index
      %c0_64 = arith.constant 0 : index
      %125 = vector.load %arg7[%c2_61, %c13_62, %c8_63, %c0_64] : memref<5x18x32x16xf32, #tpu.memory_space<vmem>>, vector<1x5x16x16xf32>
      %126 = vector.shape_cast %125 : vector<1x5x16x16xf32> to vector<5x16x16xf32>
      %127 = vector.shape_cast %118 : vector<5x16x16xf32> to vector<1x5x16x16xf32>
      tpu.vector_store %arg7[%c2_61, %c13_62, %c8_63, %c0_64], %127 {strides = array<i32>} : memref<5x18x32x16xf32, #tpu.memory_space<vmem>>, vector<1x5x16x16xf32>,
      %c3_65 = arith.constant 3 : index
      %c13_66 = arith.constant 13 : index
      %c8_67 = arith.constant 8 : index
      %c0_68 = arith.constant 0 : index
      %128 = vector.load %arg7[%c3_65, %c13_66, %c8_67, %c0_68] : memref<5x18x32x16xf32, #tpu.memory_space<vmem>>, vector<1x5x16x16xf32>
      %129 = vector.shape_cast %128 : vector<1x5x16x16xf32> to vector<5x16x16xf32>
      %130 = vector.shape_cast %118 : vector<5x16x16xf32> to vector<1x5x16x16xf32>
      tpu.vector_store %arg7[%c3_65, %c13_66, %c8_67, %c0_68], %130 {strides = array<i32>} : memref<5x18x32x16xf32, #tpu.memory_space<vmem>>, vector<1x5x16x16xf32>,
      %c4_69 = arith.constant 4 : index
      %c13_70 = arith.constant 13 : index
      %c8_71 = arith.constant 8 : index
      %c0_72 = arith.constant 0 : index
      %131 = vector.load %arg7[%c4_69, %c13_70, %c8_71, %c0_72] : memref<5x18x32x16xf32, #tpu.memory_space<vmem>>, vector<1x5x16x16xf32>
      %132 = vector.shape_cast %131 : vector<1x5x16x16xf32> to vector<5x16x16xf32>
      %133 = vector.shape_cast %118 : vector<5x16x16xf32> to vector<1x5x16x16xf32>
      tpu.vector_store %arg7[%c4_69, %c13_70, %c8_71, %c0_72], %133 {strides = array<i32>} : memref<5x18x32x16xf32, #tpu.memory_space<vmem>>, vector<1x5x16x16xf32>,
    } else {
    }
    %32 = vector.extract_strided_slice %3 {offsets = [3, 0, 0], sizes = [5, 16, 16], strides = [1, 1, 1]} : vector<8x16x16xf32> to vector<5x16x16xf32>
    %c0_25 = arith.constant 0 : index
    %c0_26 = arith.constant 0 : index
    %c0_27 = arith.constant 0 : index
    %c0_28 = arith.constant 0 : index
    %33 = vector.load %arg8[%c0_25, %c0_26, %c0_27, %c0_28] : memref<2x5x16x16xf32, #tpu.memory_space<vmem>>, vector<1x5x16x16xf32>
    %34 = vector.shape_cast %33 : vector<1x5x16x16xf32> to vector<5x16x16xf32>
    %35 = vector.shape_cast %32 : vector<5x16x16xf32> to vector<1x5x16x16xf32>
    tpu.vector_store %arg8[%c0_25, %c0_26, %c0_27, %c0_28], %35 {strides = array<i32>} : memref<2x5x16x16xf32, #tpu.memory_space<vmem>>, vector<1x5x16x16xf32>,
    %36 = vector.extract_strided_slice %4 {offsets = [3, 0, 0], sizes = [5, 16, 16], strides = [1, 1, 1]} : vector<8x16x16xf32> to vector<5x16x16xf32>
    %c1_29 = arith.constant 1 : index
    %c0_30 = arith.constant 0 : index
    %c0_31 = arith.constant 0 : index
    %c0_32 = arith.constant 0 : index
    %37 = vector.load %arg8[%c1_29, %c0_30, %c0_31, %c0_32] : memref<2x5x16x16xf32, #tpu.memory_space<vmem>>, vector<1x5x16x16xf32>
    %38 = vector.shape_cast %37 : vector<1x5x16x16xf32> to vector<5x16x16xf32>
    %39 = vector.shape_cast %36 : vector<5x16x16xf32> to vector<1x5x16x16xf32>
    tpu.vector_store %arg8[%c1_29, %c0_30, %c0_31, %c0_32], %39 {strides = array<i32>} : memref<2x5x16x16xf32, #tpu.memory_space<vmem>>, vector<1x5x16x16xf32>,
    %c0_33 = arith.constant 0 : index
    %c0_34 = arith.constant 0 : index
    %c0_35 = arith.constant 0 : index
    %c0_36 = arith.constant 0 : index
    %40 = vector.load %arg7[%c0_33, %c0_34, %c0_35, %c0_36] : memref<5x18x32x16xf32, #tpu.memory_space<vmem>>, vector<5x18x32x16xf32>
    %41 = vector.shape_cast %40 : vector<5x18x32x16xf32> to vector<2880x16xf32>
    %c0_37 = arith.constant 0 : index
    %c0_38 = arith.constant 0 : index
    %42 = vector.load %arg5[%c0_37, %c0_38] : memref<16x16xf32, #tpu.memory_space<vmem>>, vector<16x16xf32>
    %cst = arith.constant dense<0.000000e+00> : vector<2880x16xf32>
    %43 = tpu.matmul %41, %42, %cst {dimension_numbers = #tpu.dot_dimension_numbers<[1], [0], [0], [1], [0, 0, 1, 1], [], []>} : vector<2880x16xf32>, vector<16x16xf32>, vector<2880x16xf32> -> vector<2880x16xf32>
    %44 = vector.shape_cast %43 : vector<2880x16xf32> to vector<5x18x32x16xf32>
    %45 = vector.extract_strided_slice %44 {offsets = [0, 0, 0, 0], sizes = [5, 17, 32, 16], strides = [1, 1, 1, 1]} : vector<5x18x32x16xf32> to vector<5x17x32x16xf32>
    %46 = vector.extract_strided_slice %44 {offsets = [0, 1, 0, 0], sizes = [5, 17, 32, 16], strides = [1, 1, 1, 1]} : vector<5x18x32x16xf32> to vector<5x17x32x16xf32>
    %47 = arith.addf %45, %46 : vector<5x17x32x16xf32>
    %48 = vector.extract_strided_slice %47 {offsets = [0, 0, 0, 0], sizes = [5, 15, 32, 16], strides = [1, 1, 1, 1]} : vector<5x17x32x16xf32> to vector<5x15x32x16xf32>
    %49 = vector.extract_strided_slice %47 {offsets = [0, 2, 0, 0], sizes = [5, 15, 32, 16], strides = [1, 1, 1, 1]} : vector<5x17x32x16xf32> to vector<5x15x32x16xf32>
    %50 = arith.addf %48, %49 : vector<5x15x32x16xf32>
    %51 = vector.extract_strided_slice %50 {offsets = [0, 0, 0, 0], sizes = [5, 11, 32, 16], strides = [1, 1, 1, 1]} : vector<5x15x32x16xf32> to vector<5x11x32x16xf32>
    %52 = vector.extract_strided_slice %50 {offsets = [0, 4, 0, 0], sizes = [5, 11, 32, 16], strides = [1, 1, 1, 1]} : vector<5x15x32x16xf32> to vector<5x11x32x16xf32>
    %53 = arith.addf %51, %52 : vector<5x11x32x16xf32>
    %54 = vector.extract_strided_slice %53 {offsets = [0, 0, 0, 0], sizes = [5, 8, 32, 16], strides = [1, 1, 1, 1]} : vector<5x11x32x16xf32> to vector<5x8x32x16xf32>
    %55 = vector.extract_strided_slice %47 {offsets = [0, 8, 0, 0], sizes = [5, 8, 32, 16], strides = [1, 1, 1, 1]} : vector<5x17x32x16xf32> to vector<5x8x32x16xf32>
    %56 = arith.addf %54, %55 : vector<5x8x32x16xf32>
    %57 = vector.extract_strided_slice %44 {offsets = [0, 10, 0, 0], sizes = [5, 8, 32, 16], strides = [1, 1, 1, 1]} : vector<5x18x32x16xf32> to vector<5x8x32x16xf32>
    %58 = arith.addf %56, %57 : vector<5x8x32x16xf32>
    %59 = vector.extract_strided_slice %58 {offsets = [0, 0, 0, 0], sizes = [5, 8, 31, 16], strides = [1, 1, 1, 1]} : vector<5x8x32x16xf32> to vector<5x8x31x16xf32>
    %60 = vector.extract_strided_slice %58 {offsets = [0, 0, 1, 0], sizes = [5, 8, 31, 16], strides = [1, 1, 1, 1]} : vector<5x8x32x16xf32> to vector<5x8x31x16xf32>
    %61 = arith.addf %59, %60 : vector<5x8x31x16xf32>
    %62 = vector.extract_strided_slice %61 {offsets = [0, 0, 0, 0], sizes = [5, 8, 29, 16], strides = [1, 1, 1, 1]} : vector<5x8x31x16xf32> to vector<5x8x29x16xf32>
    %63 = vector.extract_strided_slice %61 {offsets = [0, 0, 2, 0], sizes = [5, 8, 29, 16], strides = [1, 1, 1, 1]} : vector<5x8x31x16xf32> to vector<5x8x29x16xf32>
    %64 = arith.addf %62, %63 : vector<5x8x29x16xf32>
    %65 = vector.extract_strided_slice %64 {offsets = [0, 0, 0, 0], sizes = [5, 8, 25, 16], strides = [1, 1, 1, 1]} : vector<5x8x29x16xf32> to vector<5x8x25x16xf32>
    %66 = vector.extract_strided_slice %64 {offsets = [0, 0, 4, 0], sizes = [5, 8, 25, 16], strides = [1, 1, 1, 1]} : vector<5x8x29x16xf32> to vector<5x8x25x16xf32>
    %67 = arith.addf %65, %66 : vector<5x8x25x16xf32>
    %68 = vector.extract_strided_slice %67 {offsets = [0, 0, 3, 0], sizes = [5, 8, 16, 16], strides = [1, 1, 1, 1]} : vector<5x8x25x16xf32> to vector<5x8x16x16xf32>
    %69 = vector.extract_strided_slice %61 {offsets = [0, 0, 11, 0], sizes = [5, 8, 16, 16], strides = [1, 1, 1, 1]} : vector<5x8x31x16xf32> to vector<5x8x16x16xf32>
    %70 = arith.addf %68, %69 : vector<5x8x16x16xf32>
    %71 = vector.extract_strided_slice %58 {offsets = [0, 0, 13, 0], sizes = [5, 8, 16, 16], strides = [1, 1, 1, 1]} : vector<5x8x32x16xf32> to vector<5x8x16x16xf32>
    %72 = arith.addf %70, %71 : vector<5x8x16x16xf32>
    %73 = vector.extract_strided_slice %72 {offsets = [0, 0, 0, 0], sizes = [1, 8, 16, 16], strides = [1, 1, 1, 1]} : vector<5x8x16x16xf32> to vector<1x8x16x16xf32>
    %74 = vector.shape_cast %73 : vector<1x8x16x16xf32> to vector<8x16x16xf32>
    %75 = vector.extract_strided_slice %72 {offsets = [1, 0, 0, 0], sizes = [1, 8, 16, 16], strides = [1, 1, 1, 1]} : vector<5x8x16x16xf32> to vector<1x8x16x16xf32>
    %76 = vector.shape_cast %75 : vector<1x8x16x16xf32> to vector<8x16x16xf32>
    %77 = vector.extract_strided_slice %72 {offsets = [2, 0, 0, 0], sizes = [1, 8, 16, 16], strides = [1, 1, 1, 1]} : vector<5x8x16x16xf32> to vector<1x8x16x16xf32>
    %78 = vector.shape_cast %77 : vector<1x8x16x16xf32> to vector<8x16x16xf32>
    %79 = vector.extract_strided_slice %72 {offsets = [3, 0, 0, 0], sizes = [1, 8, 16, 16], strides = [1, 1, 1, 1]} : vector<5x8x16x16xf32> to vector<1x8x16x16xf32>
    %80 = vector.shape_cast %79 : vector<1x8x16x16xf32> to vector<8x16x16xf32>
    %81 = vector.extract_strided_slice %72 {offsets = [4, 0, 0, 0], sizes = [1, 8, 16, 16], strides = [1, 1, 1, 1]} : vector<5x8x16x16xf32> to vector<1x8x16x16xf32>
    %82 = vector.shape_cast %81 : vector<1x8x16x16xf32> to vector<8x16x16xf32>
    %83 = arith.mulf %74, %76 : vector<8x16x16xf32>
    %84 = arith.mulf %74, %74 : vector<8x16x16xf32>
    %85 = arith.mulf %76, %76 : vector<8x16x16xf32>
    %86 = arith.subf %78, %84 : vector<8x16x16xf32>
    %87 = arith.subf %80, %85 : vector<8x16x16xf32>
    %88 = arith.subf %82, %83 : vector<8x16x16xf32>
    %cst_39 = arith.constant 2.000000e+00 : f32
    %89 = vector.broadcast %cst_39 : f32 to vector<8x16x16xf32>
    %90 = arith.mulf %89, %83 : vector<8x16x16xf32>
    %cst_40 = arith.constant 9.99999974E-5 : f32
    %91 = vector.broadcast %cst_40 : f32 to vector<8x16x16xf32>
    %92 = arith.addf %90, %91 : vector<8x16x16xf32>
    %cst_41 = arith.constant 2.000000e+00 : f32
    %93 = vector.broadcast %cst_41 : f32 to vector<8x16x16xf32>
    %94 = arith.mulf %93, %88 : vector<8x16x16xf32>
    %cst_42 = arith.constant 8.99999984E-4 : f32
    %95 = vector.broadcast %cst_42 : f32 to vector<8x16x16xf32>
    %96 = arith.addf %94, %95 : vector<8x16x16xf32>
    %97 = arith.mulf %92, %96 : vector<8x16x16xf32>
    %98 = arith.addf %84, %85 : vector<8x16x16xf32>
    %cst_43 = arith.constant 9.99999974E-5 : f32
    %99 = vector.broadcast %cst_43 : f32 to vector<8x16x16xf32>
    %100 = arith.addf %98, %99 : vector<8x16x16xf32>
    %101 = arith.addf %86, %87 : vector<8x16x16xf32>
    %cst_44 = arith.constant 8.99999984E-4 : f32
    %102 = vector.broadcast %cst_44 : f32 to vector<8x16x16xf32>
    %103 = arith.addf %101, %102 : vector<8x16x16xf32>
    %104 = arith.mulf %100, %103 : vector<8x16x16xf32>
    %105 = tpu.reciprocal %104 {approx = true} : vector<8x16x16xf32> -> vector<8x16x16xf32>
    %106 = arith.mulf %97, %105 : vector<8x16x16xf32>
    %107 = vector.shape_cast %106 : vector<8x16x16xf32> to vector<128x16xf32>
    %cst_45 = arith.constant dense<0.000000e+00> : vector<128xf32>
    %108 = vector.multi_reduction <add>, %107, %cst_45 [1] : vector<128x16xf32> to vector<128xf32>
    %109 = vector.shape_cast %108 : vector<128xf32> to vector<128x1xf32>
    %cst_46 = arith.constant dense<0.000000e+00> : vector<1xf32>
    %110 = vector.multi_reduction <add>, %109, %cst_46 [0] : vector<128x1xf32> to vector<1xf32>
    %111 = vector.shape_cast %110 : vector<1xf32> to vector<1x1xf32>
    %c0_47 = arith.constant 0 : index
    %c0_48 = arith.constant 0 : index
    %112 = vector.load %arg6[%c0_47, %c0_48] : memref<1x1xf32, #tpu.memory_space<vmem>>, vector<1x1xf32>
    %113 = arith.addf %112, %111 : vector<1x1xf32>
    %c0_49 = arith.constant 0 : index
    %c0_50 = arith.constant 0 : index
    %114 = vector.load %arg6[%c0_49, %c0_50] : memref<1x1xf32, #tpu.memory_space<vmem>>, vector<1x1xf32>
    tpu.vector_store %arg6[%c0_49, %c0_50], %113 {strides = array<i32>} : memref<1x1xf32, #tpu.memory_space<vmem>>, vector<1x1xf32>,
    %c1_i32_51 = arith.constant 1 : i32
    %115 = arith.cmpi eq, %arg0, %c1_i32_51 : i32
    %116 = arith.extui %115 : i1 to i32
    %c0_i32_52 = arith.constant 0 : i32
    %117 = arith.cmpi ne, %116, %c0_i32_52 : i32
    scf.if %117 {
      %c0_53 = arith.constant 0 : index
      %c0_54 = arith.constant 0 : index
      %118 = vector.load %arg6[%c0_53, %c0_54] : memref<1x1xf32, #tpu.memory_space<vmem>>, vector<1x1xf32>
      %cst_55 = arith.constant 2.44140625E-4 : f32
      %119 = vector.broadcast %cst_55 : f32 to vector<1x1xf32>
      %120 = arith.mulf %118, %119 : vector<1x1xf32>
      %cst_56 = arith.constant 1.000000e+00 : f32
      %121 = vector.broadcast %cst_56 : f32 to vector<1x1xf32>
      %122 = arith.subf %121, %120 : vector<1x1xf32>
      %c0_57 = arith.constant 0 : index
      %c0_58 = arith.constant 0 : index
      %123 = vector.load %arg6[%c0_57, %c0_58] : memref<1x1xf32, #tpu.memory_space<vmem>>, vector<1x1xf32>
      tpu.vector_store %arg6[%c0_57, %c0_58], %122 {strides = array<i32>} : memref<1x1xf32, #tpu.memory_space<vmem>>, vector<1x1xf32>,
    } else {
    }
    return
  }
  func.func @transform_0(%arg0: i32) -> (i32, i32, i32) {
    %c0_i32 = arith.constant 0 : i32
    %c0_i32_0 = arith.constant 0 : i32
    %c0_i32_1 = arith.constant 0 : i32
    return %arg0, %c0_i32, %c0_i32_0 : i32, i32, i32
  }
  func.func @transform_1(%arg0: i32) -> (i32, i32, i32) {
    %c1_i32 = arith.constant 1 : i32
    %0 = arith.addi %arg0, %c1_i32 : i32
    %c1_i32_0 = arith.constant 1 : i32
    %1 = arith.minsi %0, %c1_i32_0 : i32
    %c0_i32 = arith.constant 0 : i32
    %c0_i32_1 = arith.constant 0 : i32
    %c0_i32_2 = arith.constant 0 : i32
    return %1, %c0_i32, %c0_i32_1 : i32, i32, i32
  }
  func.func @transform_2(%arg0: i32) -> (i32, i32, i32) {
    %c0_i32 = arith.constant 0 : i32
    %c0_i32_0 = arith.constant 0 : i32
    %c0_i32_1 = arith.constant 0 : i32
    return %arg0, %c0_i32, %c0_i32_0 : i32, i32, i32
  }
  func.func @transform_3(%arg0: i32) -> (i32, i32, i32) {
    %c1_i32 = arith.constant 1 : i32
    %0 = arith.addi %arg0, %c1_i32 : i32
    %c1_i32_0 = arith.constant 1 : i32
    %1 = arith.minsi %0, %c1_i32_0 : i32
    %c0_i32 = arith.constant 0 : i32
    %c0_i32_1 = arith.constant 0 : i32
    %c0_i32_2 = arith.constant 0 : i32
    return %1, %c0_i32, %c0_i32_1 : i32, i32, i32
  }
  func.func @transform_4(%arg0: i32) -> (i32, i32) {
    %c0_i32 = arith.constant 0 : i32
    %c0_i32_0 = arith.constant 0 : i32
    %c0_i32_1 = arith.constant 0 : i32
    return %c0_i32, %c0_i32_0 : i32, i32
  }
  func.func @transform_5(%arg0: i32) -> (i32, i32) {
    %c0_i32 = arith.constant 0 : i32
    %c0_i32_0 = arith.constant 0 : i32
    %c0_i32_1 = arith.constant 0 : i32
    return %c0_i32, %c0_i32_0 : i32, i32
  }
}

</mosaic_0001>

<llo_original>
// kernel: ssim3d_loss.1
$region0: #{ssim3d_loss.1}
  #allocation0 [shape = 'u32[]', space=smem, size = 0x4, offset = 0x4, fixed_abs, tag = 'smem constant byte address 0x4 - core index']
  #allocation1 [shape = 'u32[144,128]{1,0:T(1,128)}', space=vmem, size = 0x12000, scoped, tag = 'internal scratch']
  #allocation2 [shape = 'f32[5,18,32,16]{3,2,1,0:T(8,128)}', space=vmem, size = 0x168000, scoped, tag = 'scratch operand']
  #allocation3 [shape = 'f32[2,5,16,16]{3,2,1,0:T(8,128)}', space=vmem, size = 0x14000, scoped, tag = 'scratch operand']
  %s0 = inlined_call_operand.hbm [shape: f32[16,16,16], index: 0, kind: input, shape index: {}, may-alias: {0,1}]
  %s1 = inlined_call_operand.hbm [shape: f32[16,16,16], index: 1, kind: input, shape index: {}, may-alias: {0,1}]
  %s2 = inlined_call_operand.hbm [shape: f32[16,16,16], index: 2, kind: input, shape index: {}, may-alias: {2,3}]
  %s3 = inlined_call_operand.hbm [shape: f32[16,16,16], index: 3, kind: input, shape index: {}, may-alias: {2,3}]
  %s4 = inlined_call_operand.hbm [shape: f32[16,16], index: 4, kind: input, shape index: {}]
  %s5 = inlined_call_operand.hbm [shape: f32[1,1], index: 5, kind: output, shape index: {}]
  %s6 = sld [smem:[#allocation0]]
  $region93: #{ssim3d_loss.1} parent=0
    _
  %s8 = ssub.s32 1, %s6
  %s9 = scalar_select 0, %s8, %s6
  $region1: #{ssim3d_loss.1} parent=0
    #allocation4 [shape = 'u8[131072]{0}', space=vmem, size = 0x20000, scoped, tag = 'input window, operand 0']
    #allocation5 [shape = 's32[2]{0}', space=sflag, size = 0x8, scoped, tag = 'scoped memory for ssim3d_loss.1']
    #allocation6 [shape = 's32[2]{0}', space=sflag, size = 0x8, scoped, tag = 'scoped memory for ssim3d_loss.1']
    #allocation7 [shape = 'u8[131072]{0}', space=vmem, size = 0x20000, scoped, tag = 'input window, operand 1']
    #allocation8 [shape = 's32[2]{0}', space=sflag, size = 0x8, scoped, tag = 'scoped memory for ssim3d_loss.1']
    #allocation9 [shape = 'u8[131072]{0}', space=vmem, size = 0x20000, scoped, tag = 'input window, operand 2']
    #allocation10 [shape = 'u8[131072]{0}', space=vmem, size = 0x20000, scoped, tag = 'input window, operand 3']
    #allocation11 [shape = 's32[2]{0}', space=sflag, size = 0x8, scoped, tag = 'scoped memory for ssim3d_loss.1']
    #allocation12 [shape = 'u8[8192]{0}', space=vmem, size = 0x2000, scoped, tag = 'input window, operand 4, single buffered']
    #allocation13 [shape = 'u8[512]{0}', space=vmem, size = 0x400, scoped, tag = 'output window, operand 0, single buffered']
    %10 = vsyncpa [#allocation5], 0
    %s11 = scalar_lea.sflag [#allocation5], 1
    %12 = vsyncpa %s11, 0
    %13 = vsyncpa [#allocation8], 0
    %s14 = scalar_lea.sflag [#allocation8], 1
    %15 = vsyncpa %s14, 0
    %16 = vsyncpa [#allocation11], 0
    %s17 = scalar_lea.sflag [#allocation11], 1
    %18 = vsyncpa %s17, 0
    %19 = vsyncpa [#allocation6], 0
    loop: start=0, step=1, limit=4
    $region2: #{ssim3d_loss.1} parent=1 // loop_pre_header
      _
    $region3: #{ssim3d_loss.1} parent=1 // loop_header
      %s21 = sphi 0, %s25
      %p22 = scmp.ge.s32.totalorder %s21, 4
      %s31 = sphi 0, %s33
      %s34 = sphi 0, %s31
      %s35 = sphi 0, %s34
      %s51 = sphi 0, %s35
      %s63 = sphi 0, %s65
      %s66 = sphi 0, %s63
      %s67 = sphi 0, %s66
      %s83 = sphi 0, %s67
      %s89 = sphi 0, %s91
      %s92 = sphi 0, %s89
      %s93 = sphi 0, %s92
      %s109 = sphi 0, %s93
      %s121 = sphi 0, %s123
      %s124 = sphi 0, %s121
      %s125 = sphi 0, %s124
      %s141 = sphi 0, %s125
      %s145 = sphi 0, %s145
      %s147 = sphi 0, %s145
      %s148 = sphi 0, %s147
      %s162 = sphi 0, %s148
      %s166 = sphi 0, %s166
      %s168 = sphi 0, %s166
      %s169 = sphi 0, %s168
      %s183 = sphi 0, %s169
    $region4: #{ssim3d_loss.1} parent=1 // loop_header_branch
      %24 = sbr.rel (%p22) target = $region8
    $region5: #{ssim3d_loss.1} parent=1 // loop_body
      %s26 = ssub.s32 %s21, 1
      %s27 = ssub.s32 %s21, 2
      %s28 = sadd.s32 %s21, 1
      %s29 = ssub.s32 %s21, %s28
      %p30 = scmp.eq.s32.totalorder %s29, 0
      %s32 = sadd.s32 %s31, 1
      %s33 = scalar_select %p30, %s31, %s32
      %p36 = pneg %p30
      %p37 = scmp.eq.s32.totalorder %s21, 1
      %p38 = por %p36, %p37
      %p39 = scmp.ne.s32.totalorder %s31, %s34
      %p40 = scmp.eq.s32.totalorder %s21, 0
      %p41 = por %p39, %p40
      %p42 = scmp.ne.s32.totalorder %s31, %s34
      %p43 = scmp.eq.s32.totalorder %s26, 1
      %p44 = por %p42, %p43
      %p45 = scmp.ne.s32.totalorder %s34, %s35
      %p46 = scmp.eq.s32.totalorder %s26, 0
      %p47 = por %p45, %p46
      %p48 = scmp.ne.s32.totalorder %s34, %s35
      %p49 = scmp.eq.s32.totalorder %s27, 1
      %p50 = por %p48, %p49
      %p52 = scmp.ne.s32.totalorder %s35, %s51
      %p53 = scmp.eq.s32.totalorder %s27, 0
      %p54 = por %p52, %p53
      %s55 = sadd.s32 %s21, 1
      %p56 = scmp.lt.s32.totalorder %s55, 1
      %s57 = scalar_select %p56, %s55, 1
      %s58 = sadd.s32 %s28, 1
      %p59 = scmp.lt.s32.totalorder %s58, 1
      %s60 = scalar_select %p59, %s58, 1
      %s61 = ssub.s32 %s57, %s60
      %p62 = scmp.eq.s32.totalorder %s61, 0
      %s64 = sadd.s32 %s63, 1
      %s65 = scalar_select %p62, %s63, %s64
      %p68 = pneg %p62
      %p69 = scmp.eq.s32.totalorder %s21, 1
      %p70 = por %p68, %p69
      %p71 = scmp.ne.s32.totalorder %s63, %s66
      %p72 = scmp.eq.s32.totalorder %s21, 0
      %p73 = por %p71, %p72
      %p74 = scmp.ne.s32.totalorder %s63, %s66
      %p75 = scmp.eq.s32.totalorder %s26, 1
      %p76 = por %p74, %p75
      %p77 = scmp.ne.s32.totalorder %s66, %s67
      %p78 = scmp.eq.s32.totalorder %s26, 0
      %p79 = por %p77, %p78
      %p80 = scmp.ne.s32.totalorder %s66, %s67
      %p81 = scmp.eq.s32.totalorder %s27, 1
      %p82 = por %p80, %p81
      %p84 = scmp.ne.s32.totalorder %s67, %s83
      %p85 = scmp.eq.s32.totalorder %s27, 0
      %p86 = por %p84, %p85
      %s87 = ssub.s32 %s21, %s28
      %p88 = scmp.eq.s32.totalorder %s87, 0
      %s90 = sadd.s32 %s89, 1
      %s91 = scalar_select %p88, %s89, %s90
      %p94 = pneg %p88
      %p95 = scmp.eq.s32.totalorder %s21, 1
      %p96 = por %p94, %p95
      %p97 = scmp.ne.s32.totalorder %s89, %s92
      %p98 = scmp.eq.s32.totalorder %s21, 0
      %p99 = por %p97, %p98
      %p100 = scmp.ne.s32.totalorder %s89, %s92
      %p101 = scmp.eq.s32.totalorder %s26, 1
      %p102 = por %p100, %p101
      %p103 = scmp.ne.s32.totalorder %s92, %s93
      %p104 = scmp.eq.s32.totalorder %s26, 0
      %p105 = por %p103, %p104
      %p106 = scmp.ne.s32.totalorder %s92, %s93
      %p107 = scmp.eq.s32.totalorder %s27, 1
      %p108 = por %p106, %p107
      %p110 = scmp.ne.s32.totalorder %s93, %s109
      %p111 = scmp.eq.s32.totalorder %s27, 0
      %p112 = por %p110, %p111
      %s113 = sadd.s32 %s21, 1
      %p114 = scmp.lt.s32.totalorder %s113, 1
      %s115 = scalar_select %p114, %s113, 1
      %s116 = sadd.s32 %s28, 1
      %p117 = scmp.lt.s32.totalorder %s116, 1
      %s118 = scalar_select %p117, %s116, 1
      %s119 = ssub.s32 %s115, %s118
      %p120 = scmp.eq.s32.totalorder %s119, 0
      %s122 = sadd.s32 %s121, 1
      %s123 = scalar_select %p120, %s121, %s122
      %p126 = pneg %p120
      %p127 = scmp.eq.s32.totalorder %s21, 1
      %p128 = por %p126, %p127
      %p129 = scmp.ne.s32.totalorder %s121, %s124
      %p130 = scmp.eq.s32.totalorder %s21, 0
      %p131 = por %p129, %p130
      %p132 = scmp.ne.s32.totalorder %s121, %s124
      %p133 = scmp.eq.s32.totalorder %s26, 1
      %p134 = por %p132, %p133
      %p135 = scmp.ne.s32.totalorder %s124, %s125
      %p136 = scmp.eq.s32.totalorder %s26, 0
      %p137 = por %p135, %p136
      %p138 = scmp.ne.s32.totalorder %s124, %s125
      %p139 = scmp.eq.s32.totalorder %s27, 1
      %p140 = por %p138, %p139
      %p142 = scmp.ne.s32.totalorder %s125, %s141
      %p143 = scmp.eq.s32.totalorder %s27, 0
      %p144 = por %p142, %p143
      %s146 = sadd.s32 %s145, 1
      %p149 = scmp.eq.s32.totalorder %s21, 1
      %p150 = scmp.ne.s32.totalorder %s145, %s147
      %p151 = scmp.eq.s32.totalorder %s21, 0
      %p152 = por %p150, %p151
      %p153 = scmp.ne.s32.totalorder %s145, %s147
      %p154 = scmp.eq.s32.totalorder %s26, 1
      %p155 = por %p153, %p154
      %p156 = scmp.ne.s32.totalorder %s147, %s148
      %p157 = scmp.eq.s32.totalorder %s26, 0
      %p158 = por %p156, %p157
      %p159 = scmp.ne.s32.totalorder %s147, %s148
      %p160 = scmp.eq.s32.totalorder %s27, 1
      %p161 = por %p159, %p160
      %p163 = scmp.ne.s32.totalorder %s148, %s162
      %p164 = scmp.eq.s32.totalorder %s27, 0
      %p165 = por %p163, %p164
      %s167 = sadd.s32 %s166, 1
      %p170 = scmp.eq.s32.totalorder %s21, 1
      %p171 = scmp.ne.s32.totalorder %s166, %s168
      %p172 = scmp.eq.s32.totalorder %s21, 0
      %p173 = por %p171, %p172
      %p174 = scmp.ne.s32.totalorder %s166, %s168
      %p175 = scmp.eq.s32.totalorder %s26, 1
      %p176 = por %p174, %p175
      %p177 = scmp.ne.s32.totalorder %s168, %s169
      %p178 = scmp.eq.s32.totalorder %s26, 0
      %p179 = por %p177, %p178
      %p180 = scmp.ne.s32.totalorder %s168, %s169
      %p181 = scmp.eq.s32.totalorder %s27, 1
      %p182 = por %p180, %p181
      %p184 = scmp.ne.s32.totalorder %s169, %s183
      %p185 = scmp.eq.s32.totalorder %s27, 0
      %p186 = por %p184, %p185
      %p187 = scmp.le.s32.totalorder 1, %s21
      %p188 = scmp.lt.s32.totalorder %s21, 3
      %p189 = pnand %p187, %p188
      %p190 = pneg %p189
      // Predicated region
      $region9: #{ssim3d_loss.1} parent=5 // pred_check
        _
      $region10: #{ssim3d_loss.1} parent=5 // pred_check_branch
        %192 = sbr.rel (%p189) target = $region12
      $region11: #{ssim3d_loss.1} parent=5 // pred_region
        %s193 = ssub.s32 %s21, 1
        // Predicated region
        $region13: #{ssim3d_loss.1} parent=11 // pred_check
          %p194 = pneg %p158
        $region14: #{ssim3d_loss.1} parent=11 // pred_check_branch
          %196 = sbr.rel (%p194) target = $region16
        $region15: #{ssim3d_loss.1} parent=11 // pred_region
          %s198 = ssub.s32 256, 256
          %199 = vsyncadd [#allocation11], %s198
          %s200 = sshll.u32 [#allocation12], 4
          %s201 = int_to_ptr.vmem [resolvable:$true] %s200
          %206 = dma.hbm_to_vmem [thread:$0]  %s4, 256, %s201, [#allocation11], 128, 128, 8
        $region16: #{ssim3d_loss.1} parent=11 // pred_fallthru
          _
      $region12: #{ssim3d_loss.1} parent=5 // pred_fallthru
        _
      %p207 = scmp.lt.s32.totalorder %s21, 2
      // Predicated region
      $region17: #{ssim3d_loss.1} parent=5 // pred_check
        %p208 = pneg %p207
      $region18: #{ssim3d_loss.1} parent=5 // pred_check_branch
        %210 = sbr.rel (%p208) target = $region20
      $region19: #{ssim3d_loss.1} parent=5 // pred_region
        // Predicated region
        $region21: #{ssim3d_loss.1} parent=19 // pred_check
          %p211 = pneg %p41
        $region22: #{ssim3d_loss.1} parent=19 // pred_check_branch
          %213 = sbr.rel (%p211) target = $region24
        $region23: #{ssim3d_loss.1} parent=19 // pred_region
          %s214 = sand.u32 %s31, 1
          %s215 = scalar_lea.sflag [#allocation5], %s214
          %s216 = sand.u32 %s31, 1
          %s217 = smul.addr %s216, 128
          %s218 = scalar_lea.vmem [#allocation4], %s217
          %s219 = smul.u32 8, %s21
          %s221 = ssub.s32 2048, 2048
          %222 = vsyncadd %s215, %s221
          %s223 = smul.addr %s219, 2
          %s224 = smul.addr %s223, 128
          %s225 = scalar_lea.hbm %s0, %s224
          %s226 = sshll.u32 %s218, 4
          %s227 = int_to_ptr.vmem [resolvable:$true] %s226
          %232 = dma.hbm_to_vmem [thread:$0]  %s225, 2048, %s227, %s215, 128, 128, 8
        $region24: #{ssim3d_loss.1} parent=19 // pred_fallthru
          _
        // Predicated region
        $region25: #{ssim3d_loss.1} parent=19 // pred_check
          %p233 = pneg %p73
        $region26: #{ssim3d_loss.1} parent=19 // pred_check_branch
          %235 = sbr.rel (%p233) target = $region28
        $region27: #{ssim3d_loss.1} parent=19 // pred_region
          %s236 = sand.u32 %s21, 1
          %s237 = scalar_lea.sflag [#allocation8], %s236
          %s238 = sand.u32 %s63, 1
          %s239 = smul.addr %s238, 128
          %s240 = scalar_lea.vmem [#allocation7], %s239
          %s241 = sadd.s32 %s21, 1
          %p242 = scmp.lt.s32.totalorder %s241, 1
          %s243 = scalar_select %p242, %s241, 1
          %s244 = smul.u32 8, %s243
          %s246 = ssub.s32 2048, 2048
          %247 = vsyncadd %s237, %s246
          %s248 = smul.addr %s244, 2
          %s249 = smul.addr %s248, 128
          %s250 = scalar_lea.hbm %s1, %s249
          %s251 = sshll.u32 %s240, 4
          %s252 = int_to_ptr.vmem [resolvable:$true] %s251
          %257 = dma.hbm_to_vmem [thread:$0]  %s250, 2048, %s252, %s237, 128, 128, 8
        $region28: #{ssim3d_loss.1} parent=19 // pred_fallthru
          _
        // Predicated region
        $region29: #{ssim3d_loss.1} parent=19 // pred_check
          %p258 = pneg %p99
        $region30: #{ssim3d_loss.1} parent=19 // pred_check_branch
          %260 = sbr.rel (%p258) target = $region32
        $region31: #{ssim3d_loss.1} parent=19 // pred_region
          %s261 = sand.u32 %s21, 1
          %s262 = scalar_lea.sflag [#allocation8], %s261
          %s263 = sand.u32 %s89, 1
          %s264 = smul.addr %s263, 128
          %s265 = scalar_lea.vmem [#allocation9], %s264
          %s266 = smul.u32 8, %s21
          %s268 = ssub.s32 2048, 2048
          %269 = vsyncadd %s262, %s268
          %s270 = smul.addr %s266, 2
          %s271 = smul.addr %s270, 128
          %s272 = scalar_lea.hbm %s2, %s271
          %s273 = sshll.u32 %s265, 4
          %s274 = int_to_ptr.vmem [resolvable:$true] %s273
          %279 = dma.hbm_to_vmem [thread:$0]  %s272, 2048, %s274, %s262, 128, 128, 8
        $region32: #{ssim3d_loss.1} parent=19 // pred_fallthru
          _
        // Predicated region
        $region33: #{ssim3d_loss.1} parent=19 // pred_check
          %p280 = pneg %p131
        $region34: #{ssim3d_loss.1} parent=19 // pred_check_branch
          %282 = sbr.rel (%p280) target = $region36
        $region35: #{ssim3d_loss.1} parent=19 // pred_region
          %s283 = sand.u32 %s21, 1
          %s284 = scalar_lea.sflag [#allocation11], %s283
          %s285 = sand.u32 %s121, 1
          %s286 = smul.addr %s285, 128
          %s287 = scalar_lea.vmem [#allocation10], %s286
          %s288 = sadd.s32 %s21, 1
          %p289 = scmp.lt.s32.totalorder %s288, 1
          %s290 = scalar_select %p289, %s288, 1
          %s291 = smul.u32 8, %s290
          %s293 = ssub.s32 2048, 2048
          %294 = vsyncadd %s284, %s293
          %s295 = smul.addr %s291, 2
          %s296 = smul.addr %s295, 128
          %s297 = scalar_lea.hbm %s3, %s296
          %s298 = sshll.u32 %s287, 4
          %s299 = int_to_ptr.vmem [resolvable:$true] %s298
          %304 = dma.hbm_to_vmem [thread:$0]  %s297, 2048, %s299, %s284, 128, 128, 8
        $region36: #{ssim3d_loss.1} parent=19 // pred_fallthru
          _
      $region20: #{ssim3d_loss.1} parent=5 // pred_fallthru
        _
      %p305 = scmp.le.s32.totalorder 1, %s21
      %p306 = scmp.lt.s32.totalorder %s21, 3
      %p307 = pnand %p305, %p306
      %p308 = pneg %p307
      // Predicated region
      $region37: #{ssim3d_loss.1} parent=5 // pred_check
        _
      $region38: #{ssim3d_loss.1} parent=5 // pred_check_branch
        %310 = sbr.rel (%p307) target = $region40
      $region39: #{ssim3d_loss.1} parent=5 // pred_region
        %s311 = ssub.s32 %s21, 1
        %s312 = sand.u32 %s34, 1
        %s313 = scalar_lea.sflag [#allocation5], %s312
        %s314 = sand.u32 %s34, 1
        %s315 = smul.addr %s314, 128
        %s316 = scalar_lea.vmem [#allocation4], %s315
        // Predicated region
        $region41: #{ssim3d_loss.1} parent=39 // pred_check
          %p317 = pneg %p47
        $region42: #{ssim3d_loss.1} parent=39 // pred_check_branch
          %319 = sbr.rel (%p317) target = $region44
        $region43: #{ssim3d_loss.1} parent=39 // pred_region
          %320 = dma.done %s313, 2048
        $region44: #{ssim3d_loss.1} parent=39 // pred_fallthru
          _
        %s321 = sand.u32 %s26, 1
        %s322 = scalar_lea.sflag [#allocation8], %s321
        %s323 = sand.u32 %s66, 1
        %s324 = smul.addr %s323, 128
        %s325 = scalar_lea.vmem [#allocation7], %s324
        // Predicated region
        $region45: #{ssim3d_loss.1} parent=39 // pred_check
          %p326 = pneg %p79
        $region46: #{ssim3d_loss.1} parent=39 // pred_check_branch
          %328 = sbr.rel (%p326) target = $region48
        $region47: #{ssim3d_loss.1} parent=39 // pred_region
          %329 = dma.done %s322, 2048
        $region48: #{ssim3d_loss.1} parent=39 // pred_fallthru
          _
        %s330 = sand.u32 %s26, 1
        %s331 = scalar_lea.sflag [#allocation8], %s330
        %s332 = sand.u32 %s92, 1
        %s333 = smul.addr %s332, 128
        %s334 = scalar_lea.vmem [#allocation9], %s333
        // Predicated region
        $region49: #{ssim3d_loss.1} parent=39 // pred_check
          %p335 = pneg %p105
        $region50: #{ssim3d_loss.1} parent=39 // pred_check_branch
          %337 = sbr.rel (%p335) target = $region52
        $region51: #{ssim3d_loss.1} parent=39 // pred_region
          %338 = dma.done %s331, 2048
        $region52: #{ssim3d_loss.1} parent=39 // pred_fallthru
          _
        %s339 = sand.u32 %s26, 1
        %s340 = scalar_lea.sflag [#allocation11], %s339
        %s341 = sand.u32 %s124, 1
        %s342 = smul.addr %s341, 128
        %s343 = scalar_lea.vmem [#allocation10], %s342
        // Predicated region
        $region53: #{ssim3d_loss.1} parent=39 // pred_check
          %p344 = pneg %p137
        $region54: #{ssim3d_loss.1} parent=39 // pred_check_branch
          %346 = sbr.rel (%p344) target = $region56
        $region55: #{ssim3d_loss.1} parent=39 // pred_region
          %347 = dma.done %s340, 2048
        $region56: #{ssim3d_loss.1} parent=39 // pred_fallthru
          _
        // Predicated region
        $region57: #{ssim3d_loss.1} parent=39 // pred_check
          %p348 = pneg %p158
        $region58: #{ssim3d_loss.1} parent=39 // pred_check_branch
          %350 = sbr.rel (%p348) target = $region60
        $region59: #{ssim3d_loss.1} parent=39 // pred_region
          %351 = dma.done [#allocation11], 256
        $region60: #{ssim3d_loss.1} parent=39 // pred_fallthru
          _
        %s352 = sand.u32 %s34, 1
        %s353 = scalar_lea.sflag [#allocation5], %s352
        %s354 = sand.u32 %s34, 1
        %s355 = smul.addr %s354, 128
        %s356 = scalar_lea.vmem [#allocation4], %s355
        %p357 = pneg %p47
        %p358 = pneg %p44
        %s359 = sand.u32 %s26, 1
        %s360 = scalar_lea.sflag [#allocation8], %s359
        %s361 = sand.u32 %s66, 1
        %s362 = smul.addr %s361, 128
        %s363 = scalar_lea.vmem [#allocation7], %s362
        %p364 = pneg %p79
        %p365 = pneg %p76
        %s366 = sand.u32 %s26, 1
        %s367 = scalar_lea.sflag [#allocation8], %s366
        %s368 = sand.u32 %s92, 1
        %s369 = smul.addr %s368, 128
        %s370 = scalar_lea.vmem [#allocation9], %s369
        %p371 = pneg %p105
        %p372 = pneg %p102
        %s373 = sand.u32 %s26, 1
        %s374 = scalar_lea.sflag [#allocation11], %s373
        %s375 = sand.u32 %s124, 1
        %s376 = smul.addr %s375, 128
        %s377 = scalar_lea.vmem [#allocation10], %s376
        %p378 = pneg %p137
        %p379 = pneg %p134
        %p380 = pneg %p158
        %p381 = pneg %p155
        %p382 = pneg %p179
        %p383 = pneg %p176
        %s384 = smul.u32 8, %s26
        %s385 = sadd.s32 %s26, 1
        %p386 = scmp.lt.s32.totalorder %s385, 1
        %s387 = scalar_select %p386, %s385, 1
        %s388 = smul.u32 8, %s387
        %s389 = smul.u32 8, %s26
        %s390 = sadd.s32 %s26, 1
        %p391 = scmp.lt.s32.totalorder %s390, 1
        %s392 = scalar_select %p391, %s390, 1
        %s393 = smul.u32 8, %s392
        %p394 = scmp.eq.s32.totalorder %s26, 0
        // Predicated region
        $region61: #{ssim3d_loss.1} parent=39 // pred_check
          %p395 = pneg %p394
        $region62: #{ssim3d_loss.1} parent=39 // pred_check_branch
          %397 = sbr.rel (%p395) target = $region64
        $region63: #{ssim3d_loss.1} parent=39 // pred_region
          %vm398 = vcmask 0
          %399 = vst.msk [vmem:[#allocation13] sm:$0x1] %vm398, 0.0
          %vm400 = vcmask 130048
          %401 = vst.msk [vmem:[#allocation2] sm:$0xff] %vm400, 0.0
          %402 = vst.msk [vmem:[#allocation2 + $0x8] sm:$0xff] %vm400, 0.0
          %403 = vst.msk [vmem:[#allocation2 + $0x10] sm:$0xff] %vm400, 0.0
          %404 = vst.msk [vmem:[#allocation2 + $0x18] sm:$0xff] %vm400, 0.0
          %405 = vst.msk [vmem:[#allocation2 + $0x20] sm:$0xff] %vm400, 0.0
          %406 = vst.msk [vmem:[#allocation2 + $0x28] sm:$0xff] %vm400, 0.0
          %407 = vst.msk [vmem:[#allocation2 + $0x30] sm:$0xff] %vm400, 0.0
          %408 = vst.msk [vmem:[#allocation2 + $0x38] sm:$0xff] %vm400, 0.0
          %409 = vst.msk [vmem:[#allocation2 + $0x40] sm:$0xff] %vm400, 0.0
          %410 = vst.msk [vmem:[#allocation2 + $0x48] sm:$0xff] %vm400, 0.0
          %411 = vst.msk [vmem:[#allocation2 + $0x50] sm:$0xff] %vm400, 0.0
          %412 = vst.msk [vmem:[#allocation2 + $0x58] sm:$0xff] %vm400, 0.0
          %413 = vst.msk [vmem:[#allocation2 + $0x60] sm:$0xff] %vm400, 0.0
          %414 = vst.msk [vmem:[#allocation2 + $0x68] sm:$0xff] %vm400, 0.0
          %415 = vst.msk [vmem:[#allocation2 + $0x70] sm:$0xff] %vm400, 0.0
          %416 = vst.msk [vmem:[#allocation2 + $0x78] sm:$0xff] %vm400, 0.0
          %417 = vst.msk [vmem:[#allocation2 + $0x80] sm:$0xff] %vm400, 0.0
          %418 = vst.msk [vmem:[#allocation2 + $0x88] sm:$0xff] %vm400, 0.0
          %419 = vst.msk [vmem:[#allocation2 + $0x90] sm:$0xff] %vm400, 0.0
          %420 = vst.msk [vmem:[#allocation2 + $0x98] sm:$0xff] %vm400, 0.0
          %421 = vst.msk [vmem:[#allocation2 + $0xa0] sm:$0xff] %vm400, 0.0
          %422 = vst.msk [vmem:[#allocation2 + $0xa8] sm:$0xff] %vm400, 0.0
          %423 = vst.msk [vmem:[#allocation2 + $0xb0] sm:$0xff] %vm400, 0.0
          %424 = vst.msk [vmem:[#allocation2 + $0xb8] sm:$0xff] %vm400, 0.0
          %425 = vst.msk [vmem:[#allocation2 + $0xc0] sm:$0xff] %vm400, 0.0
          %426 = vst.msk [vmem:[#allocation2 + $0xc8] sm:$0xff] %vm400, 0.0
          %427 = vst.msk [vmem:[#allocation2 + $0xd0] sm:$0xff] %vm400, 0.0
          %428 = vst.msk [vmem:[#allocation2 + $0xd8] sm:$0xff] %vm400, 0.0
          %429 = vst.msk [vmem:[#allocation2 + $0xe0] sm:$0xff] %vm400, 0.0
          %430 = vst.msk [vmem:[#allocation2 + $0xe8] sm:$0xff] %vm400, 0.0
          %431 = vst.msk [vmem:[#allocation2 + $0xf0] sm:$0xff] %vm400, 0.0
          %432 = vst.msk [vmem:[#allocation2 + $0xf8] sm:$0xff] %vm400, 0.0
          %433 = vst.msk [vmem:[#allocation2 + $0x100] sm:$0xff] %vm400, 0.0
          %434 = vst.msk [vmem:[#allocation2 + $0x108] sm:$0xff] %vm400, 0.0
          %435 = vst.msk [vmem:[#allocation2 + $0x110] sm:$0xff] %vm400, 0.0
          %436 = vst.msk [vmem:[#allocation2 + $0x118] sm:$0xff] %vm400, 0.0
          %437 = vst.msk [vmem:[#allocation2 + $0x120] sm:$0xff] %vm400, 0.0
          %438 = vst.msk [vmem:[#allocation2 + $0x128] sm:$0xff] %vm400, 0.0
          %439 = vst.msk [vmem:[#allocation2 + $0x130] sm:$0xff] %vm400, 0.0
          %440 = vst.msk [vmem:[#allocation2 + $0x138] sm:$0xff] %vm400, 0.0
          %441 = vst.msk [vmem:[#allocation2 + $0x140] sm:$0xff] %vm400, 0.0
          %442 = vst.msk [vmem:[#allocation2 + $0x148] sm:$0xff] %vm400, 0.0
          %443 = vst.msk [vmem:[#allocation2 + $0x150] sm:$0xff] %vm400, 0.0
          %444 = vst.msk [vmem:[#allocation2 + $0x158] sm:$0xff] %vm400, 0.0
          %445 = vst.msk [vmem:[#allocation2 + $0x160] sm:$0xff] %vm400, 0.0
          %446 = vst.msk [vmem:[#allocation2 + $0x168] sm:$0xff] %vm400, 0.0
          %447 = vst.msk [vmem:[#allocation2 + $0x170] sm:$0xff] %vm400, 0.0
          %448 = vst.msk [vmem:[#allocation2 + $0x178] sm:$0xff] %vm400, 0.0
          %449 = vst.msk [vmem:[#allocation2 + $0x180] sm:$0xff] %vm400, 0.0
          %450 = vst.msk [vmem:[#allocation2 + $0x188] sm:$0xff] %vm400, 0.0
          %451 = vst.msk [vmem:[#allocation2 + $0x190] sm:$0xff] %vm400, 0.0
          %452 = vst.msk [vmem:[#allocation2 + $0x198] sm:$0xff] %vm400, 0.0
          %453 = vst.msk [vmem:[#allocation2 + $0x1a0] sm:$0xff] %vm400, 0.0
          %454 = vst.msk [vmem:[#allocation2 + $0x1a8] sm:$0xff] %vm400, 0.0
          %455 = vst.msk [vmem:[#allocation2 + $0x1b0] sm:$0xff] %vm400, 0.0
          %456 = vst.msk [vmem:[#allocation2 + $0x1b8] sm:$0xff] %vm400, 0.0
          %457 = vst.msk [vmem:[#allocation2 + $0x1c0] sm:$0xff] %vm400, 0.0
          %458 = vst.msk [vmem:[#allocation2 + $0x1c8] sm:$0xff] %vm400, 0.0
          %459 = vst.msk [vmem:[#allocation2 + $0x1d0] sm:$0xff] %vm400, 0.0
          %460 = vst.msk [vmem:[#allocation2 + $0x1d8] sm:$0xff] %vm400, 0.0
          %461 = vst.msk [vmem:[#allocation2 + $0x1e0] sm:$0xff] %vm400, 0.0
          %462 = vst.msk [vmem:[#allocation2 + $0x1e8] sm:$0xff] %vm400, 0.0
          %463 = vst.msk [vmem:[#allocation2 + $0x1f0] sm:$0xff] %vm400, 0.0
          %464 = vst.msk [vmem:[#allocation2 + $0x1f8] sm:$0xff] %vm400, 0.0
          %465 = vst.msk [vmem:[#allocation2 + $0x200] sm:$0xff] %vm400, 0.0
          %466 = vst.msk [vmem:[#allocation2 + $0x208] sm:$0xff] %vm400, 0.0
          %467 = vst.msk [vmem:[#allocation2 + $0x210] sm:$0xff] %vm400, 0.0
          %468 = vst.msk [vmem:[#allocation2 + $0x218] sm:$0xff] %vm400, 0.0
          %469 = vst.msk [vmem:[#allocation2 + $0x220] sm:$0xff] %vm400, 0.0
          %470 = vst.msk [vmem:[#allocation2 + $0x228] sm:$0xff] %vm400, 0.0
          %471 = vst.msk [vmem:[#allocation2 + $0x230] sm:$0xff] %vm400, 0.0
          %472 = vst.msk [vmem:[#allocation2 + $0x238] sm:$0xff] %vm400, 0.0
          %473 = vst.msk [vmem:[#allocation2 + $0x240] sm:$0xff] %vm400, 0.0
          %474 = vst.msk [vmem:[#allocation2 + $0x248] sm:$0xff] %vm400, 0.0
          %475 = vst.msk [vmem:[#allocation2 + $0x250] sm:$0xff] %vm400, 0.0
          %476 = vst.msk [vmem:[#allocation2 + $0x258] sm:$0xff] %vm400, 0.0
          %477 = vst.msk [vmem:[#allocation2 + $0x260] sm:$0xff] %vm400, 0.0
          %478 = vst.msk [vmem:[#allocation2 + $0x268] sm:$0xff] %vm400, 0.0
          %479 = vst.msk [vmem:[#allocation2 + $0x270] sm:$0xff] %vm400, 0.0
          %480 = vst.msk [vmem:[#allocation2 + $0x278] sm:$0xff] %vm400, 0.0
          %481 = vst.msk [vmem:[#allocation2 + $0x280] sm:$0xff] %vm400, 0.0
          %482 = vst.msk [vmem:[#allocation2 + $0x288] sm:$0xff] %vm400, 0.0
          %483 = vst.msk [vmem:[#allocation2 + $0x290] sm:$0xff] %vm400, 0.0
          %484 = vst.msk [vmem:[#allocation2 + $0x298] sm:$0xff] %vm400, 0.0
          %485 = vst.msk [vmem:[#allocation2 + $0x2a0] sm:$0xff] %vm400, 0.0
          %486 = vst.msk [vmem:[#allocation2 + $0x2a8] sm:$0xff] %vm400, 0.0
          %487 = vst.msk [vmem:[#allocation2 + $0x2b0] sm:$0xff] %vm400, 0.0
          %488 = vst.msk [vmem:[#allocation2 + $0x2b8] sm:$0xff] %vm400, 0.0
          %489 = vst.msk [vmem:[#allocation2 + $0x2c0] sm:$0xff] %vm400, 0.0
          %490 = vst.msk [vmem:[#allocation2 + $0x2c8] sm:$0xff] %vm400, 0.0
          %491 = vst.msk [vmem:[#allocation2 + $0x2d0] sm:$0xff] %vm400, 0.0
          %492 = vst.msk [vmem:[#allocation2 + $0x2d8] sm:$0xff] %vm400, 0.0
          %493 = vst.msk [vmem:[#allocation2 + $0x2e0] sm:$0xff] %vm400, 0.0
          %494 = vst.msk [vmem:[#allocation2 + $0x2e8] sm:$0xff] %vm400, 0.0
          %495 = vst.msk [vmem:[#allocation2 + $0x2f0] sm:$0xff] %vm400, 0.0
          %496 = vst.msk [vmem:[#allocation2 + $0x2f8] sm:$0xff] %vm400, 0.0
          %497 = vst.msk [vmem:[#allocation2 + $0x300] sm:$0xff] %vm400, 0.0
          %498 = vst.msk [vmem:[#allocation2 + $0x308] sm:$0xff] %vm400, 0.0
          %499 = vst.msk [vmem:[#allocation2 + $0x310] sm:$0xff] %vm400, 0.0
          %500 = vst.msk [vmem:[#allocation2 + $0x318] sm:$0xff] %vm400, 0.0
          %501 = vst.msk [vmem:[#allocation2 + $0x320] sm:$0xff] %vm400, 0.0
          %502 = vst.msk [vmem:[#allocation2 + $0x328] sm:$0xff] %vm400, 0.0
          %503 = vst.msk [vmem:[#allocation2 + $0x330] sm:$0xff] %vm400, 0.0
          %504 = vst.msk [vmem:[#allocation2 + $0x338] sm:$0xff] %vm400, 0.0
          %505 = vst.msk [vmem:[#allocation2 + $0x340] sm:$0xff] %vm400, 0.0
          %506 = vst.msk [vmem:[#allocation2 + $0x348] sm:$0xff] %vm400, 0.0
          %507 = vst.msk [vmem:[#allocation2 + $0x350] sm:$0xff] %vm400, 0.0
          %508 = vst.msk [vmem:[#allocation2 + $0x358] sm:$0xff] %vm400, 0.0
          %509 = vst.msk [vmem:[#allocation2 + $0x360] sm:$0xff] %vm400, 0.0
          %510 = vst.msk [vmem:[#allocation2 + $0x368] sm:$0xff] %vm400, 0.0
          %511 = vst.msk [vmem:[#allocation2 + $0x370] sm:$0xff] %vm400, 0.0
          %512 = vst.msk [vmem:[#allocation2 + $0x378] sm:$0xff] %vm400, 0.0
          %513 = vst.msk [vmem:[#allocation2 + $0x380] sm:$0xff] %vm400, 0.0
          %514 = vst.msk [vmem:[#allocation2 + $0x388] sm:$0xff] %vm400, 0.0
          %515 = vst.msk [vmem:[#allocation2 + $0x390] sm:$0xff] %vm400, 0.0
          %516 = vst.msk [vmem:[#allocation2 + $0x398] sm:$0xff] %vm400, 0.0
          %517 = vst.msk [vmem:[#allocation2 + $0x3a0] sm:$0xff] %vm400, 0.0
          %518 = vst.msk [vmem:[#allocation2 + $0x3a8] sm:$0xff] %vm400, 0.0
          %519 = vst.msk [vmem:[#allocation2 + $0x3b0] sm:$0xff] %vm400, 0.0
          %520 = vst.msk [vmem:[#allocation2 + $0x3b8] sm:$0xff] %vm400, 0.0
          %521 = vst.msk [vmem:[#allocation2 + $0x3c0] sm:$0xff] %vm400, 0.0
          %522 = vst.msk [vmem:[#allocation2 + $0x3c8] sm:$0xff] %vm400, 0.0
          %523 = vst.msk [vmem:[#allocation2 + $0x3d0] sm:$0xff] %vm400, 0.0
          %524 = vst.msk [vmem:[#allocation2 + $0x3d8] sm:$0xff] %vm400, 0.0
          %525 = vst.msk [vmem:[#allocation2 + $0x3e0] sm:$0xff] %vm400, 0.0
          %526 = vst.msk [vmem:[#allocation2 + $0x3e8] sm:$0xff] %vm400, 0.0
          %527 = vst.msk [vmem:[#allocation2 + $0x3f0] sm:$0xff] %vm400, 0.0
          %528 = vst.msk [vmem:[#allocation2 + $0x3f8] sm:$0xff] %vm400, 0.0
          %529 = vst.msk [vmem:[#allocation2 + $0x400] sm:$0xff] %vm400, 0.0
          %530 = vst.msk [vmem:[#allocation2 + $0x408] sm:$0xff] %vm400, 0.0
          %531 = vst.msk [vmem:[#allocation2 + $0x410] sm:$0xff] %vm400, 0.0
          %532 = vst.msk [vmem:[#allocation2 + $0x418] sm:$0xff] %vm400, 0.0
          %533 = vst.msk [vmem:[#allocation2 + $0x420] sm:$0xff] %vm400, 0.0
          %534 = vst.msk [vmem:[#allocation2 + $0x428] sm:$0xff] %vm400, 0.0
          %535 = vst.msk [vmem:[#allocation2 + $0x430] sm:$0xff] %vm400, 0.0
          %536 = vst.msk [vmem:[#allocation2 + $0x438] sm:$0xff] %vm400, 0.0
          %537 = vst.msk [vmem:[#allocation2 + $0x440] sm:$0xff] %vm400, 0.0
          %538 = vst.msk [vmem:[#allocation2 + $0x448] sm:$0xff] %vm400, 0.0
          %539 = vst.msk [vmem:[#allocation2 + $0x450] sm:$0xff] %vm400, 0.0
          %540 = vst.msk [vmem:[#allocation2 + $0x458] sm:$0xff] %vm400, 0.0
          %541 = vst.msk [vmem:[#allocation2 + $0x460] sm:$0xff] %vm400, 0.0
          %542 = vst.msk [vmem:[#allocation2 + $0x468] sm:$0xff] %vm400, 0.0
          %543 = vst.msk [vmem:[#allocation2 + $0x470] sm:$0xff] %vm400, 0.0
          %544 = vst.msk [vmem:[#allocation2 + $0x478] sm:$0xff] %vm400, 0.0
          %545 = vst.msk [vmem:[#allocation2 + $0x480] sm:$0xff] %vm400, 0.0
          %546 = vst.msk [vmem:[#allocation2 + $0x488] sm:$0xff] %vm400, 0.0
          %547 = vst.msk [vmem:[#allocation2 + $0x490] sm:$0xff] %vm400, 0.0
          %548 = vst.msk [vmem:[#allocation2 + $0x498] sm:$0xff] %vm400, 0.0
          %549 = vst.msk [vmem:[#allocation2 + $0x4a0] sm:$0xff] %vm400, 0.0
          %550 = vst.msk [vmem:[#allocation2 + $0x4a8] sm:$0xff] %vm400, 0.0
          %551 = vst.msk [vmem:[#allocation2 + $0x4b0] sm:$0xff] %vm400, 0.0
          %552 = vst.msk [vmem:[#allocation2 + $0x4b8] sm:$0xff] %vm400, 0.0
          %553 = vst.msk [vmem:[#allocation2 + $0x4c0] sm:$0xff] %vm400, 0.0
          %554 = vst.msk [vmem:[#allocation2 + $0x4c8] sm:$0xff] %vm400, 0.0
          %555 = vst.msk [vmem:[#allocation2 + $0x4d0] sm:$0xff] %vm400, 0.0
          %556 = vst.msk [vmem:[#allocation2 + $0x4d8] sm:$0xff] %vm400, 0.0
          %557 = vst.msk [vmem:[#allocation2 + $0x4e0] sm:$0xff] %vm400, 0.0
          %558 = vst.msk [vmem:[#allocation2 + $0x4e8] sm:$0xff] %vm400, 0.0
          %559 = vst.msk [vmem:[#allocation2 + $0x4f0] sm:$0xff] %vm400, 0.0
          %560 = vst.msk [vmem:[#allocation2 + $0x4f8] sm:$0xff] %vm400, 0.0
          %561 = vst.msk [vmem:[#allocation2 + $0x500] sm:$0xff] %vm400, 0.0
          %562 = vst.msk [vmem:[#allocation2 + $0x508] sm:$0xff] %vm400, 0.0
          %563 = vst.msk [vmem:[#allocation2 + $0x510] sm:$0xff] %vm400, 0.0
          %564 = vst.msk [vmem:[#allocation2 + $0x518] sm:$0xff] %vm400, 0.0
          %565 = vst.msk [vmem:[#allocation2 + $0x520] sm:$0xff] %vm400, 0.0
          %566 = vst.msk [vmem:[#allocation2 + $0x528] sm:$0xff] %vm400, 0.0
          %567 = vst.msk [vmem:[#allocation2 + $0x530] sm:$0xff] %vm400, 0.0
          %568 = vst.msk [vmem:[#allocation2 + $0x538] sm:$0xff] %vm400, 0.0
          %569 = vst.msk [vmem:[#allocation2 + $0x540] sm:$0xff] %vm400, 0.0
          %570 = vst.msk [vmem:[#allocation2 + $0x548] sm:$0xff] %vm400, 0.0
          %571 = vst.msk [vmem:[#allocation2 + $0x550] sm:$0xff] %vm400, 0.0
          %572 = vst.msk [vmem:[#allocation2 + $0x558] sm:$0xff] %vm400, 0.0
          %573 = vst.msk [vmem:[#allocation2 + $0x560] sm:$0xff] %vm400, 0.0
          %574 = vst.msk [vmem:[#allocation2 + $0x568] sm:$0xff] %vm400, 0.0
          %575 = vst.msk [vmem:[#allocation2 + $0x570] sm:$0xff] %vm400, 0.0
          %576 = vst.msk [vmem:[#allocation2 + $0x578] sm:$0xff] %vm400, 0.0
          %577 = vst.msk [vmem:[#allocation2 + $0x580] sm:$0xff] %vm400, 0.0
          %578 = vst.msk [vmem:[#allocation2 + $0x588] sm:$0xff] %vm400, 0.0
          %579 = vst.msk [vmem:[#allocation2 + $0x590] sm:$0xff] %vm400, 0.0
          %580 = vst.msk [vmem:[#allocation2 + $0x598] sm:$0xff] %vm400, 0.0
          %581 = vst.msk [vmem:[#allocation2 + $0x5a0] sm:$0xff] %vm400, 0.0
          %582 = vst.msk [vmem:[#allocation2 + $0x5a8] sm:$0xff] %vm400, 0.0
          %583 = vst.msk [vmem:[#allocation2 + $0x5b0] sm:$0xff] %vm400, 0.0
          %584 = vst.msk [vmem:[#allocation2 + $0x5b8] sm:$0xff] %vm400, 0.0
          %585 = vst.msk [vmem:[#allocation2 + $0x5c0] sm:$0xff] %vm400, 0.0
          %586 = vst.msk [vmem:[#allocation2 + $0x5c8] sm:$0xff] %vm400, 0.0
          %587 = vst.msk [vmem:[#allocation2 + $0x5d0] sm:$0xff] %vm400, 0.0
          %588 = vst.msk [vmem:[#allocation2 + $0x5d8] sm:$0xff] %vm400, 0.0
          %589 = vst.msk [vmem:[#allocation2 + $0x5e0] sm:$0xff] %vm400, 0.0
          %590 = vst.msk [vmem:[#allocation2 + $0x5e8] sm:$0xff] %vm400, 0.0
          %591 = vst.msk [vmem:[#allocation2 + $0x5f0] sm:$0xff] %vm400, 0.0
          %592 = vst.msk [vmem:[#allocation2 + $0x5f8] sm:$0xff] %vm400, 0.0
          %593 = vst.msk [vmem:[#allocation2 + $0x600] sm:$0xff] %vm400, 0.0
          %594 = vst.msk [vmem:[#allocation2 + $0x608] sm:$0xff] %vm400, 0.0
          %595 = vst.msk [vmem:[#allocation2 + $0x610] sm:$0xff] %vm400, 0.0
          %596 = vst.msk [vmem:[#allocation2 + $0x618] sm:$0xff] %vm400, 0.0
          %597 = vst.msk [vmem:[#allocation2 + $0x620] sm:$0xff] %vm400, 0.0
          %598 = vst.msk [vmem:[#allocation2 + $0x628] sm:$0xff] %vm400, 0.0
          %599 = vst.msk [vmem:[#allocation2 + $0x630] sm:$0xff] %vm400, 0.0
          %600 = vst.msk [vmem:[#allocation2 + $0x638] sm:$0xff] %vm400, 0.0
          %601 = vst.msk [vmem:[#allocation2 + $0x640] sm:$0xff] %vm400, 0.0
          %602 = vst.msk [vmem:[#allocation2 + $0x648] sm:$0xff] %vm400, 0.0
          %603 = vst.msk [vmem:[#allocation2 + $0x650] sm:$0xff] %vm400, 0.0
          %604 = vst.msk [vmem:[#allocation2 + $0x658] sm:$0xff] %vm400, 0.0
          %605 = vst.msk [vmem:[#allocation2 + $0x660] sm:$0xff] %vm400, 0.0
          %606 = vst.msk [vmem:[#allocation2 + $0x668] sm:$0xff] %vm400, 0.0
          %607 = vst.msk [vmem:[#allocation2 + $0x670] sm:$0xff] %vm400, 0.0
          %608 = vst.msk [vmem:[#allocation2 + $0x678] sm:$0xff] %vm400, 0.0
          %609 = vst.msk [vmem:[#allocation2 + $0x680] sm:$0xff] %vm400, 0.0
          %610 = vst.msk [vmem:[#allocation2 + $0x688] sm:$0xff] %vm400, 0.0
          %611 = vst.msk [vmem:[#allocation2 + $0x690] sm:$0xff] %vm400, 0.0
          %612 = vst.msk [vmem:[#allocation2 + $0x698] sm:$0xff] %vm400, 0.0
          %613 = vst.msk [vmem:[#allocation2 + $0x6a0] sm:$0xff] %vm400, 0.0
          %614 = vst.msk [vmem:[#allocation2 + $0x6a8] sm:$0xff] %vm400, 0.0
          %615 = vst.msk [vmem:[#allocation2 + $0x6b0] sm:$0xff] %vm400, 0.0
          %616 = vst.msk [vmem:[#allocation2 + $0x6b8] sm:$0xff] %vm400, 0.0
          %617 = vst.msk [vmem:[#allocation2 + $0x6c0] sm:$0xff] %vm400, 0.0
          %618 = vst.msk [vmem:[#allocation2 + $0x6c8] sm:$0xff] %vm400, 0.0
          %619 = vst.msk [vmem:[#allocation2 + $0x6d0] sm:$0xff] %vm400, 0.0
          %620 = vst.msk [vmem:[#allocation2 + $0x6d8] sm:$0xff] %vm400, 0.0
          %621 = vst.msk [vmem:[#allocation2 + $0x6e0] sm:$0xff] %vm400, 0.0
          %622 = vst.msk [vmem:[#allocation2 + $0x6e8] sm:$0xff] %vm400, 0.0
          %623 = vst.msk [vmem:[#allocation2 + $0x6f0] sm:$0xff] %vm400, 0.0
          %624 = vst.msk [vmem:[#allocation2 + $0x6f8] sm:$0xff] %vm400, 0.0
          %625 = vst.msk [vmem:[#allocation2 + $0x700] sm:$0xff] %vm400, 0.0
          %626 = vst.msk [vmem:[#allocation2 + $0x708] sm:$0xff] %vm400, 0.0
          %627 = vst.msk [vmem:[#allocation2 + $0x710] sm:$0xff] %vm400, 0.0
          %628 = vst.msk [vmem:[#allocation2 + $0x718] sm:$0xff] %vm400, 0.0
          %629 = vst.msk [vmem:[#allocation2 + $0x720] sm:$0xff] %vm400, 0.0
          %630 = vst.msk [vmem:[#allocation2 + $0x728] sm:$0xff] %vm400, 0.0
          %631 = vst.msk [vmem:[#allocation2 + $0x730] sm:$0xff] %vm400, 0.0
          %632 = vst.msk [vmem:[#allocation2 + $0x738] sm:$0xff] %vm400, 0.0
          %633 = vst.msk [vmem:[#allocation2 + $0x740] sm:$0xff] %vm400, 0.0
          %634 = vst.msk [vmem:[#allocation2 + $0x748] sm:$0xff] %vm400, 0.0
          %635 = vst.msk [vmem:[#allocation2 + $0x750] sm:$0xff] %vm400, 0.0
          %636 = vst.msk [vmem:[#allocation2 + $0x758] sm:$0xff] %vm400, 0.0
          %637 = vst.msk [vmem:[#allocation2 + $0x760] sm:$0xff] %vm400, 0.0
          %638 = vst.msk [vmem:[#allocation2 + $0x768] sm:$0xff] %vm400, 0.0
          %639 = vst.msk [vmem:[#allocation2 + $0x770] sm:$0xff] %vm400, 0.0
          %640 = vst.msk [vmem:[#allocation2 + $0x778] sm:$0xff] %vm400, 0.0
          %641 = vst.msk [vmem:[#allocation2 + $0x780] sm:$0xff] %vm400, 0.0
          %642 = vst.msk [vmem:[#allocation2 + $0x788] sm:$0xff] %vm400, 0.0
          %643 = vst.msk [vmem:[#allocation2 + $0x790] sm:$0xff] %vm400, 0.0
          %644 = vst.msk [vmem:[#allocation2 + $0x798] sm:$0xff] %vm400, 0.0
          %645 = vst.msk [vmem:[#allocation2 + $0x7a0] sm:$0xff] %vm400, 0.0
          %646 = vst.msk [vmem:[#allocation2 + $0x7a8] sm:$0xff] %vm400, 0.0
          %647 = vst.msk [vmem:[#allocation2 + $0x7b0] sm:$0xff] %vm400, 0.0
          %648 = vst.msk [vmem:[#allocation2 + $0x7b8] sm:$0xff] %vm400, 0.0
          %649 = vst.msk [vmem:[#allocation2 + $0x7c0] sm:$0xff] %vm400, 0.0
          %650 = vst.msk [vmem:[#allocation2 + $0x7c8] sm:$0xff] %vm400, 0.0
          %651 = vst.msk [vmem:[#allocation2 + $0x7d0] sm:$0xff] %vm400, 0.0
          %652 = vst.msk [vmem:[#allocation2 + $0x7d8] sm:$0xff] %vm400, 0.0
          %653 = vst.msk [vmem:[#allocation2 + $0x7e0] sm:$0xff] %vm400, 0.0
          %654 = vst.msk [vmem:[#allocation2 + $0x7e8] sm:$0xff] %vm400, 0.0
          %655 = vst.msk [vmem:[#allocation2 + $0x7f0] sm:$0xff] %vm400, 0.0
          %656 = vst.msk [vmem:[#allocation2 + $0x7f8] sm:$0xff] %vm400, 0.0
          %657 = vst.msk [vmem:[#allocation2 + $0x800] sm:$0xff] %vm400, 0.0
          %658 = vst.msk [vmem:[#allocation2 + $0x808] sm:$0xff] %vm400, 0.0
          %659 = vst.msk [vmem:[#allocation2 + $0x810] sm:$0xff] %vm400, 0.0
          %660 = vst.msk [vmem:[#allocation2 + $0x818] sm:$0xff] %vm400, 0.0
          %661 = vst.msk [vmem:[#allocation2 + $0x820] sm:$0xff] %vm400, 0.0
          %662 = vst.msk [vmem:[#allocation2 + $0x828] sm:$0xff] %vm400, 0.0
          %663 = vst.msk [vmem:[#allocation2 + $0x830] sm:$0xff] %vm400, 0.0
          %664 = vst.msk [vmem:[#allocation2 + $0x838] sm:$0xff] %vm400, 0.0
          %665 = vst.msk [vmem:[#allocation2 + $0x840] sm:$0xff] %vm400, 0.0
          %666 = vst.msk [vmem:[#allocation2 + $0x848] sm:$0xff] %vm400, 0.0
          %667 = vst.msk [vmem:[#allocation2 + $0x850] sm:$0xff] %vm400, 0.0
          %668 = vst.msk [vmem:[#allocation2 + $0x858] sm:$0xff] %vm400, 0.0
          %669 = vst.msk [vmem:[#allocation2 + $0x860] sm:$0xff] %vm400, 0.0
          %670 = vst.msk [vmem:[#allocation2 + $0x868] sm:$0xff] %vm400, 0.0
          %671 = vst.msk [vmem:[#allocation2 + $0x870] sm:$0xff] %vm400, 0.0
          %672 = vst.msk [vmem:[#allocation2 + $0x878] sm:$0xff] %vm400, 0.0
          %673 = vst.msk [vmem:[#allocation2 + $0x880] sm:$0xff] %vm400, 0.0
          %674 = vst.msk [vmem:[#allocation2 + $0x888] sm:$0xff] %vm400, 0.0
          %675 = vst.msk [vmem:[#allocation2 + $0x890] sm:$0xff] %vm400, 0.0
          %676 = vst.msk [vmem:[#allocation2 + $0x898] sm:$0xff] %vm400, 0.0
          %677 = vst.msk [vmem:[#allocation2 + $0x8a0] sm:$0xff] %vm400, 0.0
          %678 = vst.msk [vmem:[#allocation2 + $0x8a8] sm:$0xff] %vm400, 0.0
          %679 = vst.msk [vmem:[#allocation2 + $0x8b0] sm:$0xff] %vm400, 0.0
          %680 = vst.msk [vmem:[#allocation2 + $0x8b8] sm:$0xff] %vm400, 0.0
          %681 = vst.msk [vmem:[#allocation2 + $0x8c0] sm:$0xff] %vm400, 0.0
          %682 = vst.msk [vmem:[#allocation2 + $0x8c8] sm:$0xff] %vm400, 0.0
          %683 = vst.msk [vmem:[#allocation2 + $0x8d0] sm:$0xff] %vm400, 0.0
          %684 = vst.msk [vmem:[#allocation2 + $0x8d8] sm:$0xff] %vm400, 0.0
          %685 = vst.msk [vmem:[#allocation2 + $0x8e0] sm:$0xff] %vm400, 0.0
          %686 = vst.msk [vmem:[#allocation2 + $0x8e8] sm:$0xff] %vm400, 0.0
          %687 = vst.msk [vmem:[#allocation2 + $0x8f0] sm:$0xff] %vm400, 0.0
          %688 = vst.msk [vmem:[#allocation2 + $0x8f8] sm:$0xff] %vm400, 0.0
          %689 = vst.msk [vmem:[#allocation2 + $0x900] sm:$0xff] %vm400, 0.0
          %690 = vst.msk [vmem:[#allocation2 + $0x908] sm:$0xff] %vm400, 0.0
          %691 = vst.msk [vmem:[#allocation2 + $0x910] sm:$0xff] %vm400, 0.0
          %692 = vst.msk [vmem:[#allocation2 + $0x918] sm:$0xff] %vm400, 0.0
          %693 = vst.msk [vmem:[#allocation2 + $0x920] sm:$0xff] %vm400, 0.0
          %694 = vst.msk [vmem:[#allocation2 + $0x928] sm:$0xff] %vm400, 0.0
          %695 = vst.msk [vmem:[#allocation2 + $0x930] sm:$0xff] %vm400, 0.0
          %696 = vst.msk [vmem:[#allocation2 + $0x938] sm:$0xff] %vm400, 0.0
          %697 = vst.msk [vmem:[#allocation2 + $0x940] sm:$0xff] %vm400, 0.0
          %698 = vst.msk [vmem:[#allocation2 + $0x948] sm:$0xff] %vm400, 0.0
          %699 = vst.msk [vmem:[#allocation2 + $0x950] sm:$0xff] %vm400, 0.0
          %700 = vst.msk [vmem:[#allocation2 + $0x958] sm:$0xff] %vm400, 0.0
          %701 = vst.msk [vmem:[#allocation2 + $0x960] sm:$0xff] %vm400, 0.0
          %702 = vst.msk [vmem:[#allocation2 + $0x968] sm:$0xff] %vm400, 0.0
          %703 = vst.msk [vmem:[#allocation2 + $0x970] sm:$0xff] %vm400, 0.0
          %704 = vst.msk [vmem:[#allocation2 + $0x978] sm:$0xff] %vm400, 0.0
          %705 = vst.msk [vmem:[#allocation2 + $0x980] sm:$0xff] %vm400, 0.0
          %706 = vst.msk [vmem:[#allocation2 + $0x988] sm:$0xff] %vm400, 0.0
          %707 = vst.msk [vmem:[#allocation2 + $0x990] sm:$0xff] %vm400, 0.0
          %708 = vst.msk [vmem:[#allocation2 + $0x998] sm:$0xff] %vm400, 0.0
          %709 = vst.msk [vmem:[#allocation2 + $0x9a0] sm:$0xff] %vm400, 0.0
          %710 = vst.msk [vmem:[#allocation2 + $0x9a8] sm:$0xff] %vm400, 0.0
          %711 = vst.msk [vmem:[#allocation2 + $0x9b0] sm:$0xff] %vm400, 0.0
          %712 = vst.msk [vmem:[#allocation2 + $0x9b8] sm:$0xff] %vm400, 0.0
          %713 = vst.msk [vmem:[#allocation2 + $0x9c0] sm:$0xff] %vm400, 0.0
          %714 = vst.msk [vmem:[#allocation2 + $0x9c8] sm:$0xff] %vm400, 0.0
          %715 = vst.msk [vmem:[#allocation2 + $0x9d0] sm:$0xff] %vm400, 0.0
          %716 = vst.msk [vmem:[#allocation2 + $0x9d8] sm:$0xff] %vm400, 0.0
          %717 = vst.msk [vmem:[#allocation2 + $0x9e0] sm:$0xff] %vm400, 0.0
          %718 = vst.msk [vmem:[#allocation2 + $0x9e8] sm:$0xff] %vm400, 0.0
          %719 = vst.msk [vmem:[#allocation2 + $0x9f0] sm:$0xff] %vm400, 0.0
          %720 = vst.msk [vmem:[#allocation2 + $0x9f8] sm:$0xff] %vm400, 0.0
          %721 = vst.msk [vmem:[#allocation2 + $0xa00] sm:$0xff] %vm400, 0.0
          %722 = vst.msk [vmem:[#allocation2 + $0xa08] sm:$0xff] %vm400, 0.0
          %723 = vst.msk [vmem:[#allocation2 + $0xa10] sm:$0xff] %vm400, 0.0
          %724 = vst.msk [vmem:[#allocation2 + $0xa18] sm:$0xff] %vm400, 0.0
          %725 = vst.msk [vmem:[#allocation2 + $0xa20] sm:$0xff] %vm400, 0.0
          %726 = vst.msk [vmem:[#allocation2 + $0xa28] sm:$0xff] %vm400, 0.0
          %727 = vst.msk [vmem:[#allocation2 + $0xa30] sm:$0xff] %vm400, 0.0
          %728 = vst.msk [vmem:[#allocation2 + $0xa38] sm:$0xff] %vm400, 0.0
          %729 = vst.msk [vmem:[#allocation2 + $0xa40] sm:$0xff] %vm400, 0.0
          %730 = vst.msk [vmem:[#allocation2 + $0xa48] sm:$0xff] %vm400, 0.0
          %731 = vst.msk [vmem:[#allocation2 + $0xa50] sm:$0xff] %vm400, 0.0
          %732 = vst.msk [vmem:[#allocation2 + $0xa58] sm:$0xff] %vm400, 0.0
          %733 = vst.msk [vmem:[#allocation2 + $0xa60] sm:$0xff] %vm400, 0.0
          %734 = vst.msk [vmem:[#allocation2 + $0xa68] sm:$0xff] %vm400, 0.0
          %735 = vst.msk [vmem:[#allocation2 + $0xa70] sm:$0xff] %vm400, 0.0
          %736 = vst.msk [vmem:[#allocation2 + $0xa78] sm:$0xff] %vm400, 0.0
          %737 = vst.msk [vmem:[#allocation2 + $0xa80] sm:$0xff] %vm400, 0.0
          %738 = vst.msk [vmem:[#allocation2 + $0xa88] sm:$0xff] %vm400, 0.0
          %739 = vst.msk [vmem:[#allocation2 + $0xa90] sm:$0xff] %vm400, 0.0
          %740 = vst.msk [vmem:[#allocation2 + $0xa98] sm:$0xff] %vm400, 0.0
          %741 = vst.msk [vmem:[#allocation2 + $0xaa0] sm:$0xff] %vm400, 0.0
          %742 = vst.msk [vmem:[#allocation2 + $0xaa8] sm:$0xff] %vm400, 0.0
          %743 = vst.msk [vmem:[#allocation2 + $0xab0] sm:$0xff] %vm400, 0.0
          %744 = vst.msk [vmem:[#allocation2 + $0xab8] sm:$0xff] %vm400, 0.0
          %745 = vst.msk [vmem:[#allocation2 + $0xac0] sm:$0xff] %vm400, 0.0
          %746 = vst.msk [vmem:[#allocation2 + $0xac8] sm:$0xff] %vm400, 0.0
          %747 = vst.msk [vmem:[#allocation2 + $0xad0] sm:$0xff] %vm400, 0.0
          %748 = vst.msk [vmem:[#allocation2 + $0xad8] sm:$0xff] %vm400, 0.0
          %749 = vst.msk [vmem:[#allocation2 + $0xae0] sm:$0xff] %vm400, 0.0
          %750 = vst.msk [vmem:[#allocation2 + $0xae8] sm:$0xff] %vm400, 0.0
          %751 = vst.msk [vmem:[#allocation2 + $0xaf0] sm:$0xff] %vm400, 0.0
          %752 = vst.msk [vmem:[#allocation2 + $0xaf8] sm:$0xff] %vm400, 0.0
          %753 = vst.msk [vmem:[#allocation2 + $0xb00] sm:$0xff] %vm400, 0.0
          %754 = vst.msk [vmem:[#allocation2 + $0xb08] sm:$0xff] %vm400, 0.0
          %755 = vst.msk [vmem:[#allocation2 + $0xb10] sm:$0xff] %vm400, 0.0
          %756 = vst.msk [vmem:[#allocation2 + $0xb18] sm:$0xff] %vm400, 0.0
          %757 = vst.msk [vmem:[#allocation2 + $0xb20] sm:$0xff] %vm400, 0.0
          %758 = vst.msk [vmem:[#allocation2 + $0xb28] sm:$0xff] %vm400, 0.0
          %759 = vst.msk [vmem:[#allocation2 + $0xb30] sm:$0xff] %vm400, 0.0
          %760 = vst.msk [vmem:[#allocation2 + $0xb38] sm:$0xff] %vm400, 0.0
        $region64: #{ssim3d_loss.1} parent=39 // pred_fallthru
          _
        %v761 = vld [vmem:[%s316] sm:$0xff]
        %v762 = vld [vmem:[%s316 + $0x8] sm:$0xff]
        %v763 = vld [vmem:[%s316 + $0x10] sm:$0xff]
        %v764 = vld [vmem:[%s316 + $0x18] sm:$0xff]
        %v765 = vld [vmem:[%s316 + $0x20] sm:$0xff]
        %v766 = vld [vmem:[%s316 + $0x28] sm:$0xff]
        %v767 = vld [vmem:[%s316 + $0x30] sm:$0xff]
        %v768 = vld [vmem:[%s316 + $0x38] sm:$0xff]
        %v769 = vld [vmem:[%s316 + $0x40] sm:$0xff]
        %v770 = vld [vmem:[%s316 + $0x48] sm:$0xff]
        %v771 = vld [vmem:[%s316 + $0x50] sm:$0xff]
        %v772 = vld [vmem:[%s316 + $0x58] sm:$0xff]
        %v773 = vld [vmem:[%s316 + $0x60] sm:$0xff]
        %v774 = vld [vmem:[%s316 + $0x68] sm:$0xff]
        %v775 = vld [vmem:[%s316 + $0x70] sm:$0xff]
        %v776 = vld [vmem:[%s316 + $0x78] sm:$0xff]
        %v777 = vld [vmem:[%s334] sm:$0xff]
        %v778 = vld [vmem:[%s334 + $0x8] sm:$0xff]
        %v779 = vld [vmem:[%s334 + $0x10] sm:$0xff]
        %v780 = vld [vmem:[%s334 + $0x18] sm:$0xff]
        %v781 = vld [vmem:[%s334 + $0x20] sm:$0xff]
        %v782 = vld [vmem:[%s334 + $0x28] sm:$0xff]
        %v783 = vld [vmem:[%s334 + $0x30] sm:$0xff]
        %v784 = vld [vmem:[%s334 + $0x38] sm:$0xff]
        %v785 = vld [vmem:[%s334 + $0x40] sm:$0xff]
        %v786 = vld [vmem:[%s334 + $0x48] sm:$0xff]
        %v787 = vld [vmem:[%s334 + $0x50] sm:$0xff]
        %v788 = vld [vmem:[%s334 + $0x58] sm:$0xff]
        %v789 = vld [vmem:[%s334 + $0x60] sm:$0xff]
        %v790 = vld [vmem:[%s334 + $0x68] sm:$0xff]
        %v791 = vld [vmem:[%s334 + $0x70] sm:$0xff]
        %v792 = vld [vmem:[%s334 + $0x78] sm:$0xff]
        %s793 = scalar_lea.vmem [#allocation2], 160
        %vm794 = vcmask 130048
        %795 = vst.msk [vmem:[%s793 + $0x8] sm:$0xff] %vm794, %v761
        %796 = vst.msk [vmem:[%s793 + $0x10] sm:$0xff] %vm794, %v762
        %797 = vst.msk [vmem:[%s793 + $0x28] sm:$0xff] %vm794, %v763
        %798 = vst.msk [vmem:[%s793 + $0x30] sm:$0xff] %vm794, %v764
        %799 = vst.msk [vmem:[%s793 + $0x48] sm:$0xff] %vm794, %v765
        %800 = vst.msk [vmem:[%s793 + $0x50] sm:$0xff] %vm794, %v766
        %801 = vst.msk [vmem:[%s793 + $0x68] sm:$0xff] %vm794, %v767
        %802 = vst.msk [vmem:[%s793 + $0x70] sm:$0xff] %vm794, %v768
        %803 = vst.msk [vmem:[%s793 + $0x88] sm:$0xff] %vm794, %v769
        %804 = vst.msk [vmem:[%s793 + $0x90] sm:$0xff] %vm794, %v770
        %805 = vst.msk [vmem:[%s793 + $0xa8] sm:$0xff] %vm794, %v771
        %806 = vst.msk [vmem:[%s793 + $0xb0] sm:$0xff] %vm794, %v772
        %807 = vst.msk [vmem:[%s793 + $0xc8] sm:$0xff] %vm794, %v773
        %808 = vst.msk [vmem:[%s793 + $0xd0] sm:$0xff] %vm794, %v774
        %809 = vst.msk [vmem:[%s793 + $0xe8] sm:$0xff] %vm794, %v775
        %810 = vst.msk [vmem:[%s793 + $0xf0] sm:$0xff] %vm794, %v776
        %s811 = scalar_lea.vmem [#allocation2], 736
        %812 = vst.msk [vmem:[%s811 + $0x8] sm:$0xff] %vm794, %v777
        %813 = vst.msk [vmem:[%s811 + $0x10] sm:$0xff] %vm794, %v778
        %814 = vst.msk [vmem:[%s811 + $0x28] sm:$0xff] %vm794, %v779
        %815 = vst.msk [vmem:[%s811 + $0x30] sm:$0xff] %vm794, %v780
        %816 = vst.msk [vmem:[%s811 + $0x48] sm:$0xff] %vm794, %v781
        %817 = vst.msk [vmem:[%s811 + $0x50] sm:$0xff] %vm794, %v782
        %818 = vst.msk [vmem:[%s811 + $0x68] sm:$0xff] %vm794, %v783
        %819 = vst.msk [vmem:[%s811 + $0x70] sm:$0xff] %vm794, %v784
        %820 = vst.msk [vmem:[%s811 + $0x88] sm:$0xff] %vm794, %v785
        %821 = vst.msk [vmem:[%s811 + $0x90] sm:$0xff] %vm794, %v786
        %822 = vst.msk [vmem:[%s811 + $0xa8] sm:$0xff] %vm794, %v787
        %823 = vst.msk [vmem:[%s811 + $0xb0] sm:$0xff] %vm794, %v788
        %824 = vst.msk [vmem:[%s811 + $0xc8] sm:$0xff] %vm794, %v789
        %825 = vst.msk [vmem:[%s811 + $0xd0] sm:$0xff] %vm794, %v790
        %826 = vst.msk [vmem:[%s811 + $0xe8] sm:$0xff] %vm794, %v791
        %827 = vst.msk [vmem:[%s811 + $0xf0] sm:$0xff] %vm794, %v792
        %v828 = vmul.f32 %v761, %v761
        %v829 = vmul.f32 %v762, %v762
        %v830 = vmul.f32 %v763, %v763
        %v831 = vmul.f32 %v764, %v764
        %v832 = vmul.f32 %v765, %v765
        %v833 = vmul.f32 %v766, %v766
        %v834 = vmul.f32 %v767, %v767
        %v835 = vmul.f32 %v768, %v768
        %v836 = vmul.f32 %v769, %v769
        %v837 = vmul.f32 %v770, %v770
        %v838 = vmul.f32 %v771, %v771
        %v839 = vmul.f32 %v772, %v772
        %v840 = vmul.f32 %v773, %v773
        %v841 = vmul.f32 %v774, %v774
        %v842 = vmul.f32 %v775, %v775
        %v843 = vmul.f32 %v776, %v776
        %s844 = scalar_lea.vmem [#allocation2], 1312
        %845 = vst.msk [vmem:[%s844 + $0x8] sm:$0xff] %vm794, %v828
        %846 = vst.msk [vmem:[%s844 + $0x10] sm:$0xff] %vm794, %v829
        %847 = vst.msk [vmem:[%s844 + $0x28] sm:$0xff] %vm794, %v830
        %848 = vst.msk [vmem:[%s844 + $0x30] sm:$0xff] %vm794, %v831
        %849 = vst.msk [vmem:[%s844 + $0x48] sm:$0xff] %vm794, %v832
        %850 = vst.msk [vmem:[%s844 + $0x50] sm:$0xff] %vm794, %v833
        %851 = vst.msk [vmem:[%s844 + $0x68] sm:$0xff] %vm794, %v834
        %852 = vst.msk [vmem:[%s844 + $0x70] sm:$0xff] %vm794, %v835
        %853 = vst.msk [vmem:[%s844 + $0x88] sm:$0xff] %vm794, %v836
        %854 = vst.msk [vmem:[%s844 + $0x90] sm:$0xff] %vm794, %v837
        %855 = vst.msk [vmem:[%s844 + $0xa8] sm:$0xff] %vm794, %v838
        %856 = vst.msk [vmem:[%s844 + $0xb0] sm:$0xff] %vm794, %v839
        %857 = vst.msk [vmem:[%s844 + $0xc8] sm:$0xff] %vm794, %v840
        %858 = vst.msk [vmem:[%s844 + $0xd0] sm:$0xff] %vm794, %v841
        %859 = vst.msk [vmem:[%s844 + $0xe8] sm:$0xff] %vm794, %v842
        %860 = vst.msk [vmem:[%s844 + $0xf0] sm:$0xff] %vm794, %v843
        %v861 = vmul.f32 %v777, %v777
        %v862 = vmul.f32 %v778, %v778
        %v863 = vmul.f32 %v779, %v779
        %v864 = vmul.f32 %v780, %v780
        %v865 = vmul.f32 %v781, %v781
        %v866 = vmul.f32 %v782, %v782
        %v867 = vmul.f32 %v783, %v783
        %v868 = vmul.f32 %v784, %v784
        %v869 = vmul.f32 %v785, %v785
        %v870 = vmul.f32 %v786, %v786
        %v871 = vmul.f32 %v787, %v787
        %v872 = vmul.f32 %v788, %v788
        %v873 = vmul.f32 %v789, %v789
        %v874 = vmul.f32 %v790, %v790
        %v875 = vmul.f32 %v791, %v791
        %v876 = vmul.f32 %v792, %v792
        %s877 = scalar_lea.vmem [#allocation2], 1888
        %878 = vst.msk [vmem:[%s877 + $0x8] sm:$0xff] %vm794, %v861
        %879 = vst.msk [vmem:[%s877 + $0x10] sm:$0xff] %vm794, %v862
        %880 = vst.msk [vmem:[%s877 + $0x28] sm:$0xff] %vm794, %v863
        %881 = vst.msk [vmem:[%s877 + $0x30] sm:$0xff] %vm794, %v864
        %882 = vst.msk [vmem:[%s877 + $0x48] sm:$0xff] %vm794, %v865
        %883 = vst.msk [vmem:[%s877 + $0x50] sm:$0xff] %vm794, %v866
        %884 = vst.msk [vmem:[%s877 + $0x68] sm:$0xff] %vm794, %v867
        %885 = vst.msk [vmem:[%s877 + $0x70] sm:$0xff] %vm794, %v868
        %886 = vst.msk [vmem:[%s877 + $0x88] sm:$0xff] %vm794, %v869
        %887 = vst.msk [vmem:[%s877 + $0x90] sm:$0xff] %vm794, %v870
        %888 = vst.msk [vmem:[%s877 + $0xa8] sm:$0xff] %vm794, %v871
        %889 = vst.msk [vmem:[%s877 + $0xb0] sm:$0xff] %vm794, %v872
        %890 = vst.msk [vmem:[%s877 + $0xc8] sm:$0xff] %vm794, %v873
        %891 = vst.msk [vmem:[%s877 + $0xd0] sm:$0xff] %vm794, %v874
        %892 = vst.msk [vmem:[%s877 + $0xe8] sm:$0xff] %vm794, %v875
        %893 = vst.msk [vmem:[%s877 + $0xf0] sm:$0xff] %vm794, %v876
        %v894 = vmul.f32 %v761, %v777
        %v895 = vmul.f32 %v762, %v778
        %v896 = vmul.f32 %v763, %v779
        %v897 = vmul.f32 %v764, %v780
        %v898 = vmul.f32 %v765, %v781
        %v899 = vmul.f32 %v766, %v782
        %v900 = vmul.f32 %v767, %v783
        %v901 = vmul.f32 %v768, %v784
        %v902 = vmul.f32 %v769, %v785
        %v903 = vmul.f32 %v770, %v786
        %v904 = vmul.f32 %v771, %v787
        %v905 = vmul.f32 %v772, %v788
        %v906 = vmul.f32 %v773, %v789
        %v907 = vmul.f32 %v774, %v790
        %v908 = vmul.f32 %v775, %v791
        %v909 = vmul.f32 %v776, %v792
        %s910 = scalar_lea.vmem [#allocation2], 2464
        %911 = vst.msk [vmem:[%s910 + $0x8] sm:$0xff] %vm794, %v894
        %912 = vst.msk [vmem:[%s910 + $0x10] sm:$0xff] %vm794, %v895
        %913 = vst.msk [vmem:[%s910 + $0x28] sm:$0xff] %vm794, %v896
        %914 = vst.msk [vmem:[%s910 + $0x30] sm:$0xff] %vm794, %v897
        %915 = vst.msk [vmem:[%s910 + $0x48] sm:$0xff] %vm794, %v898
        %916 = vst.msk [vmem:[%s910 + $0x50] sm:$0xff] %vm794, %v899
        %917 = vst.msk [vmem:[%s910 + $0x68] sm:$0xff] %vm794, %v900
        %918 = vst.msk [vmem:[%s910 + $0x70] sm:$0xff] %vm794, %v901
        %919 = vst.msk [vmem:[%s910 + $0x88] sm:$0xff] %vm794, %v902
        %920 = vst.msk [vmem:[%s910 + $0x90] sm:$0xff] %vm794, %v903
        %921 = vst.msk [vmem:[%s910 + $0xa8] sm:$0xff] %vm794, %v904
        %922 = vst.msk [vmem:[%s910 + $0xb0] sm:$0xff] %vm794, %v905
        %923 = vst.msk [vmem:[%s910 + $0xc8] sm:$0xff] %vm794, %v906
        %924 = vst.msk [vmem:[%s910 + $0xd0] sm:$0xff] %vm794, %v907
        %925 = vst.msk [vmem:[%s910 + $0xe8] sm:$0xff] %vm794, %v908
        %926 = vst.msk [vmem:[%s910 + $0xf0] sm:$0xff] %vm794, %v909
        %p927 = scmp.gt.s32.totalorder %s26, 0
        // Predicated region
        $region65: #{ssim3d_loss.1} parent=39 // pred_check
          %p928 = pneg %p927
        $region66: #{ssim3d_loss.1} parent=39 // pred_check_branch
          %930 = sbr.rel (%p928) target = $region68
        $region67: #{ssim3d_loss.1} parent=39 // pred_region
          %v931 = vld [vmem:[#allocation3] sm:$0xff]
          %v932 = vld [vmem:[#allocation3 + $0x8] sm:$0xff]
          %v933 = vld [vmem:[#allocation3 + $0x10] sm:$0xff]
          %v934 = vld [vmem:[#allocation3 + $0x18] sm:$0xff]
          %v935 = vld [vmem:[#allocation3 + $0x20] sm:$0xff]
          %v936 = vld [vmem:[#allocation3 + $0x28] sm:$0xff]
          %v937 = vld [vmem:[#allocation3 + $0x30] sm:$0xff]
          %v938 = vld [vmem:[#allocation3 + $0x38] sm:$0xff]
          %v939 = vld [vmem:[#allocation3 + $0x40] sm:$0xff]
          %v940 = vld [vmem:[#allocation3 + $0x48] sm:$0xff]
          %s941 = scalar_lea.vmem [#allocation3], 80
          %v942 = vld [vmem:[%s941] sm:$0xff]
          %v943 = vld [vmem:[%s941 + $0x8] sm:$0xff]
          %v944 = vld [vmem:[%s941 + $0x10] sm:$0xff]
          %v945 = vld [vmem:[%s941 + $0x18] sm:$0xff]
          %v946 = vld [vmem:[%s941 + $0x20] sm:$0xff]
          %v947 = vld [vmem:[%s941 + $0x28] sm:$0xff]
          %v948 = vld [vmem:[%s941 + $0x30] sm:$0xff]
          %v949 = vld [vmem:[%s941 + $0x38] sm:$0xff]
          %v950 = vld [vmem:[%s941 + $0x40] sm:$0xff]
          %v951 = vld [vmem:[%s941 + $0x48] sm:$0xff]
          %952 = vst.msk [vmem:[#allocation2 + $0x8] sm:$0xff] %vm794, %v931
          %953 = vst.msk [vmem:[#allocation2 + $0x10] sm:$0xff] %vm794, %v932
          %954 = vst.msk [vmem:[#allocation2 + $0x28] sm:$0xff] %vm794, %v933
          %955 = vst.msk [vmem:[#allocation2 + $0x30] sm:$0xff] %vm794, %v934
          %956 = vst.msk [vmem:[#allocation2 + $0x48] sm:$0xff] %vm794, %v935
          %957 = vst.msk [vmem:[#allocation2 + $0x50] sm:$0xff] %vm794, %v936
          %958 = vst.msk [vmem:[#allocation2 + $0x68] sm:$0xff] %vm794, %v937
          %959 = vst.msk [vmem:[#allocation2 + $0x70] sm:$0xff] %vm794, %v938
          %960 = vst.msk [vmem:[#allocation2 + $0x88] sm:$0xff] %vm794, %v939
          %961 = vst.msk [vmem:[#allocation2 + $0x90] sm:$0xff] %vm794, %v940
          %s962 = scalar_lea.vmem [#allocation2], 576
          %963 = vst.msk [vmem:[%s962 + $0x8] sm:$0xff] %vm794, %v942
          %964 = vst.msk [vmem:[%s962 + $0x10] sm:$0xff] %vm794, %v943
          %965 = vst.msk [vmem:[%s962 + $0x28] sm:$0xff] %vm794, %v944
          %966 = vst.msk [vmem:[%s962 + $0x30] sm:$0xff] %vm794, %v945
          %967 = vst.msk [vmem:[%s962 + $0x48] sm:$0xff] %vm794, %v946
          %968 = vst.msk [vmem:[%s962 + $0x50] sm:$0xff] %vm794, %v947
          %969 = vst.msk [vmem:[%s962 + $0x68] sm:$0xff] %vm794, %v948
          %970 = vst.msk [vmem:[%s962 + $0x70] sm:$0xff] %vm794, %v949
          %971 = vst.msk [vmem:[%s962 + $0x88] sm:$0xff] %vm794, %v950
          %972 = vst.msk [vmem:[%s962 + $0x90] sm:$0xff] %vm794, %v951
          %v973 = vmul.f32 %v931, %v931
          %v974 = vmul.f32 %v932, %v932
          %v975 = vmul.f32 %v933, %v933
          %v976 = vmul.f32 %v934, %v934
          %v977 = vmul.f32 %v935, %v935
          %v978 = vmul.f32 %v936, %v936
          %v979 = vmul.f32 %v937, %v937
          %v980 = vmul.f32 %v938, %v938
          %v981 = vmul.f32 %v939, %v939
          %v982 = vmul.f32 %v940, %v940
          %s983 = scalar_lea.vmem [#allocation2], 1152
          %984 = vst.msk [vmem:[%s983 + $0x8] sm:$0xff] %vm794, %v973
          %985 = vst.msk [vmem:[%s983 + $0x10] sm:$0xff] %vm794, %v974
          %986 = vst.msk [vmem:[%s983 + $0x28] sm:$0xff] %vm794, %v975
          %987 = vst.msk [vmem:[%s983 + $0x30] sm:$0xff] %vm794, %v976
          %988 = vst.msk [vmem:[%s983 + $0x48] sm:$0xff] %vm794, %v977
          %989 = vst.msk [vmem:[%s983 + $0x50] sm:$0xff] %vm794, %v978
          %990 = vst.msk [vmem:[%s983 + $0x68] sm:$0xff] %vm794, %v979
          %991 = vst.msk [vmem:[%s983 + $0x70] sm:$0xff] %vm794, %v980
          %992 = vst.msk [vmem:[%s983 + $0x88] sm:$0xff] %vm794, %v981
          %993 = vst.msk [vmem:[%s983 + $0x90] sm:$0xff] %vm794, %v982
          %v994 = vmul.f32 %v942, %v942
          %v995 = vmul.f32 %v943, %v943
          %v996 = vmul.f32 %v944, %v944
          %v997 = vmul.f32 %v945, %v945
          %v998 = vmul.f32 %v946, %v946
          %v999 = vmul.f32 %v947, %v947
          %v1000 = vmul.f32 %v948, %v948
          %v1001 = vmul.f32 %v949, %v949
          %v1002 = vmul.f32 %v950, %v950
          %v1003 = vmul.f32 %v951, %v951
          %s1004 = scalar_lea.vmem [#allocation2], 1728
          %1005 = vst.msk [vmem:[%s1004 + $0x8] sm:$0xff] %vm794, %v994
          %1006 = vst.msk [vmem:[%s1004 + $0x10] sm:$0xff] %vm794, %v995
          %1007 = vst.msk [vmem:[%s1004 + $0x28] sm:$0xff] %vm794, %v996
          %1008 = vst.msk [vmem:[%s1004 + $0x30] sm:$0xff] %vm794, %v997
          %1009 = vst.msk [vmem:[%s1004 + $0x48] sm:$0xff] %vm794, %v998
          %1010 = vst.msk [vmem:[%s1004 + $0x50] sm:$0xff] %vm794, %v999
          %1011 = vst.msk [vmem:[%s1004 + $0x68] sm:$0xff] %vm794, %v1000
          %1012 = vst.msk [vmem:[%s1004 + $0x70] sm:$0xff] %vm794, %v1001
          %1013 = vst.msk [vmem:[%s1004 + $0x88] sm:$0xff] %vm794, %v1002
          %1014 = vst.msk [vmem:[%s1004 + $0x90] sm:$0xff] %vm794, %v1003
          %v1015 = vmul.f32 %v931, %v942
          %v1016 = vmul.f32 %v932, %v943
          %v1017 = vmul.f32 %v933, %v944
          %v1018 = vmul.f32 %v934, %v945
          %v1019 = vmul.f32 %v935, %v946
          %v1020 = vmul.f32 %v936, %v947
          %v1021 = vmul.f32 %v937, %v948
          %v1022 = vmul.f32 %v938, %v949
          %v1023 = vmul.f32 %v939, %v950
          %v1024 = vmul.f32 %v940, %v951
          %s1025 = scalar_lea.vmem [#allocation2], 2304
          %1026 = vst.msk [vmem:[%s1025 + $0x8] sm:$0xff] %vm794, %v1015
          %1027 = vst.msk [vmem:[%s1025 + $0x10] sm:$0xff] %vm794, %v1016
          %1028 = vst.msk [vmem:[%s1025 + $0x28] sm:$0xff] %vm794, %v1017
          %1029 = vst.msk [vmem:[%s1025 + $0x30] sm:$0xff] %vm794, %v1018
          %1030 = vst.msk [vmem:[%s1025 + $0x48] sm:$0xff] %vm794, %v1019
          %1031 = vst.msk [vmem:[%s1025 + $0x50] sm:$0xff] %vm794, %v1020
          %1032 = vst.msk [vmem:[%s1025 + $0x68] sm:$0xff] %vm794, %v1021
          %1033 = vst.msk [vmem:[%s1025 + $0x70] sm:$0xff] %vm794, %v1022
          %1034 = vst.msk [vmem:[%s1025 + $0x88] sm:$0xff] %vm794, %v1023
          %1035 = vst.msk [vmem:[%s1025 + $0x90] sm:$0xff] %vm794, %v1024
        $region68: #{ssim3d_loss.1} parent=39 // pred_fallthru
          _
        %p1036 = scmp.lt.s32.totalorder %s26, 1
        // Predicated region
        $region69: #{ssim3d_loss.1} parent=39 // pred_check
          %p1037 = pneg %p1036
        $region70: #{ssim3d_loss.1} parent=39 // pred_check_branch
          %1039 = sbr.rel (%p1037) target = $region72
        $region71: #{ssim3d_loss.1} parent=39 // pred_region
          %v1040 = vld [vmem:[%s325] sm:$0xff]
          %v1041 = vld [vmem:[%s325 + $0x8] sm:$0xff]
          %v1042 = vld [vmem:[%s325 + $0x10] sm:$0xff]
          %v1043 = vld [vmem:[%s325 + $0x18] sm:$0xff]
          %v1044 = vld [vmem:[%s325 + $0x20] sm:$0xff]
          %v1045 = vld [vmem:[%s325 + $0x28] sm:$0xff]
          %v1046 = vld [vmem:[%s325 + $0x30] sm:$0xff]
          %v1047 = vld [vmem:[%s325 + $0x38] sm:$0xff]
          %v1048 = vld [vmem:[%s325 + $0x40] sm:$0xff]
          %v1049 = vld [vmem:[%s325 + $0x48] sm:$0xff]
          %v1050 = vld [vmem:[%s343] sm:$0xff]
          %v1051 = vld [vmem:[%s343 + $0x8] sm:$0xff]
          %v1052 = vld [vmem:[%s343 + $0x10] sm:$0xff]
          %v1053 = vld [vmem:[%s343 + $0x18] sm:$0xff]
          %v1054 = vld [vmem:[%s343 + $0x20] sm:$0xff]
          %v1055 = vld [vmem:[%s343 + $0x28] sm:$0xff]
          %v1056 = vld [vmem:[%s343 + $0x30] sm:$0xff]
          %v1057 = vld [vmem:[%s343 + $0x38] sm:$0xff]
          %v1058 = vld [vmem:[%s343 + $0x40] sm:$0xff]
          %v1059 = vld [vmem:[%s343 + $0x48] sm:$0xff]
          %s1060 = scalar_lea.vmem [#allocation2], 416
          %1061 = vst.msk [vmem:[%s1060 + $0x8] sm:$0xff] %vm794, %v1040
          %1062 = vst.msk [vmem:[%s1060 + $0x10] sm:$0xff] %vm794, %v1041
          %1063 = vst.msk [vmem:[%s1060 + $0x28] sm:$0xff] %vm794, %v1042
          %1064 = vst.msk [vmem:[%s1060 + $0x30] sm:$0xff] %vm794, %v1043
          %1065 = vst.msk [vmem:[%s1060 + $0x48] sm:$0xff] %vm794, %v1044
          %1066 = vst.msk [vmem:[%s1060 + $0x50] sm:$0xff] %vm794, %v1045
          %1067 = vst.msk [vmem:[%s1060 + $0x68] sm:$0xff] %vm794, %v1046
          %1068 = vst.msk [vmem:[%s1060 + $0x70] sm:$0xff] %vm794, %v1047
          %1069 = vst.msk [vmem:[%s1060 + $0x88] sm:$0xff] %vm794, %v1048
          %1070 = vst.msk [vmem:[%s1060 + $0x90] sm:$0xff] %vm794, %v1049
          %s1071 = scalar_lea.vmem [#allocation2], 992
          %1072 = vst.msk [vmem:[%s1071 + $0x8] sm:$0xff] %vm794, %v1050
          %1073 = vst.msk [vmem:[%s1071 + $0x10] sm:$0xff] %vm794, %v1051
          %1074 = vst.msk [vmem:[%s1071 + $0x28] sm:$0xff] %vm794, %v1052
          %1075 = vst.msk [vmem:[%s1071 + $0x30] sm:$0xff] %vm794, %v1053
          %1076 = vst.msk [vmem:[%s1071 + $0x48] sm:$0xff] %vm794, %v1054
          %1077 = vst.msk [vmem:[%s1071 + $0x50] sm:$0xff] %vm794, %v1055
          %1078 = vst.msk [vmem:[%s1071 + $0x68] sm:$0xff] %vm794, %v1056
          %1079 = vst.msk [vmem:[%s1071 + $0x70] sm:$0xff] %vm794, %v1057
          %1080 = vst.msk [vmem:[%s1071 + $0x88] sm:$0xff] %vm794, %v1058
          %1081 = vst.msk [vmem:[%s1071 + $0x90] sm:$0xff] %vm794, %v1059
          %v1082 = vmul.f32 %v1040, %v1040
          %v1083 = vmul.f32 %v1041, %v1041
          %v1084 = vmul.f32 %v1042, %v1042
          %v1085 = vmul.f32 %v1043, %v1043
          %v1086 = vmul.f32 %v1044, %v1044
          %v1087 = vmul.f32 %v1045, %v1045
          %v1088 = vmul.f32 %v1046, %v1046
          %v1089 = vmul.f32 %v1047, %v1047
          %v1090 = vmul.f32 %v1048, %v1048
          %v1091 = vmul.f32 %v1049, %v1049
          %s1092 = scalar_lea.vmem [#allocation2], 1568
          %1093 = vst.msk [vmem:[%s1092 + $0x8] sm:$0xff] %vm794, %v1082
          %1094 = vst.msk [vmem:[%s1092 + $0x10] sm:$0xff] %vm794, %v1083
          %1095 = vst.msk [vmem:[%s1092 + $0x28] sm:$0xff] %vm794, %v1084
          %1096 = vst.msk [vmem:[%s1092 + $0x30] sm:$0xff] %vm794, %v1085
          %1097 = vst.msk [vmem:[%s1092 + $0x48] sm:$0xff] %vm794, %v1086
          %1098 = vst.msk [vmem:[%s1092 + $0x50] sm:$0xff] %vm794, %v1087
          %1099 = vst.msk [vmem:[%s1092 + $0x68] sm:$0xff] %vm794, %v1088
          %1100 = vst.msk [vmem:[%s1092 + $0x70] sm:$0xff] %vm794, %v1089
          %1101 = vst.msk [vmem:[%s1092 + $0x88] sm:$0xff] %vm794, %v1090
          %1102 = vst.msk [vmem:[%s1092 + $0x90] sm:$0xff] %vm794, %v1091
          %v1103 = vmul.f32 %v1050, %v1050
          %v1104 = vmul.f32 %v1051, %v1051
          %v1105 = vmul.f32 %v1052, %v1052
          %v1106 = vmul.f32 %v1053, %v1053
          %v1107 = vmul.f32 %v1054, %v1054
          %v1108 = vmul.f32 %v1055, %v1055
          %v1109 = vmul.f32 %v1056, %v1056
          %v1110 = vmul.f32 %v1057, %v1057
          %v1111 = vmul.f32 %v1058, %v1058
          %v1112 = vmul.f32 %v1059, %v1059
          %s1113 = scalar_lea.vmem [#allocation2], 2144
          %1114 = vst.msk [vmem:[%s1113 + $0x8] sm:$0xff] %vm794, %v1103
          %1115 = vst.msk [vmem:[%s1113 + $0x10] sm:$0xff] %vm794, %v1104
          %1116 = vst.msk [vmem:[%s1113 + $0x28] sm:$0xff] %vm794, %v1105
          %1117 = vst.msk [vmem:[%s1113 + $0x30] sm:$0xff] %vm794, %v1106
          %1118 = vst.msk [vmem:[%s1113 + $0x48] sm:$0xff] %vm794, %v1107
          %1119 = vst.msk [vmem:[%s1113 + $0x50] sm:$0xff] %vm794, %v1108
          %1120 = vst.msk [vmem:[%s1113 + $0x68] sm:$0xff] %vm794, %v1109
          %1121 = vst.msk [vmem:[%s1113 + $0x70] sm:$0xff] %vm794, %v1110
          %1122 = vst.msk [vmem:[%s1113 + $0x88] sm:$0xff] %vm794, %v1111
          %1123 = vst.msk [vmem:[%s1113 + $0x90] sm:$0xff] %vm794, %v1112
          %v1124 = vmul.f32 %v1040, %v1050
          %v1125 = vmul.f32 %v1041, %v1051
          %v1126 = vmul.f32 %v1042, %v1052
          %v1127 = vmul.f32 %v1043, %v1053
          %v1128 = vmul.f32 %v1044, %v1054
          %v1129 = vmul.f32 %v1045, %v1055
          %v1130 = vmul.f32 %v1046, %v1056
          %v1131 = vmul.f32 %v1047, %v1057
          %v1132 = vmul.f32 %v1048, %v1058
          %v1133 = vmul.f32 %v1049, %v1059
          %s1134 = scalar_lea.vmem [#allocation2], 2720
          %1135 = vst.msk [vmem:[%s1134 + $0x8] sm:$0xff] %vm794, %v1124
          %1136 = vst.msk [vmem:[%s1134 + $0x10] sm:$0xff] %vm794, %v1125
          %1137 = vst.msk [vmem:[%s1134 + $0x28] sm:$0xff] %vm794, %v1126
          %1138 = vst.msk [vmem:[%s1134 + $0x30] sm:$0xff] %vm794, %v1127
          %1139 = vst.msk [vmem:[%s1134 + $0x48] sm:$0xff] %vm794, %v1128
          %1140 = vst.msk [vmem:[%s1134 + $0x50] sm:$0xff] %vm794, %v1129
          %1141 = vst.msk [vmem:[%s1134 + $0x68] sm:$0xff] %vm794, %v1130
          %1142 = vst.msk [vmem:[%s1134 + $0x70] sm:$0xff] %vm794, %v1131
          %1143 = vst.msk [vmem:[%s1134 + $0x88] sm:$0xff] %vm794, %v1132
          %1144 = vst.msk [vmem:[%s1134 + $0x90] sm:$0xff] %vm794, %v1133
        $region72: #{ssim3d_loss.1} parent=39 // pred_fallthru
          _
        %p1145 = scmp.eq.s32.totalorder %s26, 1
        // Predicated region
        $region73: #{ssim3d_loss.1} parent=39 // pred_check
          %p1146 = pneg %p1145
        $region74: #{ssim3d_loss.1} parent=39 // pred_check_branch
          %1148 = sbr.rel (%p1146) target = $region76
        $region75: #{ssim3d_loss.1} parent=39 // pred_region
          %s1149 = scalar_lea.vmem [#allocation2], 416
          %1150 = vst.msk [vmem:[%s1149 + $0x8] sm:$0xff] %vm794, 0.0
          %1151 = vst.msk [vmem:[%s1149 + $0x10] sm:$0xff] %vm794, 0.0
          %1152 = vst.msk [vmem:[%s1149 + $0x28] sm:$0xff] %vm794, 0.0
          %1153 = vst.msk [vmem:[%s1149 + $0x30] sm:$0xff] %vm794, 0.0
          %1154 = vst.msk [vmem:[%s1149 + $0x48] sm:$0xff] %vm794, 0.0
          %1155 = vst.msk [vmem:[%s1149 + $0x50] sm:$0xff] %vm794, 0.0
          %1156 = vst.msk [vmem:[%s1149 + $0x68] sm:$0xff] %vm794, 0.0
          %1157 = vst.msk [vmem:[%s1149 + $0x70] sm:$0xff] %vm794, 0.0
          %1158 = vst.msk [vmem:[%s1149 + $0x88] sm:$0xff] %vm794, 0.0
          %1159 = vst.msk [vmem:[%s1149 + $0x90] sm:$0xff] %vm794, 0.0
          %s1160 = scalar_lea.vmem [#allocation2], 992
          %1161 = vst.msk [vmem:[%s1160 + $0x8] sm:$0xff] %vm794, 0.0
          %1162 = vst.msk [vmem:[%s1160 + $0x10] sm:$0xff] %vm794, 0.0
          %1163 = vst.msk [vmem:[%s1160 + $0x28] sm:$0xff] %vm794, 0.0
          %1164 = vst.msk [vmem:[%s1160 + $0x30] sm:$0xff] %vm794, 0.0
          %1165 = vst.msk [vmem:[%s1160 + $0x48] sm:$0xff] %vm794, 0.0
          %1166 = vst.msk [vmem:[%s1160 + $0x50] sm:$0xff] %vm794, 0.0
          %1167 = vst.msk [vmem:[%s1160 + $0x68] sm:$0xff] %vm794, 0.0
          %1168 = vst.msk [vmem:[%s1160 + $0x70] sm:$0xff] %vm794, 0.0
          %1169 = vst.msk [vmem:[%s1160 + $0x88] sm:$0xff] %vm794, 0.0
          %1170 = vst.msk [vmem:[%s1160 + $0x90] sm:$0xff] %vm794, 0.0
          %s1171 = scalar_lea.vmem [#allocation2], 1568
          %1172 = vst.msk [vmem:[%s1171 + $0x8] sm:$0xff] %vm794, 0.0
          %1173 = vst.msk [vmem:[%s1171 + $0x10] sm:$0xff] %vm794, 0.0
          %1174 = vst.msk [vmem:[%s1171 + $0x28] sm:$0xff] %vm794, 0.0
          %1175 = vst.msk [vmem:[%s1171 + $0x30] sm:$0xff] %vm794, 0.0
          %1176 = vst.msk [vmem:[%s1171 + $0x48] sm:$0xff] %vm794, 0.0
          %1177 = vst.msk [vmem:[%s1171 + $0x50] sm:$0xff] %vm794, 0.0
          %1178 = vst.msk [vmem:[%s1171 + $0x68] sm:$0xff] %vm794, 0.0
          %1179 = vst.msk [vmem:[%s1171 + $0x70] sm:$0xff] %vm794, 0.0
          %1180 = vst.msk [vmem:[%s1171 + $0x88] sm:$0xff] %vm794, 0.0
          %1181 = vst.msk [vmem:[%s1171 + $0x90] sm:$0xff] %vm794, 0.0
          %s1182 = scalar_lea.vmem [#allocation2], 2144
          %1183 = vst.msk [vmem:[%s1182 + $0x8] sm:$0xff] %vm794, 0.0
          %1184 = vst.msk [vmem:[%s1182 + $0x10] sm:$0xff] %vm794, 0.0
          %1185 = vst.msk [vmem:[%s1182 + $0x28] sm:$0xff] %vm794, 0.0
          %1186 = vst.msk [vmem:[%s1182 + $0x30] sm:$0xff] %vm794, 0.0
          %1187 = vst.msk [vmem:[%s1182 + $0x48] sm:$0xff] %vm794, 0.0
          %1188 = vst.msk [vmem:[%s1182 + $0x50] sm:$0xff] %vm794, 0.0
          %1189 = vst.msk [vmem:[%s1182 + $0x68] sm:$0xff] %vm794, 0.0
          %1190 = vst.msk [vmem:[%s1182 + $0x70] sm:$0xff] %vm794, 0.0
          %1191 = vst.msk [vmem:[%s1182 + $0x88] sm:$0xff] %vm794, 0.0
          %1192 = vst.msk [vmem:[%s1182 + $0x90] sm:$0xff] %vm794, 0.0
          %s1193 = scalar_lea.vmem [#allocation2], 2720
          %1194 = vst.msk [vmem:[%s1193 + $0x8] sm:$0xff] %vm794, 0.0
          %1195 = vst.msk [vmem:[%s1193 + $0x10] sm:$0xff] %vm794, 0.0
          %1196 = vst.msk [vmem:[%s1193 + $0x28] sm:$0xff] %vm794, 0.0
          %1197 = vst.msk [vmem:[%s1193 + $0x30] sm:$0xff] %vm794, 0.0
          %1198 = vst.msk [vmem:[%s1193 + $0x48] sm:$0xff] %vm794, 0.0
          %1199 = vst.msk [vmem:[%s1193 + $0x50] sm:$0xff] %vm794, 0.0
          %1200 = vst.msk [vmem:[%s1193 + $0x68] sm:$0xff] %vm794, 0.0
          %1201 = vst.msk [vmem:[%s1193 + $0x70] sm:$0xff] %vm794, 0.0
          %1202 = vst.msk [vmem:[%s1193 + $0x88] sm:$0xff] %vm794, 0.0
          %1203 = vst.msk [vmem:[%s1193 + $0x90] sm:$0xff] %vm794, 0.0
        $region76: #{ssim3d_loss.1} parent=39 // pred_fallthru
          _
        %1204 = vst.msk [vmem:[#allocation3] sm:$0xff] %vm794, %v767
        %1205 = vst.msk [vmem:[#allocation3 + $0x8] sm:$0xff] %vm794, %v768
        %1206 = vst.msk [vmem:[#allocation3 + $0x10] sm:$0xff] %vm794, %v769
        %1207 = vst.msk [vmem:[#allocation3 + $0x18] sm:$0xff] %vm794, %v770
        %1208 = vst.msk [vmem:[#allocation3 + $0x20] sm:$0xff] %vm794, %v771
        %1209 = vst.msk [vmem:[#allocation3 + $0x28] sm:$0xff] %vm794, %v772
        %1210 = vst.msk [vmem:[#allocation3 + $0x30] sm:$0xff] %vm794, %v773
        %1211 = vst.msk [vmem:[#allocation3 + $0x38] sm:$0xff] %vm794, %v774
        %1212 = vst.msk [vmem:[#allocation3 + $0x40] sm:$0xff] %vm794, %v775
        %1213 = vst.msk [vmem:[#allocation3 + $0x48] sm:$0xff] %vm794, %v776
        %s1214 = scalar_lea.vmem [#allocation3], 80
        %1215 = vst.msk [vmem:[%s1214] sm:$0xff] %vm794, %v783
        %1216 = vst.msk [vmem:[%s1214 + $0x8] sm:$0xff] %vm794, %v784
        %1217 = vst.msk [vmem:[%s1214 + $0x10] sm:$0xff] %vm794, %v785
        %1218 = vst.msk [vmem:[%s1214 + $0x18] sm:$0xff] %vm794, %v786
        %1219 = vst.msk [vmem:[%s1214 + $0x20] sm:$0xff] %vm794, %v787
        %1220 = vst.msk [vmem:[%s1214 + $0x28] sm:$0xff] %vm794, %v788
        %1221 = vst.msk [vmem:[%s1214 + $0x30] sm:$0xff] %vm794, %v789
        %1222 = vst.msk [vmem:[%s1214 + $0x38] sm:$0xff] %vm794, %v790
        %1223 = vst.msk [vmem:[%s1214 + $0x40] sm:$0xff] %vm794, %v791
        %1224 = vst.msk [vmem:[%s1214 + $0x48] sm:$0xff] %vm794, %v792
        %v1225 = vld [vmem:[#allocation2] sm:$0xff]
        %v1226 = vld [vmem:[#allocation2 + $0x8] sm:$0xff]
        %v1227 = vld [vmem:[#allocation2 + $0x10] sm:$0xff]
        %v1228 = vld [vmem:[#allocation2 + $0x18] sm:$0xff]
        %v1229 = vld [vmem:[#allocation2 + $0x20] sm:$0xff]
        %v1230 = vld [vmem:[#allocation2 + $0x28] sm:$0xff]
        %v1231 = vld [vmem:[#allocation2 + $0x30] sm:$0xff]
        %v1232 = vld [vmem:[#allocation2 + $0x38] sm:$0xff]
        %v1233 = vld [vmem:[#allocation2 + $0x40] sm:$0xff]
        %v1234 = vld [vmem:[#allocation2 + $0x48] sm:$0xff]
        %v1235 = vld [vmem:[#allocation2 + $0x50] sm:$0xff]
        %v1236 = vld [vmem:[#allocation2 + $0x58] sm:$0xff]
        %v1237 = vld [vmem:[#allocation2 + $0x60] sm:$0xff]
        %v1238 = vld [vmem:[#allocation2 + $0x68] sm:$0xff]
        %v1239 = vld [vmem:[#allocation2 + $0x70] sm:$0xff]
        %v1240 = vld [vmem:[#allocation2 + $0x78] sm:$0xff]
        %v1241 = vld [vmem:[#allocation2 + $0x80] sm:$0xff]
        %v1242 = vld [vmem:[#allocation2 + $0x88] sm:$0xff]
        %v1243 = vld [vmem:[#allocation2 + $0x90] sm:$0xff]
        %v1244 = vld [vmem:[#allocation2 + $0x98] sm:$0xff]
        %v1245 = vld [vmem:[#allocation2 + $0xa0] sm:$0xff]
        %v1246 = vld [vmem:[#allocation2 + $0xa8] sm:$0xff]
        %v1247 = vld [vmem:[#allocation2 + $0xb0] sm:$0xff]
        %v1248 = vld [vmem:[#allocation2 + $0xb8] sm:$0xff]
        %v1249 = vld [vmem:[#allocation2 + $0xc0] sm:$0xff]
        %v1250 = vld [vmem:[#allocation2 + $0xc8] sm:$0xff]
        %v1251 = vld [vmem:[#allocation2 + $0xd0] sm:$0xff]
        %v1252 = vld [vmem:[#allocation2 + $0xd8] sm:$0xff]
        %v1253 = vld [vmem:[#allocation2 + $0xe0] sm:$0xff]
        %v1254 = vld [vmem:[#allocation2 + $0xe8] sm:$0xff]
        %v1255 = vld [vmem:[#allocation2 + $0xf0] sm:$0xff]
        %v1256 = vld [vmem:[#allocation2 + $0xf8] sm:$0xff]
        %v1257 = vld [vmem:[#allocation2 + $0x100] sm:$0xff]
        %v1258 = vld [vmem:[#allocation2 + $0x108] sm:$0xff]
        %v1259 = vld [vmem:[#allocation2 + $0x110] sm:$0xff]
        %v1260 = vld [vmem:[#allocation2 + $0x118] sm:$0xff]
        %v1261 = vld [vmem:[#allocation2 + $0x120] sm:$0xff]
        %v1262 = vld [vmem:[#allocation2 + $0x128] sm:$0xff]
        %v1263 = vld [vmem:[#allocation2 + $0x130] sm:$0xff]
        %v1264 = vld [vmem:[#allocation2 + $0x138] sm:$0xff]
        %v1265 = vld [vmem:[#allocation2 + $0x140] sm:$0xff]
        %v1266 = vld [vmem:[#allocation2 + $0x148] sm:$0xff]
        %v1267 = vld [vmem:[#allocation2 + $0x150] sm:$0xff]
        %v1268 = vld [vmem:[#allocation2 + $0x158] sm:$0xff]
        %v1269 = vld [vmem:[#allocation2 + $0x160] sm:$0xff]
        %v1270 = vld [vmem:[#allocation2 + $0x168] sm:$0xff]
        %v1271 = vld [vmem:[#allocation2 + $0x170] sm:$0xff]
        %v1272 = vld [vmem:[#allocation2 + $0x178] sm:$0xff]
        %v1273 = vld [vmem:[#allocation2 + $0x180] sm:$0xff]
        %v1274 = vld [vmem:[#allocation2 + $0x188] sm:$0xff]
        %v1275 = vld [vmem:[#allocation2 + $0x190] sm:$0xff]
        %v1276 = vld [vmem:[#allocation2 + $0x198] sm:$0xff]
        %v1277 = vld [vmem:[#allocation2 + $0x1a0] sm:$0xff]
        %v1278 = vld [vmem:[#allocation2 + $0x1a8] sm:$0xff]
        %v1279 = vld [vmem:[#allocation2 + $0x1b0] sm:$0xff]
        %v1280 = vld [vmem:[#allocation2 + $0x1b8] sm:$0xff]
        %v1281 = vld [vmem:[#allocation2 + $0x1c0] sm:$0xff]
        %v1282 = vld [vmem:[#allocation2 + $0x1c8] sm:$0xff]
        %v1283 = vld [vmem:[#allocation2 + $0x1d0] sm:$0xff]
        %v1284 = vld [vmem:[#allocation2 + $0x1d8] sm:$0xff]
        %v1285 = vld [vmem:[#allocation2 + $0x1e0] sm:$0xff]
        %v1286 = vld [vmem:[#allocation2 + $0x1e8] sm:$0xff]
        %v1287 = vld [vmem:[#allocation2 + $0x1f0] sm:$0xff]
        %v1288 = vld [vmem:[#allocation2 + $0x1f8] sm:$0xff]
        %v1289 = vld [vmem:[#allocation2 + $0x200] sm:$0xff]
        %v1290 = vld [vmem:[#allocation2 + $0x208] sm:$0xff]
        %v1291 = vld [vmem:[#allocation2 + $0x210] sm:$0xff]
        %v1292 = vld [vmem:[#allocation2 + $0x218] sm:$0xff]
        %v1293 = vld [vmem:[#allocation2 + $0x220] sm:$0xff]
        %v1294 = vld [vmem:[#allocation2 + $0x228] sm:$0xff]
        %v1295 = vld [vmem:[#allocation2 + $0x230] sm:$0xff]
        %v1296 = vld [vmem:[#allocation2 + $0x238] sm:$0xff]
        %v1297 = vld [vmem:[#allocation2 + $0x240] sm:$0xff]
        %v1298 = vld [vmem:[#allocation2 + $0x248] sm:$0xff]
        %v1299 = vld [vmem:[#allocation2 + $0x250] sm:$0xff]
        %v1300 = vld [vmem:[#allocation2 + $0x258] sm:$0xff]
        %v1301 = vld [vmem:[#allocation2 + $0x260] sm:$0xff]
        %v1302 = vld [vmem:[#allocation2 + $0x268] sm:$0xff]
        %v1303 = vld [vmem:[#allocation2 + $0x270] sm:$0xff]
        %v1304 = vld [vmem:[#allocation2 + $0x278] sm:$0xff]
        %v1305 = vld [vmem:[#allocation2 + $0x280] sm:$0xff]
        %v1306 = vld [vmem:[#allocation2 + $0x288] sm:$0xff]
        %v1307 = vld [vmem:[#allocation2 + $0x290] sm:$0xff]
        %v1308 = vld [vmem:[#allocation2 + $0x298] sm:$0xff]
        %v1309 = vld [vmem:[#allocation2 + $0x2a0] sm:$0xff]
        %v1310 = vld [vmem:[#allocation2 + $0x2a8] sm:$0xff]
        %v1311 = vld [vmem:[#allocation2 + $0x2b0] sm:$0xff]
        %v1312 = vld [vmem:[#allocation2 + $0x2b8] sm:$0xff]
        %v1313 = vld [vmem:[#allocation2 + $0x2c0] sm:$0xff]
        %v1314 = vld [vmem:[#allocation2 + $0x2c8] sm:$0xff]
        %v1315 = vld [vmem:[#allocation2 + $0x2d0] sm:$0xff]
        %v1316 = vld [vmem:[#allocation2 + $0x2d8] sm:$0xff]
        %v1317 = vld [vmem:[#allocation2 + $0x2e0] sm:$0xff]
        %v1318 = vld [vmem:[#allocation2 + $0x2e8] sm:$0xff]
        %v1319 = vld [vmem:[#allocation2 + $0x2f0] sm:$0xff]
        %v1320 = vld [vmem:[#allocation2 + $0x2f8] sm:$0xff]
        %v1321 = vld [vmem:[#allocation2 + $0x300] sm:$0xff]
        %v1322 = vld [vmem:[#allocation2 + $0x308] sm:$0xff]
        %v1323 = vld [vmem:[#allocation2 + $0x310] sm:$0xff]
        %v1324 = vld [vmem:[#allocation2 + $0x318] sm:$0xff]
        %v1325 = vld [vmem:[#allocation2 + $0x320] sm:$0xff]
        %v1326 = vld [vmem:[#allocation2 + $0x328] sm:$0xff]
        %v1327 = vld [vmem:[#allocation2 + $0x330] sm:$0xff]
        %v1328 = vld [vmem:[#allocation2 + $0x338] sm:$0xff]
        %v1329 = vld [vmem:[#allocation2 + $0x340] sm:$0xff]
        %v1330 = vld [vmem:[#allocation2 + $0x348] sm:$0xff]
        %v1331 = vld [vmem:[#allocation2 + $0x350] sm:$0xff]
        %v1332 = vld [vmem:[#allocation2 + $0x358] sm:$0xff]
        %v1333 = vld [vmem:[#allocation2 + $0x360] sm:$0xff]
        %v1334 = vld [vmem:[#allocation2 + $0x368] sm:$0xff]
        %v1335 = vld [vmem:[#allocation2 + $0x370] sm:$0xff]
        %v1336 = vld [vmem:[#allocation2 + $0x378] sm:$0xff]
        %v1337 = vld [vmem:[#allocation2 + $0x380] sm:$0xff]
        %v1338 = vld [vmem:[#allocation2 + $0x388] sm:$0xff]
        %v1339 = vld [vmem:[#allocation2 + $0x390] sm:$0xff]
        %v1340 = vld [vmem:[#allocation2 + $0x398] sm:$0xff]
        %v1341 = vld [vmem:[#allocation2 + $0x3a0] sm:$0xff]
        %v1342 = vld [vmem:[#allocation2 + $0x3a8] sm:$0xff]
        %v1343 = vld [vmem:[#allocation2 + $0x3b0] sm:$0xff]
        %v1344 = vld [vmem:[#allocation2 + $0x3b8] sm:$0xff]
        %v1345 = vld [vmem:[#allocation2 + $0x3c0] sm:$0xff]
        %v1346 = vld [vmem:[#allocation2 + $0x3c8] sm:$0xff]
        %v1347 = vld [vmem:[#allocation2 + $0x3d0] sm:$0xff]
        %v1348 = vld [vmem:[#allocation2 + $0x3d8] sm:$0xff]
        %v1349 = vld [vmem:[#allocation2 + $0x3e0] sm:$0xff]
        %v1350 = vld [vmem:[#allocation2 + $0x3e8] sm:$0xff]
        %v1351 = vld [vmem:[#allocation2 + $0x3f0] sm:$0xff]
        %v1352 = vld [vmem:[#allocation2 + $0x3f8] sm:$0xff]
        %v1353 = vld [vmem:[#allocation2 + $0x400] sm:$0xff]
        %v1354 = vld [vmem:[#allocation2 + $0x408] sm:$0xff]
        %v1355 = vld [vmem:[#allocation2 + $0x410] sm:$0xff]
        %v1356 = vld [vmem:[#allocation2 + $0x418] sm:$0xff]
        %v1357 = vld [vmem:[#allocation2 + $0x420] sm:$0xff]
        %v1358 = vld [vmem:[#allocation2 + $0x428] sm:$0xff]
        %v1359 = vld [vmem:[#allocation2 + $0x430] sm:$0xff]
        %v1360 = vld [vmem:[#allocation2 + $0x438] sm:$0xff]
        %v1361 = vld [vmem:[#allocation2 + $0x440] sm:$0xff]
        %v1362 = vld [vmem:[#allocation2 + $0x448] sm:$0xff]
        %v1363 = vld [vmem:[#allocation2 + $0x450] sm:$0xff]
        %v1364 = vld [vmem:[#allocation2 + $0x458] sm:$0xff]
        %v1365 = vld [vmem:[#allocation2 + $0x460] sm:$0xff]
        %v1366 = vld [vmem:[#allocation2 + $0x468] sm:$0xff]
        %v1367 = vld [vmem:[#allocation2 + $0x470] sm:$0xff]
        %v1368 = vld [vmem:[#allocation2 + $0x478] sm:$0xff]
        %v1369 = vld [vmem:[#allocation2 + $0x480] sm:$0xff]
        %v1370 = vld [vmem:[#allocation2 + $0x488] sm:$0xff]
        %v1371 = vld [vmem:[#allocation2 + $0x490] sm:$0xff]
        %v1372 = vld [vmem:[#allocation2 + $0x498] sm:$0xff]
        %v1373 = vld [vmem:[#allocation2 + $0x4a0] sm:$0xff]
        %v1374 = vld [vmem:[#allocation2 + $0x4a8] sm:$0xff]
        %v1375 = vld [vmem:[#allocation2 + $0x4b0] sm:$0xff]
        %v1376 = vld [vmem:[#allocation2 + $0x4b8] sm:$0xff]
        %v1377 = vld [vmem:[#allocation2 + $0x4c0] sm:$0xff]
        %v1378 = vld [vmem:[#allocation2 + $0x4c8] sm:$0xff]
        %v1379 = vld [vmem:[#allocation2 + $0x4d0] sm:$0xff]
        %v1380 = vld [vmem:[#allocation2 + $0x4d8] sm:$0xff]
        %v1381 = vld [vmem:[#allocation2 + $0x4e0] sm:$0xff]
        %v1382 = vld [vmem:[#allocation2 + $0x4e8] sm:$0xff]
        %v1383 = vld [vmem:[#allocation2 + $0x4f0] sm:$0xff]
        %v1384 = vld [vmem:[#allocation2 + $0x4f8] sm:$0xff]
        %v1385 = vld [vmem:[#allocation2 + $0x500] sm:$0xff]
        %v1386 = vld [vmem:[#allocation2 + $0x508] sm:$0xff]
        %v1387 = vld [vmem:[#allocation2 + $0x510] sm:$0xff]
        %v1388 = vld [vmem:[#allocation2 + $0x518] sm:$0xff]
        %v1389 = vld [vmem:[#allocation2 + $0x520] sm:$0xff]
        %v1390 = vld [vmem:[#allocation2 + $0x528] sm:$0xff]
        %v1391 = vld [vmem:[#allocation2 + $0x530] sm:$0xff]
        %v1392 = vld [vmem:[#allocation2 + $0x538] sm:$0xff]
        %v1393 = vld [vmem:[#allocation2 + $0x540] sm:$0xff]
        %v1394 = vld [vmem:[#allocation2 + $0x548] sm:$0xff]
        %v1395 = vld [vmem:[#allocation2 + $0x550] sm:$0xff]
        %v1396 = vld [vmem:[#allocation2 + $0x558] sm:$0xff]
        %v1397 = vld [vmem:[#allocation2 + $0x560] sm:$0xff]
        %v1398 = vld [vmem:[#allocation2 + $0x568] sm:$0xff]
        %v1399 = vld [vmem:[#allocation2 + $0x570] sm:$0xff]
        %v1400 = vld [vmem:[#allocation2 + $0x578] sm:$0xff]
        %v1401 = vld [vmem:[#allocation2 + $0x580] sm:$0xff]
        %v1402 = vld [vmem:[#allocation2 + $0x588] sm:$0xff]
        %v1403 = vld [vmem:[#allocation2 + $0x590] sm:$0xff]
        %v1404 = vld [vmem:[#allocation2 + $0x598] sm:$0xff]
        %v1405 = vld [vmem:[#allocation2 + $0x5a0] sm:$0xff]
        %v1406 = vld [vmem:[#allocation2 + $0x5a8] sm:$0xff]
        %v1407 = vld [vmem:[#allocation2 + $0x5b0] sm:$0xff]
        %v1408 = vld [vmem:[#allocation2 + $0x5b8] sm:$0xff]
        %v1409 = vld [vmem:[#allocation2 + $0x5c0] sm:$0xff]
        %v1410 = vld [vmem:[#allocation2 + $0x5c8] sm:$0xff]
        %v1411 = vld [vmem:[#allocation2 + $0x5d0] sm:$0xff]
        %v1412 = vld [vmem:[#allocation2 + $0x5d8] sm:$0xff]
        %v1413 = vld [vmem:[#allocation2 + $0x5e0] sm:$0xff]
        %v1414 = vld [vmem:[#allocation2 + $0x5e8] sm:$0xff]
        %v1415 = vld [vmem:[#allocation2 + $0x5f0] sm:$0xff]
        %v1416 = vld [vmem:[#allocation2 + $0x5f8] sm:$0xff]
        %v1417 = vld [vmem:[#allocation2 + $0x600] sm:$0xff]
        %v1418 = vld [vmem:[#allocation2 + $0x608] sm:$0xff]
        %v1419 = vld [vmem:[#allocation2 + $0x610] sm:$0xff]
        %v1420 = vld [vmem:[#allocation2 + $0x618] sm:$0xff]
        %v1421 = vld [vmem:[#allocation2 + $0x620] sm:$0xff]
        %v1422 = vld [vmem:[#allocation2 + $0x628] sm:$0xff]
        %v1423 = vld [vmem:[#allocation2 + $0x630] sm:$0xff]
        %v1424 = vld [vmem:[#allocation2 + $0x638] sm:$0xff]
        %v1425 = vld [vmem:[#allocation2 + $0x640] sm:$0xff]
        %v1426 = vld [vmem:[#allocation2 + $0x648] sm:$0xff]
        %v1427 = vld [vmem:[#allocation2 + $0x650] sm:$0xff]
        %v1428 = vld [vmem:[#allocation2 + $0x658] sm:$0xff]
        %v1429 = vld [vmem:[#allocation2 + $0x660] sm:$0xff]
        %v1430 = vld [vmem:[#allocation2 + $0x668] sm:$0xff]
        %v1431 = vld [vmem:[#allocation2 + $0x670] sm:$0xff]
        %v1432 = vld [vmem:[#allocation2 + $0x678] sm:$0xff]
        %v1433 = vld [vmem:[#allocation2 + $0x680] sm:$0xff]
        %v1434 = vld [vmem:[#allocation2 + $0x688] sm:$0xff]
        %v1435 = vld [vmem:[#allocation2 + $0x690] sm:$0xff]
        %v1436 = vld [vmem:[#allocation2 + $0x698] sm:$0xff]
        %v1437 = vld [vmem:[#allocation2 + $0x6a0] sm:$0xff]
        %v1438 = vld [vmem:[#allocation2 + $0x6a8] sm:$0xff]
        %v1439 = vld [vmem:[#allocation2 + $0x6b0] sm:$0xff]
        %v1440 = vld [vmem:[#allocation2 + $0x6b8] sm:$0xff]
        %v1441 = vld [vmem:[#allocation2 + $0x6c0] sm:$0xff]
        %v1442 = vld [vmem:[#allocation2 + $0x6c8] sm:$0xff]
        %v1443 = vld [vmem:[#allocation2 + $0x6d0] sm:$0xff]
        %v1444 = vld [vmem:[#allocation2 + $0x6d8] sm:$0xff]
        %v1445 = vld [vmem:[#allocation2 + $0x6e0] sm:$0xff]
        %v1446 = vld [vmem:[#allocation2 + $0x6e8] sm:$0xff]
        %v1447 = vld [vmem:[#allocation2 + $0x6f0] sm:$0xff]
        %v1448 = vld [vmem:[#allocation2 + $0x6f8] sm:$0xff]
        %v1449 = vld [vmem:[#allocation2 + $0x700] sm:$0xff]
        %v1450 = vld [vmem:[#allocation2 + $0x708] sm:$0xff]
        %v1451 = vld [vmem:[#allocation2 + $0x710] sm:$0xff]
        %v1452 = vld [vmem:[#allocation2 + $0x718] sm:$0xff]
        %v1453 = vld [vmem:[#allocation2 + $0x720] sm:$0xff]
        %v1454 = vld [vmem:[#allocation2 + $0x728] sm:$0xff]
        %v1455 = vld [vmem:[#allocation2 + $0x730] sm:$0xff]
        %v1456 = vld [vmem:[#allocation2 + $0x738] sm:$0xff]
        %v1457 = vld [vmem:[#allocation2 + $0x740] sm:$0xff]
        %v1458 = vld [vmem:[#allocation2 + $0x748] sm:$0xff]
        %v1459 = vld [vmem:[#allocation2 + $0x750] sm:$0xff]
        %v1460 = vld [vmem:[#allocation2 + $0x758] sm:$0xff]
        %v1461 = vld [vmem:[#allocation2 + $0x760] sm:$0xff]
        %v1462 = vld [vmem:[#allocation2 + $0x768] sm:$0xff]
        %v1463 = vld [vmem:[#allocation2 + $0x770] sm:$0xff]
        %v1464 = vld [vmem:[#allocation2 + $0x778] sm:$0xff]
        %v1465 = vld [vmem:[#allocation2 + $0x780] sm:$0xff]
        %v1466 = vld [vmem:[#allocation2 + $0x788] sm:$0xff]
        %v1467 = vld [vmem:[#allocation2 + $0x790] sm:$0xff]
        %v1468 = vld [vmem:[#allocation2 + $0x798] sm:$0xff]
        %v1469 = vld [vmem:[#allocation2 + $0x7a0] sm:$0xff]
        %v1470 = vld [vmem:[#allocation2 + $0x7a8] sm:$0xff]
        %v1471 = vld [vmem:[#allocation2 + $0x7b0] sm:$0xff]
        %v1472 = vld [vmem:[#allocation2 + $0x7b8] sm:$0xff]
        %v1473 = vld [vmem:[#allocation2 + $0x7c0] sm:$0xff]
        %v1474 = vld [vmem:[#allocation2 + $0x7c8] sm:$0xff]
        %v1475 = vld [vmem:[#allocation2 + $0x7d0] sm:$0xff]
        %v1476 = vld [vmem:[#allocation2 + $0x7d8] sm:$0xff]
        %v1477 = vld [vmem:[#allocation2 + $0x7e0] sm:$0xff]
        %v1478 = vld [vmem:[#allocation2 + $0x7e8] sm:$0xff]
        %v1479 = vld [vmem:[#allocation2 + $0x7f0] sm:$0xff]
        %v1480 = vld [vmem:[#allocation2 + $0x7f8] sm:$0xff]
        %v1481 = vld [vmem:[#allocation2 + $0x800] sm:$0xff]
        %v1482 = vld [vmem:[#allocation2 + $0x808] sm:$0xff]
        %v1483 = vld [vmem:[#allocation2 + $0x810] sm:$0xff]
        %v1484 = vld [vmem:[#allocation2 + $0x818] sm:$0xff]
        %v1485 = vld [vmem:[#allocation2 + $0x820] sm:$0xff]
        %v1486 = vld [vmem:[#allocation2 + $0x828] sm:$0xff]
        %v1487 = vld [vmem:[#allocation2 + $0x830] sm:$0xff]
        %v1488 = vld [vmem:[#allocation2 + $0x838] sm:$0xff]
        %v1489 = vld [vmem:[#allocation2 + $0x840] sm:$0xff]
        %v1490 = vld [vmem:[#allocation2 + $0x848] sm:$0xff]
        %v1491 = vld [vmem:[#allocation2 + $0x850] sm:$0xff]
        %v1492 = vld [vmem:[#allocation2 + $0x858] sm:$0xff]
        %v1493 = vld [vmem:[#allocation2 + $0x860] sm:$0xff]
        %v1494 = vld [vmem:[#allocation2 + $0x868] sm:$0xff]
        %v1495 = vld [vmem:[#allocation2 + $0x870] sm:$0xff]
        %v1496 = vld [vmem:[#allocation2 + $0x878] sm:$0xff]
        %v1497 = vld [vmem:[#allocation2 + $0x880] sm:$0xff]
        %v1498 = vld [vmem:[#allocation2 + $0x888] sm:$0xff]
        %v1499 = vld [vmem:[#allocation2 + $0x890] sm:$0xff]
        %v1500 = vld [vmem:[#allocation2 + $0x898] sm:$0xff]
        %v1501 = vld [vmem:[#allocation2 + $0x8a0] sm:$0xff]
        %v1502 = vld [vmem:[#allocation2 + $0x8a8] sm:$0xff]
        %v1503 = vld [vmem:[#allocation2 + $0x8b0] sm:$0xff]
        %v1504 = vld [vmem:[#allocation2 + $0x8b8] sm:$0xff]
        %v1505 = vld [vmem:[#allocation2 + $0x8c0] sm:$0xff]
        %v1506 = vld [vmem:[#allocation2 + $0x8c8] sm:$0xff]
        %v1507 = vld [vmem:[#allocation2 + $0x8d0] sm:$0xff]
        %v1508 = vld [vmem:[#allocation2 + $0x8d8] sm:$0xff]
        %v1509 = vld [vmem:[#allocation2 + $0x8e0] sm:$0xff]
        %v1510 = vld [vmem:[#allocation2 + $0x8e8] sm:$0xff]
        %v1511 = vld [vmem:[#allocation2 + $0x8f0] sm:$0xff]
        %v1512 = vld [vmem:[#allocation2 + $0x8f8] sm:$0xff]
        %v1513 = vld [vmem:[#allocation2 + $0x900] sm:$0xff]
        %v1514 = vld [vmem:[#allocation2 + $0x908] sm:$0xff]
        %v1515 = vld [vmem:[#allocation2 + $0x910] sm:$0xff]
        %v1516 = vld [vmem:[#allocation2 + $0x918] sm:$0xff]
        %v1517 = vld [vmem:[#allocation2 + $0x920] sm:$0xff]
        %v1518 = vld [vmem:[#allocation2 + $0x928] sm:$0xff]
        %v1519 = vld [vmem:[#allocation2 + $0x930] sm:$0xff]
        %v1520 = vld [vmem:[#allocation2 + $0x938] sm:$0xff]
        %v1521 = vld [vmem:[#allocation2 + $0x940] sm:$0xff]
        %v1522 = vld [vmem:[#allocation2 + $0x948] sm:$0xff]
        %v1523 = vld [vmem:[#allocation2 + $0x950] sm:$0xff]
        %v1524 = vld [vmem:[#allocation2 + $0x958] sm:$0xff]
        %v1525 = vld [vmem:[#allocation2 + $0x960] sm:$0xff]
        %v1526 = vld [vmem:[#allocation2 + $0x968] sm:$0xff]
        %v1527 = vld [vmem:[#allocation2 + $0x970] sm:$0xff]
        %v1528 = vld [vmem:[#allocation2 + $0x978] sm:$0xff]
        %v1529 = vld [vmem:[#allocation2 + $0x980] sm:$0xff]
        %v1530 = vld [vmem:[#allocation2 + $0x988] sm:$0xff]
        %v1531 = vld [vmem:[#allocation2 + $0x990] sm:$0xff]
        %v1532 = vld [vmem:[#allocation2 + $0x998] sm:$0xff]
        %v1533 = vld [vmem:[#allocation2 + $0x9a0] sm:$0xff]
        %v1534 = vld [vmem:[#allocation2 + $0x9a8] sm:$0xff]
        %v1535 = vld [vmem:[#allocation2 + $0x9b0] sm:$0xff]
        %v1536 = vld [vmem:[#allocation2 + $0x9b8] sm:$0xff]
        %v1537 = vld [vmem:[#allocation2 + $0x9c0] sm:$0xff]
        %v1538 = vld [vmem:[#allocation2 + $0x9c8] sm:$0xff]
        %v1539 = vld [vmem:[#allocation2 + $0x9d0] sm:$0xff]
        %v1540 = vld [vmem:[#allocation2 + $0x9d8] sm:$0xff]
        %v1541 = vld [vmem:[#allocation2 + $0x9e0] sm:$0xff]
        %v1542 = vld [vmem:[#allocation2 + $0x9e8] sm:$0xff]
        %v1543 = vld [vmem:[#allocation2 + $0x9f0] sm:$0xff]
        %v1544 = vld [vmem:[#allocation2 + $0x9f8] sm:$0xff]
        %v1545 = vld [vmem:[#allocation2 + $0xa00] sm:$0xff]
        %v1546 = vld [vmem:[#allocation2 + $0xa08] sm:$0xff]
        %v1547 = vld [vmem:[#allocation2 + $0xa10] sm:$0xff]
        %v1548 = vld [vmem:[#allocation2 + $0xa18] sm:$0xff]
        %v1549 = vld [vmem:[#allocation2 + $0xa20] sm:$0xff]
        %v1550 = vld [vmem:[#allocation2 + $0xa28] sm:$0xff]
        %v1551 = vld [vmem:[#allocation2 + $0xa30] sm:$0xff]
        %v1552 = vld [vmem:[#allocation2 + $0xa38] sm:$0xff]
        %v1553 = vld [vmem:[#allocation2 + $0xa40] sm:$0xff]
        %v1554 = vld [vmem:[#allocation2 + $0xa48] sm:$0xff]
        %v1555 = vld [vmem:[#allocation2 + $0xa50] sm:$0xff]
        %v1556 = vld [vmem:[#allocation2 + $0xa58] sm:$0xff]
        %v1557 = vld [vmem:[#allocation2 + $0xa60] sm:$0xff]
        %v1558 = vld [vmem:[#allocation2 + $0xa68] sm:$0xff]
        %v1559 = vld [vmem:[#allocation2 + $0xa70] sm:$0xff]
        %v1560 = vld [vmem:[#allocation2 + $0xa78] sm:$0xff]
        %v1561 = vld [vmem:[#allocation2 + $0xa80] sm:$0xff]
        %v1562 = vld [vmem:[#allocation2 + $0xa88] sm:$0xff]
        %v1563 = vld [vmem:[#allocation2 + $0xa90] sm:$0xff]
        %v1564 = vld [vmem:[#allocation2 + $0xa98] sm:$0xff]
        %v1565 = vld [vmem:[#allocation2 + $0xaa0] sm:$0xff]
        %v1566 = vld [vmem:[#allocation2 + $0xaa8] sm:$0xff]
        %v1567 = vld [vmem:[#allocation2 + $0xab0] sm:$0xff]
        %v1568 = vld [vmem:[#allocation2 + $0xab8] sm:$0xff]
        %v1569 = vld [vmem:[#allocation2 + $0xac0] sm:$0xff]
        %v1570 = vld [vmem:[#allocation2 + $0xac8] sm:$0xff]
        %v1571 = vld [vmem:[#allocation2 + $0xad0] sm:$0xff]
        %v1572 = vld [vmem:[#allocation2 + $0xad8] sm:$0xff]
        %v1573 = vld [vmem:[#allocation2 + $0xae0] sm:$0xff]
        %v1574 = vld [vmem:[#allocation2 + $0xae8] sm:$0xff]
        %v1575 = vld [vmem:[#allocation2 + $0xaf0] sm:$0xff]
        %v1576 = vld [vmem:[#allocation2 + $0xaf8] sm:$0xff]
        %v1577 = vld [vmem:[#allocation2 + $0xb00] sm:$0xff]
        %v1578 = vld [vmem:[#allocation2 + $0xb08] sm:$0xff]
        %v1579 = vld [vmem:[#allocation2 + $0xb10] sm:$0xff]
        %v1580 = vld [vmem:[#allocation2 + $0xb18] sm:$0xff]
        %v1581 = vld [vmem:[#allocation2 + $0xb20] sm:$0xff]
        %v1582 = vld [vmem:[#allocation2 + $0xb28] sm:$0xff]
        %v1583 = vld [vmem:[#allocation2 + $0xb30] sm:$0xff]
        %v1584 = vld [vmem:[#allocation2 + $0xb38] sm:$0xff]
        %v1585 = vld [vmem:[#allocation12] sm:$0xff]
        %v1586 = vld [vmem:[#allocation12 + $0x8] sm:$0xff]
        %v1588 = vsel %vm794, %v1225, 0
        %v1591 = vsel %vm794, %v1226, 0
        %v1594 = vsel %vm794, %v1227, 0
        %v1597 = vsel %vm794, %v1228, 0
        %v1600 = vsel %vm794, %v1229, 0
        %v1603 = vsel %vm794, %v1230, 0
        %v1606 = vsel %vm794, %v1231, 0
        %v1609 = vsel %vm794, %v1232, 0
        %v1612 = vsel %vm794, %v1233, 0
        %v1615 = vsel %vm794, %v1234, 0
        %v1618 = vsel %vm794, %v1235, 0
        %v1621 = vsel %vm794, %v1236, 0
        %v1624 = vsel %vm794, %v1237, 0
        %v1627 = vsel %vm794, %v1238, 0
        %v1630 = vsel %vm794, %v1239, 0
        %v1633 = vsel %vm794, %v1240, 0
        %v1636 = vsel %vm794, %v1241, 0
        %v1639 = vsel %vm794, %v1242, 0
        %v1642 = vsel %vm794, %v1243, 0
        %v1645 = vsel %vm794, %v1244, 0
        %v1648 = vsel %vm794, %v1245, 0
        %v1651 = vsel %vm794, %v1246, 0
        %v1654 = vsel %vm794, %v1247, 0
        %v1657 = vsel %vm794, %v1248, 0
        %v1660 = vsel %vm794, %v1249, 0
        %v1663 = vsel %vm794, %v1250, 0
        %v1666 = vsel %vm794, %v1251, 0
        %v1669 = vsel %vm794, %v1252, 0
        %v1672 = vsel %vm794, %v1253, 0
        %v1675 = vsel %vm794, %v1254, 0
        %v1678 = vsel %vm794, %v1255, 0
        %v1681 = vsel %vm794, %v1256, 0
        %v1684 = vsel %vm794, %v1257, 0
        %v1687 = vsel %vm794, %v1258, 0
        %v1690 = vsel %vm794, %v1259, 0
        %v1693 = vsel %vm794, %v1260, 0
        %v1696 = vsel %vm794, %v1261, 0
        %v1699 = vsel %vm794, %v1262, 0
        %v1702 = vsel %vm794, %v1263, 0
        %v1705 = vsel %vm794, %v1264, 0
        %v1708 = vsel %vm794, %v1265, 0
        %v1711 = vsel %vm794, %v1266, 0
        %v1714 = vsel %vm794, %v1267, 0
        %v1717 = vsel %vm794, %v1268, 0
        %v1720 = vsel %vm794, %v1269, 0
        %v1723 = vsel %vm794, %v1270, 0
        %v1726 = vsel %vm794, %v1271, 0
        %v1729 = vsel %vm794, %v1272, 0
        %v1732 = vsel %vm794, %v1273, 0
        %v1735 = vsel %vm794, %v1274, 0
        %v1738 = vsel %vm794, %v1275, 0
        %v1741 = vsel %vm794, %v1276, 0
        %v1744 = vsel %vm794, %v1277, 0
        %v1747 = vsel %vm794, %v1278, 0
        %v1750 = vsel %vm794, %v1279, 0
        %v1753 = vsel %vm794, %v1280, 0
        %v1756 = vsel %vm794, %v1281, 0
        %v1759 = vsel %vm794, %v1282, 0
        %v1762 = vsel %vm794, %v1283, 0
        %v1765 = vsel %vm794, %v1284, 0
        %v1768 = vsel %vm794, %v1285, 0
        %v1771 = vsel %vm794, %v1286, 0
        %v1774 = vsel %vm794, %v1287, 0
        %v1777 = vsel %vm794, %v1288, 0
        %v1780 = vsel %vm794, %v1289, 0
        %v1783 = vsel %vm794, %v1290, 0
        %v1786 = vsel %vm794, %v1291, 0
        %v1789 = vsel %vm794, %v1292, 0
        %v1792 = vsel %vm794, %v1293, 0
        %v1795 = vsel %vm794, %v1294, 0
        %v1798 = vsel %vm794, %v1295, 0
        %v1801 = vsel %vm794, %v1296, 0
        %v1804 = vsel %vm794, %v1297, 0
        %v1807 = vsel %vm794, %v1298, 0
        %v1810 = vsel %vm794, %v1299, 0
        %v1813 = vsel %vm794, %v1300, 0
        %v1816 = vsel %vm794, %v1301, 0
        %v1819 = vsel %vm794, %v1302, 0
        %v1822 = vsel %vm794, %v1303, 0
        %v1825 = vsel %vm794, %v1304, 0
        %v1828 = vsel %vm794, %v1305, 0
        %v1831 = vsel %vm794, %v1306, 0
        %v1834 = vsel %vm794, %v1307, 0
        %v1837 = vsel %vm794, %v1308, 0
        %v1840 = vsel %vm794, %v1309, 0
        %v1843 = vsel %vm794, %v1310, 0
        %v1846 = vsel %vm794, %v1311, 0
        %v1849 = vsel %vm794, %v1312, 0
        %v1852 = vsel %vm794, %v1313, 0
        %v1855 = vsel %vm794, %v1314, 0
        %v1858 = vsel %vm794, %v1315, 0
        %v1861 = vsel %vm794, %v1316, 0
        %v1864 = vsel %vm794, %v1317, 0
        %v1867 = vsel %vm794, %v1318, 0
        %v1870 = vsel %vm794, %v1319, 0
        %v1873 = vsel %vm794, %v1320, 0
        %v1876 = vsel %vm794, %v1321, 0
        %v1879 = vsel %vm794, %v1322, 0
        %v1882 = vsel %vm794, %v1323, 0
        %v1885 = vsel %vm794, %v1324, 0
        %v1888 = vsel %vm794, %v1325, 0
        %v1891 = vsel %vm794, %v1326, 0
        %v1894 = vsel %vm794, %v1327, 0
        %v1897 = vsel %vm794, %v1328, 0
        %v1900 = vsel %vm794, %v1329, 0
        %v1903 = vsel %vm794, %v1330, 0
        %v1906 = vsel %vm794, %v1331, 0
        %v1909 = vsel %vm794, %v1332, 0
        %v1912 = vsel %vm794, %v1333, 0
        %v1915 = vsel %vm794, %v1334, 0
        %v1918 = vsel %vm794, %v1335, 0
        %v1921 = vsel %vm794, %v1336, 0
        %v1924 = vsel %vm794, %v1337, 0
        %v1927 = vsel %vm794, %v1338, 0
        %v1930 = vsel %vm794, %v1339, 0
        %v1933 = vsel %vm794, %v1340, 0
        %v1936 = vsel %vm794, %v1341, 0
        %v1939 = vsel %vm794, %v1342, 0
        %v1942 = vsel %vm794, %v1343, 0
        %v1945 = vsel %vm794, %v1344, 0
        %v1948 = vsel %vm794, %v1345, 0
        %v1951 = vsel %vm794, %v1346, 0
        %v1954 = vsel %vm794, %v1347, 0
        %v1957 = vsel %vm794, %v1348, 0
        %v1960 = vsel %vm794, %v1349, 0
        %v1963 = vsel %vm794, %v1350, 0
        %v1966 = vsel %vm794, %v1351, 0
        %v1969 = vsel %vm794, %v1352, 0
        %v1972 = vsel %vm794, %v1353, 0
        %v1975 = vsel %vm794, %v1354, 0
        %v1978 = vsel %vm794, %v1355, 0
        %v1981 = vsel %vm794, %v1356, 0
        %v1984 = vsel %vm794, %v1357, 0
        %v1987 = vsel %vm794, %v1358, 0
        %v1990 = vsel %vm794, %v1359, 0
        %v1993 = vsel %vm794, %v1360, 0
        %v1996 = vsel %vm794, %v1361, 0
        %v1999 = vsel %vm794, %v1362, 0
        %v2002 = vsel %vm794, %v1363, 0
        %v2005 = vsel %vm794, %v1364, 0
        %v2008 = vsel %vm794, %v1365, 0
        %v2011 = vsel %vm794, %v1366, 0
        %v2014 = vsel %vm794, %v1367, 0
        %v2017 = vsel %vm794, %v1368, 0
        %v2020 = vsel %vm794, %v1369, 0
        %v2023 = vsel %vm794, %v1370, 0
        %v2026 = vsel %vm794, %v1371, 0
        %v2029 = vsel %vm794, %v1372, 0
        %v2032 = vsel %vm794, %v1373, 0
        %v2035 = vsel %vm794, %v1374, 0
        %v2038 = vsel %vm794, %v1375, 0
        %v2041 = vsel %vm794, %v1376, 0
        %v2044 = vsel %vm794, %v1377, 0
        %v2047 = vsel %vm794, %v1378, 0
        %v2050 = vsel %vm794, %v1379, 0
        %v2053 = vsel %vm794, %v1380, 0
        %v2056 = vsel %vm794, %v1381, 0
        %v2059 = vsel %vm794, %v1382, 0
        %v2062 = vsel %vm794, %v1383, 0
        %v2065 = vsel %vm794, %v1384, 0
        %v2068 = vsel %vm794, %v1385, 0
        %v2071 = vsel %vm794, %v1386, 0
        %v2074 = vsel %vm794, %v1387, 0
        %v2077 = vsel %vm794, %v1388, 0
        %v2080 = vsel %vm794, %v1389, 0
        %v2083 = vsel %vm794, %v1390, 0
        %v2086 = vsel %vm794, %v1391, 0
        %v2089 = vsel %vm794, %v1392, 0
        %v2092 = vsel %vm794, %v1393, 0
        %v2095 = vsel %vm794, %v1394, 0
        %v2098 = vsel %vm794, %v1395, 0
        %v2101 = vsel %vm794, %v1396, 0
        %v2104 = vsel %vm794, %v1397, 0
        %v2107 = vsel %vm794, %v1398, 0
        %v2110 = vsel %vm794, %v1399, 0
        %v2113 = vsel %vm794, %v1400, 0
        %v2116 = vsel %vm794, %v1401, 0
        %v2119 = vsel %vm794, %v1402, 0
        %v2122 = vsel %vm794, %v1403, 0
        %v2125 = vsel %vm794, %v1404, 0
        %v2128 = vsel %vm794, %v1405, 0
        %v2131 = vsel %vm794, %v1406, 0
        %v2134 = vsel %vm794, %v1407, 0
        %v2137 = vsel %vm794, %v1408, 0
        %v2140 = vsel %vm794, %v1409, 0
        %v2143 = vsel %vm794, %v1410, 0
        %v2146 = vsel %vm794, %v1411, 0
        %v2149 = vsel %vm794, %v1412, 0
        %v2152 = vsel %vm794, %v1413, 0
        %v2155 = vsel %vm794, %v1414, 0
        %v2158 = vsel %vm794, %v1415, 0
        %v2161 = vsel %vm794, %v1416, 0
        %v2164 = vsel %vm794, %v1417, 0
        %v2167 = vsel %vm794, %v1418, 0
        %v2170 = vsel %vm794, %v1419, 0
        %v2173 = vsel %vm794, %v1420, 0
        %v2176 = vsel %vm794, %v1421, 0
        %v2179 = vsel %vm794, %v1422, 0
        %v2182 = vsel %vm794, %v1423, 0
        %v2185 = vsel %vm794, %v1424, 0
        %v2188 = vsel %vm794, %v1425, 0
        %v2191 = vsel %vm794, %v1426, 0
        %v2194 = vsel %vm794, %v1427, 0
        %v2197 = vsel %vm794, %v1428, 0
        %v2200 = vsel %vm794, %v1429, 0
        %v2203 = vsel %vm794, %v1430, 0
        %v2206 = vsel %vm794, %v1431, 0
        %v2209 = vsel %vm794, %v1432, 0
        %v2212 = vsel %vm794, %v1433, 0
        %v2215 = vsel %vm794, %v1434, 0
        %v2218 = vsel %vm794, %v1435, 0
        %v2221 = vsel %vm794, %v1436, 0
        %v2224 = vsel %vm794, %v1437, 0
        %v2227 = vsel %vm794, %v1438, 0
        %v2230 = vsel %vm794, %v1439, 0
        %v2233 = vsel %vm794, %v1440, 0
        %v2236 = vsel %vm794, %v1441, 0
        %v2239 = vsel %vm794, %v1442, 0
        %v2242 = vsel %vm794, %v1443, 0
        %v2245 = vsel %vm794, %v1444, 0
        %v2248 = vsel %vm794, %v1445, 0
        %v2251 = vsel %vm794, %v1446, 0
        %v2254 = vsel %vm794, %v1447, 0
        %v2257 = vsel %vm794, %v1448, 0
        %v2260 = vsel %vm794, %v1449, 0
        %v2263 = vsel %vm794, %v1450, 0
        %v2266 = vsel %vm794, %v1451, 0
        %v2269 = vsel %vm794, %v1452, 0
        %v2272 = vsel %vm794, %v1453, 0
        %v2275 = vsel %vm794, %v1454, 0
        %v2278 = vsel %vm794, %v1455, 0
        %v2281 = vsel %vm794, %v1456, 0
        %v2284 = vsel %vm794, %v1457, 0
        %v2287 = vsel %vm794, %v1458, 0
        %v2290 = vsel %vm794, %v1459, 0
        %v2293 = vsel %vm794, %v1460, 0
        %v2296 = vsel %vm794, %v1461, 0
        %v2299 = vsel %vm794, %v1462, 0
        %v2302 = vsel %vm794, %v1463, 0
        %v2305 = vsel %vm794, %v1464, 0
        %v2308 = vsel %vm794, %v1465, 0
        %v2311 = vsel %vm794, %v1466, 0
        %v2314 = vsel %vm794, %v1467, 0
        %v2317 = vsel %vm794, %v1468, 0
        %v2320 = vsel %vm794, %v1469, 0
        %v2323 = vsel %vm794, %v1470, 0
        %v2326 = vsel %vm794, %v1471, 0
        %v2329 = vsel %vm794, %v1472, 0
        %v2332 = vsel %vm794, %v1473, 0
        %v2335 = vsel %vm794, %v1474, 0
        %v2338 = vsel %vm794, %v1475, 0
        %v2341 = vsel %vm794, %v1476, 0
        %v2344 = vsel %vm794, %v1477, 0
        %v2347 = vsel %vm794, %v1478, 0
        %v2350 = vsel %vm794, %v1479, 0
        %v2353 = vsel %vm794, %v1480, 0
        %v2356 = vsel %vm794, %v1481, 0
        %v2359 = vsel %vm794, %v1482, 0
        %v2362 = vsel %vm794, %v1483, 0
        %v2365 = vsel %vm794, %v1484, 0
        %v2368 = vsel %vm794, %v1485, 0
        %v2371 = vsel %vm794, %v1486, 0
        %v2374 = vsel %vm794, %v1487, 0
        %v2377 = vsel %vm794, %v1488, 0
        %v2380 = vsel %vm794, %v1489, 0
        %v2383 = vsel %vm794, %v1490, 0
        %v2386 = vsel %vm794, %v1491, 0
        %v2389 = vsel %vm794, %v1492, 0
        %v2392 = vsel %vm794, %v1493, 0
        %v2395 = vsel %vm794, %v1494, 0
        %v2398 = vsel %vm794, %v1495, 0
        %v2401 = vsel %vm794, %v1496, 0
        %v2404 = vsel %vm794, %v1497, 0
        %v2407 = vsel %vm794, %v1498, 0
        %v2410 = vsel %vm794, %v1499, 0
        %v2413 = vsel %vm794, %v1500, 0
        %v2416 = vsel %vm794, %v1501, 0
        %v2419 = vsel %vm794, %v1502, 0
        %v2422 = vsel %vm794, %v1503, 0
        %v2425 = vsel %vm794, %v1504, 0
        %v2428 = vsel %vm794, %v1505, 0
        %v2431 = vsel %vm794, %v1506, 0
        %v2434 = vsel %vm794, %v1507, 0
        %v2437 = vsel %vm794, %v1508, 0
        %v2440 = vsel %vm794, %v1509, 0
        %v2443 = vsel %vm794, %v1510, 0
        %v2446 = vsel %vm794, %v1511, 0
        %v2449 = vsel %vm794, %v1512, 0
        %v2452 = vsel %vm794, %v1513, 0
        %v2455 = vsel %vm794, %v1514, 0
        %v2458 = vsel %vm794, %v1515, 0
        %v2461 = vsel %vm794, %v1516, 0
        %v2464 = vsel %vm794, %v1517, 0
        %v2467 = vsel %vm794, %v1518, 0
        %v2470 = vsel %vm794, %v1519, 0
        %v2473 = vsel %vm794, %v1520, 0
        %v2476 = vsel %vm794, %v1521, 0
        %v2479 = vsel %vm794, %v1522, 0
        %v2482 = vsel %vm794, %v1523, 0
        %v2485 = vsel %vm794, %v1524, 0
        %v2488 = vsel %vm794, %v1525, 0
        %v2491 = vsel %vm794, %v1526, 0
        %v2494 = vsel %vm794, %v1527, 0
        %v2497 = vsel %vm794, %v1528, 0
        %v2500 = vsel %vm794, %v1529, 0
        %v2503 = vsel %vm794, %v1530, 0
        %v2506 = vsel %vm794, %v1531, 0
        %v2509 = vsel %vm794, %v1532, 0
        %v2512 = vsel %vm794, %v1533, 0
        %v2515 = vsel %vm794, %v1534, 0
        %v2518 = vsel %vm794, %v1535, 0
        %v2521 = vsel %vm794, %v1536, 0
        %v2524 = vsel %vm794, %v1537, 0
        %v2527 = vsel %vm794, %v1538, 0
        %v2530 = vsel %vm794, %v1539, 0
        %v2533 = vsel %vm794, %v1540, 0
        %v2536 = vsel %vm794, %v1541, 0
        %v2539 = vsel %vm794, %v1542, 0
        %v2542 = vsel %vm794, %v1543, 0
        %v2545 = vsel %vm794, %v1544, 0
        %v2548 = vsel %vm794, %v1545, 0
        %v2551 = vsel %vm794, %v1546, 0
        %v2554 = vsel %vm794, %v1547, 0
        %v2557 = vsel %vm794, %v1548, 0
        %v2560 = vsel %vm794, %v1549, 0
        %v2563 = vsel %vm794, %v1550, 0
        %v2566 = vsel %vm794, %v1551, 0
        %v2569 = vsel %vm794, %v1552, 0
        %v2572 = vsel %vm794, %v1553, 0
        %v2575 = vsel %vm794, %v1554, 0
        %v2578 = vsel %vm794, %v1555, 0
        %v2581 = vsel %vm794, %v1556, 0
        %v2584 = vsel %vm794, %v1557, 0
        %v2587 = vsel %vm794, %v1558, 0
        %v2590 = vsel %vm794, %v1559, 0
        %v2593 = vsel %vm794, %v1560, 0
        %v2596 = vsel %vm794, %v1561, 0
        %v2599 = vsel %vm794, %v1562, 0
        %v2602 = vsel %vm794, %v1563, 0
        %v2605 = vsel %vm794, %v1564, 0
        %v2608 = vsel %vm794, %v1565, 0
        %v2611 = vsel %vm794, %v1566, 0
        %v2614 = vsel %vm794, %v1567, 0
        %v2617 = vsel %vm794, %v1568, 0
        %v2620 = vsel %vm794, %v1569, 0
        %v2623 = vsel %vm794, %v1570, 0
        %v2626 = vsel %vm794, %v1571, 0
        %v2629 = vsel %vm794, %v1572, 0
        %v2632 = vsel %vm794, %v1573, 0
        %v2635 = vsel %vm794, %v1574, 0
        %v2638 = vsel %vm794, %v1575, 0
        %v2641 = vsel %vm794, %v1576, 0
        %v2644 = vsel %vm794, %v1577, 0
        %v2647 = vsel %vm794, %v1578, 0
        %v2650 = vsel %vm794, %v1579, 0
        %v2653 = vsel %vm794, %v1580, 0
        %v2656 = vsel %vm794, %v1581, 0
        %v2659 = vsel %vm794, %v1582, 0
        %v2662 = vsel %vm794, %v1583, 0
        %v2665 = vsel %vm794, %v1584, 0
        %2667 = vmatprep.subr.mxu0 0.0
        %2668 = vmatpush1.msra.mxu0 %v1585
        %2669 = vmatprep.subr.mxu0 0.0
        %2670 = vmatpush1.msra.mxu0 %v1586
        %2671 = vmatprep.subr.mxu0 0.0
        %2672 = vmatpush1.msra.mxu0 0.0
        %2673 = vmatprep.subr.mxu0 0.0
        %2674 = vmatpush1.msra.mxu0 0.0
        %2675 = vmatprep.subr.mxu0 0.0
        %2676 = vmatpush1.msra.mxu0 0.0
        %2677 = vmatprep.subr.mxu0 0.0
        %2678 = vmatpush1.msra.mxu0 0.0
        %2679 = vmatprep.subr.mxu0 0.0
        %2680 = vmatpush1.msra.mxu0 0.0
        %2681 = vmatprep.subr.mxu0 0.0
        %2682 = vmatpush1.msra.mxu0 0.0
        %2683 = vmatprep.subr.mxu0 0.0
        %2684 = vmatpush1.msra.mxu0 0.0
        %2685 = vmatprep.subr.mxu0 0.0
        %2686 = vmatpush1.msra.mxu0 0.0
        %2687 = vmatprep.subr.mxu0 0.0
        %2688 = vmatpush1.msra.mxu0 0.0
        %2689 = vmatprep.subr.mxu0 0.0
        %2690 = vmatpush1.msra.mxu0 0.0
        %2691 = vmatprep.subr.mxu0 0.0
        %2692 = vmatpush1.msra.mxu0 0.0
        %2693 = vmatprep.subr.mxu0 0.0
        %2694 = vmatpush1.msra.mxu0 0.0
        %2695 = vmatprep.subr.mxu0 0.0
        %2696 = vmatpush1.msra.mxu0 0.0
        %2697 = vmatprep.subr.mxu0 0.0
        %2698 = vmatpush1.msra.mxu0 0.0
        %2699 = vmatprep.subr.mxu0 0.0
        %2700 = vmatpush1.msra.mxu0 0.0
        %2701 = vmatprep.subr.mxu0 0.0
        %2702 = vmatpush1.msra.mxu0 0.0
        %2703 = vmatprep.subr.mxu0 0.0
        %2704 = vmatpush1.msra.mxu0 0.0
        %2705 = vmatprep.subr.mxu0 0.0
        %2706 = vmatpush1.msra.mxu0 0.0
        %2707 = vmatprep.subr.mxu0 0.0
        %2708 = vmatpush1.msra.mxu0 0.0
        %2709 = vmatprep.subr.mxu0 0.0
        %2710 = vmatpush1.msra.mxu0 0.0
        %2711 = vmatprep.subr.mxu0 0.0
        %2712 = vmatpush1.msra.mxu0 0.0
        %2713 = vmatprep.subr.mxu0 0.0
        %2714 = vmatpush1.msra.mxu0 0.0
        %2715 = vmatprep.subr.mxu0 0.0
        %2716 = vmatpush1.msra.mxu0 0.0
        %2717 = vmatprep.subr.mxu0 0.0
        %2718 = vmatpush1.msra.mxu0 0.0
        %2719 = vmatprep.subr.mxu0 0.0
        %2720 = vmatpush1.msra.mxu0 0.0
        %2721 = vmatprep.subr.mxu0 0.0
        %2722 = vmatpush1.msra.mxu0 0.0
        %2723 = vmatprep.subr.mxu0 0.0
        %2724 = vmatpush1.msra.mxu0 0.0
        %2725 = vmatprep.subr.mxu0 0.0
        %2726 = vmatpush1.msra.mxu0 0.0
        %2727 = vmatprep.subr.mxu0 0.0
        %2728 = vmatpush1.msra.mxu0 0.0
        %2729 = vmatprep.subr.mxu0 0.0
        %2730 = vmatpush1.msra.mxu0 0.0
        %2731 = vmatprep.mubr.f32.mxu0 0.0
        %2732 = vmatmul.mubr.f32.gmra.mrb[0].mxu0 %v1588
        %v2733 = vpop.f32.mrb[0].mxu0
        %v2734 = vadd.f32 0.0, %v2733
        %v2735 = vpop.f32.mrb[0].mxu0
        %2736 = vmatprep.mubr.f32.mxu0 0.0
        %2737 = vmatmul.mubr.f32.gmra.mrb[0].mxu0 %v1591
        %v2738 = vpop.f32.mrb[0].mxu0
        %v2739 = vadd.f32 0.0, %v2738
        %v2740 = vpop.f32.mrb[0].mxu0
        %2741 = vmatprep.mubr.f32.mxu0 0.0
        %2742 = vmatmul.mubr.f32.gmra.mrb[0].mxu0 %v1594
        %v2743 = vpop.f32.mrb[0].mxu0
        %v2744 = vadd.f32 0.0, %v2743
        %v2745 = vpop.f32.mrb[0].mxu0
        %2746 = vmatprep.mubr.f32.mxu0 0.0
        %2747 = vmatmul.mubr.f32.gmra.mrb[0].mxu0 %v1597
        %v2748 = vpop.f32.mrb[0].mxu0
        %v2749 = vadd.f32 0.0, %v2748
        %v2750 = vpop.f32.mrb[0].mxu0
        %2751 = vmatprep.mubr.f32.mxu0 0.0
        %2752 = vmatmul.mubr.f32.gmra.mrb[0].mxu0 %v1600
        %v2753 = vpop.f32.mrb[0].mxu0
        %v2754 = vadd.f32 0.0, %v2753
        %v2755 = vpop.f32.mrb[0].mxu0
        %2756 = vmatprep.mubr.f32.mxu0 0.0
        %2757 = vmatmul.mubr.f32.gmra.mrb[0].mxu0 %v1603
        %v2758 = vpop.f32.mrb[0].mxu0
        %v2759 = vadd.f32 0.0, %v2758
        %v2760 = vpop.f32.mrb[0].mxu0
        %2761 = vmatprep.mubr.f32.mxu0 0.0
        %2762 = vmatmul.mubr.f32.gmra.mrb[0].mxu0 %v1606
        %v2763 = vpop.f32.mrb[0].mxu0
        %v2764 = vadd.f32 0.0, %v2763
        %v2765 = vpop.f32.mrb[0].mxu0
        %2766 = vmatprep.mubr.f32.mxu0 0.0
        %2767 = vmatmul.mubr.f32.gmra.mrb[0].mxu0 %v1609
        %v2768 = vpop.f32.mrb[0].mxu0
        %v2769 = vadd.f32 0.0, %v2768
        %v2770 = vpop.f32.mrb[0].mxu0
        %2771 = vmatprep.mubr.f32.mxu0 0.0
        %2772 = vmatmul.mubr.f32.gmra.mrb[0].mxu0 %v1612
        %v2773 = vpop.f32.mrb[0].mxu0
        %v2774 = vadd.f32 0.0, %v2773
        %v2775 = vpop.f32.mrb[0].mxu0
        %2776 = vmatprep.mubr.f32.mxu0 0.0
        %2777 = vmatmul.mubr.f32.gmra.mrb[0].mxu0 %v1615
        %v2778 = vpop.f32.mrb[0].mxu0
        %v2779 = vadd.f32 0.0, %v2778
        %v2780 = vpop.f32.mrb[0].mxu0
        %2781 = vmatprep.mubr.f32.mxu0 0.0
        %2782 = vmatmul.mubr.f32.gmra.mrb[0].mxu0 %v1618
        %v2783 = vpop.f32.mrb[0].mxu0
        %v2784 = vadd.f32 0.0, %v2783
        %v2785 = vpop.f32.mrb[0].mxu0
        %2786 = vmatprep.mubr.f32.mxu0 0.0
        %2787 = vmatmul.mubr.f32.gmra.mrb[0].mxu0 %v1621
        %v2788 = vpop.f32.mrb[0].mxu0
        %v2789 = vadd.f32 0.0, %v2788
        %v2790 = vpop.f32.mrb[0].mxu0
        %2791 = vmatprep.mubr.f32.mxu0 0.0
        %2792 = vmatmul.mubr.f32.gmra.mrb[0].mxu0 %v1624
        %v2793 = vpop.f32.mrb[0].mxu0
        %v2794 = vadd.f32 0.0, %v2793
        %v2795 = vpop.f32.mrb[0].mxu0
        %2796 = vmatprep.mubr.f32.mxu0 0.0
        %2797 = vmatmul.mubr.f32.gmra.mrb[0].mxu0 %v1627
        %v2798 = vpop.f32.mrb[0].mxu0
        %v2799 = vadd.f32 0.0, %v2798
        %v2800 = vpop.f32.mrb[0].mxu0
        %2801 = vmatprep.mubr.f32.mxu0 0.0
        %2802 = vmatmul.mubr.f32.gmra.mrb[0].mxu0 %v1630
        %v2803 = vpop.f32.mrb[0].mxu0
        %v2804 = vadd.f32 0.0, %v2803
        %v2805 = vpop.f32.mrb[0].mxu0
        %2806 = vmatprep.mubr.f32.mxu0 0.0
        %2807 = vmatmul.mubr.f32.gmra.mrb[0].mxu0 %v1633
        %v2808 = vpop.f32.mrb[0].mxu0
        %v2809 = vadd.f32 0.0, %v2808
        %v2810 = vpop.f32.mrb[0].mxu0
        %2811 = vmatprep.mubr.f32.mxu0 0.0
        %2812 = vmatmul.mubr.f32.gmra.mrb[0].mxu0 %v1636
        %v2813 = vpop.f32.mrb[0].mxu0
        %v2814 = vadd.f32 0.0, %v2813
        %v2815 = vpop.f32.mrb[0].mxu0
        %2816 = vmatprep.mubr.f32.mxu0 0.0
        %2817 = vmatmul.mubr.f32.gmra.mrb[0].mxu0 %v1639
        %v2818 = vpop.f32.mrb[0].mxu0
        %v2819 = vadd.f32 0.0, %v2818
        %v2820 = vpop.f32.mrb[0].mxu0
        %2821 = vmatprep.mubr.f32.mxu0 0.0
        %2822 = vmatmul.mubr.f32.gmra.mrb[0].mxu0 %v1642
        %v2823 = vpop.f32.mrb[0].mxu0
        %v2824 = vadd.f32 0.0, %v2823
        %v2825 = vpop.f32.mrb[0].mxu0
        %2826 = vmatprep.mubr.f32.mxu0 0.0
        %2827 = vmatmul.mubr.f32.gmra.mrb[0].mxu0 %v1645
        %v2828 = vpop.f32.mrb[0].mxu0
        %v2829 = vadd.f32 0.0, %v2828
        %v2830 = vpop.f32.mrb[0].mxu0
        %2831 = vmatprep.mubr.f32.mxu0 0.0
        %2832 = vmatmul.mubr.f32.gmra.mrb[0].mxu0 %v1648
        %v2833 = vpop.f32.mrb[0].mxu0
        %v2834 = vadd.f32 0.0, %v2833
        %v2835 = vpop.f32.mrb[0].mxu0
        %2836 = vmatprep.mubr.f32.mxu0 0.0
        %2837 = vmatmul.mubr.f32.gmra.mrb[0].mxu0 %v1651
        %v2838 = vpop.f32.mrb[0].mxu0
        %v2839 = vadd.f32 0.0, %v2838
        %v2840 = vpop.f32.mrb[0].mxu0
        %2841 = vmatprep.mubr.f32.mxu0 0.0
        %2842 = vmatmul.mubr.f32.gmra.mrb[0].mxu0 %v1654
        %v2843 = vpop.f32.mrb[0].mxu0
        %v2844 = vadd.f32 0.0, %v2843
        %v2845 = vpop.f32.mrb[0].mxu0
        %2846 = vmatprep.mubr.f32.mxu0 0.0
        %2847 = vmatmul.mubr.f32.gmra.mrb[0].mxu0 %v1657
        %v2848 = vpop.f32.mrb[0].mxu0
        %v2849 = vadd.f32 0.0, %v2848
        %v2850 = vpop.f32.mrb[0].mxu0
        %2851 = vmatprep.mubr.f32.mxu0 0.0
        %2852 = vmatmul.mubr.f32.gmra.mrb[0].mxu0 %v1660
        %v2853 = vpop.f32.mrb[0].mxu0
        %v2854 = vadd.f32 0.0, %v2853
        %v2855 = vpop.f32.mrb[0].mxu0
        %2856 = vmatprep.mubr.f32.mxu0 0.0
        %2857 = vmatmul.mubr.f32.gmra.mrb[0].mxu0 %v1663
        %v2858 = vpop.f32.mrb[0].mxu0
        %v2859 = vadd.f32 0.0, %v2858
        %v2860 = vpop.f32.mrb[0].mxu0
        %2861 = vmatprep.mubr.f32.mxu0 0.0
        %2862 = vmatmul.mubr.f32.gmra.mrb[0].mxu0 %v1666
        %v2863 = vpop.f32.mrb[0].mxu0
        %v2864 = vadd.f32 0.0, %v2863
        %v2865 = vpop.f32.mrb[0].mxu0
        %2866 = vmatprep.mubr.f32.mxu0 0.0
        %2867 = vmatmul.mubr.f32.gmra.mrb[0].mxu0 %v1669
        %v2868 = vpop.f32.mrb[0].mxu0
        %v2869 = vadd.f32 0.0, %v2868
        %v2870 = vpop.f32.mrb[0].mxu0
        %2871 = vmatprep.mubr.f32.mxu0 0.0
        %2872 = vmatmul.mubr.f32.gmra.mrb[0].mxu0 %v1672
        %v2873 = vpop.f32.mrb[0].mxu0
        %v2874 = vadd.f32 0.0, %v2873
        %v2875 = vpop.f32.mrb[0].mxu0
        %2876 = vmatprep.mubr.f32.mxu0 0.0
        %2877 = vmatmul.mubr.f32.gmra.mrb[0].mxu0 %v1675
        %v2878 = vpop.f32.mrb[0].mxu0
        %v2879 = vadd.f32 0.0, %v2878
        %v2880 = vpop.f32.mrb[0].mxu0
        %2881 = vmatprep.mubr.f32.mxu0 0.0
        %2882 = vmatmul.mubr.f32.gmra.mrb[0].mxu0 %v1678
        %v2883 = vpop.f32.mrb[0].mxu0
        %v2884 = vadd.f32 0.0, %v2883
        %v2885 = vpop.f32.mrb[0].mxu0
        %2886 = vmatprep.mubr.f32.mxu0 0.0
        %2887 = vmatmul.mubr.f32.gmra.mrb[0].mxu0 %v1681
        %v2888 = vpop.f32.mrb[0].mxu0
        %v2889 = vadd.f32 0.0, %v2888
        %v2890 = vpop.f32.mrb[0].mxu0
        %2891 = vmatprep.mubr.f32.mxu0 0.0
        %2892 = vmatmul.mubr.f32.gmra.mrb[0].mxu0 %v1684
        %v2893 = vpop.f32.mrb[0].mxu0
        %v2894 = vadd.f32 0.0, %v2893
        %v2895 = vpop.f32.mrb[0].mxu0
        %2896 = vmatprep.mubr.f32.mxu0 0.0
        %2897 = vmatmul.mubr.f32.gmra.mrb[0].mxu0 %v1687
        %v2898 = vpop.f32.mrb[0].mxu0
        %v2899 = vadd.f32 0.0, %v2898
        %v2900 = vpop.f32.mrb[0].mxu0
        %2901 = vmatprep.mubr.f32.mxu0 0.0
        %2902 = vmatmul.mubr.f32.gmra.mrb[0].mxu0 %v1690
        %v2903 = vpop.f32.mrb[0].mxu0
        %v2904 = vadd.f32 0.0, %v2903
        %v2905 = vpop.f32.mrb[0].mxu0
        %2906 = vmatprep.mubr.f32.mxu0 0.0
        %2907 = vmatmul.mubr.f32.gmra.mrb[0].mxu0 %v1693
        %v2908 = vpop.f32.mrb[0].mxu0
        %v2909 = vadd.f32 0.0, %v2908
        %v2910 = vpop.f32.mrb[0].mxu0
        %2911 = vmatprep.mubr.f32.mxu0 0.0
        %2912 = vmatmul.mubr.f32.gmra.mrb[0].mxu0 %v1696
        %v2913 = vpop.f32.mrb[0].mxu0
        %v2914 = vadd.f32 0.0, %v2913
        %v2915 = vpop.f32.mrb[0].mxu0
        %2916 = vmatprep.mubr.f32.mxu0 0.0
        %2917 = vmatmul.mubr.f32.gmra.mrb[0].mxu0 %v1699
        %v2918 = vpop.f32.mrb[0].mxu0
        %v2919 = vadd.f32 0.0, %v2918
        %v2920 = vpop.f32.mrb[0].mxu0
        %2921 = vmatprep.mubr.f32.mxu0 0.0
        %2922 = vmatmul.mubr.f32.gmra.mrb[0].mxu0 %v1702
        %v2923 = vpop.f32.mrb[0].mxu0
        %v2924 = vadd.f32 0.0, %v2923
        %v2925 = vpop.f32.mrb[0].mxu0
        %2926 = vmatprep.mubr.f32.mxu0 0.0
        %2927 = vmatmul.mubr.f32.gmra.mrb[0].mxu0 %v1705
        %v2928 = vpop.f32.mrb[0].mxu0
        %v2929 = vadd.f32 0.0, %v2928
        %v2930 = vpop.f32.mrb[0].mxu0
        %2931 = vmatprep.mubr.f32.mxu0 0.0
        %2932 = vmatmul.mubr.f32.gmra.mrb[0].mxu0 %v1708
        %v2933 = vpop.f32.mrb[0].mxu0
        %v2934 = vadd.f32 0.0, %v2933
        %v2935 = vpop.f32.mrb[0].mxu0
        %2936 = vmatprep.mubr.f32.mxu0 0.0
        %2937 = vmatmul.mubr.f32.gmra.mrb[0].mxu0 %v1711
        %v2938 = vpop.f32.mrb[0].mxu0
        %v2939 = vadd.f32 0.0, %v2938
        %v2940 = vpop.f32.mrb[0].mxu0
        %2941 = vmatprep.mubr.f32.mxu0 0.0
        %2942 = vmatmul.mubr.f32.gmra.mrb[0].mxu0 %v1714
        %v2943 = vpop.f32.mrb[0].mxu0
        %v2944 = vadd.f32 0.0, %v2943
        %v2945 = vpop.f32.mrb[0].mxu0
        %2946 = vmatprep.mubr.f32.mxu0 0.0
        %2947 = vmatmul.mubr.f32.gmra.mrb[0].mxu0 %v1717
        %v2948 = vpop.f32.mrb[0].mxu0
        %v2949 = vadd.f32 0.0, %v2948
        %v2950 = vpop.f32.mrb[0].mxu0
        %2951 = vmatprep.mubr.f32.mxu0 0.0
        %2952 = vmatmul.mubr.f32.gmra.mrb[0].mxu0 %v1720
        %v2953 = vpop.f32.mrb[0].mxu0
        %v2954 = vadd.f32 0.0, %v2953
        %v2955 = vpop.f32.mrb[0].mxu0
        %2956 = vmatprep.mubr.f32.mxu0 0.0
        %2957 = vmatmul.mubr.f32.gmra.mrb[0].mxu0 %v1723
        %v2958 = vpop.f32.mrb[0].mxu0
        %v2959 = vadd.f32 0.0, %v2958
        %v2960 = vpop.f32.mrb[0].mxu0
        %2961 = vmatprep.mubr.f32.mxu0 0.0
        %2962 = vmatmul.mubr.f32.gmra.mrb[0].mxu0 %v1726
        %v2963 = vpop.f32.mrb[0].mxu0
        %v2964 = vadd.f32 0.0, %v2963
        %v2965 = vpop.f32.mrb[0].mxu0
        %2966 = vmatprep.mubr.f32.mxu0 0.0
        %2967 = vmatmul.mubr.f32.gmra.mrb[0].mxu0 %v1729
        %v2968 = vpop.f32.mrb[0].mxu0
        %v2969 = vadd.f32 0.0, %v2968
        %v2970 = vpop.f32.mrb[0].mxu0
        %2971 = vmatprep.mubr.f32.mxu0 0.0
        %2972 = vmatmul.mubr.f32.gmra.mrb[0].mxu0 %v1732
        %v2973 = vpop.f32.mrb[0].mxu0
        %v2974 = vadd.f32 0.0, %v2973
        %v2975 = vpop.f32.mrb[0].mxu0
        %2976 = vmatprep.mubr.f32.mxu0 0.0
        %2977 = vmatmul.mubr.f32.gmra.mrb[0].mxu0 %v1735
        %v2978 = vpop.f32.mrb[0].mxu0
        %v2979 = vadd.f32 0.0, %v2978
        %v2980 = vpop.f32.mrb[0].mxu0
        %2981 = vmatprep.mubr.f32.mxu0 0.0
        %2982 = vmatmul.mubr.f32.gmra.mrb[0].mxu0 %v1738
        %v2983 = vpop.f32.mrb[0].mxu0
        %v2984 = vadd.f32 0.0, %v2983
        %v2985 = vpop.f32.mrb[0].mxu0
        %2986 = vmatprep.mubr.f32.mxu0 0.0
        %2987 = vmatmul.mubr.f32.gmra.mrb[0].mxu0 %v1741
        %v2988 = vpop.f32.mrb[0].mxu0
        %v2989 = vadd.f32 0.0, %v2988
        %v2990 = vpop.f32.mrb[0].mxu0
        %2991 = vmatprep.mubr.f32.mxu0 0.0
        %2992 = vmatmul.mubr.f32.gmra.mrb[0].mxu0 %v1744
        %v2993 = vpop.f32.mrb[0].mxu0
        %v2994 = vadd.f32 0.0, %v2993
        %v2995 = vpop.f32.mrb[0].mxu0
        %2996 = vmatprep.mubr.f32.mxu0 0.0
        %2997 = vmatmul.mubr.f32.gmra.mrb[0].mxu0 %v1747
        %v2998 = vpop.f32.mrb[0].mxu0
        %v2999 = vadd.f32 0.0, %v2998
        %v3000 = vpop.f32.mrb[0].mxu0
        %3001 = vmatprep.mubr.f32.mxu0 0.0
        %3002 = vmatmul.mubr.f32.gmra.mrb[0].mxu0 %v1750
        %v3003 = vpop.f32.mrb[0].mxu0
        %v3004 = vadd.f32 0.0, %v3003
        %v3005 = vpop.f32.mrb[0].mxu0
        %3006 = vmatprep.mubr.f32.mxu0 0.0
        %3007 = vmatmul.mubr.f32.gmra.mrb[0].mxu0 %v1753
        %v3008 = vpop.f32.mrb[0].mxu0
        %v3009 = vadd.f32 0.0, %v3008
        %v3010 = vpop.f32.mrb[0].mxu0
        %3011 = vmatprep.mubr.f32.mxu0 0.0
        %3012 = vmatmul.mubr.f32.gmra.mrb[0].mxu0 %v1756
        %v3013 = vpop.f32.mrb[0].mxu0
        %v3014 = vadd.f32 0.0, %v3013
        %v3015 = vpop.f32.mrb[0].mxu0
        %3016 = vmatprep.mubr.f32.mxu0 0.0
        %3017 = vmatmul.mubr.f32.gmra.mrb[0].mxu0 %v1759
        %v3018 = vpop.f32.mrb[0].mxu0
        %v3019 = vadd.f32 0.0, %v3018
        %v3020 = vpop.f32.mrb[0].mxu0
        %3021 = vmatprep.mubr.f32.mxu0 0.0
        %3022 = vmatmul.mubr.f32.gmra.mrb[0].mxu0 %v1762
        %v3023 = vpop.f32.mrb[0].mxu0
        %v3024 = vadd.f32 0.0, %v3023
        %v3025 = vpop.f32.mrb[0].mxu0
        %3026 = vmatprep.mubr.f32.mxu0 0.0
        %3027 = vmatmul.mubr.f32.gmra.mrb[0].mxu0 %v1765
        %v3028 = vpop.f32.mrb[0].mxu0
        %v3029 = vadd.f32 0.0, %v3028
        %v3030 = vpop.f32.mrb[0].mxu0
        %3031 = vmatprep.mubr.f32.mxu0 0.0
        %3032 = vmatmul.mubr.f32.gmra.mrb[0].mxu0 %v1768
        %v3033 = vpop.f32.mrb[0].mxu0
        %v3034 = vadd.f32 0.0, %v3033
        %v3035 = vpop.f32.mrb[0].mxu0
        %3036 = vmatprep.mubr.f32.mxu0 0.0
        %3037 = vmatmul.mubr.f32.gmra.mrb[0].mxu0 %v1771
        %v3038 = vpop.f32.mrb[0].mxu0
        %v3039 = vadd.f32 0.0, %v3038
        %v3040 = vpop.f32.mrb[0].mxu0
        %3041 = vmatprep.mubr.f32.mxu0 0.0
        %3042 = vmatmul.mubr.f32.gmra.mrb[0].mxu0 %v1774
        %v3043 = vpop.f32.mrb[0].mxu0
        %v3044 = vadd.f32 0.0, %v3043
        %v3045 = vpop.f32.mrb[0].mxu0
        %3046 = vmatprep.mubr.f32.mxu0 0.0
        %3047 = vmatmul.mubr.f32.gmra.mrb[0].mxu0 %v1777
        %v3048 = vpop.f32.mrb[0].mxu0
        %v3049 = vadd.f32 0.0, %v3048
        %v3050 = vpop.f32.mrb[0].mxu0
        %3051 = vmatprep.mubr.f32.mxu0 0.0
        %3052 = vmatmul.mubr.f32.gmra.mrb[0].mxu0 %v1780
        %v3053 = vpop.f32.mrb[0].mxu0
        %v3054 = vadd.f32 0.0, %v3053
        %v3055 = vpop.f32.mrb[0].mxu0
        %3056 = vmatprep.mubr.f32.mxu0 0.0
        %3057 = vmatmul.mubr.f32.gmra.mrb[0].mxu0 %v1783
        %v3058 = vpop.f32.mrb[0].mxu0
        %v3059 = vadd.f32 0.0, %v3058
        %v3060 = vpop.f32.mrb[0].mxu0
        %3061 = vmatprep.mubr.f32.mxu0 0.0
        %3062 = vmatmul.mubr.f32.gmra.mrb[0].mxu0 %v1786
        %v3063 = vpop.f32.mrb[0].mxu0
        %v3064 = vadd.f32 0.0, %v3063
        %v3065 = vpop.f32.mrb[0].mxu0
        %3066 = vmatprep.mubr.f32.mxu0 0.0
        %3067 = vmatmul.mubr.f32.gmra.mrb[0].mxu0 %v1789
        %v3068 = vpop.f32.mrb[0].mxu0
        %v3069 = vadd.f32 0.0, %v3068
        %v3070 = vpop.f32.mrb[0].mxu0
        %3071 = vmatprep.mubr.f32.mxu0 0.0
        %3072 = vmatmul.mubr.f32.gmra.mrb[0].mxu0 %v1792
        %v3073 = vpop.f32.mrb[0].mxu0
        %v3074 = vadd.f32 0.0, %v3073
        %v3075 = vpop.f32.mrb[0].mxu0
        %3076 = vmatprep.mubr.f32.mxu0 0.0
        %3077 = vmatmul.mubr.f32.gmra.mrb[0].mxu0 %v1795
        %v3078 = vpop.f32.mrb[0].mxu0
        %v3079 = vadd.f32 0.0, %v3078
        %v3080 = vpop.f32.mrb[0].mxu0
        %3081 = vmatprep.mubr.f32.mxu0 0.0
        %3082 = vmatmul.mubr.f32.gmra.mrb[0].mxu0 %v1798
        %v3083 = vpop.f32.mrb[0].mxu0
        %v3084 = vadd.f32 0.0, %v3083
        %v3085 = vpop.f32.mrb[0].mxu0
        %3086 = vmatprep.mubr.f32.mxu0 0.0
        %3087 = vmatmul.mubr.f32.gmra.mrb[0].mxu0 %v1801
        %v3088 = vpop.f32.mrb[0].mxu0
        %v3089 = vadd.f32 0.0, %v3088
        %v3090 = vpop.f32.mrb[0].mxu0
        %3091 = vmatprep.mubr.f32.mxu0 0.0
        %3092 = vmatmul.mubr.f32.gmra.mrb[0].mxu0 %v1804
        %v3093 = vpop.f32.mrb[0].mxu0
        %v3094 = vadd.f32 0.0, %v3093
        %v3095 = vpop.f32.mrb[0].mxu0
        %3096 = vmatprep.mubr.f32.mxu0 0.0
        %3097 = vmatmul.mubr.f32.gmra.mrb[0].mxu0 %v1807
        %v3098 = vpop.f32.mrb[0].mxu0
        %v3099 = vadd.f32 0.0, %v3098
        %v3100 = vpop.f32.mrb[0].mxu0
        %3101 = vmatprep.mubr.f32.mxu0 0.0
        %3102 = vmatmul.mubr.f32.gmra.mrb[0].mxu0 %v1810
        %v3103 = vpop.f32.mrb[0].mxu0
        %v3104 = vadd.f32 0.0, %v3103
        %v3105 = vpop.f32.mrb[0].mxu0
        %3106 = vmatprep.mubr.f32.mxu0 0.0
        %3107 = vmatmul.mubr.f32.gmra.mrb[0].mxu0 %v1813
        %v3108 = vpop.f32.mrb[0].mxu0
        %v3109 = vadd.f32 0.0, %v3108
        %v3110 = vpop.f32.mrb[0].mxu0
        %3111 = vmatprep.mubr.f32.mxu0 0.0
        %3112 = vmatmul.mubr.f32.gmra.mrb[0].mxu0 %v1816
        %v3113 = vpop.f32.mrb[0].mxu0
        %v3114 = vadd.f32 0.0, %v3113
        %v3115 = vpop.f32.mrb[0].mxu0
        %3116 = vmatprep.mubr.f32.mxu0 0.0
        %3117 = vmatmul.mubr.f32.gmra.mrb[0].mxu0 %v1819
        %v3118 = vpop.f32.mrb[0].mxu0
        %v3119 = vadd.f32 0.0, %v3118
        %v3120 = vpop.f32.mrb[0].mxu0
        %3121 = vmatprep.mubr.f32.mxu0 0.0
        %3122 = vmatmul.mubr.f32.gmra.mrb[0].mxu0 %v1822
        %v3123 = vpop.f32.mrb[0].mxu0
        %v3124 = vadd.f32 0.0, %v3123
        %v3125 = vpop.f32.mrb[0].mxu0
        %3126 = vmatprep.mubr.f32.mxu0 0.0
        %3127 = vmatmul.mubr.f32.gmra.mrb[0].mxu0 %v1825
        %v3128 = vpop.f32.mrb[0].mxu0
        %v3129 = vadd.f32 0.0, %v3128
        %v3130 = vpop.f32.mrb[0].mxu0
        %3131 = vmatprep.mubr.f32.mxu0 0.0
        %3132 = vmatmul.mubr.f32.gmra.mrb[0].mxu0 %v1828
        %v3133 = vpop.f32.mrb[0].mxu0
        %v3134 = vadd.f32 0.0, %v3133
        %v3135 = vpop.f32.mrb[0].mxu0
        %3136 = vmatprep.mubr.f32.mxu0 0.0
        %3137 = vmatmul.mubr.f32.gmra.mrb[0].mxu0 %v1831
        %v3138 = vpop.f32.mrb[0].mxu0
        %v3139 = vadd.f32 0.0, %v3138
        %v3140 = vpop.f32.mrb[0].mxu0
        %3141 = vmatprep.mubr.f32.mxu0 0.0
        %3142 = vmatmul.mubr.f32.gmra.mrb[0].mxu0 %v1834
        %v3143 = vpop.f32.mrb[0].mxu0
        %v3144 = vadd.f32 0.0, %v3143
        %v3145 = vpop.f32.mrb[0].mxu0
        %3146 = vmatprep.mubr.f32.mxu0 0.0
        %3147 = vmatmul.mubr.f32.gmra.mrb[0].mxu0 %v1837
        %v3148 = vpop.f32.mrb[0].mxu0
        %v3149 = vadd.f32 0.0, %v3148
        %v3150 = vpop.f32.mrb[0].mxu0
        %3151 = vmatprep.mubr.f32.mxu0 0.0
        %3152 = vmatmul.mubr.f32.gmra.mrb[0].mxu0 %v1840
        %v3153 = vpop.f32.mrb[0].mxu0
        %v3154 = vadd.f32 0.0, %v3153
        %v3155 = vpop.f32.mrb[0].mxu0
        %3156 = vmatprep.mubr.f32.mxu0 0.0
        %3157 = vmatmul.mubr.f32.gmra.mrb[0].mxu0 %v1843
        %v3158 = vpop.f32.mrb[0].mxu0
        %v3159 = vadd.f32 0.0, %v3158
        %v3160 = vpop.f32.mrb[0].mxu0
        %3161 = vmatprep.mubr.f32.mxu0 0.0
        %3162 = vmatmul.mubr.f32.gmra.mrb[0].mxu0 %v1846
        %v3163 = vpop.f32.mrb[0].mxu0
        %v3164 = vadd.f32 0.0, %v3163
        %v3165 = vpop.f32.mrb[0].mxu0
        %3166 = vmatprep.mubr.f32.mxu0 0.0
        %3167 = vmatmul.mubr.f32.gmra.mrb[0].mxu0 %v1849
        %v3168 = vpop.f32.mrb[0].mxu0
        %v3169 = vadd.f32 0.0, %v3168
        %v3170 = vpop.f32.mrb[0].mxu0
        %3171 = vmatprep.mubr.f32.mxu0 0.0
        %3172 = vmatmul.mubr.f32.gmra.mrb[0].mxu0 %v1852
        %v3173 = vpop.f32.mrb[0].mxu0
        %v3174 = vadd.f32 0.0, %v3173
        %v3175 = vpop.f32.mrb[0].mxu0
        %3176 = vmatprep.mubr.f32.mxu0 0.0
        %3177 = vmatmul.mubr.f32.gmra.mrb[0].mxu0 %v1855
        %v3178 = vpop.f32.mrb[0].mxu0
        %v3179 = vadd.f32 0.0, %v3178
        %v3180 = vpop.f32.mrb[0].mxu0
        %3181 = vmatprep.mubr.f32.mxu0 0.0
        %3182 = vmatmul.mubr.f32.gmra.mrb[0].mxu0 %v1858
        %v3183 = vpop.f32.mrb[0].mxu0
        %v3184 = vadd.f32 0.0, %v3183
        %v3185 = vpop.f32.mrb[0].mxu0
        %3186 = vmatprep.mubr.f32.mxu0 0.0
        %3187 = vmatmul.mubr.f32.gmra.mrb[0].mxu0 %v1861
        %v3188 = vpop.f32.mrb[0].mxu0
        %v3189 = vadd.f32 0.0, %v3188
        %v3190 = vpop.f32.mrb[0].mxu0
        %3191 = vmatprep.mubr.f32.mxu0 0.0
        %3192 = vmatmul.mubr.f32.gmra.mrb[0].mxu0 %v1864
        %v3193 = vpop.f32.mrb[0].mxu0
        %v3194 = vadd.f32 0.0, %v3193
        %v3195 = vpop.f32.mrb[0].mxu0
        %3196 = vmatprep.mubr.f32.mxu0 0.0
        %3197 = vmatmul.mubr.f32.gmra.mrb[0].mxu0 %v1867
        %v3198 = vpop.f32.mrb[0].mxu0
        %v3199 = vadd.f32 0.0, %v3198
        %v3200 = vpop.f32.mrb[0].mxu0
        %3201 = vmatprep.mubr.f32.mxu0 0.0
        %3202 = vmatmul.mubr.f32.gmra.mrb[0].mxu0 %v1870
        %v3203 = vpop.f32.mrb[0].mxu0
        %v3204 = vadd.f32 0.0, %v3203
        %v3205 = vpop.f32.mrb[0].mxu0
        %3206 = vmatprep.mubr.f32.mxu0 0.0
        %3207 = vmatmul.mubr.f32.gmra.mrb[0].mxu0 %v1873
        %v3208 = vpop.f32.mrb[0].mxu0
        %v3209 = vadd.f32 0.0, %v3208
        %v3210 = vpop.f32.mrb[0].mxu0
        %3211 = vmatprep.mubr.f32.mxu0 0.0
        %3212 = vmatmul.mubr.f32.gmra.mrb[0].mxu0 %v1876
        %v3213 = vpop.f32.mrb[0].mxu0
        %v3214 = vadd.f32 0.0, %v3213
        %v3215 = vpop.f32.mrb[0].mxu0
        %3216 = vmatprep.mubr.f32.mxu0 0.0
        %3217 = vmatmul.mubr.f32.gmra.mrb[0].mxu0 %v1879
        %v3218 = vpop.f32.mrb[0].mxu0
        %v3219 = vadd.f32 0.0, %v3218
        %v3220 = vpop.f32.mrb[0].mxu0
        %3221 = vmatprep.mubr.f32.mxu0 0.0
        %3222 = vmatmul.mubr.f32.gmra.mrb[0].mxu0 %v1882
        %v3223 = vpop.f32.mrb[0].mxu0
        %v3224 = vadd.f32 0.0, %v3223
        %v3225 = vpop.f32.mrb[0].mxu0
        %3226 = vmatprep.mubr.f32.mxu0 0.0
        %3227 = vmatmul.mubr.f32.gmra.mrb[0].mxu0 %v1885
        %v3228 = vpop.f32.mrb[0].mxu0
        %v3229 = vadd.f32 0.0, %v3228
        %v3230 = vpop.f32.mrb[0].mxu0
        %3231 = vmatprep.mubr.f32.mxu0 0.0
        %3232 = vmatmul.mubr.f32.gmra.mrb[0].mxu0 %v1888
        %v3233 = vpop.f32.mrb[0].mxu0
        %v3234 = vadd.f32 0.0, %v3233
        %v3235 = vpop.f32.mrb[0].mxu0
        %3236 = vmatprep.mubr.f32.mxu0 0.0
        %3237 = vmatmul.mubr.f32.gmra.mrb[0].mxu0 %v1891
        %v3238 = vpop.f32.mrb[0].mxu0
        %v3239 = vadd.f32 0.0, %v3238
        %v3240 = vpop.f32.mrb[0].mxu0
        %3241 = vmatprep.mubr.f32.mxu0 0.0
        %3242 = vmatmul.mubr.f32.gmra.mrb[0].mxu0 %v1894
        %v3243 = vpop.f32.mrb[0].mxu0
        %v3244 = vadd.f32 0.0, %v3243
        %v3245 = vpop.f32.mrb[0].mxu0
        %3246 = vmatprep.mubr.f32.mxu0 0.0
        %3247 = vmatmul.mubr.f32.gmra.mrb[0].mxu0 %v1897
        %v3248 = vpop.f32.mrb[0].mxu0
        %v3249 = vadd.f32 0.0, %v3248
        %v3250 = vpop.f32.mrb[0].mxu0
        %3251 = vmatprep.mubr.f32.mxu0 0.0
        %3252 = vmatmul.mubr.f32.gmra.mrb[0].mxu0 %v1900
        %v3253 = vpop.f32.mrb[0].mxu0
        %v3254 = vadd.f32 0.0, %v3253
        %v3255 = vpop.f32.mrb[0].mxu0
        %3256 = vmatprep.mubr.f32.mxu0 0.0
        %3257 = vmatmul.mubr.f32.gmra.mrb[0].mxu0 %v1903
        %v3258 = vpop.f32.mrb[0].mxu0
        %v3259 = vadd.f32 0.0, %v3258
        %v3260 = vpop.f32.mrb[0].mxu0
        %3261 = vmatprep.mubr.f32.mxu0 0.0
        %3262 = vmatmul.mubr.f32.gmra.mrb[0].mxu0 %v1906
        %v3263 = vpop.f32.mrb[0].mxu0
        %v3264 = vadd.f32 0.0, %v3263
        %v3265 = vpop.f32.mrb[0].mxu0
        %3266 = vmatprep.mubr.f32.mxu0 0.0
        %3267 = vmatmul.mubr.f32.gmra.mrb[0].mxu0 %v1909
        %v3268 = vpop.f32.mrb[0].mxu0
        %v3269 = vadd.f32 0.0, %v3268
        %v3270 = vpop.f32.mrb[0].mxu0
        %3271 = vmatprep.mubr.f32.mxu0 0.0
        %3272 = vmatmul.mubr.f32.gmra.mrb[0].mxu0 %v1912
        %v3273 = vpop.f32.mrb[0].mxu0
        %v3274 = vadd.f32 0.0, %v3273
        %v3275 = vpop.f32.mrb[0].mxu0
        %3276 = vmatprep.mubr.f32.mxu0 0.0
        %3277 = vmatmul.mubr.f32.gmra.mrb[0].mxu0 %v1915
        %v3278 = vpop.f32.mrb[0].mxu0
        %v3279 = vadd.f32 0.0, %v3278
        %v3280 = vpop.f32.mrb[0].mxu0
        %3281 = vmatprep.mubr.f32.mxu0 0.0
        %3282 = vmatmul.mubr.f32.gmra.mrb[0].mxu0 %v1918
        %v3283 = vpop.f32.mrb[0].mxu0
        %v3284 = vadd.f32 0.0, %v3283
        %v3285 = vpop.f32.mrb[0].mxu0
        %3286 = vmatprep.mubr.f32.mxu0 0.0
        %3287 = vmatmul.mubr.f32.gmra.mrb[0].mxu0 %v1921
        %v3288 = vpop.f32.mrb[0].mxu0
        %v3289 = vadd.f32 0.0, %v3288
        %v3290 = vpop.f32.mrb[0].mxu0
        %3291 = vmatprep.mubr.f32.mxu0 0.0
        %3292 = vmatmul.mubr.f32.gmra.mrb[0].mxu0 %v1924
        %v3293 = vpop.f32.mrb[0].mxu0
        %v3294 = vadd.f32 0.0, %v3293
        %v3295 = vpop.f32.mrb[0].mxu0
        %3296 = vmatprep.mubr.f32.mxu0 0.0
        %3297 = vmatmul.mubr.f32.gmra.mrb[0].mxu0 %v1927
        %v3298 = vpop.f32.mrb[0].mxu0
        %v3299 = vadd.f32 0.0, %v3298
        %v3300 = vpop.f32.mrb[0].mxu0
        %3301 = vmatprep.mubr.f32.mxu0 0.0
        %3302 = vmatmul.mubr.f32.gmra.mrb[0].mxu0 %v1930
        %v3303 = vpop.f32.mrb[0].mxu0
        %v3304 = vadd.f32 0.0, %v3303
        %v3305 = vpop.f32.mrb[0].mxu0
        %3306 = vmatprep.mubr.f32.mxu0 0.0
        %3307 = vmatmul.mubr.f32.gmra.mrb[0].mxu0 %v1933
        %v3308 = vpop.f32.mrb[0].mxu0
        %v3309 = vadd.f32 0.0, %v3308
        %v3310 = vpop.f32.mrb[0].mxu0
        %3311 = vmatprep.mubr.f32.mxu0 0.0
        %3312 = vmatmul.mubr.f32.gmra.mrb[0].mxu0 %v1936
        %v3313 = vpop.f32.mrb[0].mxu0
        %v3314 = vadd.f32 0.0, %v3313
        %v3315 = vpop.f32.mrb[0].mxu0
        %3316 = vmatprep.mubr.f32.mxu0 0.0
        %3317 = vmatmul.mubr.f32.gmra.mrb[0].mxu0 %v1939
        %v3318 = vpop.f32.mrb[0].mxu0
        %v3319 = vadd.f32 0.0, %v3318
        %v3320 = vpop.f32.mrb[0].mxu0
        %3321 = vmatprep.mubr.f32.mxu0 0.0
        %3322 = vmatmul.mubr.f32.gmra.mrb[0].mxu0 %v1942
        %v3323 = vpop.f32.mrb[0].mxu0
        %v3324 = vadd.f32 0.0, %v3323
        %v3325 = vpop.f32.mrb[0].mxu0
        %3326 = vmatprep.mubr.f32.mxu0 0.0
        %3327 = vmatmul.mubr.f32.gmra.mrb[0].mxu0 %v1945
        %v3328 = vpop.f32.mrb[0].mxu0
        %v3329 = vadd.f32 0.0, %v3328
        %v3330 = vpop.f32.mrb[0].mxu0
        %3331 = vmatprep.mubr.f32.mxu0 0.0
        %3332 = vmatmul.mubr.f32.gmra.mrb[0].mxu0 %v1948
        %v3333 = vpop.f32.mrb[0].mxu0
        %v3334 = vadd.f32 0.0, %v3333
        %v3335 = vpop.f32.mrb[0].mxu0
        %3336 = vmatprep.mubr.f32.mxu0 0.0
        %3337 = vmatmul.mubr.f32.gmra.mrb[0].mxu0 %v1951
        %v3338 = vpop.f32.mrb[0].mxu0
        %v3339 = vadd.f32 0.0, %v3338
        %v3340 = vpop.f32.mrb[0].mxu0
        %3341 = vmatprep.mubr.f32.mxu0 0.0
        %3342 = vmatmul.mubr.f32.gmra.mrb[0].mxu0 %v1954
        %v3343 = vpop.f32.mrb[0].mxu0
        %v3344 = vadd.f32 0.0, %v3343
        %v3345 = vpop.f32.mrb[0].mxu0
        %3346 = vmatprep.mubr.f32.mxu0 0.0
        %3347 = vmatmul.mubr.f32.gmra.mrb[0].mxu0 %v1957
        %v3348 = vpop.f32.mrb[0].mxu0
        %v3349 = vadd.f32 0.0, %v3348
        %v3350 = vpop.f32.mrb[0].mxu0
        %3351 = vmatprep.mubr.f32.mxu0 0.0
        %3352 = vmatmul.mubr.f32.gmra.mrb[0].mxu0 %v1960
        %v3353 = vpop.f32.mrb[0].mxu0
        %v3354 = vadd.f32 0.0, %v3353
        %v3355 = vpop.f32.mrb[0].mxu0
        %3356 = vmatprep.mubr.f32.mxu0 0.0
        %3357 = vmatmul.mubr.f32.gmra.mrb[0].mxu0 %v1963
        %v3358 = vpop.f32.mrb[0].mxu0
        %v3359 = vadd.f32 0.0, %v3358
        %v3360 = vpop.f32.mrb[0].mxu0
        %3361 = vmatprep.mubr.f32.mxu0 0.0
        %3362 = vmatmul.mubr.f32.gmra.mrb[0].mxu0 %v1966
        %v3363 = vpop.f32.mrb[0].mxu0
        %v3364 = vadd.f32 0.0, %v3363
        %v3365 = vpop.f32.mrb[0].mxu0
        %3366 = vmatprep.mubr.f32.mxu0 0.0
        %3367 = vmatmul.mubr.f32.gmra.mrb[0].mxu0 %v1969
        %v3368 = vpop.f32.mrb[0].mxu0
        %v3369 = vadd.f32 0.0, %v3368
        %v3370 = vpop.f32.mrb[0].mxu0
        %3371 = vmatprep.mubr.f32.mxu0 0.0
        %3372 = vmatmul.mubr.f32.gmra.mrb[0].mxu0 %v1972
        %v3373 = vpop.f32.mrb[0].mxu0
        %v3374 = vadd.f32 0.0, %v3373
        %v3375 = vpop.f32.mrb[0].mxu0
        %3376 = vmatprep.mubr.f32.mxu0 0.0
        %3377 = vmatmul.mubr.f32.gmra.mrb[0].mxu0 %v1975
        %v3378 = vpop.f32.mrb[0].mxu0
        %v3379 = vadd.f32 0.0, %v3378
        %v3380 = vpop.f32.mrb[0].mxu0
        %3381 = vmatprep.mubr.f32.mxu0 0.0
        %3382 = vmatmul.mubr.f32.gmra.mrb[0].mxu0 %v1978
        %v3383 = vpop.f32.mrb[0].mxu0
        %v3384 = vadd.f32 0.0, %v3383
        %v3385 = vpop.f32.mrb[0].mxu0
        %3386 = vmatprep.mubr.f32.mxu0 0.0
        %3387 = vmatmul.mubr.f32.gmra.mrb[0].mxu0 %v1981
        %v3388 = vpop.f32.mrb[0].mxu0
        %v3389 = vadd.f32 0.0, %v3388
        %v3390 = vpop.f32.mrb[0].mxu0
        %3391 = vmatprep.mubr.f32.mxu0 0.0
        %3392 = vmatmul.mubr.f32.gmra.mrb[0].mxu0 %v1984
        %v3393 = vpop.f32.mrb[0].mxu0
        %v3394 = vadd.f32 0.0, %v3393
        %v3395 = vpop.f32.mrb[0].mxu0
        %3396 = vmatprep.mubr.f32.mxu0 0.0
        %3397 = vmatmul.mubr.f32.gmra.mrb[0].mxu0 %v1987
        %v3398 = vpop.f32.mrb[0].mxu0
        %v3399 = vadd.f32 0.0, %v3398
        %v3400 = vpop.f32.mrb[0].mxu0
        %3401 = vmatprep.mubr.f32.mxu0 0.0
        %3402 = vmatmul.mubr.f32.gmra.mrb[0].mxu0 %v1990
        %v3403 = vpop.f32.mrb[0].mxu0
        %v3404 = vadd.f32 0.0, %v3403
        %v3405 = vpop.f32.mrb[0].mxu0
        %3406 = vmatprep.mubr.f32.mxu0 0.0
        %3407 = vmatmul.mubr.f32.gmra.mrb[0].mxu0 %v1993
        %v3408 = vpop.f32.mrb[0].mxu0
        %v3409 = vadd.f32 0.0, %v3408
        %v3410 = vpop.f32.mrb[0].mxu0
        %3411 = vmatprep.mubr.f32.mxu0 0.0
        %3412 = vmatmul.mubr.f32.gmra.mrb[0].mxu0 %v1996
        %v3413 = vpop.f32.mrb[0].mxu0
        %v3414 = vadd.f32 0.0, %v3413
        %v3415 = vpop.f32.mrb[0].mxu0
        %3416 = vmatprep.mubr.f32.mxu0 0.0
        %3417 = vmatmul.mubr.f32.gmra.mrb[0].mxu0 %v1999
        %v3418 = vpop.f32.mrb[0].mxu0
        %v3419 = vadd.f32 0.0, %v3418
        %v3420 = vpop.f32.mrb[0].mxu0
        %3421 = vmatprep.mubr.f32.mxu0 0.0
        %3422 = vmatmul.mubr.f32.gmra.mrb[0].mxu0 %v2002
        %v3423 = vpop.f32.mrb[0].mxu0
        %v3424 = vadd.f32 0.0, %v3423
        %v3425 = vpop.f32.mrb[0].mxu0
        %3426 = vmatprep.mubr.f32.mxu0 0.0
        %3427 = vmatmul.mubr.f32.gmra.mrb[0].mxu0 %v2005
        %v3428 = vpop.f32.mrb[0].mxu0
        %v3429 = vadd.f32 0.0, %v3428
        %v3430 = vpop.f32.mrb[0].mxu0
        %3431 = vmatprep.mubr.f32.mxu0 0.0
        %3432 = vmatmul.mubr.f32.gmra.mrb[0].mxu0 %v2008
        %v3433 = vpop.f32.mrb[0].mxu0
        %v3434 = vadd.f32 0.0, %v3433
        %v3435 = vpop.f32.mrb[0].mxu0
        %3436 = vmatprep.mubr.f32.mxu0 0.0
        %3437 = vmatmul.mubr.f32.gmra.mrb[0].mxu0 %v2011
        %v3438 = vpop.f32.mrb[0].mxu0
        %v3439 = vadd.f32 0.0, %v3438
        %v3440 = vpop.f32.mrb[0].mxu0
        %3441 = vmatprep.mubr.f32.mxu0 0.0
        %3442 = vmatmul.mubr.f32.gmra.mrb[0].mxu0 %v2014
        %v3443 = vpop.f32.mrb[0].mxu0
        %v3444 = vadd.f32 0.0, %v3443
        %v3445 = vpop.f32.mrb[0].mxu0
        %3446 = vmatprep.mubr.f32.mxu0 0.0
        %3447 = vmatmul.mubr.f32.gmra.mrb[0].mxu0 %v2017
        %v3448 = vpop.f32.mrb[0].mxu0
        %v3449 = vadd.f32 0.0, %v3448
        %v3450 = vpop.f32.mrb[0].mxu0
        %3451 = vmatprep.mubr.f32.mxu0 0.0
        %3452 = vmatmul.mubr.f32.gmra.mrb[0].mxu0 %v2020
        %v3453 = vpop.f32.mrb[0].mxu0
        %v3454 = vadd.f32 0.0, %v3453
        %v3455 = vpop.f32.mrb[0].mxu0
        %3456 = vmatprep.mubr.f32.mxu0 0.0
        %3457 = vmatmul.mubr.f32.gmra.mrb[0].mxu0 %v2023
        %v3458 = vpop.f32.mrb[0].mxu0
        %v3459 = vadd.f32 0.0, %v3458
        %v3460 = vpop.f32.mrb[0].mxu0
        %3461 = vmatprep.mubr.f32.mxu0 0.0
        %3462 = vmatmul.mubr.f32.gmra.mrb[0].mxu0 %v2026
        %v3463 = vpop.f32.mrb[0].mxu0
        %v3464 = vadd.f32 0.0, %v3463
        %v3465 = vpop.f32.mrb[0].mxu0
        %3466 = vmatprep.mubr.f32.mxu0 0.0
        %3467 = vmatmul.mubr.f32.gmra.mrb[0].mxu0 %v2029
        %v3468 = vpop.f32.mrb[0].mxu0
        %v3469 = vadd.f32 0.0, %v3468
        %v3470 = vpop.f32.mrb[0].mxu0
        %3471 = vmatprep.mubr.f32.mxu0 0.0
        %3472 = vmatmul.mubr.f32.gmra.mrb[0].mxu0 %v2032
        %v3473 = vpop.f32.mrb[0].mxu0
        %v3474 = vadd.f32 0.0, %v3473
        %v3475 = vpop.f32.mrb[0].mxu0
        %3476 = vmatprep.mubr.f32.mxu0 0.0
        %3477 = vmatmul.mubr.f32.gmra.mrb[0].mxu0 %v2035
        %v3478 = vpop.f32.mrb[0].mxu0
        %v3479 = vadd.f32 0.0, %v3478
        %v3480 = vpop.f32.mrb[0].mxu0
        %3481 = vmatprep.mubr.f32.mxu0 0.0
        %3482 = vmatmul.mubr.f32.gmra.mrb[0].mxu0 %v2038
        %v3483 = vpop.f32.mrb[0].mxu0
        %v3484 = vadd.f32 0.0, %v3483
        %v3485 = vpop.f32.mrb[0].mxu0
        %3486 = vmatprep.mubr.f32.mxu0 0.0
        %3487 = vmatmul.mubr.f32.gmra.mrb[0].mxu0 %v2041
        %v3488 = vpop.f32.mrb[0].mxu0
        %v3489 = vadd.f32 0.0, %v3488
        %v3490 = vpop.f32.mrb[0].mxu0
        %3491 = vmatprep.mubr.f32.mxu0 0.0
        %3492 = vmatmul.mubr.f32.gmra.mrb[0].mxu0 %v2044
        %v3493 = vpop.f32.mrb[0].mxu0
        %v3494 = vadd.f32 0.0, %v3493
        %v3495 = vpop.f32.mrb[0].mxu0
        %3496 = vmatprep.mubr.f32.mxu0 0.0
        %3497 = vmatmul.mubr.f32.gmra.mrb[0].mxu0 %v2047
        %v3498 = vpop.f32.mrb[0].mxu0
        %v3499 = vadd.f32 0.0, %v3498
        %v3500 = vpop.f32.mrb[0].mxu0
        %3501 = vmatprep.mubr.f32.mxu0 0.0
        %3502 = vmatmul.mubr.f32.gmra.mrb[0].mxu0 %v2050
        %v3503 = vpop.f32.mrb[0].mxu0
        %v3504 = vadd.f32 0.0, %v3503
        %v3505 = vpop.f32.mrb[0].mxu0
        %3506 = vmatprep.mubr.f32.mxu0 0.0
        %3507 = vmatmul.mubr.f32.gmra.mrb[0].mxu0 %v2053
        %v3508 = vpop.f32.mrb[0].mxu0
        %v3509 = vadd.f32 0.0, %v3508
        %v3510 = vpop.f32.mrb[0].mxu0
        %3511 = vmatprep.mubr.f32.mxu0 0.0
        %3512 = vmatmul.mubr.f32.gmra.mrb[0].mxu0 %v2056
        %v3513 = vpop.f32.mrb[0].mxu0
        %v3514 = vadd.f32 0.0, %v3513
        %v3515 = vpop.f32.mrb[0].mxu0
        %3516 = vmatprep.mubr.f32.mxu0 0.0
        %3517 = vmatmul.mubr.f32.gmra.mrb[0].mxu0 %v2059
        %v3518 = vpop.f32.mrb[0].mxu0
        %v3519 = vadd.f32 0.0, %v3518
        %v3520 = vpop.f32.mrb[0].mxu0
        %3521 = vmatprep.mubr.f32.mxu0 0.0
        %3522 = vmatmul.mubr.f32.gmra.mrb[0].mxu0 %v2062
        %v3523 = vpop.f32.mrb[0].mxu0
        %v3524 = vadd.f32 0.0, %v3523
        %v3525 = vpop.f32.mrb[0].mxu0
        %3526 = vmatprep.mubr.f32.mxu0 0.0
        %3527 = vmatmul.mubr.f32.gmra.mrb[0].mxu0 %v2065
        %v3528 = vpop.f32.mrb[0].mxu0
        %v3529 = vadd.f32 0.0, %v3528
        %v3530 = vpop.f32.mrb[0].mxu0
        %3531 = vmatprep.mubr.f32.mxu0 0.0
        %3532 = vmatmul.mubr.f32.gmra.mrb[0].mxu0 %v2068
        %v3533 = vpop.f32.mrb[0].mxu0
        %v3534 = vadd.f32 0.0, %v3533
        %v3535 = vpop.f32.mrb[0].mxu0
        %3536 = vmatprep.mubr.f32.mxu0 0.0
        %3537 = vmatmul.mubr.f32.gmra.mrb[0].mxu0 %v2071
        %v3538 = vpop.f32.mrb[0].mxu0
        %v3539 = vadd.f32 0.0, %v3538
        %v3540 = vpop.f32.mrb[0].mxu0
        %3541 = vmatprep.mubr.f32.mxu0 0.0
        %3542 = vmatmul.mubr.f32.gmra.mrb[0].mxu0 %v2074
        %v3543 = vpop.f32.mrb[0].mxu0
        %v3544 = vadd.f32 0.0, %v3543
        %v3545 = vpop.f32.mrb[0].mxu0
        %3546 = vmatprep.mubr.f32.mxu0 0.0
        %3547 = vmatmul.mubr.f32.gmra.mrb[0].mxu0 %v2077
        %v3548 = vpop.f32.mrb[0].mxu0
        %v3549 = vadd.f32 0.0, %v3548
        %v3550 = vpop.f32.mrb[0].mxu0
        %3551 = vmatprep.mubr.f32.mxu0 0.0
        %3552 = vmatmul.mubr.f32.gmra.mrb[0].mxu0 %v2080
        %v3553 = vpop.f32.mrb[0].mxu0
        %v3554 = vadd.f32 0.0, %v3553
        %v3555 = vpop.f32.mrb[0].mxu0
        %3556 = vmatprep.mubr.f32.mxu0 0.0
        %3557 = vmatmul.mubr.f32.gmra.mrb[0].mxu0 %v2083
        %v3558 = vpop.f32.mrb[0].mxu0
        %v3559 = vadd.f32 0.0, %v3558
        %v3560 = vpop.f32.mrb[0].mxu0
        %3561 = vmatprep.mubr.f32.mxu0 0.0
        %3562 = vmatmul.mubr.f32.gmra.mrb[0].mxu0 %v2086
        %v3563 = vpop.f32.mrb[0].mxu0
        %v3564 = vadd.f32 0.0, %v3563
        %v3565 = vpop.f32.mrb[0].mxu0
        %3566 = vmatprep.mubr.f32.mxu0 0.0
        %3567 = vmatmul.mubr.f32.gmra.mrb[0].mxu0 %v2089
        %v3568 = vpop.f32.mrb[0].mxu0
        %v3569 = vadd.f32 0.0, %v3568
        %v3570 = vpop.f32.mrb[0].mxu0
        %3571 = vmatprep.mubr.f32.mxu0 0.0
        %3572 = vmatmul.mubr.f32.gmra.mrb[0].mxu0 %v2092
        %v3573 = vpop.f32.mrb[0].mxu0
        %v3574 = vadd.f32 0.0, %v3573
        %v3575 = vpop.f32.mrb[0].mxu0
        %3576 = vmatprep.mubr.f32.mxu0 0.0
        %3577 = vmatmul.mubr.f32.gmra.mrb[0].mxu0 %v2095
        %v3578 = vpop.f32.mrb[0].mxu0
        %v3579 = vadd.f32 0.0, %v3578
        %v3580 = vpop.f32.mrb[0].mxu0
        %3581 = vmatprep.mubr.f32.mxu0 0.0
        %3582 = vmatmul.mubr.f32.gmra.mrb[0].mxu0 %v2098
        %v3583 = vpop.f32.mrb[0].mxu0
        %v3584 = vadd.f32 0.0, %v3583
        %v3585 = vpop.f32.mrb[0].mxu0
        %3586 = vmatprep.mubr.f32.mxu0 0.0
        %3587 = vmatmul.mubr.f32.gmra.mrb[0].mxu0 %v2101
        %v3588 = vpop.f32.mrb[0].mxu0
        %v3589 = vadd.f32 0.0, %v3588
        %v3590 = vpop.f32.mrb[0].mxu0
        %3591 = vmatprep.mubr.f32.mxu0 0.0
        %3592 = vmatmul.mubr.f32.gmra.mrb[0].mxu0 %v2104
        %v3593 = vpop.f32.mrb[0].mxu0
        %v3594 = vadd.f32 0.0, %v3593
        %v3595 = vpop.f32.mrb[0].mxu0
        %3596 = vmatprep.mubr.f32.mxu0 0.0
        %3597 = vmatmul.mubr.f32.gmra.mrb[0].mxu0 %v2107
        %v3598 = vpop.f32.mrb[0].mxu0
        %v3599 = vadd.f32 0.0, %v3598
        %v3600 = vpop.f32.mrb[0].mxu0
        %3601 = vmatprep.mubr.f32.mxu0 0.0
        %3602 = vmatmul.mubr.f32.gmra.mrb[0].mxu0 %v2110
        %v3603 = vpop.f32.mrb[0].mxu0
        %v3604 = vadd.f32 0.0, %v3603
        %v3605 = vpop.f32.mrb[0].mxu0
        %3606 = vmatprep.mubr.f32.mxu0 0.0
        %3607 = vmatmul.mubr.f32.gmra.mrb[0].mxu0 %v2113
        %v3608 = vpop.f32.mrb[0].mxu0
        %v3609 = vadd.f32 0.0, %v3608
        %v3610 = vpop.f32.mrb[0].mxu0
        %3611 = vmatprep.mubr.f32.mxu0 0.0
        %3612 = vmatmul.mubr.f32.gmra.mrb[0].mxu0 %v2116
        %v3613 = vpop.f32.mrb[0].mxu0
        %v3614 = vadd.f32 0.0, %v3613
        %v3615 = vpop.f32.mrb[0].mxu0
        %3616 = vmatprep.mubr.f32.mxu0 0.0
        %3617 = vmatmul.mubr.f32.gmra.mrb[0].mxu0 %v2119
        %v3618 = vpop.f32.mrb[0].mxu0
        %v3619 = vadd.f32 0.0, %v3618
        %v3620 = vpop.f32.mrb[0].mxu0
        %3621 = vmatprep.mubr.f32.mxu0 0.0
        %3622 = vmatmul.mubr.f32.gmra.mrb[0].mxu0 %v2122
        %v3623 = vpop.f32.mrb[0].mxu0
        %v3624 = vadd.f32 0.0, %v3623
        %v3625 = vpop.f32.mrb[0].mxu0
        %3626 = vmatprep.mubr.f32.mxu0 0.0
        %3627 = vmatmul.mubr.f32.gmra.mrb[0].mxu0 %v2125
        %v3628 = vpop.f32.mrb[0].mxu0
        %v3629 = vadd.f32 0.0, %v3628
        %v3630 = vpop.f32.mrb[0].mxu0
        %3631 = vmatprep.mubr.f32.mxu0 0.0
        %3632 = vmatmul.mubr.f32.gmra.mrb[0].mxu0 %v2128
        %v3633 = vpop.f32.mrb[0].mxu0
        %v3634 = vadd.f32 0.0, %v3633
        %v3635 = vpop.f32.mrb[0].mxu0
        %3636 = vmatprep.mubr.f32.mxu0 0.0
        %3637 = vmatmul.mubr.f32.gmra.mrb[0].mxu0 %v2131
        %v3638 = vpop.f32.mrb[0].mxu0
        %v3639 = vadd.f32 0.0, %v3638
        %v3640 = vpop.f32.mrb[0].mxu0
        %3641 = vmatprep.mubr.f32.mxu0 0.0
        %3642 = vmatmul.mubr.f32.gmra.mrb[0].mxu0 %v2134
        %v3643 = vpop.f32.mrb[0].mxu0
        %v3644 = vadd.f32 0.0, %v3643
        %v3645 = vpop.f32.mrb[0].mxu0
        %3646 = vmatprep.mubr.f32.mxu0 0.0
        %3647 = vmatmul.mubr.f32.gmra.mrb[0].mxu0 %v2137
        %v3648 = vpop.f32.mrb[0].mxu0
        %v3649 = vadd.f32 0.0, %v3648
        %v3650 = vpop.f32.mrb[0].mxu0
        %3651 = vmatprep.mubr.f32.mxu0 0.0
        %3652 = vmatmul.mubr.f32.gmra.mrb[0].mxu0 %v2140
        %v3653 = vpop.f32.mrb[0].mxu0
        %v3654 = vadd.f32 0.0, %v3653
        %v3655 = vpop.f32.mrb[0].mxu0
        %3656 = vmatprep.mubr.f32.mxu0 0.0
        %3657 = vmatmul.mubr.f32.gmra.mrb[0].mxu0 %v2143
        %v3658 = vpop.f32.mrb[0].mxu0
        %v3659 = vadd.f32 0.0, %v3658
        %v3660 = vpop.f32.mrb[0].mxu0
        %3661 = vmatprep.mubr.f32.mxu0 0.0
        %3662 = vmatmul.mubr.f32.gmra.mrb[0].mxu0 %v2146
        %v3663 = vpop.f32.mrb[0].mxu0
        %v3664 = vadd.f32 0.0, %v3663
        %v3665 = vpop.f32.mrb[0].mxu0
        %3666 = vmatprep.mubr.f32.mxu0 0.0
        %3667 = vmatmul.mubr.f32.gmra.mrb[0].mxu0 %v2149
        %v3668 = vpop.f32.mrb[0].mxu0
        %v3669 = vadd.f32 0.0, %v3668
        %v3670 = vpop.f32.mrb[0].mxu0
        %3671 = vmatprep.mubr.f32.mxu0 0.0
        %3672 = vmatmul.mubr.f32.gmra.mrb[0].mxu0 %v2152
        %v3673 = vpop.f32.mrb[0].mxu0
        %v3674 = vadd.f32 0.0, %v3673
        %v3675 = vpop.f32.mrb[0].mxu0
        %3676 = vmatprep.mubr.f32.mxu0 0.0
        %3677 = vmatmul.mubr.f32.gmra.mrb[0].mxu0 %v2155
        %v3678 = vpop.f32.mrb[0].mxu0
        %v3679 = vadd.f32 0.0, %v3678
        %v3680 = vpop.f32.mrb[0].mxu0
        %3681 = vmatprep.mubr.f32.mxu0 0.0
        %3682 = vmatmul.mubr.f32.gmra.mrb[0].mxu0 %v2158
        %v3683 = vpop.f32.mrb[0].mxu0
        %v3684 = vadd.f32 0.0, %v3683
        %v3685 = vpop.f32.mrb[0].mxu0
        %3686 = vmatprep.mubr.f32.mxu0 0.0
        %3687 = vmatmul.mubr.f32.gmra.mrb[0].mxu0 %v2161
        %v3688 = vpop.f32.mrb[0].mxu0
        %v3689 = vadd.f32 0.0, %v3688
        %v3690 = vpop.f32.mrb[0].mxu0
        %3691 = vmatprep.mubr.f32.mxu0 0.0
        %3692 = vmatmul.mubr.f32.gmra.mrb[0].mxu0 %v2164
        %v3693 = vpop.f32.mrb[0].mxu0
        %v3694 = vadd.f32 0.0, %v3693
        %v3695 = vpop.f32.mrb[0].mxu0
        %3696 = vmatprep.mubr.f32.mxu0 0.0
        %3697 = vmatmul.mubr.f32.gmra.mrb[0].mxu0 %v2167
        %v3698 = vpop.f32.mrb[0].mxu0
        %v3699 = vadd.f32 0.0, %v3698
        %v3700 = vpop.f32.mrb[0].mxu0
        %3701 = vmatprep.mubr.f32.mxu0 0.0
        %3702 = vmatmul.mubr.f32.gmra.mrb[0].mxu0 %v2170
        %v3703 = vpop.f32.mrb[0].mxu0
        %v3704 = vadd.f32 0.0, %v3703
        %v3705 = vpop.f32.mrb[0].mxu0
        %3706 = vmatprep.mubr.f32.mxu0 0.0
        %3707 = vmatmul.mubr.f32.gmra.mrb[0].mxu0 %v2173
        %v3708 = vpop.f32.mrb[0].mxu0
        %v3709 = vadd.f32 0.0, %v3708
        %v3710 = vpop.f32.mrb[0].mxu0
        %3711 = vmatprep.mubr.f32.mxu0 0.0
        %3712 = vmatmul.mubr.f32.gmra.mrb[0].mxu0 %v2176
        %v3713 = vpop.f32.mrb[0].mxu0
        %v3714 = vadd.f32 0.0, %v3713
        %v3715 = vpop.f32.mrb[0].mxu0
        %3716 = vmatprep.mubr.f32.mxu0 0.0
        %3717 = vmatmul.mubr.f32.gmra.mrb[0].mxu0 %v2179
        %v3718 = vpop.f32.mrb[0].mxu0
        %v3719 = vadd.f32 0.0, %v3718
        %v3720 = vpop.f32.mrb[0].mxu0
        %3721 = vmatprep.mubr.f32.mxu0 0.0
        %3722 = vmatmul.mubr.f32.gmra.mrb[0].mxu0 %v2182
        %v3723 = vpop.f32.mrb[0].mxu0
        %v3724 = vadd.f32 0.0, %v3723
        %v3725 = vpop.f32.mrb[0].mxu0
        %3726 = vmatprep.mubr.f32.mxu0 0.0
        %3727 = vmatmul.mubr.f32.gmra.mrb[0].mxu0 %v2185
        %v3728 = vpop.f32.mrb[0].mxu0
        %v3729 = vadd.f32 0.0, %v3728
        %v3730 = vpop.f32.mrb[0].mxu0
        %3731 = vmatprep.mubr.f32.mxu0 0.0
        %3732 = vmatmul.mubr.f32.gmra.mrb[0].mxu0 %v2188
        %v3733 = vpop.f32.mrb[0].mxu0
        %v3734 = vadd.f32 0.0, %v3733
        %v3735 = vpop.f32.mrb[0].mxu0
        %3736 = vmatprep.mubr.f32.mxu0 0.0
        %3737 = vmatmul.mubr.f32.gmra.mrb[0].mxu0 %v2191
        %v3738 = vpop.f32.mrb[0].mxu0
        %v3739 = vadd.f32 0.0, %v3738
        %v3740 = vpop.f32.mrb[0].mxu0
        %3741 = vmatprep.mubr.f32.mxu0 0.0
        %3742 = vmatmul.mubr.f32.gmra.mrb[0].mxu0 %v2194
        %v3743 = vpop.f32.mrb[0].mxu0
        %v3744 = vadd.f32 0.0, %v3743
        %v3745 = vpop.f32.mrb[0].mxu0
        %3746 = vmatprep.mubr.f32.mxu0 0.0
        %3747 = vmatmul.mubr.f32.gmra.mrb[0].mxu0 %v2197
        %v3748 = vpop.f32.mrb[0].mxu0
        %v3749 = vadd.f32 0.0, %v3748
        %v3750 = vpop.f32.mrb[0].mxu0
        %3751 = vmatprep.mubr.f32.mxu0 0.0
        %3752 = vmatmul.mubr.f32.gmra.mrb[0].mxu0 %v2200
        %v3753 = vpop.f32.mrb[0].mxu0
        %v3754 = vadd.f32 0.0, %v3753
        %v3755 = vpop.f32.mrb[0].mxu0
        %3756 = vmatprep.mubr.f32.mxu0 0.0
        %3757 = vmatmul.mubr.f32.gmra.mrb[0].mxu0 %v2203
        %v3758 = vpop.f32.mrb[0].mxu0
        %v3759 = vadd.f32 0.0, %v3758
        %v3760 = vpop.f32.mrb[0].mxu0
        %3761 = vmatprep.mubr.f32.mxu0 0.0
        %3762 = vmatmul.mubr.f32.gmra.mrb[0].mxu0 %v2206
        %v3763 = vpop.f32.mrb[0].mxu0
        %v3764 = vadd.f32 0.0, %v3763
        %v3765 = vpop.f32.mrb[0].mxu0
        %3766 = vmatprep.mubr.f32.mxu0 0.0
        %3767 = vmatmul.mubr.f32.gmra.mrb[0].mxu0 %v2209
        %v3768 = vpop.f32.mrb[0].mxu0
        %v3769 = vadd.f32 0.0, %v3768
        %v3770 = vpop.f32.mrb[0].mxu0
        %3771 = vmatprep.mubr.f32.mxu0 0.0
        %3772 = vmatmul.mubr.f32.gmra.mrb[0].mxu0 %v2212
        %v3773 = vpop.f32.mrb[0].mxu0
        %v3774 = vadd.f32 0.0, %v3773
        %v3775 = vpop.f32.mrb[0].mxu0
        %3776 = vmatprep.mubr.f32.mxu0 0.0
        %3777 = vmatmul.mubr.f32.gmra.mrb[0].mxu0 %v2215
        %v3778 = vpop.f32.mrb[0].mxu0
        %v3779 = vadd.f32 0.0, %v3778
        %v3780 = vpop.f32.mrb[0].mxu0
        %3781 = vmatprep.mubr.f32.mxu0 0.0
        %3782 = vmatmul.mubr.f32.gmra.mrb[0].mxu0 %v2218
        %v3783 = vpop.f32.mrb[0].mxu0
        %v3784 = vadd.f32 0.0, %v3783
        %v3785 = vpop.f32.mrb[0].mxu0
        %3786 = vmatprep.mubr.f32.mxu0 0.0
        %3787 = vmatmul.mubr.f32.gmra.mrb[0].mxu0 %v2221
        %v3788 = vpop.f32.mrb[0].mxu0
        %v3789 = vadd.f32 0.0, %v3788
        %v3790 = vpop.f32.mrb[0].mxu0
        %3791 = vmatprep.mubr.f32.mxu0 0.0
        %3792 = vmatmul.mubr.f32.gmra.mrb[0].mxu0 %v2224
        %v3793 = vpop.f32.mrb[0].mxu0
        %v3794 = vadd.f32 0.0, %v3793
        %v3795 = vpop.f32.mrb[0].mxu0
        %3796 = vmatprep.mubr.f32.mxu0 0.0
        %3797 = vmatmul.mubr.f32.gmra.mrb[0].mxu0 %v2227
        %v3798 = vpop.f32.mrb[0].mxu0
        %v3799 = vadd.f32 0.0, %v3798
        %v3800 = vpop.f32.mrb[0].mxu0
        %3801 = vmatprep.mubr.f32.mxu0 0.0
        %3802 = vmatmul.mubr.f32.gmra.mrb[0].mxu0 %v2230
        %v3803 = vpop.f32.mrb[0].mxu0
        %v3804 = vadd.f32 0.0, %v3803
        %v3805 = vpop.f32.mrb[0].mxu0
        %3806 = vmatprep.mubr.f32.mxu0 0.0
        %3807 = vmatmul.mubr.f32.gmra.mrb[0].mxu0 %v2233
        %v3808 = vpop.f32.mrb[0].mxu0
        %v3809 = vadd.f32 0.0, %v3808
        %v3810 = vpop.f32.mrb[0].mxu0
        %3811 = vmatprep.mubr.f32.mxu0 0.0
        %3812 = vmatmul.mubr.f32.gmra.mrb[0].mxu0 %v2236
        %v3813 = vpop.f32.mrb[0].mxu0
        %v3814 = vadd.f32 0.0, %v3813
        %v3815 = vpop.f32.mrb[0].mxu0
        %3816 = vmatprep.mubr.f32.mxu0 0.0
        %3817 = vmatmul.mubr.f32.gmra.mrb[0].mxu0 %v2239
        %v3818 = vpop.f32.mrb[0].mxu0
        %v3819 = vadd.f32 0.0, %v3818
        %v3820 = vpop.f32.mrb[0].mxu0
        %3821 = vmatprep.mubr.f32.mxu0 0.0
        %3822 = vmatmul.mubr.f32.gmra.mrb[0].mxu0 %v2242
        %v3823 = vpop.f32.mrb[0].mxu0
        %v3824 = vadd.f32 0.0, %v3823
        %v3825 = vpop.f32.mrb[0].mxu0
        %3826 = vmatprep.mubr.f32.mxu0 0.0
        %3827 = vmatmul.mubr.f32.gmra.mrb[0].mxu0 %v2245
        %v3828 = vpop.f32.mrb[0].mxu0
        %v3829 = vadd.f32 0.0, %v3828
        %v3830 = vpop.f32.mrb[0].mxu0
        %3831 = vmatprep.mubr.f32.mxu0 0.0
        %3832 = vmatmul.mubr.f32.gmra.mrb[0].mxu0 %v2248
        %v3833 = vpop.f32.mrb[0].mxu0
        %v3834 = vadd.f32 0.0, %v3833
        %v3835 = vpop.f32.mrb[0].mxu0
        %3836 = vmatprep.mubr.f32.mxu0 0.0
        %3837 = vmatmul.mubr.f32.gmra.mrb[0].mxu0 %v2251
        %v3838 = vpop.f32.mrb[0].mxu0
        %v3839 = vadd.f32 0.0, %v3838
        %v3840 = vpop.f32.mrb[0].mxu0
        %3841 = vmatprep.mubr.f32.mxu0 0.0
        %3842 = vmatmul.mubr.f32.gmra.mrb[0].mxu0 %v2254
        %v3843 = vpop.f32.mrb[0].mxu0
        %v3844 = vadd.f32 0.0, %v3843
        %v3845 = vpop.f32.mrb[0].mxu0
        %3846 = vmatprep.mubr.f32.mxu0 0.0
        %3847 = vmatmul.mubr.f32.gmra.mrb[0].mxu0 %v2257
        %v3848 = vpop.f32.mrb[0].mxu0
        %v3849 = vadd.f32 0.0, %v3848
        %v3850 = vpop.f32.mrb[0].mxu0
        %3851 = vmatprep.mubr.f32.mxu0 0.0
        %3852 = vmatmul.mubr.f32.gmra.mrb[0].mxu0 %v2260
        %v3853 = vpop.f32.mrb[0].mxu0
        %v3854 = vadd.f32 0.0, %v3853
        %v3855 = vpop.f32.mrb[0].mxu0
        %3856 = vmatprep.mubr.f32.mxu0 0.0
        %3857 = vmatmul.mubr.f32.gmra.mrb[0].mxu0 %v2263
        %v3858 = vpop.f32.mrb[0].mxu0
        %v3859 = vadd.f32 0.0, %v3858
        %v3860 = vpop.f32.mrb[0].mxu0
        %3861 = vmatprep.mubr.f32.mxu0 0.0
        %3862 = vmatmul.mubr.f32.gmra.mrb[0].mxu0 %v2266
        %v3863 = vpop.f32.mrb[0].mxu0
        %v3864 = vadd.f32 0.0, %v3863
        %v3865 = vpop.f32.mrb[0].mxu0
        %3866 = vmatprep.mubr.f32.mxu0 0.0
        %3867 = vmatmul.mubr.f32.gmra.mrb[0].mxu0 %v2269
        %v3868 = vpop.f32.mrb[0].mxu0
        %v3869 = vadd.f32 0.0, %v3868
        %v3870 = vpop.f32.mrb[0].mxu0
        %3871 = vmatprep.mubr.f32.mxu0 0.0
        %3872 = vmatmul.mubr.f32.gmra.mrb[0].mxu0 %v2272
        %v3873 = vpop.f32.mrb[0].mxu0
        %v3874 = vadd.f32 0.0, %v3873
        %v3875 = vpop.f32.mrb[0].mxu0
        %3876 = vmatprep.mubr.f32.mxu0 0.0
        %3877 = vmatmul.mubr.f32.gmra.mrb[0].mxu0 %v2275
        %v3878 = vpop.f32.mrb[0].mxu0
        %v3879 = vadd.f32 0.0, %v3878
        %v3880 = vpop.f32.mrb[0].mxu0
        %3881 = vmatprep.mubr.f32.mxu0 0.0
        %3882 = vmatmul.mubr.f32.gmra.mrb[0].mxu0 %v2278
        %v3883 = vpop.f32.mrb[0].mxu0
        %v3884 = vadd.f32 0.0, %v3883
        %v3885 = vpop.f32.mrb[0].mxu0
        %3886 = vmatprep.mubr.f32.mxu0 0.0
        %3887 = vmatmul.mubr.f32.gmra.mrb[0].mxu0 %v2281
        %v3888 = vpop.f32.mrb[0].mxu0
        %v3889 = vadd.f32 0.0, %v3888
        %v3890 = vpop.f32.mrb[0].mxu0
        %3891 = vmatprep.mubr.f32.mxu0 0.0
        %3892 = vmatmul.mubr.f32.gmra.mrb[0].mxu0 %v2284
        %v3893 = vpop.f32.mrb[0].mxu0
        %v3894 = vadd.f32 0.0, %v3893
        %v3895 = vpop.f32.mrb[0].mxu0
        %3896 = vmatprep.mubr.f32.mxu0 0.0
        %3897 = vmatmul.mubr.f32.gmra.mrb[0].mxu0 %v2287
        %v3898 = vpop.f32.mrb[0].mxu0
        %v3899 = vadd.f32 0.0, %v3898
        %v3900 = vpop.f32.mrb[0].mxu0
        %3901 = vmatprep.mubr.f32.mxu0 0.0
        %3902 = vmatmul.mubr.f32.gmra.mrb[0].mxu0 %v2290
        %v3903 = vpop.f32.mrb[0].mxu0
        %v3904 = vadd.f32 0.0, %v3903
        %v3905 = vpop.f32.mrb[0].mxu0
        %3906 = vmatprep.mubr.f32.mxu0 0.0
        %3907 = vmatmul.mubr.f32.gmra.mrb[0].mxu0 %v2293
        %v3908 = vpop.f32.mrb[0].mxu0
        %v3909 = vadd.f32 0.0, %v3908
        %v3910 = vpop.f32.mrb[0].mxu0
        %3911 = vmatprep.mubr.f32.mxu0 0.0
        %3912 = vmatmul.mubr.f32.gmra.mrb[0].mxu0 %v2296
        %v3913 = vpop.f32.mrb[0].mxu0
        %v3914 = vadd.f32 0.0, %v3913
        %v3915 = vpop.f32.mrb[0].mxu0
        %3916 = vmatprep.mubr.f32.mxu0 0.0
        %3917 = vmatmul.mubr.f32.gmra.mrb[0].mxu0 %v2299
        %v3918 = vpop.f32.mrb[0].mxu0
        %v3919 = vadd.f32 0.0, %v3918
        %v3920 = vpop.f32.mrb[0].mxu0
        %3921 = vmatprep.mubr.f32.mxu0 0.0
        %3922 = vmatmul.mubr.f32.gmra.mrb[0].mxu0 %v2302
        %v3923 = vpop.f32.mrb[0].mxu0
        %v3924 = vadd.f32 0.0, %v3923
        %v3925 = vpop.f32.mrb[0].mxu0
        %3926 = vmatprep.mubr.f32.mxu0 0.0
        %3927 = vmatmul.mubr.f32.gmra.mrb[0].mxu0 %v2305
        %v3928 = vpop.f32.mrb[0].mxu0
        %v3929 = vadd.f32 0.0, %v3928
        %v3930 = vpop.f32.mrb[0].mxu0
        %3931 = vmatprep.mubr.f32.mxu0 0.0
        %3932 = vmatmul.mubr.f32.gmra.mrb[0].mxu0 %v2308
        %v3933 = vpop.f32.mrb[0].mxu0
        %v3934 = vadd.f32 0.0, %v3933
        %v3935 = vpop.f32.mrb[0].mxu0
        %3936 = vmatprep.mubr.f32.mxu0 0.0
        %3937 = vmatmul.mubr.f32.gmra.mrb[0].mxu0 %v2311
        %v3938 = vpop.f32.mrb[0].mxu0
        %v3939 = vadd.f32 0.0, %v3938
        %v3940 = vpop.f32.mrb[0].mxu0
        %3941 = vmatprep.mubr.f32.mxu0 0.0
        %3942 = vmatmul.mubr.f32.gmra.mrb[0].mxu0 %v2314
        %v3943 = vpop.f32.mrb[0].mxu0
        %v3944 = vadd.f32 0.0, %v3943
        %v3945 = vpop.f32.mrb[0].mxu0
        %3946 = vmatprep.mubr.f32.mxu0 0.0
        %3947 = vmatmul.mubr.f32.gmra.mrb[0].mxu0 %v2317
        %v3948 = vpop.f32.mrb[0].mxu0
        %v3949 = vadd.f32 0.0, %v3948
        %v3950 = vpop.f32.mrb[0].mxu0
        %3951 = vmatprep.mubr.f32.mxu0 0.0
        %3952 = vmatmul.mubr.f32.gmra.mrb[0].mxu0 %v2320
        %v3953 = vpop.f32.mrb[0].mxu0
        %v3954 = vadd.f32 0.0, %v3953
        %v3955 = vpop.f32.mrb[0].mxu0
        %3956 = vmatprep.mubr.f32.mxu0 0.0
        %3957 = vmatmul.mubr.f32.gmra.mrb[0].mxu0 %v2323
        %v3958 = vpop.f32.mrb[0].mxu0
        %v3959 = vadd.f32 0.0, %v3958
        %v3960 = vpop.f32.mrb[0].mxu0
        %3961 = vmatprep.mubr.f32.mxu0 0.0
        %3962 = vmatmul.mubr.f32.gmra.mrb[0].mxu0 %v2326
        %v3963 = vpop.f32.mrb[0].mxu0
        %v3964 = vadd.f32 0.0, %v3963
        %v3965 = vpop.f32.mrb[0].mxu0
        %3966 = vmatprep.mubr.f32.mxu0 0.0
        %3967 = vmatmul.mubr.f32.gmra.mrb[0].mxu0 %v2329
        %v3968 = vpop.f32.mrb[0].mxu0
        %v3969 = vadd.f32 0.0, %v3968
        %v3970 = vpop.f32.mrb[0].mxu0
        %3971 = vmatprep.mubr.f32.mxu0 0.0
        %3972 = vmatmul.mubr.f32.gmra.mrb[0].mxu0 %v2332
        %v3973 = vpop.f32.mrb[0].mxu0
        %v3974 = vadd.f32 0.0, %v3973
        %v3975 = vpop.f32.mrb[0].mxu0
        %3976 = vmatprep.mubr.f32.mxu0 0.0
        %3977 = vmatmul.mubr.f32.gmra.mrb[0].mxu0 %v2335
        %v3978 = vpop.f32.mrb[0].mxu0
        %v3979 = vadd.f32 0.0, %v3978
        %v3980 = vpop.f32.mrb[0].mxu0
        %3981 = vmatprep.mubr.f32.mxu0 0.0
        %3982 = vmatmul.mubr.f32.gmra.mrb[0].mxu0 %v2338
        %v3983 = vpop.f32.mrb[0].mxu0
        %v3984 = vadd.f32 0.0, %v3983
        %v3985 = vpop.f32.mrb[0].mxu0
        %3986 = vmatprep.mubr.f32.mxu0 0.0
        %3987 = vmatmul.mubr.f32.gmra.mrb[0].mxu0 %v2341
        %v3988 = vpop.f32.mrb[0].mxu0
        %v3989 = vadd.f32 0.0, %v3988
        %v3990 = vpop.f32.mrb[0].mxu0
        %3991 = vmatprep.mubr.f32.mxu0 0.0
        %3992 = vmatmul.mubr.f32.gmra.mrb[0].mxu0 %v2344
        %v3993 = vpop.f32.mrb[0].mxu0
        %v3994 = vadd.f32 0.0, %v3993
        %v3995 = vpop.f32.mrb[0].mxu0
        %3996 = vmatprep.mubr.f32.mxu0 0.0
        %3997 = vmatmul.mubr.f32.gmra.mrb[0].mxu0 %v2347
        %v3998 = vpop.f32.mrb[0].mxu0
        %v3999 = vadd.f32 0.0, %v3998
        %v4000 = vpop.f32.mrb[0].mxu0
        %4001 = vmatprep.mubr.f32.mxu0 0.0
        %4002 = vmatmul.mubr.f32.gmra.mrb[0].mxu0 %v2350
        %v4003 = vpop.f32.mrb[0].mxu0
        %v4004 = vadd.f32 0.0, %v4003
        %v4005 = vpop.f32.mrb[0].mxu0
        %4006 = vmatprep.mubr.f32.mxu0 0.0
        %4007 = vmatmul.mubr.f32.gmra.mrb[0].mxu0 %v2353
        %v4008 = vpop.f32.mrb[0].mxu0
        %v4009 = vadd.f32 0.0, %v4008
        %v4010 = vpop.f32.mrb[0].mxu0
        %4011 = vmatprep.mubr.f32.mxu0 0.0
        %4012 = vmatmul.mubr.f32.gmra.mrb[0].mxu0 %v2356
        %v4013 = vpop.f32.mrb[0].mxu0
        %v4014 = vadd.f32 0.0, %v4013
        %v4015 = vpop.f32.mrb[0].mxu0
        %4016 = vmatprep.mubr.f32.mxu0 0.0
        %4017 = vmatmul.mubr.f32.gmra.mrb[0].mxu0 %v2359
        %v4018 = vpop.f32.mrb[0].mxu0
        %v4019 = vadd.f32 0.0, %v4018
        %v4020 = vpop.f32.mrb[0].mxu0
        %4021 = vmatprep.mubr.f32.mxu0 0.0
        %4022 = vmatmul.mubr.f32.gmra.mrb[0].mxu0 %v2362
        %v4023 = vpop.f32.mrb[0].mxu0
        %v4024 = vadd.f32 0.0, %v4023
        %v4025 = vpop.f32.mrb[0].mxu0
        %4026 = vmatprep.mubr.f32.mxu0 0.0
        %4027 = vmatmul.mubr.f32.gmra.mrb[0].mxu0 %v2365
        %v4028 = vpop.f32.mrb[0].mxu0
        %v4029 = vadd.f32 0.0, %v4028
        %v4030 = vpop.f32.mrb[0].mxu0
        %4031 = vmatprep.mubr.f32.mxu0 0.0
        %4032 = vmatmul.mubr.f32.gmra.mrb[0].mxu0 %v2368
        %v4033 = vpop.f32.mrb[0].mxu0
        %v4034 = vadd.f32 0.0, %v4033
        %v4035 = vpop.f32.mrb[0].mxu0
        %4036 = vmatprep.mubr.f32.mxu0 0.0
        %4037 = vmatmul.mubr.f32.gmra.mrb[0].mxu0 %v2371
        %v4038 = vpop.f32.mrb[0].mxu0
        %v4039 = vadd.f32 0.0, %v4038
        %v4040 = vpop.f32.mrb[0].mxu0
        %4041 = vmatprep.mubr.f32.mxu0 0.0
        %4042 = vmatmul.mubr.f32.gmra.mrb[0].mxu0 %v2374
        %v4043 = vpop.f32.mrb[0].mxu0
        %v4044 = vadd.f32 0.0, %v4043
        %v4045 = vpop.f32.mrb[0].mxu0
        %4046 = vmatprep.mubr.f32.mxu0 0.0
        %4047 = vmatmul.mubr.f32.gmra.mrb[0].mxu0 %v2377
        %v4048 = vpop.f32.mrb[0].mxu0
        %v4049 = vadd.f32 0.0, %v4048
        %v4050 = vpop.f32.mrb[0].mxu0
        %4051 = vmatprep.mubr.f32.mxu0 0.0
        %4052 = vmatmul.mubr.f32.gmra.mrb[0].mxu0 %v2380
        %v4053 = vpop.f32.mrb[0].mxu0
        %v4054 = vadd.f32 0.0, %v4053
        %v4055 = vpop.f32.mrb[0].mxu0
        %4056 = vmatprep.mubr.f32.mxu0 0.0
        %4057 = vmatmul.mubr.f32.gmra.mrb[0].mxu0 %v2383
        %v4058 = vpop.f32.mrb[0].mxu0
        %v4059 = vadd.f32 0.0, %v4058
        %v4060 = vpop.f32.mrb[0].mxu0
        %4061 = vmatprep.mubr.f32.mxu0 0.0
        %4062 = vmatmul.mubr.f32.gmra.mrb[0].mxu0 %v2386
        %v4063 = vpop.f32.mrb[0].mxu0
        %v4064 = vadd.f32 0.0, %v4063
        %v4065 = vpop.f32.mrb[0].mxu0
        %4066 = vmatprep.mubr.f32.mxu0 0.0
        %4067 = vmatmul.mubr.f32.gmra.mrb[0].mxu0 %v2389
        %v4068 = vpop.f32.mrb[0].mxu0
        %v4069 = vadd.f32 0.0, %v4068
        %v4070 = vpop.f32.mrb[0].mxu0
        %4071 = vmatprep.mubr.f32.mxu0 0.0
        %4072 = vmatmul.mubr.f32.gmra.mrb[0].mxu0 %v2392
        %v4073 = vpop.f32.mrb[0].mxu0
        %v4074 = vadd.f32 0.0, %v4073
        %v4075 = vpop.f32.mrb[0].mxu0
        %4076 = vmatprep.mubr.f32.mxu0 0.0
        %4077 = vmatmul.mubr.f32.gmra.mrb[0].mxu0 %v2395
        %v4078 = vpop.f32.mrb[0].mxu0
        %v4079 = vadd.f32 0.0, %v4078
        %v4080 = vpop.f32.mrb[0].mxu0
        %4081 = vmatprep.mubr.f32.mxu0 0.0
        %4082 = vmatmul.mubr.f32.gmra.mrb[0].mxu0 %v2398
        %v4083 = vpop.f32.mrb[0].mxu0
        %v4084 = vadd.f32 0.0, %v4083
        %v4085 = vpop.f32.mrb[0].mxu0
        %4086 = vmatprep.mubr.f32.mxu0 0.0
        %4087 = vmatmul.mubr.f32.gmra.mrb[0].mxu0 %v2401
        %v4088 = vpop.f32.mrb[0].mxu0
        %v4089 = vadd.f32 0.0, %v4088
        %v4090 = vpop.f32.mrb[0].mxu0
        %4091 = vmatprep.mubr.f32.mxu0 0.0
        %4092 = vmatmul.mubr.f32.gmra.mrb[0].mxu0 %v2404
        %v4093 = vpop.f32.mrb[0].mxu0
        %v4094 = vadd.f32 0.0, %v4093
        %v4095 = vpop.f32.mrb[0].mxu0
        %4096 = vmatprep.mubr.f32.mxu0 0.0
        %4097 = vmatmul.mubr.f32.gmra.mrb[0].mxu0 %v2407
        %v4098 = vpop.f32.mrb[0].mxu0
        %v4099 = vadd.f32 0.0, %v4098
        %v4100 = vpop.f32.mrb[0].mxu0
        %4101 = vmatprep.mubr.f32.mxu0 0.0
        %4102 = vmatmul.mubr.f32.gmra.mrb[0].mxu0 %v2410
        %v4103 = vpop.f32.mrb[0].mxu0
        %v4104 = vadd.f32 0.0, %v4103
        %v4105 = vpop.f32.mrb[0].mxu0
        %4106 = vmatprep.mubr.f32.mxu0 0.0
        %4107 = vmatmul.mubr.f32.gmra.mrb[0].mxu0 %v2413
        %v4108 = vpop.f32.mrb[0].mxu0
        %v4109 = vadd.f32 0.0, %v4108
        %v4110 = vpop.f32.mrb[0].mxu0
        %4111 = vmatprep.mubr.f32.mxu0 0.0
        %4112 = vmatmul.mubr.f32.gmra.mrb[0].mxu0 %v2416
        %v4113 = vpop.f32.mrb[0].mxu0
        %v4114 = vadd.f32 0.0, %v4113
        %v4115 = vpop.f32.mrb[0].mxu0
        %4116 = vmatprep.mubr.f32.mxu0 0.0
        %4117 = vmatmul.mubr.f32.gmra.mrb[0].mxu0 %v2419
        %v4118 = vpop.f32.mrb[0].mxu0
        %v4119 = vadd.f32 0.0, %v4118
        %v4120 = vpop.f32.mrb[0].mxu0
        %4121 = vmatprep.mubr.f32.mxu0 0.0
        %4122 = vmatmul.mubr.f32.gmra.mrb[0].mxu0 %v2422
        %v4123 = vpop.f32.mrb[0].mxu0
        %v4124 = vadd.f32 0.0, %v4123
        %v4125 = vpop.f32.mrb[0].mxu0
        %4126 = vmatprep.mubr.f32.mxu0 0.0
        %4127 = vmatmul.mubr.f32.gmra.mrb[0].mxu0 %v2425
        %v4128 = vpop.f32.mrb[0].mxu0
        %v4129 = vadd.f32 0.0, %v4128
        %v4130 = vpop.f32.mrb[0].mxu0
        %4131 = vmatprep.mubr.f32.mxu0 0.0
        %4132 = vmatmul.mubr.f32.gmra.mrb[0].mxu0 %v2428
        %v4133 = vpop.f32.mrb[0].mxu0
        %v4134 = vadd.f32 0.0, %v4133
        %v4135 = vpop.f32.mrb[0].mxu0
        %4136 = vmatprep.mubr.f32.mxu0 0.0
        %4137 = vmatmul.mubr.f32.gmra.mrb[0].mxu0 %v2431
        %v4138 = vpop.f32.mrb[0].mxu0
        %v4139 = vadd.f32 0.0, %v4138
        %v4140 = vpop.f32.mrb[0].mxu0
        %4141 = vmatprep.mubr.f32.mxu0 0.0
        %4142 = vmatmul.mubr.f32.gmra.mrb[0].mxu0 %v2434
        %v4143 = vpop.f32.mrb[0].mxu0
        %v4144 = vadd.f32 0.0, %v4143
        %v4145 = vpop.f32.mrb[0].mxu0
        %4146 = vmatprep.mubr.f32.mxu0 0.0
        %4147 = vmatmul.mubr.f32.gmra.mrb[0].mxu0 %v2437
        %v4148 = vpop.f32.mrb[0].mxu0
        %v4149 = vadd.f32 0.0, %v4148
        %v4150 = vpop.f32.mrb[0].mxu0
        %4151 = vmatprep.mubr.f32.mxu0 0.0
        %4152 = vmatmul.mubr.f32.gmra.mrb[0].mxu0 %v2440
        %v4153 = vpop.f32.mrb[0].mxu0
        %v4154 = vadd.f32 0.0, %v4153
        %v4155 = vpop.f32.mrb[0].mxu0
        %4156 = vmatprep.mubr.f32.mxu0 0.0
        %4157 = vmatmul.mubr.f32.gmra.mrb[0].mxu0 %v2443
        %v4158 = vpop.f32.mrb[0].mxu0
        %v4159 = vadd.f32 0.0, %v4158
        %v4160 = vpop.f32.mrb[0].mxu0
        %4161 = vmatprep.mubr.f32.mxu0 0.0
        %4162 = vmatmul.mubr.f32.gmra.mrb[0].mxu0 %v2446
        %v4163 = vpop.f32.mrb[0].mxu0
        %v4164 = vadd.f32 0.0, %v4163
        %v4165 = vpop.f32.mrb[0].mxu0
        %4166 = vmatprep.mubr.f32.mxu0 0.0
        %4167 = vmatmul.mubr.f32.gmra.mrb[0].mxu0 %v2449
        %v4168 = vpop.f32.mrb[0].mxu0
        %v4169 = vadd.f32 0.0, %v4168
        %v4170 = vpop.f32.mrb[0].mxu0
        %4171 = vmatprep.mubr.f32.mxu0 0.0
        %4172 = vmatmul.mubr.f32.gmra.mrb[0].mxu0 %v2452
        %v4173 = vpop.f32.mrb[0].mxu0
        %v4174 = vadd.f32 0.0, %v4173
        %v4175 = vpop.f32.mrb[0].mxu0
        %4176 = vmatprep.mubr.f32.mxu0 0.0
        %4177 = vmatmul.mubr.f32.gmra.mrb[0].mxu0 %v2455
        %v4178 = vpop.f32.mrb[0].mxu0
        %v4179 = vadd.f32 0.0, %v4178
        %v4180 = vpop.f32.mrb[0].mxu0
        %4181 = vmatprep.mubr.f32.mxu0 0.0
        %4182 = vmatmul.mubr.f32.gmra.mrb[0].mxu0 %v2458
        %v4183 = vpop.f32.mrb[0].mxu0
        %v4184 = vadd.f32 0.0, %v4183
        %v4185 = vpop.f32.mrb[0].mxu0
        %4186 = vmatprep.mubr.f32.mxu0 0.0
        %4187 = vmatmul.mubr.f32.gmra.mrb[0].mxu0 %v2461
        %v4188 = vpop.f32.mrb[0].mxu0
        %v4189 = vadd.f32 0.0, %v4188
        %v4190 = vpop.f32.mrb[0].mxu0
        %4191 = vmatprep.mubr.f32.mxu0 0.0
        %4192 = vmatmul.mubr.f32.gmra.mrb[0].mxu0 %v2464
        %v4193 = vpop.f32.mrb[0].mxu0
        %v4194 = vadd.f32 0.0, %v4193
        %v4195 = vpop.f32.mrb[0].mxu0
        %4196 = vmatprep.mubr.f32.mxu0 0.0
        %4197 = vmatmul.mubr.f32.gmra.mrb[0].mxu0 %v2467
        %v4198 = vpop.f32.mrb[0].mxu0
        %v4199 = vadd.f32 0.0, %v4198
        %v4200 = vpop.f32.mrb[0].mxu0
        %4201 = vmatprep.mubr.f32.mxu0 0.0
        %4202 = vmatmul.mubr.f32.gmra.mrb[0].mxu0 %v2470
        %v4203 = vpop.f32.mrb[0].mxu0
        %v4204 = vadd.f32 0.0, %v4203
        %v4205 = vpop.f32.mrb[0].mxu0
        %4206 = vmatprep.mubr.f32.mxu0 0.0
        %4207 = vmatmul.mubr.f32.gmra.mrb[0].mxu0 %v2473
        %v4208 = vpop.f32.mrb[0].mxu0
        %v4209 = vadd.f32 0.0, %v4208
        %v4210 = vpop.f32.mrb[0].mxu0
        %4211 = vmatprep.mubr.f32.mxu0 0.0
        %4212 = vmatmul.mubr.f32.gmra.mrb[0].mxu0 %v2476
        %v4213 = vpop.f32.mrb[0].mxu0
        %v4214 = vadd.f32 0.0, %v4213
        %v4215 = vpop.f32.mrb[0].mxu0
        %4216 = vmatprep.mubr.f32.mxu0 0.0
        %4217 = vmatmul.mubr.f32.gmra.mrb[0].mxu0 %v2479
        %v4218 = vpop.f32.mrb[0].mxu0
        %v4219 = vadd.f32 0.0, %v4218
        %v4220 = vpop.f32.mrb[0].mxu0
        %4221 = vmatprep.mubr.f32.mxu0 0.0
        %4222 = vmatmul.mubr.f32.gmra.mrb[0].mxu0 %v2482
        %v4223 = vpop.f32.mrb[0].mxu0
        %v4224 = vadd.f32 0.0, %v4223
        %v4225 = vpop.f32.mrb[0].mxu0
        %4226 = vmatprep.mubr.f32.mxu0 0.0
        %4227 = vmatmul.mubr.f32.gmra.mrb[0].mxu0 %v2485
        %v4228 = vpop.f32.mrb[0].mxu0
        %v4229 = vadd.f32 0.0, %v4228
        %v4230 = vpop.f32.mrb[0].mxu0
        %4231 = vmatprep.mubr.f32.mxu0 0.0
        %4232 = vmatmul.mubr.f32.gmra.mrb[0].mxu0 %v2488
        %v4233 = vpop.f32.mrb[0].mxu0
        %v4234 = vadd.f32 0.0, %v4233
        %v4235 = vpop.f32.mrb[0].mxu0
        %4236 = vmatprep.mubr.f32.mxu0 0.0
        %4237 = vmatmul.mubr.f32.gmra.mrb[0].mxu0 %v2491
        %v4238 = vpop.f32.mrb[0].mxu0
        %v4239 = vadd.f32 0.0, %v4238
        %v4240 = vpop.f32.mrb[0].mxu0
        %4241 = vmatprep.mubr.f32.mxu0 0.0
        %4242 = vmatmul.mubr.f32.gmra.mrb[0].mxu0 %v2494
        %v4243 = vpop.f32.mrb[0].mxu0
        %v4244 = vadd.f32 0.0, %v4243
        %v4245 = vpop.f32.mrb[0].mxu0
        %4246 = vmatprep.mubr.f32.mxu0 0.0
        %4247 = vmatmul.mubr.f32.gmra.mrb[0].mxu0 %v2497
        %v4248 = vpop.f32.mrb[0].mxu0
        %v4249 = vadd.f32 0.0, %v4248
        %v4250 = vpop.f32.mrb[0].mxu0
        %4251 = vmatprep.mubr.f32.mxu0 0.0
        %4252 = vmatmul.mubr.f32.gmra.mrb[0].mxu0 %v2500
        %v4253 = vpop.f32.mrb[0].mxu0
        %v4254 = vadd.f32 0.0, %v4253
        %v4255 = vpop.f32.mrb[0].mxu0
        %4256 = vmatprep.mubr.f32.mxu0 0.0
        %4257 = vmatmul.mubr.f32.gmra.mrb[0].mxu0 %v2503
        %v4258 = vpop.f32.mrb[0].mxu0
        %v4259 = vadd.f32 0.0, %v4258
        %v4260 = vpop.f32.mrb[0].mxu0
        %4261 = vmatprep.mubr.f32.mxu0 0.0
        %4262 = vmatmul.mubr.f32.gmra.mrb[0].mxu0 %v2506
        %v4263 = vpop.f32.mrb[0].mxu0
        %v4264 = vadd.f32 0.0, %v4263
        %v4265 = vpop.f32.mrb[0].mxu0
        %4266 = vmatprep.mubr.f32.mxu0 0.0
        %4267 = vmatmul.mubr.f32.gmra.mrb[0].mxu0 %v2509
        %v4268 = vpop.f32.mrb[0].mxu0
        %v4269 = vadd.f32 0.0, %v4268
        %v4270 = vpop.f32.mrb[0].mxu0
        %4271 = vmatprep.mubr.f32.mxu0 0.0
        %4272 = vmatmul.mubr.f32.gmra.mrb[0].mxu0 %v2512
        %v4273 = vpop.f32.mrb[0].mxu0
        %v4274 = vadd.f32 0.0, %v4273
        %v4275 = vpop.f32.mrb[0].mxu0
        %4276 = vmatprep.mubr.f32.mxu0 0.0
        %4277 = vmatmul.mubr.f32.gmra.mrb[0].mxu0 %v2515
        %v4278 = vpop.f32.mrb[0].mxu0
        %v4279 = vadd.f32 0.0, %v4278
        %v4280 = vpop.f32.mrb[0].mxu0
        %4281 = vmatprep.mubr.f32.mxu0 0.0
        %4282 = vmatmul.mubr.f32.gmra.mrb[0].mxu0 %v2518
        %v4283 = vpop.f32.mrb[0].mxu0
        %v4284 = vadd.f32 0.0, %v4283
        %v4285 = vpop.f32.mrb[0].mxu0
        %4286 = vmatprep.mubr.f32.mxu0 0.0
        %4287 = vmatmul.mubr.f32.gmra.mrb[0].mxu0 %v2521
        %v4288 = vpop.f32.mrb[0].mxu0
        %v4289 = vadd.f32 0.0, %v4288
        %v4290 = vpop.f32.mrb[0].mxu0
        %4291 = vmatprep.mubr.f32.mxu0 0.0
        %4292 = vmatmul.mubr.f32.gmra.mrb[0].mxu0 %v2524
        %v4293 = vpop.f32.mrb[0].mxu0
        %v4294 = vadd.f32 0.0, %v4293
        %v4295 = vpop.f32.mrb[0].mxu0
        %4296 = vmatprep.mubr.f32.mxu0 0.0
        %4297 = vmatmul.mubr.f32.gmra.mrb[0].mxu0 %v2527
        %v4298 = vpop.f32.mrb[0].mxu0
        %v4299 = vadd.f32 0.0, %v4298
        %v4300 = vpop.f32.mrb[0].mxu0
        %4301 = vmatprep.mubr.f32.mxu0 0.0
        %4302 = vmatmul.mubr.f32.gmra.mrb[0].mxu0 %v2530
        %v4303 = vpop.f32.mrb[0].mxu0
        %v4304 = vadd.f32 0.0, %v4303
        %v4305 = vpop.f32.mrb[0].mxu0
        %4306 = vmatprep.mubr.f32.mxu0 0.0
        %4307 = vmatmul.mubr.f32.gmra.mrb[0].mxu0 %v2533
        %v4308 = vpop.f32.mrb[0].mxu0
        %v4309 = vadd.f32 0.0, %v4308
        %v4310 = vpop.f32.mrb[0].mxu0
        %4311 = vmatprep.mubr.f32.mxu0 0.0
        %4312 = vmatmul.mubr.f32.gmra.mrb[0].mxu0 %v2536
        %v4313 = vpop.f32.mrb[0].mxu0
        %v4314 = vadd.f32 0.0, %v4313
        %v4315 = vpop.f32.mrb[0].mxu0
        %4316 = vmatprep.mubr.f32.mxu0 0.0
        %4317 = vmatmul.mubr.f32.gmra.mrb[0].mxu0 %v2539
        %v4318 = vpop.f32.mrb[0].mxu0
        %v4319 = vadd.f32 0.0, %v4318
        %v4320 = vpop.f32.mrb[0].mxu0
        %4321 = vmatprep.mubr.f32.mxu0 0.0
        %4322 = vmatmul.mubr.f32.gmra.mrb[0].mxu0 %v2542
        %v4323 = vpop.f32.mrb[0].mxu0
        %v4324 = vadd.f32 0.0, %v4323
        %v4325 = vpop.f32.mrb[0].mxu0
        %4326 = vmatprep.mubr.f32.mxu0 0.0
        %4327 = vmatmul.mubr.f32.gmra.mrb[0].mxu0 %v2545
        %v4328 = vpop.f32.mrb[0].mxu0
        %v4329 = vadd.f32 0.0, %v4328
        %v4330 = vpop.f32.mrb[0].mxu0
        %4331 = vmatprep.mubr.f32.mxu0 0.0
        %4332 = vmatmul.mubr.f32.gmra.mrb[0].mxu0 %v2548
        %v4333 = vpop.f32.mrb[0].mxu0
        %v4334 = vadd.f32 0.0, %v4333
        %v4335 = vpop.f32.mrb[0].mxu0
        %4336 = vmatprep.mubr.f32.mxu0 0.0
        %4337 = vmatmul.mubr.f32.gmra.mrb[0].mxu0 %v2551
        %v4338 = vpop.f32.mrb[0].mxu0
        %v4339 = vadd.f32 0.0, %v4338
        %v4340 = vpop.f32.mrb[0].mxu0
        %4341 = vmatprep.mubr.f32.mxu0 0.0
        %4342 = vmatmul.mubr.f32.gmra.mrb[0].mxu0 %v2554
        %v4343 = vpop.f32.mrb[0].mxu0
        %v4344 = vadd.f32 0.0, %v4343
        %v4345 = vpop.f32.mrb[0].mxu0
        %4346 = vmatprep.mubr.f32.mxu0 0.0
        %4347 = vmatmul.mubr.f32.gmra.mrb[0].mxu0 %v2557
        %v4348 = vpop.f32.mrb[0].mxu0
        %v4349 = vadd.f32 0.0, %v4348
        %v4350 = vpop.f32.mrb[0].mxu0
        %4351 = vmatprep.mubr.f32.mxu0 0.0
        %4352 = vmatmul.mubr.f32.gmra.mrb[0].mxu0 %v2560
        %v4353 = vpop.f32.mrb[0].mxu0
        %v4354 = vadd.f32 0.0, %v4353
        %v4355 = vpop.f32.mrb[0].mxu0
        %4356 = vmatprep.mubr.f32.mxu0 0.0
        %4357 = vmatmul.mubr.f32.gmra.mrb[0].mxu0 %v2563
        %v4358 = vpop.f32.mrb[0].mxu0
        %v4359 = vadd.f32 0.0, %v4358
        %v4360 = vpop.f32.mrb[0].mxu0
        %4361 = vmatprep.mubr.f32.mxu0 0.0
        %4362 = vmatmul.mubr.f32.gmra.mrb[0].mxu0 %v2566
        %v4363 = vpop.f32.mrb[0].mxu0
        %v4364 = vadd.f32 0.0, %v4363
        %v4365 = vpop.f32.mrb[0].mxu0
        %4366 = vmatprep.mubr.f32.mxu0 0.0
        %4367 = vmatmul.mubr.f32.gmra.mrb[0].mxu0 %v2569
        %v4368 = vpop.f32.mrb[0].mxu0
        %v4369 = vadd.f32 0.0, %v4368
        %v4370 = vpop.f32.mrb[0].mxu0
        %4371 = vmatprep.mubr.f32.mxu0 0.0
        %4372 = vmatmul.mubr.f32.gmra.mrb[0].mxu0 %v2572
        %v4373 = vpop.f32.mrb[0].mxu0
        %v4374 = vadd.f32 0.0, %v4373
        %v4375 = vpop.f32.mrb[0].mxu0
        %4376 = vmatprep.mubr.f32.mxu0 0.0
        %4377 = vmatmul.mubr.f32.gmra.mrb[0].mxu0 %v2575
        %v4378 = vpop.f32.mrb[0].mxu0
        %v4379 = vadd.f32 0.0, %v4378
        %v4380 = vpop.f32.mrb[0].mxu0
        %4381 = vmatprep.mubr.f32.mxu0 0.0
        %4382 = vmatmul.mubr.f32.gmra.mrb[0].mxu0 %v2578
        %v4383 = vpop.f32.mrb[0].mxu0
        %v4384 = vadd.f32 0.0, %v4383
        %v4385 = vpop.f32.mrb[0].mxu0
        %4386 = vmatprep.mubr.f32.mxu0 0.0
        %4387 = vmatmul.mubr.f32.gmra.mrb[0].mxu0 %v2581
        %v4388 = vpop.f32.mrb[0].mxu0
        %v4389 = vadd.f32 0.0, %v4388
        %v4390 = vpop.f32.mrb[0].mxu0
        %4391 = vmatprep.mubr.f32.mxu0 0.0
        %4392 = vmatmul.mubr.f32.gmra.mrb[0].mxu0 %v2584
        %v4393 = vpop.f32.mrb[0].mxu0
        %v4394 = vadd.f32 0.0, %v4393
        %v4395 = vpop.f32.mrb[0].mxu0
        %4396 = vmatprep.mubr.f32.mxu0 0.0
        %4397 = vmatmul.mubr.f32.gmra.mrb[0].mxu0 %v2587
        %v4398 = vpop.f32.mrb[0].mxu0
        %v4399 = vadd.f32 0.0, %v4398
        %v4400 = vpop.f32.mrb[0].mxu0
        %4401 = vmatprep.mubr.f32.mxu0 0.0
        %4402 = vmatmul.mubr.f32.gmra.mrb[0].mxu0 %v2590
        %v4403 = vpop.f32.mrb[0].mxu0
        %v4404 = vadd.f32 0.0, %v4403
        %v4405 = vpop.f32.mrb[0].mxu0
        %4406 = vmatprep.mubr.f32.mxu0 0.0
        %4407 = vmatmul.mubr.f32.gmra.mrb[0].mxu0 %v2593
        %v4408 = vpop.f32.mrb[0].mxu0
        %v4409 = vadd.f32 0.0, %v4408
        %v4410 = vpop.f32.mrb[0].mxu0
        %4411 = vmatprep.mubr.f32.mxu0 0.0
        %4412 = vmatmul.mubr.f32.gmra.mrb[0].mxu0 %v2596
        %v4413 = vpop.f32.mrb[0].mxu0
        %v4414 = vadd.f32 0.0, %v4413
        %v4415 = vpop.f32.mrb[0].mxu0
        %4416 = vmatprep.mubr.f32.mxu0 0.0
        %4417 = vmatmul.mubr.f32.gmra.mrb[0].mxu0 %v2599
        %v4418 = vpop.f32.mrb[0].mxu0
        %v4419 = vadd.f32 0.0, %v4418
        %v4420 = vpop.f32.mrb[0].mxu0
        %4421 = vmatprep.mubr.f32.mxu0 0.0
        %4422 = vmatmul.mubr.f32.gmra.mrb[0].mxu0 %v2602
        %v4423 = vpop.f32.mrb[0].mxu0
        %v4424 = vadd.f32 0.0, %v4423
        %v4425 = vpop.f32.mrb[0].mxu0
        %4426 = vmatprep.mubr.f32.mxu0 0.0
        %4427 = vmatmul.mubr.f32.gmra.mrb[0].mxu0 %v2605
        %v4428 = vpop.f32.mrb[0].mxu0
        %v4429 = vadd.f32 0.0, %v4428
        %v4430 = vpop.f32.mrb[0].mxu0
        %4431 = vmatprep.mubr.f32.mxu0 0.0
        %4432 = vmatmul.mubr.f32.gmra.mrb[0].mxu0 %v2608
        %v4433 = vpop.f32.mrb[0].mxu0
        %v4434 = vadd.f32 0.0, %v4433
        %v4435 = vpop.f32.mrb[0].mxu0
        %4436 = vmatprep.mubr.f32.mxu0 0.0
        %4437 = vmatmul.mubr.f32.gmra.mrb[0].mxu0 %v2611
        %v4438 = vpop.f32.mrb[0].mxu0
        %v4439 = vadd.f32 0.0, %v4438
        %v4440 = vpop.f32.mrb[0].mxu0
        %4441 = vmatprep.mubr.f32.mxu0 0.0
        %4442 = vmatmul.mubr.f32.gmra.mrb[0].mxu0 %v2614
        %v4443 = vpop.f32.mrb[0].mxu0
        %v4444 = vadd.f32 0.0, %v4443
        %v4445 = vpop.f32.mrb[0].mxu0
        %4446 = vmatprep.mubr.f32.mxu0 0.0
        %4447 = vmatmul.mubr.f32.gmra.mrb[0].mxu0 %v2617
        %v4448 = vpop.f32.mrb[0].mxu0
        %v4449 = vadd.f32 0.0, %v4448
        %v4450 = vpop.f32.mrb[0].mxu0
        %4451 = vmatprep.mubr.f32.mxu0 0.0
        %4452 = vmatmul.mubr.f32.gmra.mrb[0].mxu0 %v2620
        %v4453 = vpop.f32.mrb[0].mxu0
        %v4454 = vadd.f32 0.0, %v4453
        %v4455 = vpop.f32.mrb[0].mxu0
        %4456 = vmatprep.mubr.f32.mxu0 0.0
        %4457 = vmatmul.mubr.f32.gmra.mrb[0].mxu0 %v2623
        %v4458 = vpop.f32.mrb[0].mxu0
        %v4459 = vadd.f32 0.0, %v4458
        %v4460 = vpop.f32.mrb[0].mxu0
        %4461 = vmatprep.mubr.f32.mxu0 0.0
        %4462 = vmatmul.mubr.f32.gmra.mrb[0].mxu0 %v2626
        %v4463 = vpop.f32.mrb[0].mxu0
        %v4464 = vadd.f32 0.0, %v4463
        %v4465 = vpop.f32.mrb[0].mxu0
        %4466 = vmatprep.mubr.f32.mxu0 0.0
        %4467 = vmatmul.mubr.f32.gmra.mrb[0].mxu0 %v2629
        %v4468 = vpop.f32.mrb[0].mxu0
        %v4469 = vadd.f32 0.0, %v4468
        %v4470 = vpop.f32.mrb[0].mxu0
        %4471 = vmatprep.mubr.f32.mxu0 0.0
        %4472 = vmatmul.mubr.f32.gmra.mrb[0].mxu0 %v2632
        %v4473 = vpop.f32.mrb[0].mxu0
        %v4474 = vadd.f32 0.0, %v4473
        %v4475 = vpop.f32.mrb[0].mxu0
        %4476 = vmatprep.mubr.f32.mxu0 0.0
        %4477 = vmatmul.mubr.f32.gmra.mrb[0].mxu0 %v2635
        %v4478 = vpop.f32.mrb[0].mxu0
        %v4479 = vadd.f32 0.0, %v4478
        %v4480 = vpop.f32.mrb[0].mxu0
        %4481 = vmatprep.mubr.f32.mxu0 0.0
        %4482 = vmatmul.mubr.f32.gmra.mrb[0].mxu0 %v2638
        %v4483 = vpop.f32.mrb[0].mxu0
        %v4484 = vadd.f32 0.0, %v4483
        %v4485 = vpop.f32.mrb[0].mxu0
        %4486 = vmatprep.mubr.f32.mxu0 0.0
        %4487 = vmatmul.mubr.f32.gmra.mrb[0].mxu0 %v2641
        %v4488 = vpop.f32.mrb[0].mxu0
        %v4489 = vadd.f32 0.0, %v4488
        %v4490 = vpop.f32.mrb[0].mxu0
        %4491 = vmatprep.mubr.f32.mxu0 0.0
        %4492 = vmatmul.mubr.f32.gmra.mrb[0].mxu0 %v2644
        %v4493 = vpop.f32.mrb[0].mxu0
        %v4494 = vadd.f32 0.0, %v4493
        %v4495 = vpop.f32.mrb[0].mxu0
        %4496 = vmatprep.mubr.f32.mxu0 0.0
        %4497 = vmatmul.mubr.f32.gmra.mrb[0].mxu0 %v2647
        %v4498 = vpop.f32.mrb[0].mxu0
        %v4499 = vadd.f32 0.0, %v4498
        %v4500 = vpop.f32.mrb[0].mxu0
        %4501 = vmatprep.mubr.f32.mxu0 0.0
        %4502 = vmatmul.mubr.f32.gmra.mrb[0].mxu0 %v2650
        %v4503 = vpop.f32.mrb[0].mxu0
        %v4504 = vadd.f32 0.0, %v4503
        %v4505 = vpop.f32.mrb[0].mxu0
        %4506 = vmatprep.mubr.f32.mxu0 0.0
        %4507 = vmatmul.mubr.f32.gmra.mrb[0].mxu0 %v2653
        %v4508 = vpop.f32.mrb[0].mxu0
        %v4509 = vadd.f32 0.0, %v4508
        %v4510 = vpop.f32.mrb[0].mxu0
        %4511 = vmatprep.mubr.f32.mxu0 0.0
        %4512 = vmatmul.mubr.f32.gmra.mrb[0].mxu0 %v2656
        %v4513 = vpop.f32.mrb[0].mxu0
        %v4514 = vadd.f32 0.0, %v4513
        %v4515 = vpop.f32.mrb[0].mxu0
        %4516 = vmatprep.mubr.f32.mxu0 0.0
        %4517 = vmatmul.mubr.f32.gmra.mrb[0].mxu0 %v2659
        %v4518 = vpop.f32.mrb[0].mxu0
        %v4519 = vadd.f32 0.0, %v4518
        %v4520 = vpop.f32.mrb[0].mxu0
        %4521 = vmatprep.mubr.f32.mxu0 0.0
        %4522 = vmatmul.mubr.f32.gmra.mrb[0].mxu0 %v2662
        %v4523 = vpop.f32.mrb[0].mxu0
        %v4524 = vadd.f32 0.0, %v4523
        %v4525 = vpop.f32.mrb[0].mxu0
        %4526 = vmatprep.mubr.f32.mxu0 0.0
        %4527 = vmatmul.mubr.f32.gmra.mrb[0].mxu0 %v2665
        %v4528 = vpop.f32.mrb[0].mxu0
        %v4529 = vadd.f32 0.0, %v4528
        %v4530 = vpop.f32.mrb[0].mxu0
        %4531 = vdwg.mxu0
        %v4532 = vadd.f32 %v2734, %v2754
        %v4533 = vadd.f32 %v2739, %v2759
        %v4534 = vadd.f32 %v2744, %v2764
        %v4535 = vadd.f32 %v2749, %v2769
        %v4536 = vadd.f32 %v2754, %v2774
        %v4537 = vadd.f32 %v2759, %v2779
        %v4538 = vadd.f32 %v2764, %v2784
        %v4539 = vadd.f32 %v2769, %v2789
        %v4540 = vadd.f32 %v2774, %v2794
        %v4541 = vadd.f32 %v2779, %v2799
        %v4542 = vadd.f32 %v2784, %v2804
        %v4543 = vadd.f32 %v2789, %v2809
        %v4544 = vadd.f32 %v2794, %v2814
        %v4545 = vadd.f32 %v2799, %v2819
        %v4546 = vadd.f32 %v2804, %v2824
        %v4547 = vadd.f32 %v2809, %v2829
        %v4548 = vadd.f32 %v2814, %v2834
        %v4549 = vadd.f32 %v2819, %v2839
        %v4550 = vadd.f32 %v2824, %v2844
        %v4551 = vadd.f32 %v2829, %v2849
        %v4552 = vadd.f32 %v2834, %v2854
        %v4553 = vadd.f32 %v2839, %v2859
        %v4554 = vadd.f32 %v2844, %v2864
        %v4555 = vadd.f32 %v2849, %v2869
        %v4556 = vadd.f32 %v2854, %v2874
        %v4557 = vadd.f32 %v2859, %v2879
        %v4558 = vadd.f32 %v2864, %v2884
        %v4559 = vadd.f32 %v2869, %v2889
        %v4560 = vadd.f32 %v2874, %v2894
        %v4561 = vadd.f32 %v2879, %v2899
        %v4562 = vadd.f32 %v2884, %v2904
        %v4563 = vadd.f32 %v2889, %v2909
        %v4564 = vadd.f32 %v2894, %v2914
        %v4565 = vadd.f32 %v2899, %v2919
        %v4566 = vadd.f32 %v2904, %v2924
        %v4567 = vadd.f32 %v2909, %v2929
        %v4568 = vadd.f32 %v2914, %v2934
        %v4569 = vadd.f32 %v2919, %v2939
        %v4570 = vadd.f32 %v2924, %v2944
        %v4571 = vadd.f32 %v2929, %v2949
        %v4572 = vadd.f32 %v2934, %v2954
        %v4573 = vadd.f32 %v2939, %v2959
        %v4574 = vadd.f32 %v2944, %v2964
        %v4575 = vadd.f32 %v2949, %v2969
        %v4576 = vadd.f32 %v2954, %v2974
        %v4577 = vadd.f32 %v2959, %v2979
        %v4578 = vadd.f32 %v2964, %v2984
        %v4579 = vadd.f32 %v2969, %v2989
        %v4580 = vadd.f32 %v2974, %v2994
        %v4581 = vadd.f32 %v2979, %v2999
        %v4582 = vadd.f32 %v2984, %v3004
        %v4583 = vadd.f32 %v2989, %v3009
        %v4584 = vadd.f32 %v2994, %v3014
        %v4585 = vadd.f32 %v2999, %v3019
        %v4586 = vadd.f32 %v3004, %v3024
        %v4587 = vadd.f32 %v3009, %v3029
        %v4588 = vadd.f32 %v3014, %v3034
        %v4589 = vadd.f32 %v3019, %v3039
        %v4590 = vadd.f32 %v3024, %v3044
        %v4591 = vadd.f32 %v3029, %v3049
        %v4592 = vadd.f32 %v3034, %v3054
        %v4593 = vadd.f32 %v3039, %v3059
        %v4594 = vadd.f32 %v3044, %v3064
        %v4595 = vadd.f32 %v3049, %v3069
        %v4596 = vadd.f32 %v3094, %v3114
        %v4597 = vadd.f32 %v3099, %v3119
        %v4598 = vadd.f32 %v3104, %v3124
        %v4599 = vadd.f32 %v3109, %v3129
        %v4600 = vadd.f32 %v3114, %v3134
        %v4601 = vadd.f32 %v3119, %v3139
        %v4602 = vadd.f32 %v3124, %v3144
        %v4603 = vadd.f32 %v3129, %v3149
        %v4604 = vadd.f32 %v3134, %v3154
        %v4605 = vadd.f32 %v3139, %v3159
        %v4606 = vadd.f32 %v3144, %v3164
        %v4607 = vadd.f32 %v3149, %v3169
        %v4608 = vadd.f32 %v3154, %v3174
        %v4609 = vadd.f32 %v3159, %v3179
        %v4610 = vadd.f32 %v3164, %v3184
        %v4611 = vadd.f32 %v3169, %v3189
        %v4612 = vadd.f32 %v3174, %v3194
        %v4613 = vadd.f32 %v3179, %v3199
        %v4614 = vadd.f32 %v3184, %v3204
        %v4615 = vadd.f32 %v3189, %v3209
        %v4616 = vadd.f32 %v3194, %v3214
        %v4617 = vadd.f32 %v3199, %v3219
        %v4618 = vadd.f32 %v3204, %v3224
        %v4619 = vadd.f32 %v3209, %v3229
        %v4620 = vadd.f32 %v3214, %v3234
        %v4621 = vadd.f32 %v3219, %v3239
        %v4622 = vadd.f32 %v3224, %v3244
        %v4623 = vadd.f32 %v3229, %v3249
        %v4624 = vadd.f32 %v3234, %v3254
        %v4625 = vadd.f32 %v3239, %v3259
        %v4626 = vadd.f32 %v3244, %v3264
        %v4627 = vadd.f32 %v3249, %v3269
        %v4628 = vadd.f32 %v3254, %v3274
        %v4629 = vadd.f32 %v3259, %v3279
        %v4630 = vadd.f32 %v3264, %v3284
        %v4631 = vadd.f32 %v3269, %v3289
        %v4632 = vadd.f32 %v3274, %v3294
        %v4633 = vadd.f32 %v3279, %v3299
        %v4634 = vadd.f32 %v3284, %v3304
        %v4635 = vadd.f32 %v3289, %v3309
        %v4636 = vadd.f32 %v3294, %v3314
        %v4637 = vadd.f32 %v3299, %v3319
        %v4638 = vadd.f32 %v3304, %v3324
        %v4639 = vadd.f32 %v3309, %v3329
        %v4640 = vadd.f32 %v3314, %v3334
        %v4641 = vadd.f32 %v3319, %v3339
        %v4642 = vadd.f32 %v3324, %v3344
        %v4643 = vadd.f32 %v3329, %v3349
        %v4644 = vadd.f32 %v3334, %v3354
        %v4645 = vadd.f32 %v3339, %v3359
        %v4646 = vadd.f32 %v3344, %v3364
        %v4647 = vadd.f32 %v3349, %v3369
        %v4648 = vadd.f32 %v3354, %v3374
        %v4649 = vadd.f32 %v3359, %v3379
        %v4650 = vadd.f32 %v3364, %v3384
        %v4651 = vadd.f32 %v3369, %v3389
        %v4652 = vadd.f32 %v3374, %v3394
        %v4653 = vadd.f32 %v3379, %v3399
        %v4654 = vadd.f32 %v3384, %v3404
        %v4655 = vadd.f32 %v3389, %v3409
        %v4656 = vadd.f32 %v3394, %v3414
        %v4657 = vadd.f32 %v3399, %v3419
        %v4658 = vadd.f32 %v3404, %v3424
        %v4659 = vadd.f32 %v3409, %v3429
        %v4660 = vadd.f32 %v3454, %v3474
        %v4661 = vadd.f32 %v3459, %v3479
        %v4662 = vadd.f32 %v3464, %v3484
        %v4663 = vadd.f32 %v3469, %v3489
        %v4664 = vadd.f32 %v3474, %v3494
        %v4665 = vadd.f32 %v3479, %v3499
        %v4666 = vadd.f32 %v3484, %v3504
        %v4667 = vadd.f32 %v3489, %v3509
        %v4668 = vadd.f32 %v3494, %v3514
        %v4669 = vadd.f32 %v3499, %v3519
        %v4670 = vadd.f32 %v3504, %v3524
        %v4671 = vadd.f32 %v3509, %v3529
        %v4672 = vadd.f32 %v3514, %v3534
        %v4673 = vadd.f32 %v3519, %v3539
        %v4674 = vadd.f32 %v3524, %v3544
        %v4675 = vadd.f32 %v3529, %v3549
        %v4676 = vadd.f32 %v3534, %v3554
        %v4677 = vadd.f32 %v3539, %v3559
        %v4678 = vadd.f32 %v3544, %v3564
        %v4679 = vadd.f32 %v3549, %v3569
        %v4680 = vadd.f32 %v3554, %v3574
        %v4681 = vadd.f32 %v3559, %v3579
        %v4682 = vadd.f32 %v3564, %v3584
        %v4683 = vadd.f32 %v3569, %v3589
        %v4684 = vadd.f32 %v3574, %v3594
        %v4685 = vadd.f32 %v3579, %v3599
        %v4686 = vadd.f32 %v3584, %v3604
        %v4687 = vadd.f32 %v3589, %v3609
        %v4688 = vadd.f32 %v3594, %v3614
        %v4689 = vadd.f32 %v3599, %v3619
        %v4690 = vadd.f32 %v3604, %v3624
        %v4691 = vadd.f32 %v3609, %v3629
        %v4692 = vadd.f32 %v3614, %v3634
        %v4693 = vadd.f32 %v3619, %v3639
        %v4694 = vadd.f32 %v3624, %v3644
        %v4695 = vadd.f32 %v3629, %v3649
        %v4696 = vadd.f32 %v3634, %v3654
        %v4697 = vadd.f32 %v3639, %v3659
        %v4698 = vadd.f32 %v3644, %v3664
        %v4699 = vadd.f32 %v3649, %v3669
        %v4700 = vadd.f32 %v3654, %v3674
        %v4701 = vadd.f32 %v3659, %v3679
        %v4702 = vadd.f32 %v3664, %v3684
        %v4703 = vadd.f32 %v3669, %v3689
        %v4704 = vadd.f32 %v3674, %v3694
        %v4705 = vadd.f32 %v3679, %v3699
        %v4706 = vadd.f32 %v3684, %v3704
        %v4707 = vadd.f32 %v3689, %v3709
        %v4708 = vadd.f32 %v3694, %v3714
        %v4709 = vadd.f32 %v3699, %v3719
        %v4710 = vadd.f32 %v3704, %v3724
        %v4711 = vadd.f32 %v3709, %v3729
        %v4712 = vadd.f32 %v3714, %v3734
        %v4713 = vadd.f32 %v3719, %v3739
        %v4714 = vadd.f32 %v3724, %v3744
        %v4715 = vadd.f32 %v3729, %v3749
        %v4716 = vadd.f32 %v3734, %v3754
        %v4717 = vadd.f32 %v3739, %v3759
        %v4718 = vadd.f32 %v3744, %v3764
        %v4719 = vadd.f32 %v3749, %v3769
        %v4720 = vadd.f32 %v3754, %v3774
        %v4721 = vadd.f32 %v3759, %v3779
        %v4722 = vadd.f32 %v3764, %v3784
        %v4723 = vadd.f32 %v3769, %v3789
        %v4724 = vadd.f32 %v3814, %v3834
        %v4725 = vadd.f32 %v3819, %v3839
        %v4726 = vadd.f32 %v3824, %v3844
        %v4727 = vadd.f32 %v3829, %v3849
        %v4728 = vadd.f32 %v3834, %v3854
        %v4729 = vadd.f32 %v3839, %v3859
        %v4730 = vadd.f32 %v3844, %v3864
        %v4731 = vadd.f32 %v3849, %v3869
        %v4732 = vadd.f32 %v3854, %v3874
        %v4733 = vadd.f32 %v3859, %v3879
        %v4734 = vadd.f32 %v3864, %v3884
        %v4735 = vadd.f32 %v3869, %v3889
        %v4736 = vadd.f32 %v3874, %v3894
        %v4737 = vadd.f32 %v3879, %v3899
        %v4738 = vadd.f32 %v3884, %v3904
        %v4739 = vadd.f32 %v3889, %v3909
        %v4740 = vadd.f32 %v3894, %v3914
        %v4741 = vadd.f32 %v3899, %v3919
        %v4742 = vadd.f32 %v3904, %v3924
        %v4743 = vadd.f32 %v3909, %v3929
        %v4744 = vadd.f32 %v3914, %v3934
        %v4745 = vadd.f32 %v3919, %v3939
        %v4746 = vadd.f32 %v3924, %v3944
        %v4747 = vadd.f32 %v3929, %v3949
        %v4748 = vadd.f32 %v3934, %v3954
        %v4749 = vadd.f32 %v3939, %v3959
        %v4750 = vadd.f32 %v3944, %v3964
        %v4751 = vadd.f32 %v3949, %v3969
        %v4752 = vadd.f32 %v3954, %v3974
        %v4753 = vadd.f32 %v3959, %v3979
        %v4754 = vadd.f32 %v3964, %v3984
        %v4755 = vadd.f32 %v3969, %v3989
        %v4756 = vadd.f32 %v3974, %v3994
        %v4757 = vadd.f32 %v3979, %v3999
        %v4758 = vadd.f32 %v3984, %v4004
        %v4759 = vadd.f32 %v3989, %v4009
        %v4760 = vadd.f32 %v3994, %v4014
        %v4761 = vadd.f32 %v3999, %v4019
        %v4762 = vadd.f32 %v4004, %v4024
        %v4763 = vadd.f32 %v4009, %v4029
        %v4764 = vadd.f32 %v4014, %v4034
        %v4765 = vadd.f32 %v4019, %v4039
        %v4766 = vadd.f32 %v4024, %v4044
        %v4767 = vadd.f32 %v4029, %v4049
        %v4768 = vadd.f32 %v4034, %v4054
        %v4769 = vadd.f32 %v4039, %v4059
        %v4770 = vadd.f32 %v4044, %v4064
        %v4771 = vadd.f32 %v4049, %v4069
        %v4772 = vadd.f32 %v4054, %v4074
        %v4773 = vadd.f32 %v4059, %v4079
        %v4774 = vadd.f32 %v4064, %v4084
        %v4775 = vadd.f32 %v4069, %v4089
        %v4776 = vadd.f32 %v4074, %v4094
        %v4777 = vadd.f32 %v4079, %v4099
        %v4778 = vadd.f32 %v4084, %v4104
        %v4779 = vadd.f32 %v4089, %v4109
        %v4780 = vadd.f32 %v4094, %v4114
        %v4781 = vadd.f32 %v4099, %v4119
        %v4782 = vadd.f32 %v4104, %v4124
        %v4783 = vadd.f32 %v4109, %v4129
        %v4784 = vadd.f32 %v4114, %v4134
        %v4785 = vadd.f32 %v4119, %v4139
        %v4786 = vadd.f32 %v4124, %v4144
        %v4787 = vadd.f32 %v4129, %v4149
        %v4788 = vadd.f32 %v4174, %v4194
        %v4789 = vadd.f32 %v4179, %v4199
        %v4790 = vadd.f32 %v4184, %v4204
        %v4791 = vadd.f32 %v4189, %v4209
        %v4792 = vadd.f32 %v4194, %v4214
        %v4793 = vadd.f32 %v4199, %v4219
        %v4794 = vadd.f32 %v4204, %v4224
        %v4795 = vadd.f32 %v4209, %v4229
        %v4796 = vadd.f32 %v4214, %v4234
        %v4797 = vadd.f32 %v4219, %v4239
        %v4798 = vadd.f32 %v4224, %v4244
        %v4799 = vadd.f32 %v4229, %v4249
        %v4800 = vadd.f32 %v4234, %v4254
        %v4801 = vadd.f32 %v4239, %v4259
        %v4802 = vadd.f32 %v4244, %v4264
        %v4803 = vadd.f32 %v4249, %v4269
        %v4804 = vadd.f32 %v4254, %v4274
        %v4805 = vadd.f32 %v4259, %v4279
        %v4806 = vadd.f32 %v4264, %v4284
        %v4807 = vadd.f32 %v4269, %v4289
        %v4808 = vadd.f32 %v4274, %v4294
        %v4809 = vadd.f32 %v4279, %v4299
        %v4810 = vadd.f32 %v4284, %v4304
        %v4811 = vadd.f32 %v4289, %v4309
        %v4812 = vadd.f32 %v4294, %v4314
        %v4813 = vadd.f32 %v4299, %v4319
        %v4814 = vadd.f32 %v4304, %v4324
        %v4815 = vadd.f32 %v4309, %v4329
        %v4816 = vadd.f32 %v4314, %v4334
        %v4817 = vadd.f32 %v4319, %v4339
        %v4818 = vadd.f32 %v4324, %v4344
        %v4819 = vadd.f32 %v4329, %v4349
        %v4820 = vadd.f32 %v4334, %v4354
        %v4821 = vadd.f32 %v4339, %v4359
        %v4822 = vadd.f32 %v4344, %v4364
        %v4823 = vadd.f32 %v4349, %v4369
        %v4824 = vadd.f32 %v4354, %v4374
        %v4825 = vadd.f32 %v4359, %v4379
        %v4826 = vadd.f32 %v4364, %v4384
        %v4827 = vadd.f32 %v4369, %v4389
        %v4828 = vadd.f32 %v4374, %v4394
        %v4829 = vadd.f32 %v4379, %v4399
        %v4830 = vadd.f32 %v4384, %v4404
        %v4831 = vadd.f32 %v4389, %v4409
        %v4832 = vadd.f32 %v4394, %v4414
        %v4833 = vadd.f32 %v4399, %v4419
        %v4834 = vadd.f32 %v4404, %v4424
        %v4835 = vadd.f32 %v4409, %v4429
        %v4836 = vadd.f32 %v4414, %v4434
        %v4837 = vadd.f32 %v4419, %v4439
        %v4838 = vadd.f32 %v4424, %v4444
        %v4839 = vadd.f32 %v4429, %v4449
        %v4840 = vadd.f32 %v4434, %v4454
        %v4841 = vadd.f32 %v4439, %v4459
        %v4842 = vadd.f32 %v4444, %v4464
        %v4843 = vadd.f32 %v4449, %v4469
        %v4844 = vadd.f32 %v4454, %v4474
        %v4845 = vadd.f32 %v4459, %v4479
        %v4846 = vadd.f32 %v4464, %v4484
        %v4847 = vadd.f32 %v4469, %v4489
        %v4848 = vadd.f32 %v4474, %v4494
        %v4849 = vadd.f32 %v4479, %v4499
        %v4850 = vadd.f32 %v4484, %v4504
        %v4851 = vadd.f32 %v4489, %v4509
        %v4852 = vadd.f32 %v4532, %v4540
        %v4853 = vadd.f32 %v4533, %v4541
        %v4854 = vadd.f32 %v4534, %v4542
        %v4855 = vadd.f32 %v4535, %v4543
        %v4856 = vadd.f32 %v4536, %v4544
        %v4857 = vadd.f32 %v4537, %v4545
        %v4858 = vadd.f32 %v4538, %v4546
        %v4859 = vadd.f32 %v4539, %v4547
        %v4860 = vadd.f32 %v4540, %v4548
        %v4861 = vadd.f32 %v4541, %v4549
        %v4862 = vadd.f32 %v4542, %v4550
        %v4863 = vadd.f32 %v4543, %v4551
        %v4864 = vadd.f32 %v4544, %v4552
        %v4865 = vadd.f32 %v4545, %v4553
        %v4866 = vadd.f32 %v4546, %v4554
        %v4867 = vadd.f32 %v4547, %v4555
        %v4868 = vadd.f32 %v4548, %v4556
        %v4869 = vadd.f32 %v4549, %v4557
        %v4870 = vadd.f32 %v4550, %v4558
        %v4871 = vadd.f32 %v4551, %v4559
        %v4872 = vadd.f32 %v4552, %v4560
        %v4873 = vadd.f32 %v4553, %v4561
        %v4874 = vadd.f32 %v4554, %v4562
        %v4875 = vadd.f32 %v4555, %v4563
        %v4876 = vadd.f32 %v4556, %v4564
        %v4877 = vadd.f32 %v4557, %v4565
        %v4878 = vadd.f32 %v4558, %v4566
        %v4879 = vadd.f32 %v4559, %v4567
        %v4880 = vadd.f32 %v4560, %v4568
        %v4881 = vadd.f32 %v4561, %v4569
        %v4882 = vadd.f32 %v4562, %v4570
        %v4883 = vadd.f32 %v4563, %v4571
        %v4884 = vadd.f32 %v4564, %v4572
        %v4885 = vadd.f32 %v4565, %v4573
        %v4886 = vadd.f32 %v4566, %v4574
        %v4887 = vadd.f32 %v4567, %v4575
        %v4888 = vadd.f32 %v4568, %v4576
        %v4889 = vadd.f32 %v4569, %v4577
        %v4890 = vadd.f32 %v4570, %v4578
        %v4891 = vadd.f32 %v4571, %v4579
        %v4892 = vadd.f32 %v4572, %v4580
        %v4893 = vadd.f32 %v4573, %v4581
        %v4894 = vadd.f32 %v4574, %v4582
        %v4895 = vadd.f32 %v4575, %v4583
        %v4896 = vadd.f32 %v4576, %v4584
        %v4897 = vadd.f32 %v4577, %v4585
        %v4898 = vadd.f32 %v4578, %v4586
        %v4899 = vadd.f32 %v4579, %v4587
        %v4900 = vadd.f32 %v4596, %v4604
        %v4901 = vadd.f32 %v4597, %v4605
        %v4902 = vadd.f32 %v4598, %v4606
        %v4903 = vadd.f32 %v4599, %v4607
        %v4904 = vadd.f32 %v4600, %v4608
        %v4905 = vadd.f32 %v4601, %v4609
        %v4906 = vadd.f32 %v4602, %v4610
        %v4907 = vadd.f32 %v4603, %v4611
        %v4908 = vadd.f32 %v4604, %v4612
        %v4909 = vadd.f32 %v4605, %v4613
        %v4910 = vadd.f32 %v4606, %v4614
        %v4911 = vadd.f32 %v4607, %v4615
        %v4912 = vadd.f32 %v4608, %v4616
        %v4913 = vadd.f32 %v4609, %v4617
        %v4914 = vadd.f32 %v4610, %v4618
        %v4915 = vadd.f32 %v4611, %v4619
        %v4916 = vadd.f32 %v4612, %v4620
        %v4917 = vadd.f32 %v4613, %v4621
        %v4918 = vadd.f32 %v4614, %v4622
        %v4919 = vadd.f32 %v4615, %v4623
        %v4920 = vadd.f32 %v4616, %v4624
        %v4921 = vadd.f32 %v4617, %v4625
        %v4922 = vadd.f32 %v4618, %v4626
        %v4923 = vadd.f32 %v4619, %v4627
        %v4924 = vadd.f32 %v4620, %v4628
        %v4925 = vadd.f32 %v4621, %v4629
        %v4926 = vadd.f32 %v4622, %v4630
        %v4927 = vadd.f32 %v4623, %v4631
        %v4928 = vadd.f32 %v4624, %v4632
        %v4929 = vadd.f32 %v4625, %v4633
        %v4930 = vadd.f32 %v4626, %v4634
        %v4931 = vadd.f32 %v4627, %v4635
        %v4932 = vadd.f32 %v4628, %v4636
        %v4933 = vadd.f32 %v4629, %v4637
        %v4934 = vadd.f32 %v4630, %v4638
        %v4935 = vadd.f32 %v4631, %v4639
        %v4936 = vadd.f32 %v4632, %v4640
        %v4937 = vadd.f32 %v4633, %v4641
        %v4938 = vadd.f32 %v4634, %v4642
        %v4939 = vadd.f32 %v4635, %v4643
        %v4940 = vadd.f32 %v4636, %v4644
        %v4941 = vadd.f32 %v4637, %v4645
        %v4942 = vadd.f32 %v4638, %v4646
        %v4943 = vadd.f32 %v4639, %v4647
        %v4944 = vadd.f32 %v4640, %v4648
        %v4945 = vadd.f32 %v4641, %v4649
        %v4946 = vadd.f32 %v4642, %v4650
        %v4947 = vadd.f32 %v4643, %v4651
        %v4948 = vadd.f32 %v4660, %v4668
        %v4949 = vadd.f32 %v4661, %v4669
        %v4950 = vadd.f32 %v4662, %v4670
        %v4951 = vadd.f32 %v4663, %v4671
        %v4952 = vadd.f32 %v4664, %v4672
        %v4953 = vadd.f32 %v4665, %v4673
        %v4954 = vadd.f32 %v4666, %v4674
        %v4955 = vadd.f32 %v4667, %v4675
        %v4956 = vadd.f32 %v4668, %v4676
        %v4957 = vadd.f32 %v4669, %v4677
        %v4958 = vadd.f32 %v4670, %v4678
        %v4959 = vadd.f32 %v4671, %v4679
        %v4960 = vadd.f32 %v4672, %v4680
        %v4961 = vadd.f32 %v4673, %v4681
        %v4962 = vadd.f32 %v4674, %v4682
        %v4963 = vadd.f32 %v4675, %v4683
        %v4964 = vadd.f32 %v4676, %v4684
        %v4965 = vadd.f32 %v4677, %v4685
        %v4966 = vadd.f32 %v4678, %v4686
        %v4967 = vadd.f32 %v4679, %v4687
        %v4968 = vadd.f32 %v4680, %v4688
        %v4969 = vadd.f32 %v4681, %v4689
        %v4970 = vadd.f32 %v4682, %v4690
        %v4971 = vadd.f32 %v4683, %v4691
        %v4972 = vadd.f32 %v4684, %v4692
        %v4973 = vadd.f32 %v4685, %v4693
        %v4974 = vadd.f32 %v4686, %v4694
        %v4975 = vadd.f32 %v4687, %v4695
        %v4976 = vadd.f32 %v4688, %v4696
        %v4977 = vadd.f32 %v4689, %v4697
        %v4978 = vadd.f32 %v4690, %v4698
        %v4979 = vadd.f32 %v4691, %v4699
        %v4980 = vadd.f32 %v4692, %v4700
        %v4981 = vadd.f32 %v4693, %v4701
        %v4982 = vadd.f32 %v4694, %v4702
        %v4983 = vadd.f32 %v4695, %v4703
        %v4984 = vadd.f32 %v4696, %v4704
        %v4985 = vadd.f32 %v4697, %v4705
        %v4986 = vadd.f32 %v4698, %v4706
        %v4987 = vadd.f32 %v4699, %v4707
        %v4988 = vadd.f32 %v4700, %v4708
        %v4989 = vadd.f32 %v4701, %v4709
        %v4990 = vadd.f32 %v4702, %v4710
        %v4991 = vadd.f32 %v4703, %v4711
        %v4992 = vadd.f32 %v4704, %v4712
        %v4993 = vadd.f32 %v4705, %v4713
        %v4994 = vadd.f32 %v4706, %v4714
        %v4995 = vadd.f32 %v4707, %v4715
        %v4996 = vadd.f32 %v4724, %v4732
        %v4997 = vadd.f32 %v4725, %v4733
        %v4998 = vadd.f32 %v4726, %v4734
        %v4999 = vadd.f32 %v4727, %v4735
        %v5000 = vadd.f32 %v4728, %v4736
        %v5001 = vadd.f32 %v4729, %v4737
        %v5002 = vadd.f32 %v4730, %v4738
        %v5003 = vadd.f32 %v4731, %v4739
        %v5004 = vadd.f32 %v4732, %v4740
        %v5005 = vadd.f32 %v4733, %v4741
        %v5006 = vadd.f32 %v4734, %v4742
        %v5007 = vadd.f32 %v4735, %v4743
        %v5008 = vadd.f32 %v4736, %v4744
        %v5009 = vadd.f32 %v4737, %v4745
        %v5010 = vadd.f32 %v4738, %v4746
        %v5011 = vadd.f32 %v4739, %v4747
        %v5012 = vadd.f32 %v4740, %v4748
        %v5013 = vadd.f32 %v4741, %v4749
        %v5014 = vadd.f32 %v4742, %v4750
        %v5015 = vadd.f32 %v4743, %v4751
        %v5016 = vadd.f32 %v4744, %v4752
        %v5017 = vadd.f32 %v4745, %v4753
        %v5018 = vadd.f32 %v4746, %v4754
        %v5019 = vadd.f32 %v4747, %v4755
        %v5020 = vadd.f32 %v4748, %v4756
        %v5021 = vadd.f32 %v4749, %v4757
        %v5022 = vadd.f32 %v4750, %v4758
        %v5023 = vadd.f32 %v4751, %v4759
        %v5024 = vadd.f32 %v4752, %v4760
        %v5025 = vadd.f32 %v4753, %v4761
        %v5026 = vadd.f32 %v4754, %v4762
        %v5027 = vadd.f32 %v4755, %v4763
        %v5028 = vadd.f32 %v4756, %v4764
        %v5029 = vadd.f32 %v4757, %v4765
        %v5030 = vadd.f32 %v4758, %v4766
        %v5031 = vadd.f32 %v4759, %v4767
        %v5032 = vadd.f32 %v4760, %v4768
        %v5033 = vadd.f32 %v4761, %v4769
        %v5034 = vadd.f32 %v4762, %v4770
        %v5035 = vadd.f32 %v4763, %v4771
        %v5036 = vadd.f32 %v4764, %v4772
        %v5037 = vadd.f32 %v4765, %v4773
        %v5038 = vadd.f32 %v4766, %v4774
        %v5039 = vadd.f32 %v4767, %v4775
        %v5040 = vadd.f32 %v4768, %v4776
        %v5041 = vadd.f32 %v4769, %v4777
        %v5042 = vadd.f32 %v4770, %v4778
        %v5043 = vadd.f32 %v4771, %v4779
        %v5044 = vadd.f32 %v4788, %v4796
        %v5045 = vadd.f32 %v4789, %v4797
        %v5046 = vadd.f32 %v4790, %v4798
        %v5047 = vadd.f32 %v4791, %v4799
        %v5048 = vadd.f32 %v4792, %v4800
        %v5049 = vadd.f32 %v4793, %v4801
        %v5050 = vadd.f32 %v4794, %v4802
        %v5051 = vadd.f32 %v4795, %v4803
        %v5052 = vadd.f32 %v4796, %v4804
        %v5053 = vadd.f32 %v4797, %v4805
        %v5054 = vadd.f32 %v4798, %v4806
        %v5055 = vadd.f32 %v4799, %v4807
        %v5056 = vadd.f32 %v4800, %v4808
        %v5057 = vadd.f32 %v4801, %v4809
        %v5058 = vadd.f32 %v4802, %v4810
        %v5059 = vadd.f32 %v4803, %v4811
        %v5060 = vadd.f32 %v4804, %v4812
        %v5061 = vadd.f32 %v4805, %v4813
        %v5062 = vadd.f32 %v4806, %v4814
        %v5063 = vadd.f32 %v4807, %v4815
        %v5064 = vadd.f32 %v4808, %v4816
        %v5065 = vadd.f32 %v4809, %v4817
        %v5066 = vadd.f32 %v4810, %v4818
        %v5067 = vadd.f32 %v4811, %v4819
        %v5068 = vadd.f32 %v4812, %v4820
        %v5069 = vadd.f32 %v4813, %v4821
        %v5070 = vadd.f32 %v4814, %v4822
        %v5071 = vadd.f32 %v4815, %v4823
        %v5072 = vadd.f32 %v4816, %v4824
        %v5073 = vadd.f32 %v4817, %v4825
        %v5074 = vadd.f32 %v4818, %v4826
        %v5075 = vadd.f32 %v4819, %v4827
        %v5076 = vadd.f32 %v4820, %v4828
        %v5077 = vadd.f32 %v4821, %v4829
        %v5078 = vadd.f32 %v4822, %v4830
        %v5079 = vadd.f32 %v4823, %v4831
        %v5080 = vadd.f32 %v4824, %v4832
        %v5081 = vadd.f32 %v4825, %v4833
        %v5082 = vadd.f32 %v4826, %v4834
        %v5083 = vadd.f32 %v4827, %v4835
        %v5084 = vadd.f32 %v4828, %v4836
        %v5085 = vadd.f32 %v4829, %v4837
        %v5086 = vadd.f32 %v4830, %v4838
        %v5087 = vadd.f32 %v4831, %v4839
        %v5088 = vadd.f32 %v4832, %v4840
        %v5089 = vadd.f32 %v4833, %v4841
        %v5090 = vadd.f32 %v4834, %v4842
        %v5091 = vadd.f32 %v4835, %v4843
        %v5092 = vadd.f32 %v4852, %v4868
        %v5093 = vadd.f32 %v4853, %v4869
        %v5094 = vadd.f32 %v4854, %v4870
        %v5095 = vadd.f32 %v4855, %v4871
        %v5096 = vadd.f32 %v4856, %v4872
        %v5097 = vadd.f32 %v4857, %v4873
        %v5098 = vadd.f32 %v4858, %v4874
        %v5099 = vadd.f32 %v4859, %v4875
        %v5100 = vadd.f32 %v4860, %v4876
        %v5101 = vadd.f32 %v4861, %v4877
        %v5102 = vadd.f32 %v4862, %v4878
        %v5103 = vadd.f32 %v4863, %v4879
        %v5104 = vadd.f32 %v4864, %v4880
        %v5105 = vadd.f32 %v4865, %v4881
        %v5106 = vadd.f32 %v4866, %v4882
        %v5107 = vadd.f32 %v4867, %v4883
        %v5108 = vadd.f32 %v4868, %v4884
        %v5109 = vadd.f32 %v4869, %v4885
        %v5110 = vadd.f32 %v4870, %v4886
        %v5111 = vadd.f32 %v4871, %v4887
        %v5112 = vadd.f32 %v4872, %v4888
        %v5113 = vadd.f32 %v4873, %v4889
        %v5114 = vadd.f32 %v4874, %v4890
        %v5115 = vadd.f32 %v4875, %v4891
        %v5116 = vadd.f32 %v4876, %v4892
        %v5117 = vadd.f32 %v4877, %v4893
        %v5118 = vadd.f32 %v4878, %v4894
        %v5119 = vadd.f32 %v4879, %v4895
        %v5120 = vadd.f32 %v4880, %v4896
        %v5121 = vadd.f32 %v4881, %v4897
        %v5122 = vadd.f32 %v4882, %v4898
        %v5123 = vadd.f32 %v4883, %v4899
        %v5124 = vadd.f32 %v4900, %v4916
        %v5125 = vadd.f32 %v4901, %v4917
        %v5126 = vadd.f32 %v4902, %v4918
        %v5127 = vadd.f32 %v4903, %v4919
        %v5128 = vadd.f32 %v4904, %v4920
        %v5129 = vadd.f32 %v4905, %v4921
        %v5130 = vadd.f32 %v4906, %v4922
        %v5131 = vadd.f32 %v4907, %v4923
        %v5132 = vadd.f32 %v4908, %v4924
        %v5133 = vadd.f32 %v4909, %v4925
        %v5134 = vadd.f32 %v4910, %v4926
        %v5135 = vadd.f32 %v4911, %v4927
        %v5136 = vadd.f32 %v4912, %v4928
        %v5137 = vadd.f32 %v4913, %v4929
        %v5138 = vadd.f32 %v4914, %v4930
        %v5139 = vadd.f32 %v4915, %v4931
        %v5140 = vadd.f32 %v4916, %v4932
        %v5141 = vadd.f32 %v4917, %v4933
        %v5142 = vadd.f32 %v4918, %v4934
        %v5143 = vadd.f32 %v4919, %v4935
        %v5144 = vadd.f32 %v4920, %v4936
        %v5145 = vadd.f32 %v4921, %v4937
        %v5146 = vadd.f32 %v4922, %v4938
        %v5147 = vadd.f32 %v4923, %v4939
        %v5148 = vadd.f32 %v4924, %v4940
        %v5149 = vadd.f32 %v4925, %v4941
        %v5150 = vadd.f32 %v4926, %v4942
        %v5151 = vadd.f32 %v4927, %v4943
        %v5152 = vadd.f32 %v4928, %v4944
        %v5153 = vadd.f32 %v4929, %v4945
        %v5154 = vadd.f32 %v4930, %v4946
        %v5155 = vadd.f32 %v4931, %v4947
        %v5156 = vadd.f32 %v4948, %v4964
        %v5157 = vadd.f32 %v4949, %v4965
        %v5158 = vadd.f32 %v4950, %v4966
        %v5159 = vadd.f32 %v4951, %v4967
        %v5160 = vadd.f32 %v4952, %v4968
        %v5161 = vadd.f32 %v4953, %v4969
        %v5162 = vadd.f32 %v4954, %v4970
        %v5163 = vadd.f32 %v4955, %v4971
        %v5164 = vadd.f32 %v4956, %v4972
        %v5165 = vadd.f32 %v4957, %v4973
        %v5166 = vadd.f32 %v4958, %v4974
        %v5167 = vadd.f32 %v4959, %v4975
        %v5168 = vadd.f32 %v4960, %v4976
        %v5169 = vadd.f32 %v4961, %v4977
        %v5170 = vadd.f32 %v4962, %v4978
        %v5171 = vadd.f32 %v4963, %v4979
        %v5172 = vadd.f32 %v4964, %v4980
        %v5173 = vadd.f32 %v4965, %v4981
        %v5174 = vadd.f32 %v4966, %v4982
        %v5175 = vadd.f32 %v4967, %v4983
        %v5176 = vadd.f32 %v4968, %v4984
        %v5177 = vadd.f32 %v4969, %v4985
        %v5178 = vadd.f32 %v4970, %v4986
        %v5179 = vadd.f32 %v4971, %v4987
        %v5180 = vadd.f32 %v4972, %v4988
        %v5181 = vadd.f32 %v4973, %v4989
        %v5182 = vadd.f32 %v4974, %v4990
        %v5183 = vadd.f32 %v4975, %v4991
        %v5184 = vadd.f32 %v4976, %v4992
        %v5185 = vadd.f32 %v4977, %v4993
        %v5186 = vadd.f32 %v4978, %v4994
        %v5187 = vadd.f32 %v4979, %v4995
        %v5188 = vadd.f32 %v4996, %v5012
        %v5189 = vadd.f32 %v4997, %v5013
        %v5190 = vadd.f32 %v4998, %v5014
        %v5191 = vadd.f32 %v4999, %v5015
        %v5192 = vadd.f32 %v5000, %v5016
        %v5193 = vadd.f32 %v5001, %v5017
        %v5194 = vadd.f32 %v5002, %v5018
        %v5195 = vadd.f32 %v5003, %v5019
        %v5196 = vadd.f32 %v5004, %v5020
        %v5197 = vadd.f32 %v5005, %v5021
        %v5198 = vadd.f32 %v5006, %v5022
        %v5199 = vadd.f32 %v5007, %v5023
        %v5200 = vadd.f32 %v5008, %v5024
        %v5201 = vadd.f32 %v5009, %v5025
        %v5202 = vadd.f32 %v5010, %v5026
        %v5203 = vadd.f32 %v5011, %v5027
        %v5204 = vadd.f32 %v5012, %v5028
        %v5205 = vadd.f32 %v5013, %v5029
        %v5206 = vadd.f32 %v5014, %v5030
        %v5207 = vadd.f32 %v5015, %v5031
        %v5208 = vadd.f32 %v5016, %v5032
        %v5209 = vadd.f32 %v5017, %v5033
        %v5210 = vadd.f32 %v5018, %v5034
        %v5211 = vadd.f32 %v5019, %v5035
        %v5212 = vadd.f32 %v5020, %v5036
        %v5213 = vadd.f32 %v5021, %v5037
        %v5214 = vadd.f32 %v5022, %v5038
        %v5215 = vadd.f32 %v5023, %v5039
        %v5216 = vadd.f32 %v5024, %v5040
        %v5217 = vadd.f32 %v5025, %v5041
        %v5218 = vadd.f32 %v5026, %v5042
        %v5219 = vadd.f32 %v5027, %v5043
        %v5220 = vadd.f32 %v5044, %v5060
        %v5221 = vadd.f32 %v5045, %v5061
        %v5222 = vadd.f32 %v5046, %v5062
        %v5223 = vadd.f32 %v5047, %v5063
        %v5224 = vadd.f32 %v5048, %v5064
        %v5225 = vadd.f32 %v5049, %v5065
        %v5226 = vadd.f32 %v5050, %v5066
        %v5227 = vadd.f32 %v5051, %v5067
        %v5228 = vadd.f32 %v5052, %v5068
        %v5229 = vadd.f32 %v5053, %v5069
        %v5230 = vadd.f32 %v5054, %v5070
        %v5231 = vadd.f32 %v5055, %v5071
        %v5232 = vadd.f32 %v5056, %v5072
        %v5233 = vadd.f32 %v5057, %v5073
        %v5234 = vadd.f32 %v5058, %v5074
        %v5235 = vadd.f32 %v5059, %v5075
        %v5236 = vadd.f32 %v5060, %v5076
        %v5237 = vadd.f32 %v5061, %v5077
        %v5238 = vadd.f32 %v5062, %v5078
        %v5239 = vadd.f32 %v5063, %v5079
        %v5240 = vadd.f32 %v5064, %v5080
        %v5241 = vadd.f32 %v5065, %v5081
        %v5242 = vadd.f32 %v5066, %v5082
        %v5243 = vadd.f32 %v5067, %v5083
        %v5244 = vadd.f32 %v5068, %v5084
        %v5245 = vadd.f32 %v5069, %v5085
        %v5246 = vadd.f32 %v5070, %v5086
        %v5247 = vadd.f32 %v5071, %v5087
        %v5248 = vadd.f32 %v5072, %v5088
        %v5249 = vadd.f32 %v5073, %v5089
        %v5250 = vadd.f32 %v5074, %v5090
        %v5251 = vadd.f32 %v5075, %v5091
        %v5252 = vadd.f32 %v5092, %v4564
        %v5253 = vadd.f32 %v5093, %v4565
        %v5254 = vadd.f32 %v5094, %v4566
        %v5255 = vadd.f32 %v5095, %v4567
        %v5256 = vadd.f32 %v5096, %v4568
        %v5257 = vadd.f32 %v5097, %v4569
        %v5258 = vadd.f32 %v5098, %v4570
        %v5259 = vadd.f32 %v5099, %v4571
        %v5260 = vadd.f32 %v5100, %v4572
        %v5261 = vadd.f32 %v5101, %v4573
        %v5262 = vadd.f32 %v5102, %v4574
        %v5263 = vadd.f32 %v5103, %v4575
        %v5264 = vadd.f32 %v5104, %v4576
        %v5265 = vadd.f32 %v5105, %v4577
        %v5266 = vadd.f32 %v5106, %v4578
        %v5267 = vadd.f32 %v5107, %v4579
        %v5268 = vadd.f32 %v5108, %v4580
        %v5269 = vadd.f32 %v5109, %v4581
        %v5270 = vadd.f32 %v5110, %v4582
        %v5271 = vadd.f32 %v5111, %v4583
        %v5272 = vadd.f32 %v5112, %v4584
        %v5273 = vadd.f32 %v5113, %v4585
        %v5274 = vadd.f32 %v5114, %v4586
        %v5275 = vadd.f32 %v5115, %v4587
        %v5276 = vadd.f32 %v5116, %v4588
        %v5277 = vadd.f32 %v5117, %v4589
        %v5278 = vadd.f32 %v5118, %v4590
        %v5279 = vadd.f32 %v5119, %v4591
        %v5280 = vadd.f32 %v5120, %v4592
        %v5281 = vadd.f32 %v5121, %v4593
        %v5282 = vadd.f32 %v5122, %v4594
        %v5283 = vadd.f32 %v5123, %v4595
        %v5284 = vadd.f32 %v5124, %v4628
        %v5285 = vadd.f32 %v5125, %v4629
        %v5286 = vadd.f32 %v5126, %v4630
        %v5287 = vadd.f32 %v5127, %v4631
        %v5288 = vadd.f32 %v5128, %v4632
        %v5289 = vadd.f32 %v5129, %v4633
        %v5290 = vadd.f32 %v5130, %v4634
        %v5291 = vadd.f32 %v5131, %v4635
        %v5292 = vadd.f32 %v5132, %v4636
        %v5293 = vadd.f32 %v5133, %v4637
        %v5294 = vadd.f32 %v5134, %v4638
        %v5295 = vadd.f32 %v5135, %v4639
        %v5296 = vadd.f32 %v5136, %v4640
        %v5297 = vadd.f32 %v5137, %v4641
        %v5298 = vadd.f32 %v5138, %v4642
        %v5299 = vadd.f32 %v5139, %v4643
        %v5300 = vadd.f32 %v5140, %v4644
        %v5301 = vadd.f32 %v5141, %v4645
        %v5302 = vadd.f32 %v5142, %v4646
        %v5303 = vadd.f32 %v5143, %v4647
        %v5304 = vadd.f32 %v5144, %v4648
        %v5305 = vadd.f32 %v5145, %v4649
        %v5306 = vadd.f32 %v5146, %v4650
        %v5307 = vadd.f32 %v5147, %v4651
        %v5308 = vadd.f32 %v5148, %v4652
        %v5309 = vadd.f32 %v5149, %v4653
        %v5310 = vadd.f32 %v5150, %v4654
        %v5311 = vadd.f32 %v5151, %v4655
        %v5312 = vadd.f32 %v5152, %v4656
        %v5313 = vadd.f32 %v5153, %v4657
        %v5314 = vadd.f32 %v5154, %v4658
        %v5315 = vadd.f32 %v5155, %v4659
        %v5316 = vadd.f32 %v5156, %v4692
        %v5317 = vadd.f32 %v5157, %v4693
        %v5318 = vadd.f32 %v5158, %v4694
        %v5319 = vadd.f32 %v5159, %v4695
        %v5320 = vadd.f32 %v5160, %v4696
        %v5321 = vadd.f32 %v5161, %v4697
        %v5322 = vadd.f32 %v5162, %v4698
        %v5323 = vadd.f32 %v5163, %v4699
        %v5324 = vadd.f32 %v5164, %v4700
        %v5325 = vadd.f32 %v5165, %v4701
        %v5326 = vadd.f32 %v5166, %v4702
        %v5327 = vadd.f32 %v5167, %v4703
        %v5328 = vadd.f32 %v5168, %v4704
        %v5329 = vadd.f32 %v5169, %v4705
        %v5330 = vadd.f32 %v5170, %v4706
        %v5331 = vadd.f32 %v5171, %v4707
        %v5332 = vadd.f32 %v5172, %v4708
        %v5333 = vadd.f32 %v5173, %v4709
        %v5334 = vadd.f32 %v5174, %v4710
        %v5335 = vadd.f32 %v5175, %v4711
        %v5336 = vadd.f32 %v5176, %v4712
        %v5337 = vadd.f32 %v5177, %v4713
        %v5338 = vadd.f32 %v5178, %v4714
        %v5339 = vadd.f32 %v5179, %v4715
        %v5340 = vadd.f32 %v5180, %v4716
        %v5341 = vadd.f32 %v5181, %v4717
        %v5342 = vadd.f32 %v5182, %v4718
        %v5343 = vadd.f32 %v5183, %v4719
        %v5344 = vadd.f32 %v5184, %v4720
        %v5345 = vadd.f32 %v5185, %v4721
        %v5346 = vadd.f32 %v5186, %v4722
        %v5347 = vadd.f32 %v5187, %v4723
        %v5348 = vadd.f32 %v5188, %v4756
        %v5349 = vadd.f32 %v5189, %v4757
        %v5350 = vadd.f32 %v5190, %v4758
        %v5351 = vadd.f32 %v5191, %v4759
        %v5352 = vadd.f32 %v5192, %v4760
        %v5353 = vadd.f32 %v5193, %v4761
        %v5354 = vadd.f32 %v5194, %v4762
        %v5355 = vadd.f32 %v5195, %v4763
        %v5356 = vadd.f32 %v5196, %v4764
        %v5357 = vadd.f32 %v5197, %v4765
        %v5358 = vadd.f32 %v5198, %v4766
        %v5359 = vadd.f32 %v5199, %v4767
        %v5360 = vadd.f32 %v5200, %v4768
        %v5361 = vadd.f32 %v5201, %v4769
        %v5362 = vadd.f32 %v5202, %v4770
        %v5363 = vadd.f32 %v5203, %v4771
        %v5364 = vadd.f32 %v5204, %v4772
        %v5365 = vadd.f32 %v5205, %v4773
        %v5366 = vadd.f32 %v5206, %v4774
        %v5367 = vadd.f32 %v5207, %v4775
        %v5368 = vadd.f32 %v5208, %v4776
        %v5369 = vadd.f32 %v5209, %v4777
        %v5370 = vadd.f32 %v5210, %v4778
        %v5371 = vadd.f32 %v5211, %v4779
        %v5372 = vadd.f32 %v5212, %v4780
        %v5373 = vadd.f32 %v5213, %v4781
        %v5374 = vadd.f32 %v5214, %v4782
        %v5375 = vadd.f32 %v5215, %v4783
        %v5376 = vadd.f32 %v5216, %v4784
        %v5377 = vadd.f32 %v5217, %v4785
        %v5378 = vadd.f32 %v5218, %v4786
        %v5379 = vadd.f32 %v5219, %v4787
        %v5380 = vadd.f32 %v5220, %v4820
        %v5381 = vadd.f32 %v5221, %v4821
        %v5382 = vadd.f32 %v5222, %v4822
        %v5383 = vadd.f32 %v5223, %v4823
        %v5384 = vadd.f32 %v5224, %v4824
        %v5385 = vadd.f32 %v5225, %v4825
        %v5386 = vadd.f32 %v5226, %v4826
        %v5387 = vadd.f32 %v5227, %v4827
        %v5388 = vadd.f32 %v5228, %v4828
        %v5389 = vadd.f32 %v5229, %v4829
        %v5390 = vadd.f32 %v5230, %v4830
        %v5391 = vadd.f32 %v5231, %v4831
        %v5392 = vadd.f32 %v5232, %v4832
        %v5393 = vadd.f32 %v5233, %v4833
        %v5394 = vadd.f32 %v5234, %v4834
        %v5395 = vadd.f32 %v5235, %v4835
        %v5396 = vadd.f32 %v5236, %v4836
        %v5397 = vadd.f32 %v5237, %v4837
        %v5398 = vadd.f32 %v5238, %v4838
        %v5399 = vadd.f32 %v5239, %v4839
        %v5400 = vadd.f32 %v5240, %v4840
        %v5401 = vadd.f32 %v5241, %v4841
        %v5402 = vadd.f32 %v5242, %v4842
        %v5403 = vadd.f32 %v5243, %v4843
        %v5404 = vadd.f32 %v5244, %v4844
        %v5405 = vadd.f32 %v5245, %v4845
        %v5406 = vadd.f32 %v5246, %v4846
        %v5407 = vadd.f32 %v5247, %v4847
        %v5408 = vadd.f32 %v5248, %v4848
        %v5409 = vadd.f32 %v5249, %v4849
        %v5410 = vadd.f32 %v5250, %v4850
        %v5411 = vadd.f32 %v5251, %v4851
        %v5412 = vadd.f32 %v5252, %v2934
        %v5413 = vadd.f32 %v5253, %v2939
        %v5414 = vadd.f32 %v5254, %v2944
        %v5415 = vadd.f32 %v5255, %v2949
        %v5416 = vadd.f32 %v5256, %v2954
        %v5417 = vadd.f32 %v5257, %v2959
        %v5418 = vadd.f32 %v5258, %v2964
        %v5419 = vadd.f32 %v5259, %v2969
        %v5420 = vadd.f32 %v5260, %v2974
        %v5421 = vadd.f32 %v5261, %v2979
        %v5422 = vadd.f32 %v5262, %v2984
        %v5423 = vadd.f32 %v5263, %v2989
        %v5424 = vadd.f32 %v5264, %v2994
        %v5425 = vadd.f32 %v5265, %v2999
        %v5426 = vadd.f32 %v5266, %v3004
        %v5427 = vadd.f32 %v5267, %v3009
        %v5428 = vadd.f32 %v5268, %v3014
        %v5429 = vadd.f32 %v5269, %v3019
        %v5430 = vadd.f32 %v5270, %v3024
        %v5431 = vadd.f32 %v5271, %v3029
        %v5432 = vadd.f32 %v5272, %v3034
        %v5433 = vadd.f32 %v5273, %v3039
        %v5434 = vadd.f32 %v5274, %v3044
        %v5435 = vadd.f32 %v5275, %v3049
        %v5436 = vadd.f32 %v5276, %v3054
        %v5437 = vadd.f32 %v5277, %v3059
        %v5438 = vadd.f32 %v5278, %v3064
        %v5439 = vadd.f32 %v5279, %v3069
        %v5440 = vadd.f32 %v5280, %v3074
        %v5441 = vadd.f32 %v5281, %v3079
        %v5442 = vadd.f32 %v5282, %v3084
        %v5443 = vadd.f32 %v5283, %v3089
        %v5444 = vadd.f32 %v5284, %v3294
        %v5445 = vadd.f32 %v5285, %v3299
        %v5446 = vadd.f32 %v5286, %v3304
        %v5447 = vadd.f32 %v5287, %v3309
        %v5448 = vadd.f32 %v5288, %v3314
        %v5449 = vadd.f32 %v5289, %v3319
        %v5450 = vadd.f32 %v5290, %v3324
        %v5451 = vadd.f32 %v5291, %v3329
        %v5452 = vadd.f32 %v5292, %v3334
        %v5453 = vadd.f32 %v5293, %v3339
        %v5454 = vadd.f32 %v5294, %v3344
        %v5455 = vadd.f32 %v5295, %v3349
        %v5456 = vadd.f32 %v5296, %v3354
        %v5457 = vadd.f32 %v5297, %v3359
        %v5458 = vadd.f32 %v5298, %v3364
        %v5459 = vadd.f32 %v5299, %v3369
        %v5460 = vadd.f32 %v5300, %v3374
        %v5461 = vadd.f32 %v5301, %v3379
        %v5462 = vadd.f32 %v5302, %v3384
        %v5463 = vadd.f32 %v5303, %v3389
        %v5464 = vadd.f32 %v5304, %v3394
        %v5465 = vadd.f32 %v5305, %v3399
        %v5466 = vadd.f32 %v5306, %v3404
        %v5467 = vadd.f32 %v5307, %v3409
        %v5468 = vadd.f32 %v5308, %v3414
        %v5469 = vadd.f32 %v5309, %v3419
        %v5470 = vadd.f32 %v5310, %v3424
        %v5471 = vadd.f32 %v5311, %v3429
        %v5472 = vadd.f32 %v5312, %v3434
        %v5473 = vadd.f32 %v5313, %v3439
        %v5474 = vadd.f32 %v5314, %v3444
        %v5475 = vadd.f32 %v5315, %v3449
        %v5476 = vadd.f32 %v5316, %v3654
        %v5477 = vadd.f32 %v5317, %v3659
        %v5478 = vadd.f32 %v5318, %v3664
        %v5479 = vadd.f32 %v5319, %v3669
        %v5480 = vadd.f32 %v5320, %v3674
        %v5481 = vadd.f32 %v5321, %v3679
        %v5482 = vadd.f32 %v5322, %v3684
        %v5483 = vadd.f32 %v5323, %v3689
        %v5484 = vadd.f32 %v5324, %v3694
        %v5485 = vadd.f32 %v5325, %v3699
        %v5486 = vadd.f32 %v5326, %v3704
        %v5487 = vadd.f32 %v5327, %v3709
        %v5488 = vadd.f32 %v5328, %v3714
        %v5489 = vadd.f32 %v5329, %v3719
        %v5490 = vadd.f32 %v5330, %v3724
        %v5491 = vadd.f32 %v5331, %v3729
        %v5492 = vadd.f32 %v5332, %v3734
        %v5493 = vadd.f32 %v5333, %v3739
        %v5494 = vadd.f32 %v5334, %v3744
        %v5495 = vadd.f32 %v5335, %v3749
        %v5496 = vadd.f32 %v5336, %v3754
        %v5497 = vadd.f32 %v5337, %v3759
        %v5498 = vadd.f32 %v5338, %v3764
        %v5499 = vadd.f32 %v5339, %v3769
        %v5500 = vadd.f32 %v5340, %v3774
        %v5501 = vadd.f32 %v5341, %v3779
        %v5502 = vadd.f32 %v5342, %v3784
        %v5503 = vadd.f32 %v5343, %v3789
        %v5504 = vadd.f32 %v5344, %v3794
        %v5505 = vadd.f32 %v5345, %v3799
        %v5506 = vadd.f32 %v5346, %v3804
        %v5507 = vadd.f32 %v5347, %v3809
        %v5508 = vadd.f32 %v5348, %v4014
        %v5509 = vadd.f32 %v5349, %v4019
        %v5510 = vadd.f32 %v5350, %v4024
        %v5511 = vadd.f32 %v5351, %v4029
        %v5512 = vadd.f32 %v5352, %v4034
        %v5513 = vadd.f32 %v5353, %v4039
        %v5514 = vadd.f32 %v5354, %v4044
        %v5515 = vadd.f32 %v5355, %v4049
        %v5516 = vadd.f32 %v5356, %v4054
        %v5517 = vadd.f32 %v5357, %v4059
        %v5518 = vadd.f32 %v5358, %v4064
        %v5519 = vadd.f32 %v5359, %v4069
        %v5520 = vadd.f32 %v5360, %v4074
        %v5521 = vadd.f32 %v5361, %v4079
        %v5522 = vadd.f32 %v5362, %v4084
        %v5523 = vadd.f32 %v5363, %v4089
        %v5524 = vadd.f32 %v5364, %v4094
        %v5525 = vadd.f32 %v5365, %v4099
        %v5526 = vadd.f32 %v5366, %v4104
        %v5527 = vadd.f32 %v5367, %v4109
        %v5528 = vadd.f32 %v5368, %v4114
        %v5529 = vadd.f32 %v5369, %v4119
        %v5530 = vadd.f32 %v5370, %v4124
        %v5531 = vadd.f32 %v5371, %v4129
        %v5532 = vadd.f32 %v5372, %v4134
        %v5533 = vadd.f32 %v5373, %v4139
        %v5534 = vadd.f32 %v5374, %v4144
        %v5535 = vadd.f32 %v5375, %v4149
        %v5536 = vadd.f32 %v5376, %v4154
        %v5537 = vadd.f32 %v5377, %v4159
        %v5538 = vadd.f32 %v5378, %v4164
        %v5539 = vadd.f32 %v5379, %v4169
        %v5540 = vadd.f32 %v5380, %v4374
        %v5541 = vadd.f32 %v5381, %v4379
        %v5542 = vadd.f32 %v5382, %v4384
        %v5543 = vadd.f32 %v5383, %v4389
        %v5544 = vadd.f32 %v5384, %v4394
        %v5545 = vadd.f32 %v5385, %v4399
        %v5546 = vadd.f32 %v5386, %v4404
        %v5547 = vadd.f32 %v5387, %v4409
        %v5548 = vadd.f32 %v5388, %v4414
        %v5549 = vadd.f32 %v5389, %v4419
        %v5550 = vadd.f32 %v5390, %v4424
        %v5551 = vadd.f32 %v5391, %v4429
        %v5552 = vadd.f32 %v5392, %v4434
        %v5553 = vadd.f32 %v5393, %v4439
        %v5554 = vadd.f32 %v5394, %v4444
        %v5555 = vadd.f32 %v5395, %v4449
        %v5556 = vadd.f32 %v5396, %v4454
        %v5557 = vadd.f32 %v5397, %v4459
        %v5558 = vadd.f32 %v5398, %v4464
        %v5559 = vadd.f32 %v5399, %v4469
        %v5560 = vadd.f32 %v5400, %v4474
        %v5561 = vadd.f32 %v5401, %v4479
        %v5562 = vadd.f32 %v5402, %v4484
        %v5563 = vadd.f32 %v5403, %v4489
        %v5564 = vadd.f32 %v5404, %v4494
        %v5565 = vadd.f32 %v5405, %v4499
        %v5566 = vadd.f32 %v5406, %v4504
        %v5567 = vadd.f32 %v5407, %v4509
        %v5568 = vadd.f32 %v5408, %v4514
        %v5569 = vadd.f32 %v5409, %v4519
        %v5570 = vadd.f32 %v5410, %v4524
        %v5571 = vadd.f32 %v5411, %v4529
        %vm5732 = vcmask 1046528
        %v5733 = vrot.slane %v5412, 1
        %v5734 = vrot.slane %v5413, 1
        %v5735 = vsel %vm5732, %v5733, %v5734
        %v5736 = vrot.slane %v5414, 1
        %v5737 = vsel %vm5732, %v5734, %v5736
        %v5738 = vrot.slane %v5415, 1
        %v5739 = vsel %vm5732, %v5736, %v5738
        %v5740 = vrot.slane %v5416, 1
        %v5741 = vrot.slane %v5417, 1
        %v5742 = vsel %vm5732, %v5740, %v5741
        %v5743 = vrot.slane %v5418, 1
        %v5744 = vsel %vm5732, %v5741, %v5743
        %v5745 = vrot.slane %v5419, 1
        %v5746 = vsel %vm5732, %v5743, %v5745
        %v5747 = vrot.slane %v5420, 1
        %v5748 = vrot.slane %v5421, 1
        %v5749 = vsel %vm5732, %v5747, %v5748
        %v5750 = vrot.slane %v5422, 1
        %v5751 = vsel %vm5732, %v5748, %v5750
        %v5752 = vrot.slane %v5423, 1
        %v5753 = vsel %vm5732, %v5750, %v5752
        %v5754 = vrot.slane %v5424, 1
        %v5755 = vrot.slane %v5425, 1
        %v5756 = vsel %vm5732, %v5754, %v5755
        %v5757 = vrot.slane %v5426, 1
        %v5758 = vsel %vm5732, %v5755, %v5757
        %v5759 = vrot.slane %v5427, 1
        %v5760 = vsel %vm5732, %v5757, %v5759
        %v5761 = vrot.slane %v5428, 1
        %v5762 = vrot.slane %v5429, 1
        %v5763 = vsel %vm5732, %v5761, %v5762
        %v5764 = vrot.slane %v5430, 1
        %v5765 = vsel %vm5732, %v5762, %v5764
        %v5766 = vrot.slane %v5431, 1
        %v5767 = vsel %vm5732, %v5764, %v5766
        %v5768 = vrot.slane %v5432, 1
        %v5769 = vrot.slane %v5433, 1
        %v5770 = vsel %vm5732, %v5768, %v5769
        %v5771 = vrot.slane %v5434, 1
        %v5772 = vsel %vm5732, %v5769, %v5771
        %v5773 = vrot.slane %v5435, 1
        %v5774 = vsel %vm5732, %v5771, %v5773
        %v5775 = vrot.slane %v5436, 1
        %v5776 = vrot.slane %v5437, 1
        %v5777 = vsel %vm5732, %v5775, %v5776
        %v5778 = vrot.slane %v5438, 1
        %v5779 = vsel %vm5732, %v5776, %v5778
        %v5780 = vrot.slane %v5439, 1
        %v5781 = vsel %vm5732, %v5778, %v5780
        %v5782 = vrot.slane %v5440, 1
        %v5783 = vrot.slane %v5441, 1
        %v5784 = vsel %vm5732, %v5782, %v5783
        %v5785 = vrot.slane %v5442, 1
        %v5786 = vsel %vm5732, %v5783, %v5785
        %v5787 = vrot.slane %v5443, 1
        %v5788 = vsel %vm5732, %v5785, %v5787
        %v5789 = vrot.slane %v5444, 1
        %v5790 = vrot.slane %v5445, 1
        %v5791 = vsel %vm5732, %v5789, %v5790
        %v5792 = vrot.slane %v5446, 1
        %v5793 = vsel %vm5732, %v5790, %v5792
        %v5794 = vrot.slane %v5447, 1
        %v5795 = vsel %vm5732, %v5792, %v5794
        %v5796 = vrot.slane %v5448, 1
        %v5797 = vrot.slane %v5449, 1
        %v5798 = vsel %vm5732, %v5796, %v5797
        %v5799 = vrot.slane %v5450, 1
        %v5800 = vsel %vm5732, %v5797, %v5799
        %v5801 = vrot.slane %v5451, 1
        %v5802 = vsel %vm5732, %v5799, %v5801
        %v5803 = vrot.slane %v5452, 1
        %v5804 = vrot.slane %v5453, 1
        %v5805 = vsel %vm5732, %v5803, %v5804
        %v5806 = vrot.slane %v5454, 1
        %v5807 = vsel %vm5732, %v5804, %v5806
        %v5808 = vrot.slane %v5455, 1
        %v5809 = vsel %vm5732, %v5806, %v5808
        %v5810 = vrot.slane %v5456, 1
        %v5811 = vrot.slane %v5457, 1
        %v5812 = vsel %vm5732, %v5810, %v5811
        %v5813 = vrot.slane %v5458, 1
        %v5814 = vsel %vm5732, %v5811, %v5813
        %v5815 = vrot.slane %v5459, 1
        %v5816 = vsel %vm5732, %v5813, %v5815
        %v5817 = vrot.slane %v5460, 1
        %v5818 = vrot.slane %v5461, 1
        %v5819 = vsel %vm5732, %v5817, %v5818
        %v5820 = vrot.slane %v5462, 1
        %v5821 = vsel %vm5732, %v5818, %v5820
        %v5822 = vrot.slane %v5463, 1
        %v5823 = vsel %vm5732, %v5820, %v5822
        %v5824 = vrot.slane %v5464, 1
        %v5825 = vrot.slane %v5465, 1
        %v5826 = vsel %vm5732, %v5824, %v5825
        %v5827 = vrot.slane %v5466, 1
        %v5828 = vsel %vm5732, %v5825, %v5827
        %v5829 = vrot.slane %v5467, 1
        %v5830 = vsel %vm5732, %v5827, %v5829
        %v5831 = vrot.slane %v5468, 1
        %v5832 = vrot.slane %v5469, 1
        %v5833 = vsel %vm5732, %v5831, %v5832
        %v5834 = vrot.slane %v5470, 1
        %v5835 = vsel %vm5732, %v5832, %v5834
        %v5836 = vrot.slane %v5471, 1
        %v5837 = vsel %vm5732, %v5834, %v5836
        %v5838 = vrot.slane %v5472, 1
        %v5839 = vrot.slane %v5473, 1
        %v5840 = vsel %vm5732, %v5838, %v5839
        %v5841 = vrot.slane %v5474, 1
        %v5842 = vsel %vm5732, %v5839, %v5841
        %v5843 = vrot.slane %v5475, 1
        %v5844 = vsel %vm5732, %v5841, %v5843
        %v5845 = vrot.slane %v5476, 1
        %v5846 = vrot.slane %v5477, 1
        %v5847 = vsel %vm5732, %v5845, %v5846
        %v5848 = vrot.slane %v5478, 1
        %v5849 = vsel %vm5732, %v5846, %v5848
        %v5850 = vrot.slane %v5479, 1
        %v5851 = vsel %vm5732, %v5848, %v5850
        %v5852 = vrot.slane %v5480, 1
        %v5853 = vrot.slane %v5481, 1
        %v5854 = vsel %vm5732, %v5852, %v5853
        %v5855 = vrot.slane %v5482, 1
        %v5856 = vsel %vm5732, %v5853, %v5855
        %v5857 = vrot.slane %v5483, 1
        %v5858 = vsel %vm5732, %v5855, %v5857
        %v5859 = vrot.slane %v5484, 1
        %v5860 = vrot.slane %v5485, 1
        %v5861 = vsel %vm5732, %v5859, %v5860
        %v5862 = vrot.slane %v5486, 1
        %v5863 = vsel %vm5732, %v5860, %v5862
        %v5864 = vrot.slane %v5487, 1
        %v5865 = vsel %vm5732, %v5862, %v5864
        %v5866 = vrot.slane %v5488, 1
        %v5867 = vrot.slane %v5489, 1
        %v5868 = vsel %vm5732, %v5866, %v5867
        %v5869 = vrot.slane %v5490, 1
        %v5870 = vsel %vm5732, %v5867, %v5869
        %v5871 = vrot.slane %v5491, 1
        %v5872 = vsel %vm5732, %v5869, %v5871
        %v5873 = vrot.slane %v5492, 1
        %v5874 = vrot.slane %v5493, 1
        %v5875 = vsel %vm5732, %v5873, %v5874
        %v5876 = vrot.slane %v5494, 1
        %v5877 = vsel %vm5732, %v5874, %v5876
        %v5878 = vrot.slane %v5495, 1
        %v5879 = vsel %vm5732, %v5876, %v5878
        %v5880 = vrot.slane %v5496, 1
        %v5881 = vrot.slane %v5497, 1
        %v5882 = vsel %vm5732, %v5880, %v5881
        %v5883 = vrot.slane %v5498, 1
        %v5884 = vsel %vm5732, %v5881, %v5883
        %v5885 = vrot.slane %v5499, 1
        %v5886 = vsel %vm5732, %v5883, %v5885
        %v5887 = vrot.slane %v5500, 1
        %v5888 = vrot.slane %v5501, 1
        %v5889 = vsel %vm5732, %v5887, %v5888
        %v5890 = vrot.slane %v5502, 1
        %v5891 = vsel %vm5732, %v5888, %v5890
        %v5892 = vrot.slane %v5503, 1
        %v5893 = vsel %vm5732, %v5890, %v5892
        %v5894 = vrot.slane %v5504, 1
        %v5895 = vrot.slane %v5505, 1
        %v5896 = vsel %vm5732, %v5894, %v5895
        %v5897 = vrot.slane %v5506, 1
        %v5898 = vsel %vm5732, %v5895, %v5897
        %v5899 = vrot.slane %v5507, 1
        %v5900 = vsel %vm5732, %v5897, %v5899
        %v5901 = vrot.slane %v5508, 1
        %v5902 = vrot.slane %v5509, 1
        %v5903 = vsel %vm5732, %v5901, %v5902
        %v5904 = vrot.slane %v5510, 1
        %v5905 = vsel %vm5732, %v5902, %v5904
        %v5906 = vrot.slane %v5511, 1
        %v5907 = vsel %vm5732, %v5904, %v5906
        %v5908 = vrot.slane %v5512, 1
        %v5909 = vrot.slane %v5513, 1
        %v5910 = vsel %vm5732, %v5908, %v5909
        %v5911 = vrot.slane %v5514, 1
        %v5912 = vsel %vm5732, %v5909, %v5911
        %v5913 = vrot.slane %v5515, 1
        %v5914 = vsel %vm5732, %v5911, %v5913
        %v5915 = vrot.slane %v5516, 1
        %v5916 = vrot.slane %v5517, 1
        %v5917 = vsel %vm5732, %v5915, %v5916
        %v5918 = vrot.slane %v5518, 1
        %v5919 = vsel %vm5732, %v5916, %v5918
        %v5920 = vrot.slane %v5519, 1
        %v5921 = vsel %vm5732, %v5918, %v5920
        %v5922 = vrot.slane %v5520, 1
        %v5923 = vrot.slane %v5521, 1
        %v5924 = vsel %vm5732, %v5922, %v5923
        %v5925 = vrot.slane %v5522, 1
        %v5926 = vsel %vm5732, %v5923, %v5925
        %v5927 = vrot.slane %v5523, 1
        %v5928 = vsel %vm5732, %v5925, %v5927
        %v5929 = vrot.slane %v5524, 1
        %v5930 = vrot.slane %v5525, 1
        %v5931 = vsel %vm5732, %v5929, %v5930
        %v5932 = vrot.slane %v5526, 1
        %v5933 = vsel %vm5732, %v5930, %v5932
        %v5934 = vrot.slane %v5527, 1
        %v5935 = vsel %vm5732, %v5932, %v5934
        %v5936 = vrot.slane %v5528, 1
        %v5937 = vrot.slane %v5529, 1
        %v5938 = vsel %vm5732, %v5936, %v5937
        %v5939 = vrot.slane %v5530, 1
        %v5940 = vsel %vm5732, %v5937, %v5939
        %v5941 = vrot.slane %v5531, 1
        %v5942 = vsel %vm5732, %v5939, %v5941
        %v5943 = vrot.slane %v5532, 1
        %v5944 = vrot.slane %v5533, 1
        %v5945 = vsel %vm5732, %v5943, %v5944
        %v5946 = vrot.slane %v5534, 1
        %v5947 = vsel %vm5732, %v5944, %v5946
        %v5948 = vrot.slane %v5535, 1
        %v5949 = vsel %vm5732, %v5946, %v5948
        %v5950 = vrot.slane %v5536, 1
        %v5951 = vrot.slane %v5537, 1
        %v5952 = vsel %vm5732, %v5950, %v5951
        %v5953 = vrot.slane %v5538, 1
        %v5954 = vsel %vm5732, %v5951, %v5953
        %v5955 = vrot.slane %v5539, 1
        %v5956 = vsel %vm5732, %v5953, %v5955
        %v5957 = vrot.slane %v5540, 1
        %v5958 = vrot.slane %v5541, 1
        %v5959 = vsel %vm5732, %v5957, %v5958
        %v5960 = vrot.slane %v5542, 1
        %v5961 = vsel %vm5732, %v5958, %v5960
        %v5962 = vrot.slane %v5543, 1
        %v5963 = vsel %vm5732, %v5960, %v5962
        %v5964 = vrot.slane %v5544, 1
        %v5965 = vrot.slane %v5545, 1
        %v5966 = vsel %vm5732, %v5964, %v5965
        %v5967 = vrot.slane %v5546, 1
        %v5968 = vsel %vm5732, %v5965, %v5967
        %v5969 = vrot.slane %v5547, 1
        %v5970 = vsel %vm5732, %v5967, %v5969
        %v5971 = vrot.slane %v5548, 1
        %v5972 = vrot.slane %v5549, 1
        %v5973 = vsel %vm5732, %v5971, %v5972
        %v5974 = vrot.slane %v5550, 1
        %v5975 = vsel %vm5732, %v5972, %v5974
        %v5976 = vrot.slane %v5551, 1
        %v5977 = vsel %vm5732, %v5974, %v5976
        %v5978 = vrot.slane %v5552, 1
        %v5979 = vrot.slane %v5553, 1
        %v5980 = vsel %vm5732, %v5978, %v5979
        %v5981 = vrot.slane %v5554, 1
        %v5982 = vsel %vm5732, %v5979, %v5981
        %v5983 = vrot.slane %v5555, 1
        %v5984 = vsel %vm5732, %v5981, %v5983
        %v5985 = vrot.slane %v5556, 1
        %v5986 = vrot.slane %v5557, 1
        %v5987 = vsel %vm5732, %v5985, %v5986
        %v5988 = vrot.slane %v5558, 1
        %v5989 = vsel %vm5732, %v5986, %v5988
        %v5990 = vrot.slane %v5559, 1
        %v5991 = vsel %vm5732, %v5988, %v5990
        %v5992 = vrot.slane %v5560, 1
        %v5993 = vrot.slane %v5561, 1
        %v5994 = vsel %vm5732, %v5992, %v5993
        %v5995 = vrot.slane %v5562, 1
        %v5996 = vsel %vm5732, %v5993, %v5995
        %v5997 = vrot.slane %v5563, 1
        %v5998 = vsel %vm5732, %v5995, %v5997
        %v5999 = vrot.slane %v5564, 1
        %v6000 = vrot.slane %v5565, 1
        %v6001 = vsel %vm5732, %v5999, %v6000
        %v6002 = vrot.slane %v5566, 1
        %v6003 = vsel %vm5732, %v6000, %v6002
        %v6004 = vrot.slane %v5567, 1
        %v6005 = vsel %vm5732, %v6002, %v6004
        %v6006 = vrot.slane %v5568, 1
        %v6007 = vrot.slane %v5569, 1
        %v6008 = vsel %vm5732, %v6006, %v6007
        %v6009 = vrot.slane %v5570, 1
        %v6010 = vsel %vm5732, %v6007, %v6009
        %v6011 = vrot.slane %v5571, 1
        %v6012 = vsel %vm5732, %v6009, %v6011
        %v6173 = vadd.f32 %v5412, %v5735
        %v6174 = vadd.f32 %v5413, %v5737
        %v6175 = vadd.f32 %v5414, %v5739
        %v6176 = vadd.f32 %v5415, %v5738
        %v6177 = vadd.f32 %v5416, %v5742
        %v6178 = vadd.f32 %v5417, %v5744
        %v6179 = vadd.f32 %v5418, %v5746
        %v6180 = vadd.f32 %v5419, %v5745
        %v6181 = vadd.f32 %v5420, %v5749
        %v6182 = vadd.f32 %v5421, %v5751
        %v6183 = vadd.f32 %v5422, %v5753
        %v6184 = vadd.f32 %v5423, %v5752
        %v6185 = vadd.f32 %v5424, %v5756
        %v6186 = vadd.f32 %v5425, %v5758
        %v6187 = vadd.f32 %v5426, %v5760
        %v6188 = vadd.f32 %v5427, %v5759
        %v6189 = vadd.f32 %v5428, %v5763
        %v6190 = vadd.f32 %v5429, %v5765
        %v6191 = vadd.f32 %v5430, %v5767
        %v6192 = vadd.f32 %v5431, %v5766
        %v6193 = vadd.f32 %v5432, %v5770
        %v6194 = vadd.f32 %v5433, %v5772
        %v6195 = vadd.f32 %v5434, %v5774
        %v6196 = vadd.f32 %v5435, %v5773
        %v6197 = vadd.f32 %v5436, %v5777
        %v6198 = vadd.f32 %v5437, %v5779
        %v6199 = vadd.f32 %v5438, %v5781
        %v6200 = vadd.f32 %v5439, %v5780
        %v6201 = vadd.f32 %v5440, %v5784
        %v6202 = vadd.f32 %v5441, %v5786
        %v6203 = vadd.f32 %v5442, %v5788
        %v6204 = vadd.f32 %v5443, %v5787
        %v6205 = vadd.f32 %v5444, %v5791
        %v6206 = vadd.f32 %v5445, %v5793
        %v6207 = vadd.f32 %v5446, %v5795
        %v6208 = vadd.f32 %v5447, %v5794
        %v6209 = vadd.f32 %v5448, %v5798
        %v6210 = vadd.f32 %v5449, %v5800
        %v6211 = vadd.f32 %v5450, %v5802
        %v6212 = vadd.f32 %v5451, %v5801
        %v6213 = vadd.f32 %v5452, %v5805
        %v6214 = vadd.f32 %v5453, %v5807
        %v6215 = vadd.f32 %v5454, %v5809
        %v6216 = vadd.f32 %v5455, %v5808
        %v6217 = vadd.f32 %v5456, %v5812
        %v6218 = vadd.f32 %v5457, %v5814
        %v6219 = vadd.f32 %v5458, %v5816
        %v6220 = vadd.f32 %v5459, %v5815
        %v6221 = vadd.f32 %v5460, %v5819
        %v6222 = vadd.f32 %v5461, %v5821
        %v6223 = vadd.f32 %v5462, %v5823
        %v6224 = vadd.f32 %v5463, %v5822
        %v6225 = vadd.f32 %v5464, %v5826
        %v6226 = vadd.f32 %v5465, %v5828
        %v6227 = vadd.f32 %v5466, %v5830
        %v6228 = vadd.f32 %v5467, %v5829
        %v6229 = vadd.f32 %v5468, %v5833
        %v6230 = vadd.f32 %v5469, %v5835
        %v6231 = vadd.f32 %v5470, %v5837
        %v6232 = vadd.f32 %v5471, %v5836
        %v6233 = vadd.f32 %v5472, %v5840
        %v6234 = vadd.f32 %v5473, %v5842
        %v6235 = vadd.f32 %v5474, %v5844
        %v6236 = vadd.f32 %v5475, %v5843
        %v6237 = vadd.f32 %v5476, %v5847
        %v6238 = vadd.f32 %v5477, %v5849
        %v6239 = vadd.f32 %v5478, %v5851
        %v6240 = vadd.f32 %v5479, %v5850
        %v6241 = vadd.f32 %v5480, %v5854
        %v6242 = vadd.f32 %v5481, %v5856
        %v6243 = vadd.f32 %v5482, %v5858
        %v6244 = vadd.f32 %v5483, %v5857
        %v6245 = vadd.f32 %v5484, %v5861
        %v6246 = vadd.f32 %v5485, %v5863
        %v6247 = vadd.f32 %v5486, %v5865
        %v6248 = vadd.f32 %v5487, %v5864
        %v6249 = vadd.f32 %v5488, %v5868
        %v6250 = vadd.f32 %v5489, %v5870
        %v6251 = vadd.f32 %v5490, %v5872
        %v6252 = vadd.f32 %v5491, %v5871
        %v6253 = vadd.f32 %v5492, %v5875
        %v6254 = vadd.f32 %v5493, %v5877
        %v6255 = vadd.f32 %v5494, %v5879
        %v6256 = vadd.f32 %v5495, %v5878
        %v6257 = vadd.f32 %v5496, %v5882
        %v6258 = vadd.f32 %v5497, %v5884
        %v6259 = vadd.f32 %v5498, %v5886
        %v6260 = vadd.f32 %v5499, %v5885
        %v6261 = vadd.f32 %v5500, %v5889
        %v6262 = vadd.f32 %v5501, %v5891
        %v6263 = vadd.f32 %v5502, %v5893
        %v6264 = vadd.f32 %v5503, %v5892
        %v6265 = vadd.f32 %v5504, %v5896
        %v6266 = vadd.f32 %v5505, %v5898
        %v6267 = vadd.f32 %v5506, %v5900
        %v6268 = vadd.f32 %v5507, %v5899
        %v6269 = vadd.f32 %v5508, %v5903
        %v6270 = vadd.f32 %v5509, %v5905
        %v6271 = vadd.f32 %v5510, %v5907
        %v6272 = vadd.f32 %v5511, %v5906
        %v6273 = vadd.f32 %v5512, %v5910
        %v6274 = vadd.f32 %v5513, %v5912
        %v6275 = vadd.f32 %v5514, %v5914
        %v6276 = vadd.f32 %v5515, %v5913
        %v6277 = vadd.f32 %v5516, %v5917
        %v6278 = vadd.f32 %v5517, %v5919
        %v6279 = vadd.f32 %v5518, %v5921
        %v6280 = vadd.f32 %v5519, %v5920
        %v6281 = vadd.f32 %v5520, %v5924
        %v6282 = vadd.f32 %v5521, %v5926
        %v6283 = vadd.f32 %v5522, %v5928
        %v6284 = vadd.f32 %v5523, %v5927
        %v6285 = vadd.f32 %v5524, %v5931
        %v6286 = vadd.f32 %v5525, %v5933
        %v6287 = vadd.f32 %v5526, %v5935
        %v6288 = vadd.f32 %v5527, %v5934
        %v6289 = vadd.f32 %v5528, %v5938
        %v6290 = vadd.f32 %v5529, %v5940
        %v6291 = vadd.f32 %v5530, %v5942
        %v6292 = vadd.f32 %v5531, %v5941
        %v6293 = vadd.f32 %v5532, %v5945
        %v6294 = vadd.f32 %v5533, %v5947
        %v6295 = vadd.f32 %v5534, %v5949
        %v6296 = vadd.f32 %v5535, %v5948
        %v6297 = vadd.f32 %v5536, %v5952
        %v6298 = vadd.f32 %v5537, %v5954
        %v6299 = vadd.f32 %v5538, %v5956
        %v6300 = vadd.f32 %v5539, %v5955
        %v6301 = vadd.f32 %v5540, %v5959
        %v6302 = vadd.f32 %v5541, %v5961
        %v6303 = vadd.f32 %v5542, %v5963
        %v6304 = vadd.f32 %v5543, %v5962
        %v6305 = vadd.f32 %v5544, %v5966
        %v6306 = vadd.f32 %v5545, %v5968
        %v6307 = vadd.f32 %v5546, %v5970
        %v6308 = vadd.f32 %v5547, %v5969
        %v6309 = vadd.f32 %v5548, %v5973
        %v6310 = vadd.f32 %v5549, %v5975
        %v6311 = vadd.f32 %v5550, %v5977
        %v6312 = vadd.f32 %v5551, %v5976
        %v6313 = vadd.f32 %v5552, %v5980
        %v6314 = vadd.f32 %v5553, %v5982
        %v6315 = vadd.f32 %v5554, %v5984
        %v6316 = vadd.f32 %v5555, %v5983
        %v6317 = vadd.f32 %v5556, %v5987
        %v6318 = vadd.f32 %v5557, %v5989
        %v6319 = vadd.f32 %v5558, %v5991
        %v6320 = vadd.f32 %v5559, %v5990
        %v6321 = vadd.f32 %v5560, %v5994
        %v6322 = vadd.f32 %v5561, %v5996
        %v6323 = vadd.f32 %v5562, %v5998
        %v6324 = vadd.f32 %v5563, %v5997
        %v6325 = vadd.f32 %v5564, %v6001
        %v6326 = vadd.f32 %v5565, %v6003
        %v6327 = vadd.f32 %v5566, %v6005
        %v6328 = vadd.f32 %v5567, %v6004
        %v6329 = vadd.f32 %v5568, %v6008
        %v6330 = vadd.f32 %v5569, %v6010
        %v6331 = vadd.f32 %v5570, %v6012
        %v6332 = vadd.f32 %v5571, %v6011
        %vm6493 = vcmask 1045504
        %v6494 = vrot.slane %v6173, 2
        %v6495 = vrot.slane %v6174, 2
        %v6496 = vsel %vm6493, %v6494, %v6495
        %v6497 = vrot.slane %v6175, 2
        %v6498 = vsel %vm6493, %v6495, %v6497
        %v6499 = vrot.slane %v6176, 2
        %v6500 = vsel %vm6493, %v6497, %v6499
        %v6501 = vrot.slane %v6177, 2
        %v6502 = vrot.slane %v6178, 2
        %v6503 = vsel %vm6493, %v6501, %v6502
        %v6504 = vrot.slane %v6179, 2
        %v6505 = vsel %vm6493, %v6502, %v6504
        %v6506 = vrot.slane %v6180, 2
        %v6507 = vsel %vm6493, %v6504, %v6506
        %v6508 = vrot.slane %v6181, 2
        %v6509 = vrot.slane %v6182, 2
        %v6510 = vsel %vm6493, %v6508, %v6509
        %v6511 = vrot.slane %v6183, 2
        %v6512 = vsel %vm6493, %v6509, %v6511
        %v6513 = vrot.slane %v6184, 2
        %v6514 = vsel %vm6493, %v6511, %v6513
        %v6515 = vrot.slane %v6185, 2
        %v6516 = vrot.slane %v6186, 2
        %v6517 = vsel %vm6493, %v6515, %v6516
        %v6518 = vrot.slane %v6187, 2
        %v6519 = vsel %vm6493, %v6516, %v6518
        %v6520 = vrot.slane %v6188, 2
        %v6521 = vsel %vm6493, %v6518, %v6520
        %v6522 = vrot.slane %v6189, 2
        %v6523 = vrot.slane %v6190, 2
        %v6524 = vsel %vm6493, %v6522, %v6523
        %v6525 = vrot.slane %v6191, 2
        %v6526 = vsel %vm6493, %v6523, %v6525
        %v6527 = vrot.slane %v6192, 2
        %v6528 = vsel %vm6493, %v6525, %v6527
        %v6529 = vrot.slane %v6193, 2
        %v6530 = vrot.slane %v6194, 2
        %v6531 = vsel %vm6493, %v6529, %v6530
        %v6532 = vrot.slane %v6195, 2
        %v6533 = vsel %vm6493, %v6530, %v6532
        %v6534 = vrot.slane %v6196, 2
        %v6535 = vsel %vm6493, %v6532, %v6534
        %v6536 = vrot.slane %v6197, 2
        %v6537 = vrot.slane %v6198, 2
        %v6538 = vsel %vm6493, %v6536, %v6537
        %v6539 = vrot.slane %v6199, 2
        %v6540 = vsel %vm6493, %v6537, %v6539
        %v6541 = vrot.slane %v6200, 2
        %v6542 = vsel %vm6493, %v6539, %v6541
        %v6543 = vrot.slane %v6201, 2
        %v6544 = vrot.slane %v6202, 2
        %v6545 = vsel %vm6493, %v6543, %v6544
        %v6546 = vrot.slane %v6203, 2
        %v6547 = vsel %vm6493, %v6544, %v6546
        %v6548 = vrot.slane %v6204, 2
        %v6549 = vsel %vm6493, %v6546, %v6548
        %v6550 = vrot.slane %v6205, 2
        %v6551 = vrot.slane %v6206, 2
        %v6552 = vsel %vm6493, %v6550, %v6551
        %v6553 = vrot.slane %v6207, 2
        %v6554 = vsel %vm6493, %v6551, %v6553
        %v6555 = vrot.slane %v6208, 2
        %v6556 = vsel %vm6493, %v6553, %v6555
        %v6557 = vrot.slane %v6209, 2
        %v6558 = vrot.slane %v6210, 2
        %v6559 = vsel %vm6493, %v6557, %v6558
        %v6560 = vrot.slane %v6211, 2
        %v6561 = vsel %vm6493, %v6558, %v6560
        %v6562 = vrot.slane %v6212, 2
        %v6563 = vsel %vm6493, %v6560, %v6562
        %v6564 = vrot.slane %v6213, 2
        %v6565 = vrot.slane %v6214, 2
        %v6566 = vsel %vm6493, %v6564, %v6565
        %v6567 = vrot.slane %v6215, 2
        %v6568 = vsel %vm6493, %v6565, %v6567
        %v6569 = vrot.slane %v6216, 2
        %v6570 = vsel %vm6493, %v6567, %v6569
        %v6571 = vrot.slane %v6217, 2
        %v6572 = vrot.slane %v6218, 2
        %v6573 = vsel %vm6493, %v6571, %v6572
        %v6574 = vrot.slane %v6219, 2
        %v6575 = vsel %vm6493, %v6572, %v6574
        %v6576 = vrot.slane %v6220, 2
        %v6577 = vsel %vm6493, %v6574, %v6576
        %v6578 = vrot.slane %v6221, 2
        %v6579 = vrot.slane %v6222, 2
        %v6580 = vsel %vm6493, %v6578, %v6579
        %v6581 = vrot.slane %v6223, 2
        %v6582 = vsel %vm6493, %v6579, %v6581
        %v6583 = vrot.slane %v6224, 2
        %v6584 = vsel %vm6493, %v6581, %v6583
        %v6585 = vrot.slane %v6225, 2
        %v6586 = vrot.slane %v6226, 2
        %v6587 = vsel %vm6493, %v6585, %v6586
        %v6588 = vrot.slane %v6227, 2
        %v6589 = vsel %vm6493, %v6586, %v6588
        %v6590 = vrot.slane %v6228, 2
        %v6591 = vsel %vm6493, %v6588, %v6590
        %v6592 = vrot.slane %v6229, 2
        %v6593 = vrot.slane %v6230, 2
        %v6594 = vsel %vm6493, %v6592, %v6593
        %v6595 = vrot.slane %v6231, 2
        %v6596 = vsel %vm6493, %v6593, %v6595
        %v6597 = vrot.slane %v6232, 2
        %v6598 = vsel %vm6493, %v6595, %v6597
        %v6599 = vrot.slane %v6233, 2
        %v6600 = vrot.slane %v6234, 2
        %v6601 = vsel %vm6493, %v6599, %v6600
        %v6602 = vrot.slane %v6235, 2
        %v6603 = vsel %vm6493, %v6600, %v6602
        %v6604 = vrot.slane %v6236, 2
        %v6605 = vsel %vm6493, %v6602, %v6604
        %v6606 = vrot.slane %v6237, 2
        %v6607 = vrot.slane %v6238, 2
        %v6608 = vsel %vm6493, %v6606, %v6607
        %v6609 = vrot.slane %v6239, 2
        %v6610 = vsel %vm6493, %v6607, %v6609
        %v6611 = vrot.slane %v6240, 2
        %v6612 = vsel %vm6493, %v6609, %v6611
        %v6613 = vrot.slane %v6241, 2
        %v6614 = vrot.slane %v6242, 2
        %v6615 = vsel %vm6493, %v6613, %v6614
        %v6616 = vrot.slane %v6243, 2
        %v6617 = vsel %vm6493, %v6614, %v6616
        %v6618 = vrot.slane %v6244, 2
        %v6619 = vsel %vm6493, %v6616, %v6618
        %v6620 = vrot.slane %v6245, 2
        %v6621 = vrot.slane %v6246, 2
        %v6622 = vsel %vm6493, %v6620, %v6621
        %v6623 = vrot.slane %v6247, 2
        %v6624 = vsel %vm6493, %v6621, %v6623
        %v6625 = vrot.slane %v6248, 2
        %v6626 = vsel %vm6493, %v6623, %v6625
        %v6627 = vrot.slane %v6249, 2
        %v6628 = vrot.slane %v6250, 2
        %v6629 = vsel %vm6493, %v6627, %v6628
        %v6630 = vrot.slane %v6251, 2
        %v6631 = vsel %vm6493, %v6628, %v6630
        %v6632 = vrot.slane %v6252, 2
        %v6633 = vsel %vm6493, %v6630, %v6632
        %v6634 = vrot.slane %v6253, 2
        %v6635 = vrot.slane %v6254, 2
        %v6636 = vsel %vm6493, %v6634, %v6635
        %v6637 = vrot.slane %v6255, 2
        %v6638 = vsel %vm6493, %v6635, %v6637
        %v6639 = vrot.slane %v6256, 2
        %v6640 = vsel %vm6493, %v6637, %v6639
        %v6641 = vrot.slane %v6257, 2
        %v6642 = vrot.slane %v6258, 2
        %v6643 = vsel %vm6493, %v6641, %v6642
        %v6644 = vrot.slane %v6259, 2
        %v6645 = vsel %vm6493, %v6642, %v6644
        %v6646 = vrot.slane %v6260, 2
        %v6647 = vsel %vm6493, %v6644, %v6646
        %v6648 = vrot.slane %v6261, 2
        %v6649 = vrot.slane %v6262, 2
        %v6650 = vsel %vm6493, %v6648, %v6649
        %v6651 = vrot.slane %v6263, 2
        %v6652 = vsel %vm6493, %v6649, %v6651
        %v6653 = vrot.slane %v6264, 2
        %v6654 = vsel %vm6493, %v6651, %v6653
        %v6655 = vrot.slane %v6265, 2
        %v6656 = vrot.slane %v6266, 2
        %v6657 = vsel %vm6493, %v6655, %v6656
        %v6658 = vrot.slane %v6267, 2
        %v6659 = vsel %vm6493, %v6656, %v6658
        %v6660 = vrot.slane %v6268, 2
        %v6661 = vsel %vm6493, %v6658, %v6660
        %v6662 = vrot.slane %v6269, 2
        %v6663 = vrot.slane %v6270, 2
        %v6664 = vsel %vm6493, %v6662, %v6663
        %v6665 = vrot.slane %v6271, 2
        %v6666 = vsel %vm6493, %v6663, %v6665
        %v6667 = vrot.slane %v6272, 2
        %v6668 = vsel %vm6493, %v6665, %v6667
        %v6669 = vrot.slane %v6273, 2
        %v6670 = vrot.slane %v6274, 2
        %v6671 = vsel %vm6493, %v6669, %v6670
        %v6672 = vrot.slane %v6275, 2
        %v6673 = vsel %vm6493, %v6670, %v6672
        %v6674 = vrot.slane %v6276, 2
        %v6675 = vsel %vm6493, %v6672, %v6674
        %v6676 = vrot.slane %v6277, 2
        %v6677 = vrot.slane %v6278, 2
        %v6678 = vsel %vm6493, %v6676, %v6677
        %v6679 = vrot.slane %v6279, 2
        %v6680 = vsel %vm6493, %v6677, %v6679
        %v6681 = vrot.slane %v6280, 2
        %v6682 = vsel %vm6493, %v6679, %v6681
        %v6683 = vrot.slane %v6281, 2
        %v6684 = vrot.slane %v6282, 2
        %v6685 = vsel %vm6493, %v6683, %v6684
        %v6686 = vrot.slane %v6283, 2
        %v6687 = vsel %vm6493, %v6684, %v6686
        %v6688 = vrot.slane %v6284, 2
        %v6689 = vsel %vm6493, %v6686, %v6688
        %v6690 = vrot.slane %v6285, 2
        %v6691 = vrot.slane %v6286, 2
        %v6692 = vsel %vm6493, %v6690, %v6691
        %v6693 = vrot.slane %v6287, 2
        %v6694 = vsel %vm6493, %v6691, %v6693
        %v6695 = vrot.slane %v6288, 2
        %v6696 = vsel %vm6493, %v6693, %v6695
        %v6697 = vrot.slane %v6289, 2
        %v6698 = vrot.slane %v6290, 2
        %v6699 = vsel %vm6493, %v6697, %v6698
        %v6700 = vrot.slane %v6291, 2
        %v6701 = vsel %vm6493, %v6698, %v6700
        %v6702 = vrot.slane %v6292, 2
        %v6703 = vsel %vm6493, %v6700, %v6702
        %v6704 = vrot.slane %v6293, 2
        %v6705 = vrot.slane %v6294, 2
        %v6706 = vsel %vm6493, %v6704, %v6705
        %v6707 = vrot.slane %v6295, 2
        %v6708 = vsel %vm6493, %v6705, %v6707
        %v6709 = vrot.slane %v6296, 2
        %v6710 = vsel %vm6493, %v6707, %v6709
        %v6711 = vrot.slane %v6297, 2
        %v6712 = vrot.slane %v6298, 2
        %v6713 = vsel %vm6493, %v6711, %v6712
        %v6714 = vrot.slane %v6299, 2
        %v6715 = vsel %vm6493, %v6712, %v6714
        %v6716 = vrot.slane %v6300, 2
        %v6717 = vsel %vm6493, %v6714, %v6716
        %v6718 = vrot.slane %v6301, 2
        %v6719 = vrot.slane %v6302, 2
        %v6720 = vsel %vm6493, %v6718, %v6719
        %v6721 = vrot.slane %v6303, 2
        %v6722 = vsel %vm6493, %v6719, %v6721
        %v6723 = vrot.slane %v6304, 2
        %v6724 = vsel %vm6493, %v6721, %v6723
        %v6725 = vrot.slane %v6305, 2
        %v6726 = vrot.slane %v6306, 2
        %v6727 = vsel %vm6493, %v6725, %v6726
        %v6728 = vrot.slane %v6307, 2
        %v6729 = vsel %vm6493, %v6726, %v6728
        %v6730 = vrot.slane %v6308, 2
        %v6731 = vsel %vm6493, %v6728, %v6730
        %v6732 = vrot.slane %v6309, 2
        %v6733 = vrot.slane %v6310, 2
        %v6734 = vsel %vm6493, %v6732, %v6733
        %v6735 = vrot.slane %v6311, 2
        %v6736 = vsel %vm6493, %v6733, %v6735
        %v6737 = vrot.slane %v6312, 2
        %v6738 = vsel %vm6493, %v6735, %v6737
        %v6739 = vrot.slane %v6313, 2
        %v6740 = vrot.slane %v6314, 2
        %v6741 = vsel %vm6493, %v6739, %v6740
        %v6742 = vrot.slane %v6315, 2
        %v6743 = vsel %vm6493, %v6740, %v6742
        %v6744 = vrot.slane %v6316, 2
        %v6745 = vsel %vm6493, %v6742, %v6744
        %v6746 = vrot.slane %v6317, 2
        %v6747 = vrot.slane %v6318, 2
        %v6748 = vsel %vm6493, %v6746, %v6747
        %v6749 = vrot.slane %v6319, 2
        %v6750 = vsel %vm6493, %v6747, %v6749
        %v6751 = vrot.slane %v6320, 2
        %v6752 = vsel %vm6493, %v6749, %v6751
        %v6753 = vrot.slane %v6321, 2
        %v6754 = vrot.slane %v6322, 2
        %v6755 = vsel %vm6493, %v6753, %v6754
        %v6756 = vrot.slane %v6323, 2
        %v6757 = vsel %vm6493, %v6754, %v6756
        %v6758 = vrot.slane %v6324, 2
        %v6759 = vsel %vm6493, %v6756, %v6758
        %v6760 = vrot.slane %v6325, 2
        %v6761 = vrot.slane %v6326, 2
        %v6762 = vsel %vm6493, %v6760, %v6761
        %v6763 = vrot.slane %v6327, 2
        %v6764 = vsel %vm6493, %v6761, %v6763
        %v6765 = vrot.slane %v6328, 2
        %v6766 = vsel %vm6493, %v6763, %v6765
        %v6767 = vrot.slane %v6329, 2
        %v6768 = vrot.slane %v6330, 2
        %v6769 = vsel %vm6493, %v6767, %v6768
        %v6770 = vrot.slane %v6331, 2
        %v6771 = vsel %vm6493, %v6768, %v6770
        %v6772 = vrot.slane %v6332, 2
        %v6773 = vsel %vm6493, %v6770, %v6772
        %v6934 = vadd.f32 %v6173, %v6496
        %v6935 = vadd.f32 %v6174, %v6498
        %v6936 = vadd.f32 %v6175, %v6500
        %v6937 = vadd.f32 %v6176, %v6499
        %v6938 = vadd.f32 %v6177, %v6503
        %v6939 = vadd.f32 %v6178, %v6505
        %v6940 = vadd.f32 %v6179, %v6507
        %v6941 = vadd.f32 %v6180, %v6506
        %v6942 = vadd.f32 %v6181, %v6510
        %v6943 = vadd.f32 %v6182, %v6512
        %v6944 = vadd.f32 %v6183, %v6514
        %v6945 = vadd.f32 %v6184, %v6513
        %v6946 = vadd.f32 %v6185, %v6517
        %v6947 = vadd.f32 %v6186, %v6519
        %v6948 = vadd.f32 %v6187, %v6521
        %v6949 = vadd.f32 %v6188, %v6520
        %v6950 = vadd.f32 %v6189, %v6524
        %v6951 = vadd.f32 %v6190, %v6526
        %v6952 = vadd.f32 %v6191, %v6528
        %v6953 = vadd.f32 %v6192, %v6527
        %v6954 = vadd.f32 %v6193, %v6531
        %v6955 = vadd.f32 %v6194, %v6533
        %v6956 = vadd.f32 %v6195, %v6535
        %v6957 = vadd.f32 %v6196, %v6534
        %v6958 = vadd.f32 %v6197, %v6538
        %v6959 = vadd.f32 %v6198, %v6540
        %v6960 = vadd.f32 %v6199, %v6542
        %v6961 = vadd.f32 %v6200, %v6541
        %v6962 = vadd.f32 %v6201, %v6545
        %v6963 = vadd.f32 %v6202, %v6547
        %v6964 = vadd.f32 %v6203, %v6549
        %v6965 = vadd.f32 %v6204, %v6548
        %v6966 = vadd.f32 %v6205, %v6552
        %v6967 = vadd.f32 %v6206, %v6554
        %v6968 = vadd.f32 %v6207, %v6556
        %v6969 = vadd.f32 %v6208, %v6555
        %v6970 = vadd.f32 %v6209, %v6559
        %v6971 = vadd.f32 %v6210, %v6561
        %v6972 = vadd.f32 %v6211, %v6563
        %v6973 = vadd.f32 %v6212, %v6562
        %v6974 = vadd.f32 %v6213, %v6566
        %v6975 = vadd.f32 %v6214, %v6568
        %v6976 = vadd.f32 %v6215, %v6570
        %v6977 = vadd.f32 %v6216, %v6569
        %v6978 = vadd.f32 %v6217, %v6573
        %v6979 = vadd.f32 %v6218, %v6575
        %v6980 = vadd.f32 %v6219, %v6577
        %v6981 = vadd.f32 %v6220, %v6576
        %v6982 = vadd.f32 %v6221, %v6580
        %v6983 = vadd.f32 %v6222, %v6582
        %v6984 = vadd.f32 %v6223, %v6584
        %v6985 = vadd.f32 %v6224, %v6583
        %v6986 = vadd.f32 %v6225, %v6587
        %v6987 = vadd.f32 %v6226, %v6589
        %v6988 = vadd.f32 %v6227, %v6591
        %v6989 = vadd.f32 %v6228, %v6590
        %v6990 = vadd.f32 %v6229, %v6594
        %v6991 = vadd.f32 %v6230, %v6596
        %v6992 = vadd.f32 %v6231, %v6598
        %v6993 = vadd.f32 %v6232, %v6597
        %v6994 = vadd.f32 %v6233, %v6601
        %v6995 = vadd.f32 %v6234, %v6603
        %v6996 = vadd.f32 %v6235, %v6605
        %v6997 = vadd.f32 %v6236, %v6604
        %v6998 = vadd.f32 %v6237, %v6608
        %v6999 = vadd.f32 %v6238, %v6610
        %v7000 = vadd.f32 %v6239, %v6612
        %v7001 = vadd.f32 %v6240, %v6611
        %v7002 = vadd.f32 %v6241, %v6615
        %v7003 = vadd.f32 %v6242, %v6617
        %v7004 = vadd.f32 %v6243, %v6619
        %v7005 = vadd.f32 %v6244, %v6618
        %v7006 = vadd.f32 %v6245, %v6622
        %v7007 = vadd.f32 %v6246, %v6624
        %v7008 = vadd.f32 %v6247, %v6626
        %v7009 = vadd.f32 %v6248, %v6625
        %v7010 = vadd.f32 %v6249, %v6629
        %v7011 = vadd.f32 %v6250, %v6631
        %v7012 = vadd.f32 %v6251, %v6633
        %v7013 = vadd.f32 %v6252, %v6632
        %v7014 = vadd.f32 %v6253, %v6636
        %v7015 = vadd.f32 %v6254, %v6638
        %v7016 = vadd.f32 %v6255, %v6640
        %v7017 = vadd.f32 %v6256, %v6639
        %v7018 = vadd.f32 %v6257, %v6643
        %v7019 = vadd.f32 %v6258, %v6645
        %v7020 = vadd.f32 %v6259, %v6647
        %v7021 = vadd.f32 %v6260, %v6646
        %v7022 = vadd.f32 %v6261, %v6650
        %v7023 = vadd.f32 %v6262, %v6652
        %v7024 = vadd.f32 %v6263, %v6654
        %v7025 = vadd.f32 %v6264, %v6653
        %v7026 = vadd.f32 %v6265, %v6657
        %v7027 = vadd.f32 %v6266, %v6659
        %v7028 = vadd.f32 %v6267, %v6661
        %v7029 = vadd.f32 %v6268, %v6660
        %v7030 = vadd.f32 %v6269, %v6664
        %v7031 = vadd.f32 %v6270, %v6666
        %v7032 = vadd.f32 %v6271, %v6668
        %v7033 = vadd.f32 %v6272, %v6667
        %v7034 = vadd.f32 %v6273, %v6671
        %v7035 = vadd.f32 %v6274, %v6673
        %v7036 = vadd.f32 %v6275, %v6675
        %v7037 = vadd.f32 %v6276, %v6674
        %v7038 = vadd.f32 %v6277, %v6678
        %v7039 = vadd.f32 %v6278, %v6680
        %v7040 = vadd.f32 %v6279, %v6682
        %v7041 = vadd.f32 %v6280, %v6681
        %v7042 = vadd.f32 %v6281, %v6685
        %v7043 = vadd.f32 %v6282, %v6687
        %v7044 = vadd.f32 %v6283, %v6689
        %v7045 = vadd.f32 %v6284, %v6688
        %v7046 = vadd.f32 %v6285, %v6692
        %v7047 = vadd.f32 %v6286, %v6694
        %v7048 = vadd.f32 %v6287, %v6696
        %v7049 = vadd.f32 %v6288, %v6695
        %v7050 = vadd.f32 %v6289, %v6699
        %v7051 = vadd.f32 %v6290, %v6701
        %v7052 = vadd.f32 %v6291, %v6703
        %v7053 = vadd.f32 %v6292, %v6702
        %v7054 = vadd.f32 %v6293, %v6706
        %v7055 = vadd.f32 %v6294, %v6708
        %v7056 = vadd.f32 %v6295, %v6710
        %v7057 = vadd.f32 %v6296, %v6709
        %v7058 = vadd.f32 %v6297, %v6713
        %v7059 = vadd.f32 %v6298, %v6715
        %v7060 = vadd.f32 %v6299, %v6717
        %v7061 = vadd.f32 %v6300, %v6716
        %v7062 = vadd.f32 %v6301, %v6720
        %v7063 = vadd.f32 %v6302, %v6722
        %v7064 = vadd.f32 %v6303, %v6724
        %v7065 = vadd.f32 %v6304, %v6723
        %v7066 = vadd.f32 %v6305, %v6727
        %v7067 = vadd.f32 %v6306, %v6729
        %v7068 = vadd.f32 %v6307, %v6731
        %v7069 = vadd.f32 %v6308, %v6730
        %v7070 = vadd.f32 %v6309, %v6734
        %v7071 = vadd.f32 %v6310, %v6736
        %v7072 = vadd.f32 %v6311, %v6738
        %v7073 = vadd.f32 %v6312, %v6737
        %v7074 = vadd.f32 %v6313, %v6741
        %v7075 = vadd.f32 %v6314, %v6743
        %v7076 = vadd.f32 %v6315, %v6745
        %v7077 = vadd.f32 %v6316, %v6744
        %v7078 = vadd.f32 %v6317, %v6748
        %v7079 = vadd.f32 %v6318, %v6750
        %v7080 = vadd.f32 %v6319, %v6752
        %v7081 = vadd.f32 %v6320, %v6751
        %v7082 = vadd.f32 %v6321, %v6755
        %v7083 = vadd.f32 %v6322, %v6757
        %v7084 = vadd.f32 %v6323, %v6759
        %v7085 = vadd.f32 %v6324, %v6758
        %v7086 = vadd.f32 %v6325, %v6762
        %v7087 = vadd.f32 %v6326, %v6764
        %v7088 = vadd.f32 %v6327, %v6766
        %v7089 = vadd.f32 %v6328, %v6765
        %v7090 = vadd.f32 %v6329, %v6769
        %v7091 = vadd.f32 %v6330, %v6771
        %v7092 = vadd.f32 %v6331, %v6773
        %v7093 = vadd.f32 %v6332, %v6772
        %vm7254 = vcmask 1043456
        %v7255 = vrot.slane %v6934, 4
        %v7256 = vrot.slane %v6935, 4
        %v7257 = vsel %vm7254, %v7255, %v7256
        %v7258 = vrot.slane %v6936, 4
        %v7259 = vsel %vm7254, %v7256, %v7258
        %v7260 = vrot.slane %v6937, 4
        %v7261 = vsel %vm7254, %v7258, %v7260
        %v7262 = vrot.slane %v6938, 4
        %v7263 = vrot.slane %v6939, 4
        %v7264 = vsel %vm7254, %v7262, %v7263
        %v7265 = vrot.slane %v6940, 4
        %v7266 = vsel %vm7254, %v7263, %v7265
        %v7267 = vrot.slane %v6941, 4
        %v7268 = vsel %vm7254, %v7265, %v7267
        %v7269 = vrot.slane %v6942, 4
        %v7270 = vrot.slane %v6943, 4
        %v7271 = vsel %vm7254, %v7269, %v7270
        %v7272 = vrot.slane %v6944, 4
        %v7273 = vsel %vm7254, %v7270, %v7272
        %v7274 = vrot.slane %v6945, 4
        %v7275 = vsel %vm7254, %v7272, %v7274
        %v7276 = vrot.slane %v6946, 4
        %v7277 = vrot.slane %v6947, 4
        %v7278 = vsel %vm7254, %v7276, %v7277
        %v7279 = vrot.slane %v6948, 4
        %v7280 = vsel %vm7254, %v7277, %v7279
        %v7281 = vrot.slane %v6949, 4
        %v7282 = vsel %vm7254, %v7279, %v7281
        %v7283 = vrot.slane %v6950, 4
        %v7284 = vrot.slane %v6951, 4
        %v7285 = vsel %vm7254, %v7283, %v7284
        %v7286 = vrot.slane %v6952, 4
        %v7287 = vsel %vm7254, %v7284, %v7286
        %v7288 = vrot.slane %v6953, 4
        %v7289 = vsel %vm7254, %v7286, %v7288
        %v7290 = vrot.slane %v6954, 4
        %v7291 = vrot.slane %v6955, 4
        %v7292 = vsel %vm7254, %v7290, %v7291
        %v7293 = vrot.slane %v6956, 4
        %v7294 = vsel %vm7254, %v7291, %v7293
        %v7295 = vrot.slane %v6957, 4
        %v7296 = vsel %vm7254, %v7293, %v7295
        %v7297 = vrot.slane %v6958, 4
        %v7298 = vrot.slane %v6959, 4
        %v7299 = vsel %vm7254, %v7297, %v7298
        %v7300 = vrot.slane %v6960, 4
        %v7301 = vsel %vm7254, %v7298, %v7300
        %v7302 = vrot.slane %v6961, 4
        %v7303 = vsel %vm7254, %v7300, %v7302
        %v7304 = vrot.slane %v6962, 4
        %v7305 = vrot.slane %v6963, 4
        %v7306 = vsel %vm7254, %v7304, %v7305
        %v7307 = vrot.slane %v6964, 4
        %v7308 = vsel %vm7254, %v7305, %v7307
        %v7309 = vrot.slane %v6965, 4
        %v7310 = vsel %vm7254, %v7307, %v7309
        %v7311 = vrot.slane %v6966, 4
        %v7312 = vrot.slane %v6967, 4
        %v7313 = vsel %vm7254, %v7311, %v7312
        %v7314 = vrot.slane %v6968, 4
        %v7315 = vsel %vm7254, %v7312, %v7314
        %v7316 = vrot.slane %v6969, 4
        %v7317 = vsel %vm7254, %v7314, %v7316
        %v7318 = vrot.slane %v6970, 4
        %v7319 = vrot.slane %v6971, 4
        %v7320 = vsel %vm7254, %v7318, %v7319
        %v7321 = vrot.slane %v6972, 4
        %v7322 = vsel %vm7254, %v7319, %v7321
        %v7323 = vrot.slane %v6973, 4
        %v7324 = vsel %vm7254, %v7321, %v7323
        %v7325 = vrot.slane %v6974, 4
        %v7326 = vrot.slane %v6975, 4
        %v7327 = vsel %vm7254, %v7325, %v7326
        %v7328 = vrot.slane %v6976, 4
        %v7329 = vsel %vm7254, %v7326, %v7328
        %v7330 = vrot.slane %v6977, 4
        %v7331 = vsel %vm7254, %v7328, %v7330
        %v7332 = vrot.slane %v6978, 4
        %v7333 = vrot.slane %v6979, 4
        %v7334 = vsel %vm7254, %v7332, %v7333
        %v7335 = vrot.slane %v6980, 4
        %v7336 = vsel %vm7254, %v7333, %v7335
        %v7337 = vrot.slane %v6981, 4
        %v7338 = vsel %vm7254, %v7335, %v7337
        %v7339 = vrot.slane %v6982, 4
        %v7340 = vrot.slane %v6983, 4
        %v7341 = vsel %vm7254, %v7339, %v7340
        %v7342 = vrot.slane %v6984, 4
        %v7343 = vsel %vm7254, %v7340, %v7342
        %v7344 = vrot.slane %v6985, 4
        %v7345 = vsel %vm7254, %v7342, %v7344
        %v7346 = vrot.slane %v6986, 4
        %v7347 = vrot.slane %v6987, 4
        %v7348 = vsel %vm7254, %v7346, %v7347
        %v7349 = vrot.slane %v6988, 4
        %v7350 = vsel %vm7254, %v7347, %v7349
        %v7351 = vrot.slane %v6989, 4
        %v7352 = vsel %vm7254, %v7349, %v7351
        %v7353 = vrot.slane %v6990, 4
        %v7354 = vrot.slane %v6991, 4
        %v7355 = vsel %vm7254, %v7353, %v7354
        %v7356 = vrot.slane %v6992, 4
        %v7357 = vsel %vm7254, %v7354, %v7356
        %v7358 = vrot.slane %v6993, 4
        %v7359 = vsel %vm7254, %v7356, %v7358
        %v7360 = vrot.slane %v6994, 4
        %v7361 = vrot.slane %v6995, 4
        %v7362 = vsel %vm7254, %v7360, %v7361
        %v7363 = vrot.slane %v6996, 4
        %v7364 = vsel %vm7254, %v7361, %v7363
        %v7365 = vrot.slane %v6997, 4
        %v7366 = vsel %vm7254, %v7363, %v7365
        %v7367 = vrot.slane %v6998, 4
        %v7368 = vrot.slane %v6999, 4
        %v7369 = vsel %vm7254, %v7367, %v7368
        %v7370 = vrot.slane %v7000, 4
        %v7371 = vsel %vm7254, %v7368, %v7370
        %v7372 = vrot.slane %v7001, 4
        %v7373 = vsel %vm7254, %v7370, %v7372
        %v7374 = vrot.slane %v7002, 4
        %v7375 = vrot.slane %v7003, 4
        %v7376 = vsel %vm7254, %v7374, %v7375
        %v7377 = vrot.slane %v7004, 4
        %v7378 = vsel %vm7254, %v7375, %v7377
        %v7379 = vrot.slane %v7005, 4
        %v7380 = vsel %vm7254, %v7377, %v7379
        %v7381 = vrot.slane %v7006, 4
        %v7382 = vrot.slane %v7007, 4
        %v7383 = vsel %vm7254, %v7381, %v7382
        %v7384 = vrot.slane %v7008, 4
        %v7385 = vsel %vm7254, %v7382, %v7384
        %v7386 = vrot.slane %v7009, 4
        %v7387 = vsel %vm7254, %v7384, %v7386
        %v7388 = vrot.slane %v7010, 4
        %v7389 = vrot.slane %v7011, 4
        %v7390 = vsel %vm7254, %v7388, %v7389
        %v7391 = vrot.slane %v7012, 4
        %v7392 = vsel %vm7254, %v7389, %v7391
        %v7393 = vrot.slane %v7013, 4
        %v7394 = vsel %vm7254, %v7391, %v7393
        %v7395 = vrot.slane %v7014, 4
        %v7396 = vrot.slane %v7015, 4
        %v7397 = vsel %vm7254, %v7395, %v7396
        %v7398 = vrot.slane %v7016, 4
        %v7399 = vsel %vm7254, %v7396, %v7398
        %v7400 = vrot.slane %v7017, 4
        %v7401 = vsel %vm7254, %v7398, %v7400
        %v7402 = vrot.slane %v7018, 4
        %v7403 = vrot.slane %v7019, 4
        %v7404 = vsel %vm7254, %v7402, %v7403
        %v7405 = vrot.slane %v7020, 4
        %v7406 = vsel %vm7254, %v7403, %v7405
        %v7407 = vrot.slane %v7021, 4
        %v7408 = vsel %vm7254, %v7405, %v7407
        %v7409 = vrot.slane %v7022, 4
        %v7410 = vrot.slane %v7023, 4
        %v7411 = vsel %vm7254, %v7409, %v7410
        %v7412 = vrot.slane %v7024, 4
        %v7413 = vsel %vm7254, %v7410, %v7412
        %v7414 = vrot.slane %v7025, 4
        %v7415 = vsel %vm7254, %v7412, %v7414
        %v7416 = vrot.slane %v7026, 4
        %v7417 = vrot.slane %v7027, 4
        %v7418 = vsel %vm7254, %v7416, %v7417
        %v7419 = vrot.slane %v7028, 4
        %v7420 = vsel %vm7254, %v7417, %v7419
        %v7421 = vrot.slane %v7029, 4
        %v7422 = vsel %vm7254, %v7419, %v7421
        %v7423 = vrot.slane %v7030, 4
        %v7424 = vrot.slane %v7031, 4
        %v7425 = vsel %vm7254, %v7423, %v7424
        %v7426 = vrot.slane %v7032, 4
        %v7427 = vsel %vm7254, %v7424, %v7426
        %v7428 = vrot.slane %v7033, 4
        %v7429 = vsel %vm7254, %v7426, %v7428
        %v7430 = vrot.slane %v7034, 4
        %v7431 = vrot.slane %v7035, 4
        %v7432 = vsel %vm7254, %v7430, %v7431
        %v7433 = vrot.slane %v7036, 4
        %v7434 = vsel %vm7254, %v7431, %v7433
        %v7435 = vrot.slane %v7037, 4
        %v7436 = vsel %vm7254, %v7433, %v7435
        %v7437 = vrot.slane %v7038, 4
        %v7438 = vrot.slane %v7039, 4
        %v7439 = vsel %vm7254, %v7437, %v7438
        %v7440 = vrot.slane %v7040, 4
        %v7441 = vsel %vm7254, %v7438, %v7440
        %v7442 = vrot.slane %v7041, 4
        %v7443 = vsel %vm7254, %v7440, %v7442
        %v7444 = vrot.slane %v7042, 4
        %v7445 = vrot.slane %v7043, 4
        %v7446 = vsel %vm7254, %v7444, %v7445
        %v7447 = vrot.slane %v7044, 4
        %v7448 = vsel %vm7254, %v7445, %v7447
        %v7449 = vrot.slane %v7045, 4
        %v7450 = vsel %vm7254, %v7447, %v7449
        %v7451 = vrot.slane %v7046, 4
        %v7452 = vrot.slane %v7047, 4
        %v7453 = vsel %vm7254, %v7451, %v7452
        %v7454 = vrot.slane %v7048, 4
        %v7455 = vsel %vm7254, %v7452, %v7454
        %v7456 = vrot.slane %v7049, 4
        %v7457 = vsel %vm7254, %v7454, %v7456
        %v7458 = vrot.slane %v7050, 4
        %v7459 = vrot.slane %v7051, 4
        %v7460 = vsel %vm7254, %v7458, %v7459
        %v7461 = vrot.slane %v7052, 4
        %v7462 = vsel %vm7254, %v7459, %v7461
        %v7463 = vrot.slane %v7053, 4
        %v7464 = vsel %vm7254, %v7461, %v7463
        %v7465 = vrot.slane %v7054, 4
        %v7466 = vrot.slane %v7055, 4
        %v7467 = vsel %vm7254, %v7465, %v7466
        %v7468 = vrot.slane %v7056, 4
        %v7469 = vsel %vm7254, %v7466, %v7468
        %v7470 = vrot.slane %v7057, 4
        %v7471 = vsel %vm7254, %v7468, %v7470
        %v7472 = vrot.slane %v7058, 4
        %v7473 = vrot.slane %v7059, 4
        %v7474 = vsel %vm7254, %v7472, %v7473
        %v7475 = vrot.slane %v7060, 4
        %v7476 = vsel %vm7254, %v7473, %v7475
        %v7477 = vrot.slane %v7061, 4
        %v7478 = vsel %vm7254, %v7475, %v7477
        %v7479 = vrot.slane %v7062, 4
        %v7480 = vrot.slane %v7063, 4
        %v7481 = vsel %vm7254, %v7479, %v7480
        %v7482 = vrot.slane %v7064, 4
        %v7483 = vsel %vm7254, %v7480, %v7482
        %v7484 = vrot.slane %v7065, 4
        %v7485 = vsel %vm7254, %v7482, %v7484
        %v7486 = vrot.slane %v7066, 4
        %v7487 = vrot.slane %v7067, 4
        %v7488 = vsel %vm7254, %v7486, %v7487
        %v7489 = vrot.slane %v7068, 4
        %v7490 = vsel %vm7254, %v7487, %v7489
        %v7491 = vrot.slane %v7069, 4
        %v7492 = vsel %vm7254, %v7489, %v7491
        %v7493 = vrot.slane %v7070, 4
        %v7494 = vrot.slane %v7071, 4
        %v7495 = vsel %vm7254, %v7493, %v7494
        %v7496 = vrot.slane %v7072, 4
        %v7497 = vsel %vm7254, %v7494, %v7496
        %v7498 = vrot.slane %v7073, 4
        %v7499 = vsel %vm7254, %v7496, %v7498
        %v7500 = vrot.slane %v7074, 4
        %v7501 = vrot.slane %v7075, 4
        %v7502 = vsel %vm7254, %v7500, %v7501
        %v7503 = vrot.slane %v7076, 4
        %v7504 = vsel %vm7254, %v7501, %v7503
        %v7505 = vrot.slane %v7077, 4
        %v7506 = vsel %vm7254, %v7503, %v7505
        %v7507 = vrot.slane %v7078, 4
        %v7508 = vrot.slane %v7079, 4
        %v7509 = vsel %vm7254, %v7507, %v7508
        %v7510 = vrot.slane %v7080, 4
        %v7511 = vsel %vm7254, %v7508, %v7510
        %v7512 = vrot.slane %v7081, 4
        %v7513 = vsel %vm7254, %v7510, %v7512
        %v7514 = vrot.slane %v7082, 4
        %v7515 = vrot.slane %v7083, 4
        %v7516 = vsel %vm7254, %v7514, %v7515
        %v7517 = vrot.slane %v7084, 4
        %v7518 = vsel %vm7254, %v7515, %v7517
        %v7519 = vrot.slane %v7085, 4
        %v7520 = vsel %vm7254, %v7517, %v7519
        %v7521 = vrot.slane %v7086, 4
        %v7522 = vrot.slane %v7087, 4
        %v7523 = vsel %vm7254, %v7521, %v7522
        %v7524 = vrot.slane %v7088, 4
        %v7525 = vsel %vm7254, %v7522, %v7524
        %v7526 = vrot.slane %v7089, 4
        %v7527 = vsel %vm7254, %v7524, %v7526
        %v7528 = vrot.slane %v7090, 4
        %v7529 = vrot.slane %v7091, 4
        %v7530 = vsel %vm7254, %v7528, %v7529
        %v7531 = vrot.slane %v7092, 4
        %v7532 = vsel %vm7254, %v7529, %v7531
        %v7533 = vrot.slane %v7093, 4
        %v7534 = vsel %vm7254, %v7531, %v7533
        %v7655 = vadd.f32 %v6934, %v7257
        %v7656 = vadd.f32 %v6935, %v7259
        %v7657 = vadd.f32 %v6936, %v7261
        %v7658 = vadd.f32 %v6938, %v7264
        %v7659 = vadd.f32 %v6939, %v7266
        %v7660 = vadd.f32 %v6940, %v7268
        %v7661 = vadd.f32 %v6942, %v7271
        %v7662 = vadd.f32 %v6943, %v7273
        %v7663 = vadd.f32 %v6944, %v7275
        %v7664 = vadd.f32 %v6946, %v7278
        %v7665 = vadd.f32 %v6947, %v7280
        %v7666 = vadd.f32 %v6948, %v7282
        %v7667 = vadd.f32 %v6950, %v7285
        %v7668 = vadd.f32 %v6951, %v7287
        %v7669 = vadd.f32 %v6952, %v7289
        %v7670 = vadd.f32 %v6954, %v7292
        %v7671 = vadd.f32 %v6955, %v7294
        %v7672 = vadd.f32 %v6956, %v7296
        %v7673 = vadd.f32 %v6958, %v7299
        %v7674 = vadd.f32 %v6959, %v7301
        %v7675 = vadd.f32 %v6960, %v7303
        %v7676 = vadd.f32 %v6962, %v7306
        %v7677 = vadd.f32 %v6963, %v7308
        %v7678 = vadd.f32 %v6964, %v7310
        %v7679 = vadd.f32 %v6966, %v7313
        %v7680 = vadd.f32 %v6967, %v7315
        %v7681 = vadd.f32 %v6968, %v7317
        %v7682 = vadd.f32 %v6970, %v7320
        %v7683 = vadd.f32 %v6971, %v7322
        %v7684 = vadd.f32 %v6972, %v7324
        %v7685 = vadd.f32 %v6974, %v7327
        %v7686 = vadd.f32 %v6975, %v7329
        %v7687 = vadd.f32 %v6976, %v7331
        %v7688 = vadd.f32 %v6978, %v7334
        %v7689 = vadd.f32 %v6979, %v7336
        %v7690 = vadd.f32 %v6980, %v7338
        %v7691 = vadd.f32 %v6982, %v7341
        %v7692 = vadd.f32 %v6983, %v7343
        %v7693 = vadd.f32 %v6984, %v7345
        %v7694 = vadd.f32 %v6986, %v7348
        %v7695 = vadd.f32 %v6987, %v7350
        %v7696 = vadd.f32 %v6988, %v7352
        %v7697 = vadd.f32 %v6990, %v7355
        %v7698 = vadd.f32 %v6991, %v7357
        %v7699 = vadd.f32 %v6992, %v7359
        %v7700 = vadd.f32 %v6994, %v7362
        %v7701 = vadd.f32 %v6995, %v7364
        %v7702 = vadd.f32 %v6996, %v7366
        %v7703 = vadd.f32 %v6998, %v7369
        %v7704 = vadd.f32 %v6999, %v7371
        %v7705 = vadd.f32 %v7000, %v7373
        %v7706 = vadd.f32 %v7002, %v7376
        %v7707 = vadd.f32 %v7003, %v7378
        %v7708 = vadd.f32 %v7004, %v7380
        %v7709 = vadd.f32 %v7006, %v7383
        %v7710 = vadd.f32 %v7007, %v7385
        %v7711 = vadd.f32 %v7008, %v7387
        %v7712 = vadd.f32 %v7010, %v7390
        %v7713 = vadd.f32 %v7011, %v7392
        %v7714 = vadd.f32 %v7012, %v7394
        %v7715 = vadd.f32 %v7014, %v7397
        %v7716 = vadd.f32 %v7015, %v7399
        %v7717 = vadd.f32 %v7016, %v7401
        %v7718 = vadd.f32 %v7018, %v7404
        %v7719 = vadd.f32 %v7019, %v7406
        %v7720 = vadd.f32 %v7020, %v7408
        %v7721 = vadd.f32 %v7022, %v7411
        %v7722 = vadd.f32 %v7023, %v7413
        %v7723 = vadd.f32 %v7024, %v7415
        %v7724 = vadd.f32 %v7026, %v7418
        %v7725 = vadd.f32 %v7027, %v7420
        %v7726 = vadd.f32 %v7028, %v7422
        %v7727 = vadd.f32 %v7030, %v7425
        %v7728 = vadd.f32 %v7031, %v7427
        %v7729 = vadd.f32 %v7032, %v7429
        %v7730 = vadd.f32 %v7034, %v7432
        %v7731 = vadd.f32 %v7035, %v7434
        %v7732 = vadd.f32 %v7036, %v7436
        %v7733 = vadd.f32 %v7038, %v7439
        %v7734 = vadd.f32 %v7039, %v7441
        %v7735 = vadd.f32 %v7040, %v7443
        %v7736 = vadd.f32 %v7042, %v7446
        %v7737 = vadd.f32 %v7043, %v7448
        %v7738 = vadd.f32 %v7044, %v7450
        %v7739 = vadd.f32 %v7046, %v7453
        %v7740 = vadd.f32 %v7047, %v7455
        %v7741 = vadd.f32 %v7048, %v7457
        %v7742 = vadd.f32 %v7050, %v7460
        %v7743 = vadd.f32 %v7051, %v7462
        %v7744 = vadd.f32 %v7052, %v7464
        %v7745 = vadd.f32 %v7054, %v7467
        %v7746 = vadd.f32 %v7055, %v7469
        %v7747 = vadd.f32 %v7056, %v7471
        %v7748 = vadd.f32 %v7058, %v7474
        %v7749 = vadd.f32 %v7059, %v7476
        %v7750 = vadd.f32 %v7060, %v7478
        %v7751 = vadd.f32 %v7062, %v7481
        %v7752 = vadd.f32 %v7063, %v7483
        %v7753 = vadd.f32 %v7064, %v7485
        %v7754 = vadd.f32 %v7066, %v7488
        %v7755 = vadd.f32 %v7067, %v7490
        %v7756 = vadd.f32 %v7068, %v7492
        %v7757 = vadd.f32 %v7070, %v7495
        %v7758 = vadd.f32 %v7071, %v7497
        %v7759 = vadd.f32 %v7072, %v7499
        %v7760 = vadd.f32 %v7074, %v7502
        %v7761 = vadd.f32 %v7075, %v7504
        %v7762 = vadd.f32 %v7076, %v7506
        %v7763 = vadd.f32 %v7078, %v7509
        %v7764 = vadd.f32 %v7079, %v7511
        %v7765 = vadd.f32 %v7080, %v7513
        %v7766 = vadd.f32 %v7082, %v7516
        %v7767 = vadd.f32 %v7083, %v7518
        %v7768 = vadd.f32 %v7084, %v7520
        %v7769 = vadd.f32 %v7086, %v7523
        %v7770 = vadd.f32 %v7087, %v7525
        %v7771 = vadd.f32 %v7088, %v7527
        %v7772 = vadd.f32 %v7090, %v7530
        %v7773 = vadd.f32 %v7091, %v7532
        %v7774 = vadd.f32 %v7092, %v7534
        %v7775 = vadd.f32 %v7655, %v6174
        %v7776 = vadd.f32 %v7656, %v6175
        %v7777 = vadd.f32 %v7657, %v6176
        %v7778 = vadd.f32 %v7658, %v6178
        %v7779 = vadd.f32 %v7659, %v6179
        %v7780 = vadd.f32 %v7660, %v6180
        %v7781 = vadd.f32 %v7661, %v6182
        %v7782 = vadd.f32 %v7662, %v6183
        %v7783 = vadd.f32 %v7663, %v6184
        %v7784 = vadd.f32 %v7664, %v6186
        %v7785 = vadd.f32 %v7665, %v6187
        %v7786 = vadd.f32 %v7666, %v6188
        %v7787 = vadd.f32 %v7667, %v6190
        %v7788 = vadd.f32 %v7668, %v6191
        %v7789 = vadd.f32 %v7669, %v6192
        %v7790 = vadd.f32 %v7670, %v6194
        %v7791 = vadd.f32 %v7671, %v6195
        %v7792 = vadd.f32 %v7672, %v6196
        %v7793 = vadd.f32 %v7673, %v6198
        %v7794 = vadd.f32 %v7674, %v6199
        %v7795 = vadd.f32 %v7675, %v6200
        %v7796 = vadd.f32 %v7676, %v6202
        %v7797 = vadd.f32 %v7677, %v6203
        %v7798 = vadd.f32 %v7678, %v6204
        %v7799 = vadd.f32 %v7679, %v6206
        %v7800 = vadd.f32 %v7680, %v6207
        %v7801 = vadd.f32 %v7681, %v6208
        %v7802 = vadd.f32 %v7682, %v6210
        %v7803 = vadd.f32 %v7683, %v6211
        %v7804 = vadd.f32 %v7684, %v6212
        %v7805 = vadd.f32 %v7685, %v6214
        %v7806 = vadd.f32 %v7686, %v6215
        %v7807 = vadd.f32 %v7687, %v6216
        %v7808 = vadd.f32 %v7688, %v6218
        %v7809 = vadd.f32 %v7689, %v6219
        %v7810 = vadd.f32 %v7690, %v6220
        %v7811 = vadd.f32 %v7691, %v6222
        %v7812 = vadd.f32 %v7692, %v6223
        %v7813 = vadd.f32 %v7693, %v6224
        %v7814 = vadd.f32 %v7694, %v6226
        %v7815 = vadd.f32 %v7695, %v6227
        %v7816 = vadd.f32 %v7696, %v6228
        %v7817 = vadd.f32 %v7697, %v6230
        %v7818 = vadd.f32 %v7698, %v6231
        %v7819 = vadd.f32 %v7699, %v6232
        %v7820 = vadd.f32 %v7700, %v6234
        %v7821 = vadd.f32 %v7701, %v6235
        %v7822 = vadd.f32 %v7702, %v6236
        %v7823 = vadd.f32 %v7703, %v6238
        %v7824 = vadd.f32 %v7704, %v6239
        %v7825 = vadd.f32 %v7705, %v6240
        %v7826 = vadd.f32 %v7706, %v6242
        %v7827 = vadd.f32 %v7707, %v6243
        %v7828 = vadd.f32 %v7708, %v6244
        %v7829 = vadd.f32 %v7709, %v6246
        %v7830 = vadd.f32 %v7710, %v6247
        %v7831 = vadd.f32 %v7711, %v6248
        %v7832 = vadd.f32 %v7712, %v6250
        %v7833 = vadd.f32 %v7713, %v6251
        %v7834 = vadd.f32 %v7714, %v6252
        %v7835 = vadd.f32 %v7715, %v6254
        %v7836 = vadd.f32 %v7716, %v6255
        %v7837 = vadd.f32 %v7717, %v6256
        %v7838 = vadd.f32 %v7718, %v6258
        %v7839 = vadd.f32 %v7719, %v6259
        %v7840 = vadd.f32 %v7720, %v6260
        %v7841 = vadd.f32 %v7721, %v6262
        %v7842 = vadd.f32 %v7722, %v6263
        %v7843 = vadd.f32 %v7723, %v6264
        %v7844 = vadd.f32 %v7724, %v6266
        %v7845 = vadd.f32 %v7725, %v6267
        %v7846 = vadd.f32 %v7726, %v6268
        %v7847 = vadd.f32 %v7727, %v6270
        %v7848 = vadd.f32 %v7728, %v6271
        %v7849 = vadd.f32 %v7729, %v6272
        %v7850 = vadd.f32 %v7730, %v6274
        %v7851 = vadd.f32 %v7731, %v6275
        %v7852 = vadd.f32 %v7732, %v6276
        %v7853 = vadd.f32 %v7733, %v6278
        %v7854 = vadd.f32 %v7734, %v6279
        %v7855 = vadd.f32 %v7735, %v6280
        %v7856 = vadd.f32 %v7736, %v6282
        %v7857 = vadd.f32 %v7737, %v6283
        %v7858 = vadd.f32 %v7738, %v6284
        %v7859 = vadd.f32 %v7739, %v6286
        %v7860 = vadd.f32 %v7740, %v6287
        %v7861 = vadd.f32 %v7741, %v6288
        %v7862 = vadd.f32 %v7742, %v6290
        %v7863 = vadd.f32 %v7743, %v6291
        %v7864 = vadd.f32 %v7744, %v6292
        %v7865 = vadd.f32 %v7745, %v6294
        %v7866 = vadd.f32 %v7746, %v6295
        %v7867 = vadd.f32 %v7747, %v6296
        %v7868 = vadd.f32 %v7748, %v6298
        %v7869 = vadd.f32 %v7749, %v6299
        %v7870 = vadd.f32 %v7750, %v6300
        %v7871 = vadd.f32 %v7751, %v6302
        %v7872 = vadd.f32 %v7752, %v6303
        %v7873 = vadd.f32 %v7753, %v6304
        %v7874 = vadd.f32 %v7754, %v6306
        %v7875 = vadd.f32 %v7755, %v6307
        %v7876 = vadd.f32 %v7756, %v6308
        %v7877 = vadd.f32 %v7757, %v6310
        %v7878 = vadd.f32 %v7758, %v6311
        %v7879 = vadd.f32 %v7759, %v6312
        %v7880 = vadd.f32 %v7760, %v6314
        %v7881 = vadd.f32 %v7761, %v6315
        %v7882 = vadd.f32 %v7762, %v6316
        %v7883 = vadd.f32 %v7763, %v6318
        %v7884 = vadd.f32 %v7764, %v6319
        %v7885 = vadd.f32 %v7765, %v6320
        %v7886 = vadd.f32 %v7766, %v6322
        %v7887 = vadd.f32 %v7767, %v6323
        %v7888 = vadd.f32 %v7768, %v6324
        %v7889 = vadd.f32 %v7769, %v6326
        %v7890 = vadd.f32 %v7770, %v6327
        %v7891 = vadd.f32 %v7771, %v6328
        %v7892 = vadd.f32 %v7772, %v6330
        %v7893 = vadd.f32 %v7773, %v6331
        %v7894 = vadd.f32 %v7774, %v6332
        %v7895 = vrot.slane %v5413, 2
        %v7896 = vrot.slane %v5414, 2
        %v7897 = vsel %vm6493, %v7895, %v7896
        %v7898 = vrot.slane %v5415, 2
        %v7899 = vsel %vm6493, %v7896, %v7898
        %v7900 = vrot.slane %v5417, 2
        %v7901 = vrot.slane %v5418, 2
        %v7902 = vsel %vm6493, %v7900, %v7901
        %v7903 = vrot.slane %v5419, 2
        %v7904 = vsel %vm6493, %v7901, %v7903
        %v7905 = vrot.slane %v5421, 2
        %v7906 = vrot.slane %v5422, 2
        %v7907 = vsel %vm6493, %v7905, %v7906
        %v7908 = vrot.slane %v5423, 2
        %v7909 = vsel %vm6493, %v7906, %v7908
        %v7910 = vrot.slane %v5425, 2
        %v7911 = vrot.slane %v5426, 2
        %v7912 = vsel %vm6493, %v7910, %v7911
        %v7913 = vrot.slane %v5427, 2
        %v7914 = vsel %vm6493, %v7911, %v7913
        %v7915 = vrot.slane %v5429, 2
        %v7916 = vrot.slane %v5430, 2
        %v7917 = vsel %vm6493, %v7915, %v7916
        %v7918 = vrot.slane %v5431, 2
        %v7919 = vsel %vm6493, %v7916, %v7918
        %v7920 = vrot.slane %v5433, 2
        %v7921 = vrot.slane %v5434, 2
        %v7922 = vsel %vm6493, %v7920, %v7921
        %v7923 = vrot.slane %v5435, 2
        %v7924 = vsel %vm6493, %v7921, %v7923
        %v7925 = vrot.slane %v5437, 2
        %v7926 = vrot.slane %v5438, 2
        %v7927 = vsel %vm6493, %v7925, %v7926
        %v7928 = vrot.slane %v5439, 2
        %v7929 = vsel %vm6493, %v7926, %v7928
        %v7930 = vrot.slane %v5441, 2
        %v7931 = vrot.slane %v5442, 2
        %v7932 = vsel %vm6493, %v7930, %v7931
        %v7933 = vrot.slane %v5443, 2
        %v7934 = vsel %vm6493, %v7931, %v7933
        %v7935 = vrot.slane %v5445, 2
        %v7936 = vrot.slane %v5446, 2
        %v7937 = vsel %vm6493, %v7935, %v7936
        %v7938 = vrot.slane %v5447, 2
        %v7939 = vsel %vm6493, %v7936, %v7938
        %v7940 = vrot.slane %v5449, 2
        %v7941 = vrot.slane %v5450, 2
        %v7942 = vsel %vm6493, %v7940, %v7941
        %v7943 = vrot.slane %v5451, 2
        %v7944 = vsel %vm6493, %v7941, %v7943
        %v7945 = vrot.slane %v5453, 2
        %v7946 = vrot.slane %v5454, 2
        %v7947 = vsel %vm6493, %v7945, %v7946
        %v7948 = vrot.slane %v5455, 2
        %v7949 = vsel %vm6493, %v7946, %v7948
        %v7950 = vrot.slane %v5457, 2
        %v7951 = vrot.slane %v5458, 2
        %v7952 = vsel %vm6493, %v7950, %v7951
        %v7953 = vrot.slane %v5459, 2
        %v7954 = vsel %vm6493, %v7951, %v7953
        %v7955 = vrot.slane %v5461, 2
        %v7956 = vrot.slane %v5462, 2
        %v7957 = vsel %vm6493, %v7955, %v7956
        %v7958 = vrot.slane %v5463, 2
        %v7959 = vsel %vm6493, %v7956, %v7958
        %v7960 = vrot.slane %v5465, 2
        %v7961 = vrot.slane %v5466, 2
        %v7962 = vsel %vm6493, %v7960, %v7961
        %v7963 = vrot.slane %v5467, 2
        %v7964 = vsel %vm6493, %v7961, %v7963
        %v7965 = vrot.slane %v5469, 2
        %v7966 = vrot.slane %v5470, 2
        %v7967 = vsel %vm6493, %v7965, %v7966
        %v7968 = vrot.slane %v5471, 2
        %v7969 = vsel %vm6493, %v7966, %v7968
        %v7970 = vrot.slane %v5473, 2
        %v7971 = vrot.slane %v5474, 2
        %v7972 = vsel %vm6493, %v7970, %v7971
        %v7973 = vrot.slane %v5475, 2
        %v7974 = vsel %vm6493, %v7971, %v7973
        %v7975 = vrot.slane %v5477, 2
        %v7976 = vrot.slane %v5478, 2
        %v7977 = vsel %vm6493, %v7975, %v7976
        %v7978 = vrot.slane %v5479, 2
        %v7979 = vsel %vm6493, %v7976, %v7978
        %v7980 = vrot.slane %v5481, 2
        %v7981 = vrot.slane %v5482, 2
        %v7982 = vsel %vm6493, %v7980, %v7981
        %v7983 = vrot.slane %v5483, 2
        %v7984 = vsel %vm6493, %v7981, %v7983
        %v7985 = vrot.slane %v5485, 2
        %v7986 = vrot.slane %v5486, 2
        %v7987 = vsel %vm6493, %v7985, %v7986
        %v7988 = vrot.slane %v5487, 2
        %v7989 = vsel %vm6493, %v7986, %v7988
        %v7990 = vrot.slane %v5489, 2
        %v7991 = vrot.slane %v5490, 2
        %v7992 = vsel %vm6493, %v7990, %v7991
        %v7993 = vrot.slane %v5491, 2
        %v7994 = vsel %vm6493, %v7991, %v7993
        %v7995 = vrot.slane %v5493, 2
        %v7996 = vrot.slane %v5494, 2
        %v7997 = vsel %vm6493, %v7995, %v7996
        %v7998 = vrot.slane %v5495, 2
        %v7999 = vsel %vm6493, %v7996, %v7998
        %v8000 = vrot.slane %v5497, 2
        %v8001 = vrot.slane %v5498, 2
        %v8002 = vsel %vm6493, %v8000, %v8001
        %v8003 = vrot.slane %v5499, 2
        %v8004 = vsel %vm6493, %v8001, %v8003
        %v8005 = vrot.slane %v5501, 2
        %v8006 = vrot.slane %v5502, 2
        %v8007 = vsel %vm6493, %v8005, %v8006
        %v8008 = vrot.slane %v5503, 2
        %v8009 = vsel %vm6493, %v8006, %v8008
        %v8010 = vrot.slane %v5505, 2
        %v8011 = vrot.slane %v5506, 2
        %v8012 = vsel %vm6493, %v8010, %v8011
        %v8013 = vrot.slane %v5507, 2
        %v8014 = vsel %vm6493, %v8011, %v8013
        %v8015 = vrot.slane %v5509, 2
        %v8016 = vrot.slane %v5510, 2
        %v8017 = vsel %vm6493, %v8015, %v8016
        %v8018 = vrot.slane %v5511, 2
        %v8019 = vsel %vm6493, %v8016, %v8018
        %v8020 = vrot.slane %v5513, 2
        %v8021 = vrot.slane %v5514, 2
        %v8022 = vsel %vm6493, %v8020, %v8021
        %v8023 = vrot.slane %v5515, 2
        %v8024 = vsel %vm6493, %v8021, %v8023
        %v8025 = vrot.slane %v5517, 2
        %v8026 = vrot.slane %v5518, 2
        %v8027 = vsel %vm6493, %v8025, %v8026
        %v8028 = vrot.slane %v5519, 2
        %v8029 = vsel %vm6493, %v8026, %v8028
        %v8030 = vrot.slane %v5521, 2
        %v8031 = vrot.slane %v5522, 2
        %v8032 = vsel %vm6493, %v8030, %v8031
        %v8033 = vrot.slane %v5523, 2
        %v8034 = vsel %vm6493, %v8031, %v8033
        %v8035 = vrot.slane %v5525, 2
        %v8036 = vrot.slane %v5526, 2
        %v8037 = vsel %vm6493, %v8035, %v8036
        %v8038 = vrot.slane %v5527, 2
        %v8039 = vsel %vm6493, %v8036, %v8038
        %v8040 = vrot.slane %v5529, 2
        %v8041 = vrot.slane %v5530, 2
        %v8042 = vsel %vm6493, %v8040, %v8041
        %v8043 = vrot.slane %v5531, 2
        %v8044 = vsel %vm6493, %v8041, %v8043
        %v8045 = vrot.slane %v5533, 2
        %v8046 = vrot.slane %v5534, 2
        %v8047 = vsel %vm6493, %v8045, %v8046
        %v8048 = vrot.slane %v5535, 2
        %v8049 = vsel %vm6493, %v8046, %v8048
        %v8050 = vrot.slane %v5537, 2
        %v8051 = vrot.slane %v5538, 2
        %v8052 = vsel %vm6493, %v8050, %v8051
        %v8053 = vrot.slane %v5539, 2
        %v8054 = vsel %vm6493, %v8051, %v8053
        %v8055 = vrot.slane %v5541, 2
        %v8056 = vrot.slane %v5542, 2
        %v8057 = vsel %vm6493, %v8055, %v8056
        %v8058 = vrot.slane %v5543, 2
        %v8059 = vsel %vm6493, %v8056, %v8058
        %v8060 = vrot.slane %v5545, 2
        %v8061 = vrot.slane %v5546, 2
        %v8062 = vsel %vm6493, %v8060, %v8061
        %v8063 = vrot.slane %v5547, 2
        %v8064 = vsel %vm6493, %v8061, %v8063
        %v8065 = vrot.slane %v5549, 2
        %v8066 = vrot.slane %v5550, 2
        %v8067 = vsel %vm6493, %v8065, %v8066
        %v8068 = vrot.slane %v5551, 2
        %v8069 = vsel %vm6493, %v8066, %v8068
        %v8070 = vrot.slane %v5553, 2
        %v8071 = vrot.slane %v5554, 2
        %v8072 = vsel %vm6493, %v8070, %v8071
        %v8073 = vrot.slane %v5555, 2
        %v8074 = vsel %vm6493, %v8071, %v8073
        %v8075 = vrot.slane %v5557, 2
        %v8076 = vrot.slane %v5558, 2
        %v8077 = vsel %vm6493, %v8075, %v8076
        %v8078 = vrot.slane %v5559, 2
        %v8079 = vsel %vm6493, %v8076, %v8078
        %v8080 = vrot.slane %v5561, 2
        %v8081 = vrot.slane %v5562, 2
        %v8082 = vsel %vm6493, %v8080, %v8081
        %v8083 = vrot.slane %v5563, 2
        %v8084 = vsel %vm6493, %v8081, %v8083
        %v8085 = vrot.slane %v5565, 2
        %v8086 = vrot.slane %v5566, 2
        %v8087 = vsel %vm6493, %v8085, %v8086
        %v8088 = vrot.slane %v5567, 2
        %v8089 = vsel %vm6493, %v8086, %v8088
        %v8090 = vrot.slane %v5569, 2
        %v8091 = vrot.slane %v5570, 2
        %v8092 = vsel %vm6493, %v8090, %v8091
        %v8093 = vrot.slane %v5571, 2
        %v8094 = vsel %vm6493, %v8091, %v8093
        %v8215 = vadd.f32 %v7775, %v7897
        %v8216 = vadd.f32 %v7776, %v7899
        %v8217 = vadd.f32 %v7777, %v7898
        %v8218 = vadd.f32 %v7778, %v7902
        %v8219 = vadd.f32 %v7779, %v7904
        %v8220 = vadd.f32 %v7780, %v7903
        %v8221 = vadd.f32 %v7781, %v7907
        %v8222 = vadd.f32 %v7782, %v7909
        %v8223 = vadd.f32 %v7783, %v7908
        %v8224 = vadd.f32 %v7784, %v7912
        %v8225 = vadd.f32 %v7785, %v7914
        %v8226 = vadd.f32 %v7786, %v7913
        %v8227 = vadd.f32 %v7787, %v7917
        %v8228 = vadd.f32 %v7788, %v7919
        %v8229 = vadd.f32 %v7789, %v7918
        %v8230 = vadd.f32 %v7790, %v7922
        %v8231 = vadd.f32 %v7791, %v7924
        %v8232 = vadd.f32 %v7792, %v7923
        %v8233 = vadd.f32 %v7793, %v7927
        %v8234 = vadd.f32 %v7794, %v7929
        %v8235 = vadd.f32 %v7795, %v7928
        %v8236 = vadd.f32 %v7796, %v7932
        %v8237 = vadd.f32 %v7797, %v7934
        %v8238 = vadd.f32 %v7798, %v7933
        %v8239 = vadd.f32 %v7799, %v7937
        %v8240 = vadd.f32 %v7800, %v7939
        %v8241 = vadd.f32 %v7801, %v7938
        %v8242 = vadd.f32 %v7802, %v7942
        %v8243 = vadd.f32 %v7803, %v7944
        %v8244 = vadd.f32 %v7804, %v7943
        %v8245 = vadd.f32 %v7805, %v7947
        %v8246 = vadd.f32 %v7806, %v7949
        %v8247 = vadd.f32 %v7807, %v7948
        %v8248 = vadd.f32 %v7808, %v7952
        %v8249 = vadd.f32 %v7809, %v7954
        %v8250 = vadd.f32 %v7810, %v7953
        %v8251 = vadd.f32 %v7811, %v7957
        %v8252 = vadd.f32 %v7812, %v7959
        %v8253 = vadd.f32 %v7813, %v7958
        %v8254 = vadd.f32 %v7814, %v7962
        %v8255 = vadd.f32 %v7815, %v7964
        %v8256 = vadd.f32 %v7816, %v7963
        %v8257 = vadd.f32 %v7817, %v7967
        %v8258 = vadd.f32 %v7818, %v7969
        %v8259 = vadd.f32 %v7819, %v7968
        %v8260 = vadd.f32 %v7820, %v7972
        %v8261 = vadd.f32 %v7821, %v7974
        %v8262 = vadd.f32 %v7822, %v7973
        %v8263 = vadd.f32 %v7823, %v7977
        %v8264 = vadd.f32 %v7824, %v7979
        %v8265 = vadd.f32 %v7825, %v7978
        %v8266 = vadd.f32 %v7826, %v7982
        %v8267 = vadd.f32 %v7827, %v7984
        %v8268 = vadd.f32 %v7828, %v7983
        %v8269 = vadd.f32 %v7829, %v7987
        %v8270 = vadd.f32 %v7830, %v7989
        %v8271 = vadd.f32 %v7831, %v7988
        %v8272 = vadd.f32 %v7832, %v7992
        %v8273 = vadd.f32 %v7833, %v7994
        %v8274 = vadd.f32 %v7834, %v7993
        %v8275 = vadd.f32 %v7835, %v7997
        %v8276 = vadd.f32 %v7836, %v7999
        %v8277 = vadd.f32 %v7837, %v7998
        %v8278 = vadd.f32 %v7838, %v8002
        %v8279 = vadd.f32 %v7839, %v8004
        %v8280 = vadd.f32 %v7840, %v8003
        %v8281 = vadd.f32 %v7841, %v8007
        %v8282 = vadd.f32 %v7842, %v8009
        %v8283 = vadd.f32 %v7843, %v8008
        %v8284 = vadd.f32 %v7844, %v8012
        %v8285 = vadd.f32 %v7845, %v8014
        %v8286 = vadd.f32 %v7846, %v8013
        %v8287 = vadd.f32 %v7847, %v8017
        %v8288 = vadd.f32 %v7848, %v8019
        %v8289 = vadd.f32 %v7849, %v8018
        %v8290 = vadd.f32 %v7850, %v8022
        %v8291 = vadd.f32 %v7851, %v8024
        %v8292 = vadd.f32 %v7852, %v8023
        %v8293 = vadd.f32 %v7853, %v8027
        %v8294 = vadd.f32 %v7854, %v8029
        %v8295 = vadd.f32 %v7855, %v8028
        %v8296 = vadd.f32 %v7856, %v8032
        %v8297 = vadd.f32 %v7857, %v8034
        %v8298 = vadd.f32 %v7858, %v8033
        %v8299 = vadd.f32 %v7859, %v8037
        %v8300 = vadd.f32 %v7860, %v8039
        %v8301 = vadd.f32 %v7861, %v8038
        %v8302 = vadd.f32 %v7862, %v8042
        %v8303 = vadd.f32 %v7863, %v8044
        %v8304 = vadd.f32 %v7864, %v8043
        %v8305 = vadd.f32 %v7865, %v8047
        %v8306 = vadd.f32 %v7866, %v8049
        %v8307 = vadd.f32 %v7867, %v8048
        %v8308 = vadd.f32 %v7868, %v8052
        %v8309 = vadd.f32 %v7869, %v8054
        %v8310 = vadd.f32 %v7870, %v8053
        %v8311 = vadd.f32 %v7871, %v8057
        %v8312 = vadd.f32 %v7872, %v8059
        %v8313 = vadd.f32 %v7873, %v8058
        %v8314 = vadd.f32 %v7874, %v8062
        %v8315 = vadd.f32 %v7875, %v8064
        %v8316 = vadd.f32 %v7876, %v8063
        %v8317 = vadd.f32 %v7877, %v8067
        %v8318 = vadd.f32 %v7878, %v8069
        %v8319 = vadd.f32 %v7879, %v8068
        %v8320 = vadd.f32 %v7880, %v8072
        %v8321 = vadd.f32 %v7881, %v8074
        %v8322 = vadd.f32 %v7882, %v8073
        %v8323 = vadd.f32 %v7883, %v8077
        %v8324 = vadd.f32 %v7884, %v8079
        %v8325 = vadd.f32 %v7885, %v8078
        %v8326 = vadd.f32 %v7886, %v8082
        %v8327 = vadd.f32 %v7887, %v8084
        %v8328 = vadd.f32 %v7888, %v8083
        %v8329 = vadd.f32 %v7889, %v8087
        %v8330 = vadd.f32 %v7890, %v8089
        %v8331 = vadd.f32 %v7891, %v8088
        %v8332 = vadd.f32 %v7892, %v8092
        %v8333 = vadd.f32 %v7893, %v8094
        %v8334 = vadd.f32 %v7894, %v8093
        %v8335 = vmul.f32 %v8215, %v8239
        %v8336 = vmul.f32 %v8216, %v8240
        %v8337 = vmul.f32 %v8217, %v8241
        %v8338 = vmul.f32 %v8218, %v8242
        %v8339 = vmul.f32 %v8219, %v8243
        %v8340 = vmul.f32 %v8220, %v8244
        %v8341 = vmul.f32 %v8221, %v8245
        %v8342 = vmul.f32 %v8222, %v8246
        %v8343 = vmul.f32 %v8223, %v8247
        %v8344 = vmul.f32 %v8224, %v8248
        %v8345 = vmul.f32 %v8225, %v8249
        %v8346 = vmul.f32 %v8226, %v8250
        %v8347 = vmul.f32 %v8227, %v8251
        %v8348 = vmul.f32 %v8228, %v8252
        %v8349 = vmul.f32 %v8229, %v8253
        %v8350 = vmul.f32 %v8230, %v8254
        %v8351 = vmul.f32 %v8231, %v8255
        %v8352 = vmul.f32 %v8232, %v8256
        %v8353 = vmul.f32 %v8233, %v8257
        %v8354 = vmul.f32 %v8234, %v8258
        %v8355 = vmul.f32 %v8235, %v8259
        %v8356 = vmul.f32 %v8236, %v8260
        %v8357 = vmul.f32 %v8237, %v8261
        %v8358 = vmul.f32 %v8238, %v8262
        %v8359 = vmul.f32 %v8215, %v8215
        %v8360 = vmul.f32 %v8216, %v8216
        %v8361 = vmul.f32 %v8217, %v8217
        %v8362 = vmul.f32 %v8218, %v8218
        %v8363 = vmul.f32 %v8219, %v8219
        %v8364 = vmul.f32 %v8220, %v8220
        %v8365 = vmul.f32 %v8221, %v8221
        %v8366 = vmul.f32 %v8222, %v8222
        %v8367 = vmul.f32 %v8223, %v8223
        %v8368 = vmul.f32 %v8224, %v8224
        %v8369 = vmul.f32 %v8225, %v8225
        %v8370 = vmul.f32 %v8226, %v8226
        %v8371 = vmul.f32 %v8227, %v8227
        %v8372 = vmul.f32 %v8228, %v8228
        %v8373 = vmul.f32 %v8229, %v8229
        %v8374 = vmul.f32 %v8230, %v8230
        %v8375 = vmul.f32 %v8231, %v8231
        %v8376 = vmul.f32 %v8232, %v8232
        %v8377 = vmul.f32 %v8233, %v8233
        %v8378 = vmul.f32 %v8234, %v8234
        %v8379 = vmul.f32 %v8235, %v8235
        %v8380 = vmul.f32 %v8236, %v8236
        %v8381 = vmul.f32 %v8237, %v8237
        %v8382 = vmul.f32 %v8238, %v8238
        %v8383 = vmul.f32 %v8239, %v8239
        %v8384 = vmul.f32 %v8240, %v8240
        %v8385 = vmul.f32 %v8241, %v8241
        %v8386 = vmul.f32 %v8242, %v8242
        %v8387 = vmul.f32 %v8243, %v8243
        %v8388 = vmul.f32 %v8244, %v8244
        %v8389 = vmul.f32 %v8245, %v8245
        %v8390 = vmul.f32 %v8246, %v8246
        %v8391 = vmul.f32 %v8247, %v8247
        %v8392 = vmul.f32 %v8248, %v8248
        %v8393 = vmul.f32 %v8249, %v8249
        %v8394 = vmul.f32 %v8250, %v8250
        %v8395 = vmul.f32 %v8251, %v8251
        %v8396 = vmul.f32 %v8252, %v8252
        %v8397 = vmul.f32 %v8253, %v8253
        %v8398 = vmul.f32 %v8254, %v8254
        %v8399 = vmul.f32 %v8255, %v8255
        %v8400 = vmul.f32 %v8256, %v8256
        %v8401 = vmul.f32 %v8257, %v8257
        %v8402 = vmul.f32 %v8258, %v8258
        %v8403 = vmul.f32 %v8259, %v8259
        %v8404 = vmul.f32 %v8260, %v8260
        %v8405 = vmul.f32 %v8261, %v8261
        %v8406 = vmul.f32 %v8262, %v8262
        %v8407 = vsub.f32 %v8263, %v8359
        %v8408 = vsub.f32 %v8264, %v8360
        %v8409 = vsub.f32 %v8265, %v8361
        %v8410 = vsub.f32 %v8266, %v8362
        %v8411 = vsub.f32 %v8267, %v8363
        %v8412 = vsub.f32 %v8268, %v8364
        %v8413 = vsub.f32 %v8269, %v8365
        %v8414 = vsub.f32 %v8270, %v8366
        %v8415 = vsub.f32 %v8271, %v8367
        %v8416 = vsub.f32 %v8272, %v8368
        %v8417 = vsub.f32 %v8273, %v8369
        %v8418 = vsub.f32 %v8274, %v8370
        %v8419 = vsub.f32 %v8275, %v8371
        %v8420 = vsub.f32 %v8276, %v8372
        %v8421 = vsub.f32 %v8277, %v8373
        %v8422 = vsub.f32 %v8278, %v8374
        %v8423 = vsub.f32 %v8279, %v8375
        %v8424 = vsub.f32 %v8280, %v8376
        %v8425 = vsub.f32 %v8281, %v8377
        %v8426 = vsub.f32 %v8282, %v8378
        %v8427 = vsub.f32 %v8283, %v8379
        %v8428 = vsub.f32 %v8284, %v8380
        %v8429 = vsub.f32 %v8285, %v8381
        %v8430 = vsub.f32 %v8286, %v8382
        %v8431 = vsub.f32 %v8287, %v8383
        %v8432 = vsub.f32 %v8288, %v8384
        %v8433 = vsub.f32 %v8289, %v8385
        %v8434 = vsub.f32 %v8290, %v8386
        %v8435 = vsub.f32 %v8291, %v8387
        %v8436 = vsub.f32 %v8292, %v8388
        %v8437 = vsub.f32 %v8293, %v8389
        %v8438 = vsub.f32 %v8294, %v8390
        %v8439 = vsub.f32 %v8295, %v8391
        %v8440 = vsub.f32 %v8296, %v8392
        %v8441 = vsub.f32 %v8297, %v8393
        %v8442 = vsub.f32 %v8298, %v8394
        %v8443 = vsub.f32 %v8299, %v8395
        %v8444 = vsub.f32 %v8300, %v8396
        %v8445 = vsub.f32 %v8301, %v8397
        %v8446 = vsub.f32 %v8302, %v8398
        %v8447 = vsub.f32 %v8303, %v8399
        %v8448 = vsub.f32 %v8304, %v8400
        %v8449 = vsub.f32 %v8305, %v8401
        %v8450 = vsub.f32 %v8306, %v8402
        %v8451 = vsub.f32 %v8307, %v8403
        %v8452 = vsub.f32 %v8308, %v8404
        %v8453 = vsub.f32 %v8309, %v8405
        %v8454 = vsub.f32 %v8310, %v8406
        %v8455 = vsub.f32 %v8311, %v8335
        %v8456 = vsub.f32 %v8312, %v8336
        %v8457 = vsub.f32 %v8313, %v8337
        %v8458 = vsub.f32 %v8314, %v8338
        %v8459 = vsub.f32 %v8315, %v8339
        %v8460 = vsub.f32 %v8316, %v8340
        %v8461 = vsub.f32 %v8317, %v8341
        %v8462 = vsub.f32 %v8318, %v8342
        %v8463 = vsub.f32 %v8319, %v8343
        %v8464 = vsub.f32 %v8320, %v8344
        %v8465 = vsub.f32 %v8321, %v8345
        %v8466 = vsub.f32 %v8322, %v8346
        %v8467 = vsub.f32 %v8323, %v8347
        %v8468 = vsub.f32 %v8324, %v8348
        %v8469 = vsub.f32 %v8325, %v8349
        %v8470 = vsub.f32 %v8326, %v8350
        %v8471 = vsub.f32 %v8327, %v8351
        %v8472 = vsub.f32 %v8328, %v8352
        %v8473 = vsub.f32 %v8329, %v8353
        %v8474 = vsub.f32 %v8330, %v8354
        %v8475 = vsub.f32 %v8331, %v8355
        %v8476 = vsub.f32 %v8332, %v8356
        %v8477 = vsub.f32 %v8333, %v8357
        %v8478 = vsub.f32 %v8334, %v8358
        %v8479 = vmul.f32 %v8335, 2.0
        %v8480 = vmul.f32 %v8336, 2.0
        %v8481 = vmul.f32 %v8337, 2.0
        %v8482 = vmul.f32 %v8338, 2.0
        %v8483 = vmul.f32 %v8339, 2.0
        %v8484 = vmul.f32 %v8340, 2.0
        %v8485 = vmul.f32 %v8341, 2.0
        %v8486 = vmul.f32 %v8342, 2.0
        %v8487 = vmul.f32 %v8343, 2.0
        %v8488 = vmul.f32 %v8344, 2.0
        %v8489 = vmul.f32 %v8345, 2.0
        %v8490 = vmul.f32 %v8346, 2.0
        %v8491 = vmul.f32 %v8347, 2.0
        %v8492 = vmul.f32 %v8348, 2.0
        %v8493 = vmul.f32 %v8349, 2.0
        %v8494 = vmul.f32 %v8350, 2.0
        %v8495 = vmul.f32 %v8351, 2.0
        %v8496 = vmul.f32 %v8352, 2.0
        %v8497 = vmul.f32 %v8353, 2.0
        %v8498 = vmul.f32 %v8354, 2.0
        %v8499 = vmul.f32 %v8355, 2.0
        %v8500 = vmul.f32 %v8356, 2.0
        %v8501 = vmul.f32 %v8357, 2.0
        %v8502 = vmul.f32 %v8358, 2.0
        %v8503 = vadd.f32 %v8479, 0.0001
        %v8504 = vadd.f32 %v8480, 0.0001
        %v8505 = vadd.f32 %v8481, 0.0001
        %v8506 = vadd.f32 %v8482, 0.0001
        %v8507 = vadd.f32 %v8483, 0.0001
        %v8508 = vadd.f32 %v8484, 0.0001
        %v8509 = vadd.f32 %v8485, 0.0001
        %v8510 = vadd.f32 %v8486, 0.0001
        %v8511 = vadd.f32 %v8487, 0.0001
        %v8512 = vadd.f32 %v8488, 0.0001
        %v8513 = vadd.f32 %v8489, 0.0001
        %v8514 = vadd.f32 %v8490, 0.0001
        %v8515 = vadd.f32 %v8491, 0.0001
        %v8516 = vadd.f32 %v8492, 0.0001
        %v8517 = vadd.f32 %v8493, 0.0001
        %v8518 = vadd.f32 %v8494, 0.0001
        %v8519 = vadd.f32 %v8495, 0.0001
        %v8520 = vadd.f32 %v8496, 0.0001
        %v8521 = vadd.f32 %v8497, 0.0001
        %v8522 = vadd.f32 %v8498, 0.0001
        %v8523 = vadd.f32 %v8499, 0.0001
        %v8524 = vadd.f32 %v8500, 0.0001
        %v8525 = vadd.f32 %v8501, 0.0001
        %v8526 = vadd.f32 %v8502, 0.0001
        %v8527 = vmul.f32 %v8455, 2.0
        %v8528 = vmul.f32 %v8456, 2.0
        %v8529 = vmul.f32 %v8457, 2.0
        %v8530 = vmul.f32 %v8458, 2.0
        %v8531 = vmul.f32 %v8459, 2.0
        %v8532 = vmul.f32 %v8460, 2.0
        %v8533 = vmul.f32 %v8461, 2.0
        %v8534 = vmul.f32 %v8462, 2.0
        %v8535 = vmul.f32 %v8463, 2.0
        %v8536 = vmul.f32 %v8464, 2.0
        %v8537 = vmul.f32 %v8465, 2.0
        %v8538 = vmul.f32 %v8466, 2.0
        %v8539 = vmul.f32 %v8467, 2.0
        %v8540 = vmul.f32 %v8468, 2.0
        %v8541 = vmul.f32 %v8469, 2.0
        %v8542 = vmul.f32 %v8470, 2.0
        %v8543 = vmul.f32 %v8471, 2.0
        %v8544 = vmul.f32 %v8472, 2.0
        %v8545 = vmul.f32 %v8473, 2.0
        %v8546 = vmul.f32 %v8474, 2.0
        %v8547 = vmul.f32 %v8475, 2.0
        %v8548 = vmul.f32 %v8476, 2.0
        %v8549 = vmul.f32 %v8477, 2.0
        %v8550 = vmul.f32 %v8478, 2.0
        %v8551 = vadd.f32 %v8527, 0.0009
        %v8552 = vadd.f32 %v8528, 0.0009
        %v8553 = vadd.f32 %v8529, 0.0009
        %v8554 = vadd.f32 %v8530, 0.0009
        %v8555 = vadd.f32 %v8531, 0.0009
        %v8556 = vadd.f32 %v8532, 0.0009
        %v8557 = vadd.f32 %v8533, 0.0009
        %v8558 = vadd.f32 %v8534, 0.0009
        %v8559 = vadd.f32 %v8535, 0.0009
        %v8560 = vadd.f32 %v8536, 0.0009
        %v8561 = vadd.f32 %v8537, 0.0009
        %v8562 = vadd.f32 %v8538, 0.0009
        %v8563 = vadd.f32 %v8539, 0.0009
        %v8564 = vadd.f32 %v8540, 0.0009
        %v8565 = vadd.f32 %v8541, 0.0009
        %v8566 = vadd.f32 %v8542, 0.0009
        %v8567 = vadd.f32 %v8543, 0.0009
        %v8568 = vadd.f32 %v8544, 0.0009
        %v8569 = vadd.f32 %v8545, 0.0009
        %v8570 = vadd.f32 %v8546, 0.0009
        %v8571 = vadd.f32 %v8547, 0.0009
        %v8572 = vadd.f32 %v8548, 0.0009
        %v8573 = vadd.f32 %v8549, 0.0009
        %v8574 = vadd.f32 %v8550, 0.0009
        %v8575 = vmul.f32 %v8503, %v8551
        %v8576 = vmul.f32 %v8504, %v8552
        %v8577 = vmul.f32 %v8505, %v8553
        %v8578 = vmul.f32 %v8506, %v8554
        %v8579 = vmul.f32 %v8507, %v8555
        %v8580 = vmul.f32 %v8508, %v8556
        %v8581 = vmul.f32 %v8509, %v8557
        %v8582 = vmul.f32 %v8510, %v8558
        %v8583 = vmul.f32 %v8511, %v8559
        %v8584 = vmul.f32 %v8512, %v8560
        %v8585 = vmul.f32 %v8513, %v8561
        %v8586 = vmul.f32 %v8514, %v8562
        %v8587 = vmul.f32 %v8515, %v8563
        %v8588 = vmul.f32 %v8516, %v8564
        %v8589 = vmul.f32 %v8517, %v8565
        %v8590 = vmul.f32 %v8518, %v8566
        %v8591 = vmul.f32 %v8519, %v8567
        %v8592 = vmul.f32 %v8520, %v8568
        %v8593 = vmul.f32 %v8521, %v8569
        %v8594 = vmul.f32 %v8522, %v8570
        %v8595 = vmul.f32 %v8523, %v8571
        %v8596 = vmul.f32 %v8524, %v8572
        %v8597 = vmul.f32 %v8525, %v8573
        %v8598 = vmul.f32 %v8526, %v8574
        %v8599 = vadd.f32 %v8359, %v8383
        %v8600 = vadd.f32 %v8360, %v8384
        %v8601 = vadd.f32 %v8361, %v8385
        %v8602 = vadd.f32 %v8362, %v8386
        %v8603 = vadd.f32 %v8363, %v8387
        %v8604 = vadd.f32 %v8364, %v8388
        %v8605 = vadd.f32 %v8365, %v8389
        %v8606 = vadd.f32 %v8366, %v8390
        %v8607 = vadd.f32 %v8367, %v8391
        %v8608 = vadd.f32 %v8368, %v8392
        %v8609 = vadd.f32 %v8369, %v8393
        %v8610 = vadd.f32 %v8370, %v8394
        %v8611 = vadd.f32 %v8371, %v8395
        %v8612 = vadd.f32 %v8372, %v8396
        %v8613 = vadd.f32 %v8373, %v8397
        %v8614 = vadd.f32 %v8374, %v8398
        %v8615 = vadd.f32 %v8375, %v8399
        %v8616 = vadd.f32 %v8376, %v8400
        %v8617 = vadd.f32 %v8377, %v8401
        %v8618 = vadd.f32 %v8378, %v8402
        %v8619 = vadd.f32 %v8379, %v8403
        %v8620 = vadd.f32 %v8380, %v8404
        %v8621 = vadd.f32 %v8381, %v8405
        %v8622 = vadd.f32 %v8382, %v8406
        %v8623 = vadd.f32 %v8599, 0.0001
        %v8624 = vadd.f32 %v8600, 0.0001
        %v8625 = vadd.f32 %v8601, 0.0001
        %v8626 = vadd.f32 %v8602, 0.0001
        %v8627 = vadd.f32 %v8603, 0.0001
        %v8628 = vadd.f32 %v8604, 0.0001
        %v8629 = vadd.f32 %v8605, 0.0001
        %v8630 = vadd.f32 %v8606, 0.0001
        %v8631 = vadd.f32 %v8607, 0.0001
        %v8632 = vadd.f32 %v8608, 0.0001
        %v8633 = vadd.f32 %v8609, 0.0001
        %v8634 = vadd.f32 %v8610, 0.0001
        %v8635 = vadd.f32 %v8611, 0.0001
        %v8636 = vadd.f32 %v8612, 0.0001
        %v8637 = vadd.f32 %v8613, 0.0001
        %v8638 = vadd.f32 %v8614, 0.0001
        %v8639 = vadd.f32 %v8615, 0.0001
        %v8640 = vadd.f32 %v8616, 0.0001
        %v8641 = vadd.f32 %v8617, 0.0001
        %v8642 = vadd.f32 %v8618, 0.0001
        %v8643 = vadd.f32 %v8619, 0.0001
        %v8644 = vadd.f32 %v8620, 0.0001
        %v8645 = vadd.f32 %v8621, 0.0001
        %v8646 = vadd.f32 %v8622, 0.0001
        %v8647 = vadd.f32 %v8407, %v8431
        %v8648 = vadd.f32 %v8408, %v8432
        %v8649 = vadd.f32 %v8409, %v8433
        %v8650 = vadd.f32 %v8410, %v8434
        %v8651 = vadd.f32 %v8411, %v8435
        %v8652 = vadd.f32 %v8412, %v8436
        %v8653 = vadd.f32 %v8413, %v8437
        %v8654 = vadd.f32 %v8414, %v8438
        %v8655 = vadd.f32 %v8415, %v8439
        %v8656 = vadd.f32 %v8416, %v8440
        %v8657 = vadd.f32 %v8417, %v8441
        %v8658 = vadd.f32 %v8418, %v8442
        %v8659 = vadd.f32 %v8419, %v8443
        %v8660 = vadd.f32 %v8420, %v8444
        %v8661 = vadd.f32 %v8421, %v8445
        %v8662 = vadd.f32 %v8422, %v8446
        %v8663 = vadd.f32 %v8423, %v8447
        %v8664 = vadd.f32 %v8424, %v8448
        %v8665 = vadd.f32 %v8425, %v8449
        %v8666 = vadd.f32 %v8426, %v8450
        %v8667 = vadd.f32 %v8427, %v8451
        %v8668 = vadd.f32 %v8428, %v8452
        %v8669 = vadd.f32 %v8429, %v8453
        %v8670 = vadd.f32 %v8430, %v8454
        %v8671 = vadd.f32 %v8647, 0.0009
        %v8672 = vadd.f32 %v8648, 0.0009
        %v8673 = vadd.f32 %v8649, 0.0009
        %v8674 = vadd.f32 %v8650, 0.0009
        %v8675 = vadd.f32 %v8651, 0.0009
        %v8676 = vadd.f32 %v8652, 0.0009
        %v8677 = vadd.f32 %v8653, 0.0009
        %v8678 = vadd.f32 %v8654, 0.0009
        %v8679 = vadd.f32 %v8655, 0.0009
        %v8680 = vadd.f32 %v8656, 0.0009
        %v8681 = vadd.f32 %v8657, 0.0009
        %v8682 = vadd.f32 %v8658, 0.0009
        %v8683 = vadd.f32 %v8659, 0.0009
        %v8684 = vadd.f32 %v8660, 0.0009
        %v8685 = vadd.f32 %v8661, 0.0009
        %v8686 = vadd.f32 %v8662, 0.0009
        %v8687 = vadd.f32 %v8663, 0.0009
        %v8688 = vadd.f32 %v8664, 0.0009
        %v8689 = vadd.f32 %v8665, 0.0009
        %v8690 = vadd.f32 %v8666, 0.0009
        %v8691 = vadd.f32 %v8667, 0.0009
        %v8692 = vadd.f32 %v8668, 0.0009
        %v8693 = vadd.f32 %v8669, 0.0009
        %v8694 = vadd.f32 %v8670, 0.0009
        %v8695 = vmul.f32 %v8623, %v8671
        %v8696 = vmul.f32 %v8624, %v8672
        %v8697 = vmul.f32 %v8625, %v8673
        %v8698 = vmul.f32 %v8626, %v8674
        %v8699 = vmul.f32 %v8627, %v8675
        %v8700 = vmul.f32 %v8628, %v8676
        %v8701 = vmul.f32 %v8629, %v8677
        %v8702 = vmul.f32 %v8630, %v8678
        %v8703 = vmul.f32 %v8631, %v8679
        %v8704 = vmul.f32 %v8632, %v8680
        %v8705 = vmul.f32 %v8633, %v8681
        %v8706 = vmul.f32 %v8634, %v8682
        %v8707 = vmul.f32 %v8635, %v8683
        %v8708 = vmul.f32 %v8636, %v8684
        %v8709 = vmul.f32 %v8637, %v8685
        %v8710 = vmul.f32 %v8638, %v8686
        %v8711 = vmul.f32 %v8639, %v8687
        %v8712 = vmul.f32 %v8640, %v8688
        %v8713 = vmul.f32 %v8641, %v8689
        %v8714 = vmul.f32 %v8642, %v8690
        %v8715 = vmul.f32 %v8643, %v8691
        %v8716 = vmul.f32 %v8644, %v8692
        %v8717 = vmul.f32 %v8645, %v8693
        %v8718 = vmul.f32 %v8646, %v8694
        %v8719 = vrcp.pop %v8695
        %v8720 = vrcp.pop %v8696
        %v8721 = vrcp.pop %v8697
        %v8722 = vrcp.pop %v8698
        %v8723 = vrcp.pop %v8699
        %v8724 = vrcp.pop %v8700
        %v8725 = vrcp.pop %v8701
        %v8726 = vrcp.pop %v8702
        %v8727 = vrcp.pop %v8703
        %v8728 = vrcp.pop %v8704
        %v8729 = vrcp.pop %v8705
        %v8730 = vrcp.pop %v8706
        %v8731 = vrcp.pop %v8707
        %v8732 = vrcp.pop %v8708
        %v8733 = vrcp.pop %v8709
        %v8734 = vrcp.pop %v8710
        %v8735 = vrcp.pop %v8711
        %v8736 = vrcp.pop %v8712
        %v8737 = vrcp.pop %v8713
        %v8738 = vrcp.pop %v8714
        %v8739 = vrcp.pop %v8715
        %v8740 = vrcp.pop %v8716
        %v8741 = vrcp.pop %v8717
        %v8742 = vrcp.pop %v8718
        %v8743 = vmul.f32 %v8575, %v8719
        %v8744 = vmul.f32 %v8576, %v8720
        %v8745 = vmul.f32 %v8577, %v8721
        %v8746 = vmul.f32 %v8578, %v8722
        %v8747 = vmul.f32 %v8579, %v8723
        %v8748 = vmul.f32 %v8580, %v8724
        %v8749 = vmul.f32 %v8581, %v8725
        %v8750 = vmul.f32 %v8582, %v8726
        %v8751 = vmul.f32 %v8583, %v8727
        %v8752 = vmul.f32 %v8584, %v8728
        %v8753 = vmul.f32 %v8585, %v8729
        %v8754 = vmul.f32 %v8586, %v8730
        %v8755 = vmul.f32 %v8587, %v8731
        %v8756 = vmul.f32 %v8588, %v8732
        %v8757 = vmul.f32 %v8589, %v8733
        %v8758 = vmul.f32 %v8590, %v8734
        %v8759 = vmul.f32 %v8591, %v8735
        %v8760 = vmul.f32 %v8592, %v8736
        %v8761 = vmul.f32 %v8593, %v8737
        %v8762 = vmul.f32 %v8594, %v8738
        %v8763 = vmul.f32 %v8595, %v8739
        %v8764 = vmul.f32 %v8596, %v8740
        %v8765 = vmul.f32 %v8597, %v8741
        %v8766 = vmul.f32 %v8598, %v8742
        %vm8791 = vcmask 1044480
        %v8792 = vrot.slane %v8743, 3
        %v8793 = vrot.slane %v8744, 3
        %v8794 = vsel %vm8791, %v8792, %v8793
        %v8795 = vrot.slane %v8745, 3
        %v8796 = vsel %vm8791, %v8793, %v8795
        %v8797 = vrot.slane %v8746, 3
        %v8798 = vrot.slane %v8747, 3
        %v8799 = vsel %vm8791, %v8797, %v8798
        %v8800 = vrot.slane %v8748, 3
        %v8801 = vsel %vm8791, %v8798, %v8800
        %v8802 = vrot.slane %v8749, 3
        %v8803 = vrot.slane %v8750, 3
        %v8804 = vsel %vm8791, %v8802, %v8803
        %v8805 = vrot.slane %v8751, 3
        %v8806 = vsel %vm8791, %v8803, %v8805
        %v8807 = vrot.slane %v8752, 3
        %v8808 = vrot.slane %v8753, 3
        %v8809 = vsel %vm8791, %v8807, %v8808
        %v8810 = vrot.slane %v8754, 3
        %v8811 = vsel %vm8791, %v8808, %v8810
        %v8812 = vrot.slane %v8755, 3
        %v8813 = vrot.slane %v8756, 3
        %v8814 = vsel %vm8791, %v8812, %v8813
        %v8815 = vrot.slane %v8757, 3
        %v8816 = vsel %vm8791, %v8813, %v8815
        %v8817 = vrot.slane %v8758, 3
        %v8818 = vrot.slane %v8759, 3
        %v8819 = vsel %vm8791, %v8817, %v8818
        %v8820 = vrot.slane %v8760, 3
        %v8821 = vsel %vm8791, %v8818, %v8820
        %v8822 = vrot.slane %v8761, 3
        %v8823 = vrot.slane %v8762, 3
        %v8824 = vsel %vm8791, %v8822, %v8823
        %v8825 = vrot.slane %v8763, 3
        %v8826 = vsel %vm8791, %v8823, %v8825
        %v8827 = vrot.slane %v8764, 3
        %v8828 = vrot.slane %v8765, 3
        %v8829 = vsel %vm8791, %v8827, %v8828
        %v8830 = vrot.slane %v8766, 3
        %v8831 = vsel %vm8791, %v8828, %v8830
        %v8848 = vsel %vm794, %v8794, 0.0
        %8849 = vadd.xlane.f32.xlu0 %v8848
        %v8850 = vpop.xlane.xlu0 %8849
        %v8851 = vsel %vm794, %v8796, 0.0
        %8852 = vadd.xlane.f32.xlu0 %v8851
        %v8853 = vpop.xlane.xlu0 %8852
        %v8854 = vsel %vm794, %v8799, 0.0
        %8855 = vadd.xlane.f32.xlu0 %v8854
        %v8856 = vpop.xlane.xlu0 %8855
        %v8857 = vsel %vm794, %v8801, 0.0
        %8858 = vadd.xlane.f32.xlu0 %v8857
        %v8859 = vpop.xlane.xlu0 %8858
        %v8860 = vsel %vm794, %v8804, 0.0
        %8861 = vadd.xlane.f32.xlu0 %v8860
        %v8862 = vpop.xlane.xlu0 %8861
        %v8863 = vsel %vm794, %v8806, 0.0
        %8864 = vadd.xlane.f32.xlu0 %v8863
        %v8865 = vpop.xlane.xlu0 %8864
        %v8866 = vsel %vm794, %v8809, 0.0
        %8867 = vadd.xlane.f32.xlu0 %v8866
        %v8868 = vpop.xlane.xlu0 %8867
        %v8869 = vsel %vm794, %v8811, 0.0
        %8870 = vadd.xlane.f32.xlu0 %v8869
        %v8871 = vpop.xlane.xlu0 %8870
        %v8872 = vsel %vm794, %v8814, 0.0
        %8873 = vadd.xlane.f32.xlu0 %v8872
        %v8874 = vpop.xlane.xlu0 %8873
        %v8875 = vsel %vm794, %v8816, 0.0
        %8876 = vadd.xlane.f32.xlu0 %v8875
        %v8877 = vpop.xlane.xlu0 %8876
        %v8878 = vsel %vm794, %v8819, 0.0
        %8879 = vadd.xlane.f32.xlu0 %v8878
        %v8880 = vpop.xlane.xlu0 %8879
        %v8881 = vsel %vm794, %v8821, 0.0
        %8882 = vadd.xlane.f32.xlu0 %v8881
        %v8883 = vpop.xlane.xlu0 %8882
        %v8884 = vsel %vm794, %v8824, 0.0
        %8885 = vadd.xlane.f32.xlu0 %v8884
        %v8886 = vpop.xlane.xlu0 %8885
        %v8887 = vsel %vm794, %v8826, 0.0
        %8888 = vadd.xlane.f32.xlu0 %v8887
        %v8889 = vpop.xlane.xlu0 %8888
        %v8890 = vsel %vm794, %v8829, 0.0
        %8891 = vadd.xlane.f32.xlu0 %v8890
        %v8892 = vpop.xlane.xlu0 %8891
        %v8893 = vsel %vm794, %v8831, 0.0
        %8894 = vadd.xlane.f32.xlu0 %v8893
        %v8895 = vpop.xlane.xlu0 %8894
        %v8896 = vadd.f32 %v8850, %v8853
        %v8897 = vadd.f32 %v8896, %v8856
        %v8898 = vadd.f32 %v8897, %v8859
        %v8899 = vadd.f32 %v8898, %v8862
        %v8900 = vadd.f32 %v8899, %v8865
        %v8901 = vadd.f32 %v8900, %v8868
        %v8902 = vadd.f32 %v8901, %v8871
        %v8903 = vadd.f32 %v8902, %v8874
        %v8904 = vadd.f32 %v8903, %v8877
        %v8905 = vadd.f32 %v8904, %v8880
        %v8906 = vadd.f32 %v8905, %v8883
        %v8907 = vadd.f32 %v8906, %v8886
        %v8908 = vadd.f32 %v8907, %v8889
        %v8909 = vadd.f32 %v8908, %v8892
        %v8910 = vadd.f32 %v8909, %v8895
        %v8911 = vrot.slane %v8910, 4
        %v8912 = vadd.f32 %v8910, %v8911
        %v8913 = vrot.slane %v8912, 2
        %v8914 = vadd.f32 %v8912, %v8913
        %v8915 = vrot.slane %v8914, 1
        %v8916 = vadd.f32 %v8914, %v8915
        %v8917 = vld [vmem:[#allocation13] sm:$0x1]
        %v8918 = vadd.f32 %v8917, %v8916
        %vm8919 = vcmask 0
        %8920 = vst.msk [vmem:[#allocation13] sm:$0x1] %vm8919, %v8918
        // Predicated region
        $region77: #{ssim3d_loss.1} parent=39 // pred_check
          %p8921 = pneg %p1145
        $region78: #{ssim3d_loss.1} parent=39 // pred_check_branch
          %8923 = sbr.rel (%p8921) target = $region80
        $region79: #{ssim3d_loss.1} parent=39 // pred_region
          %v8924 = vld [vmem:[#allocation13] sm:$0x1]
          %v8925 = vmul.f32 %v8924, 0.00024414063
          %v8926 = vsub.f32 1.0, %v8925
          %8927 = vst.msk [vmem:[#allocation13] sm:$0x1] %vm8919, %v8926
        $region80: #{ssim3d_loss.1} parent=39 // pred_fallthru
          _
        // Predicated region
        $region81: #{ssim3d_loss.1} parent=39 // pred_check
          %p8928 = pneg %p176
        $region82: #{ssim3d_loss.1} parent=39 // pred_check_branch
          %8930 = sbr.rel (%p8928) target = $region84
        $region83: #{ssim3d_loss.1} parent=39 // pred_region
          %s8932 = ssub.s32 16, 16
          %8933 = vsyncadd [#allocation6], %s8932
          %s8935 = sshll.u32 [#allocation13], 4
          %s8936 = int_to_ptr.vmem [resolvable:$true] %s8935
          %8938 = dma.vmem_to_hbm [thread:$0]  %s8936, 16, %s5, [#allocation6]
        $region84: #{ssim3d_loss.1} parent=39 // pred_fallthru
          _
        // Predicated region
        $region85: #{ssim3d_loss.1} parent=39 // pred_check
          %p8939 = pneg %p176
        $region86: #{ssim3d_loss.1} parent=39 // pred_check_branch
          %8941 = sbr.rel (%p8939) target = $region88
        $region87: #{ssim3d_loss.1} parent=39 // pred_region
          %8942 = dma.done [#allocation6], 16
        $region88: #{ssim3d_loss.1} parent=39 // pred_fallthru
          _
      $region40: #{ssim3d_loss.1} parent=5 // pred_fallthru
        _
      %p8943 = scmp.le.s32.totalorder 2, %s21
      // Predicated region
      $region89: #{ssim3d_loss.1} parent=5 // pred_check
        %p8944 = pneg %p8943
      $region90: #{ssim3d_loss.1} parent=5 // pred_check_branch
        %8946 = sbr.rel (%p8944) target = $region92
      $region91: #{ssim3d_loss.1} parent=5 // pred_region
        %s8947 = ssub.s32 %s21, 2
      $region92: #{ssim3d_loss.1} parent=5 // pred_fallthru
        _
    $region6: #{ssim3d_loss.1} parent=1 // loop_footer
      %s25 = sadd.s32 1, %s21
    $region7: #{ssim3d_loss.1} parent=1 // loop_footer_branch
      %20 = sbr.rel target = $region3
    $region8: #{ssim3d_loss.1} parent=1 // loop_exit
      _
    %8948 = vsyncpa [#allocation5], 1
    %s8949 = scalar_lea.sflag [#allocation5], 1
    %8950 = vsyncpa %s8949, 1
    %8951 = vsyncpa [#allocation8], 1
    %s8952 = scalar_lea.sflag [#allocation8], 1
    %8953 = vsyncpa %s8952, 1
    %8954 = vsyncpa [#allocation11], 1
    %s8955 = scalar_lea.sflag [#allocation11], 1
    %8956 = vsyncpa %s8955, 1
    %8957 = vsyncpa [#allocation6], 1
    %s8958 = scalar_lea.sflag [#allocation6], 1
    %8959 = vsyncpa %s8958, 1

</llo_original>
